<compile_context>
chip_gen: v7x
topology: tpu7x:2x2x1
jax: 0.10.0
libtpu: 0.0.40
codegen_flags: <defaults>
</compile_context>

<pallas_src>
import functools

import jax
import jax.numpy as jnp
from jax.experimental import pallas as pl
from jax.experimental.pallas import tpu as pltpu


# ----------------------------------------------------------------------------
# Fused kernel: patch embedding + L transformer encoder layers (single step)
# ----------------------------------------------------------------------------
def fused_encoder_kernel(
        patches_ref, conv_w_ref, bias_pos_ref, kv_mask_ref, attn_bias_ref,
        wq_ref, bq_ref, wk_ref, bk_ref, wv_ref, bv_ref,
        wo_ref, bo_ref, g1_ref, be1_ref,
        w1_ref, b1_ref, w2_ref, b2_ref, g2_ref, be2_ref,
        out_ref, *, num_heads, ffn_chunks):
    H = num_heads
    L = wq_ref.shape[0]
    BS, E = out_ref.shape
    F = w1_ref.shape[-1]
    Dh = E // H
    scale = 1.0 / (Dh ** 0.5)
    mxu_dtype = wq_ref.dtype                       # bf16 operands, f32 acc

    kv_mask = kv_mask_ref[...]                     # (H*BS, E)  0/1, bf16
    attn_bias = attn_bias_ref[...]                 # (H*BS, H*BS) f32, 0 / -1e30

    # ---- patch embedding + conv bias + positional encodings -----------------
    x = jnp.dot(patches_ref[...], conv_w_ref[...],
                preferred_element_type=jnp.float32) + bias_pos_ref[...]   # (BS,E) f32

    # ---- L encoder layers (static unrolled loop; weights indexed per layer) -
    for l in range(L):
        xm = x.astype(mxu_dtype)

        q = jnp.dot(xm, wq_ref[l], preferred_element_type=jnp.float32) + bq_ref[l]
        k = jnp.dot(xm, wk_ref[l], preferred_element_type=jnp.float32) + bk_ref[l]
        v = jnp.dot(xm, wv_ref[l], preferred_element_type=jnp.float32) + bv_ref[l]

        # Heads stacked along rows -> one dense (H*BS, H*BS) attention matmul.
        # Only K/V are head-lane-masked; cross-head / cross-batch score blocks
        # are killed by the additive bias.
        q2 = (q * scale).astype(mxu_dtype)                       # (BS, E)
        qs = jnp.concatenate([q2] * H, axis=0)                   # (H*BS, E)
        ks = jnp.concatenate([k.astype(mxu_dtype)] * H, axis=0) * kv_mask
        vs = jnp.concatenate([v.astype(mxu_dtype)] * H, axis=0) * kv_mask

        s = jnp.einsum("qe,ke->qk", qs, ks,
                       preferred_element_type=jnp.float32) + attn_bias
        s = s - jnp.max(s, axis=-1, keepdims=True)
        p = jnp.exp(s)
        p = p * pl.reciprocal(jnp.sum(p, axis=-1, keepdims=True), approx=True)

        ctx = jnp.dot(p.astype(mxu_dtype), vs,
                      preferred_element_type=jnp.float32)        # (H*BS, E)
        # Head slab h only has nonzeros in head-h lanes -> summing == concat.
        attn = ctx[0:BS]
        for h in range(1, H):
            attn = attn + ctx[h * BS:(h + 1) * BS]               # (BS, E)
        attn = jnp.dot(attn.astype(mxu_dtype), wo_ref[l],
                       preferred_element_type=jnp.float32) + bo_ref[l]

        # residual + LayerNorm 1 (post-norm, eps=1e-5); dropout = identity
        h1 = x + attn
        mu1 = jnp.mean(h1, axis=-1, keepdims=True)
        var1 = jnp.mean((h1 - mu1) ** 2, axis=-1, keepdims=True)
        h1 = (h1 - mu1) * jax.lax.rsqrt(var1 + 1e-5) * g1_ref[l] + be1_ref[l]

        # feed forward (ReLU), hidden dim chunked to cap live vregs
        h1m = h1.astype(mxu_dtype)
        CH = F // ffn_chunks
        ff = jnp.zeros((BS, E), jnp.float32)
        for c in range(ffn_chunks):
            c0 = c * CH
            ff_c = jnp.dot(h1m, w1_ref[l, :, c0:c0 + CH],
                           preferred_element_type=jnp.float32) + b1_ref[l, :, c0:c0 + CH]
            ff_c = jnp.maximum(ff_c, 0.0)
            ff = ff + jnp.dot(ff_c.astype(mxu_dtype), w2_ref[l, c0:c0 + CH, :],
                              preferred_element_type=jnp.float32)
        ff = ff + b2_ref[l]

        # residual + LayerNorm 2
        h2 = h1 + ff
        mu2 = jnp.mean(h2, axis=-1, keepdims=True)
        var2 = jnp.mean((h2 - mu2) ** 2, axis=-1, keepdims=True)
        x = (h2 - mu2) * jax.lax.rsqrt(var2 + 1e-5) * g2_ref[l] + be2_ref[l]

    out_ref[...] = x


# ----------------------------------------------------------------------------
# Wrapper: unfold -> fused pallas_call -> PyTorch output layout
# ----------------------------------------------------------------------------
def patch_transformer_encoder(x, params, *, patch_size, num_heads, ffn_chunks=4):
    """Forward pass. x: (B, C, H, W) float32. Returns (S, B, E) like PyTorch."""
    B, C, H, W = x.shape
    P = patch_size
    Hp, Wp = H // P, W // P
    S = Hp * Wp
    K = C * P * P
    E = params["conv_w"].shape[-1]
    L = params["w_q"].shape[0]
    F = params["w1"].shape[-1]
    BS = B * S
    Dh = E // num_heads
    HBS = num_heads * BS
    assert F % ffn_chunks == 0

    # Unfold into non-overlapping patches in nn.Conv2d weight order (c, ph, pw),
    # batch flattened into the row dimension; cast to the MXU operand dtype.
    patches = x.reshape(B, C, Hp, P, Wp, P).transpose(0, 2, 4, 1, 3, 5)
    patches = patches.reshape(BS, K).astype(params["conv_w"].dtype)

    # Conv bias + positional encodings, pre-broadcast to every (b, s) row.
    bias_pos = jnp.tile(params["conv_b"] + params["pos"][:S, :], (B, 1))  # (BS,E) f32

    # Host-side masks (constant-folded under jit):
    #  - attn_bias: 0 where (same head block AND same batch element), else -1e30
    #  - kv_mask:   per-row head lane selector for the stacked K / V
    row = jnp.arange(HBS)
    head_r = row // BS
    batch_r = (row % BS) // S
    same = (head_r[:, None] == head_r[None, :]) & (batch_r[:, None] == batch_r[None, :])
    attn_bias = jnp.where(same, 0.0, -1e30).astype(jnp.float32)            # (HBS, HBS)
    kv_mask = (jnp.arange(E)[None, :] // Dh ==
               head_r[:, None]).astype(params["w_q"].dtype)                # (HBS, E)

    def whole(a):   # whole-array block, same (only) block every step
        return pl.BlockSpec(a.shape, lambda i: (0,) * a.ndim)

    args = (patches, params["conv_w"], bias_pos, kv_mask, attn_bias,
            params["w_q"], params["b_q"], params["w_k"], params["b_k"],
            params["w_v"], params["b_v"], params["w_o"], params["b_o"],
            params["g1"], params["beta1"], params["w1"], params["b1"],
            params["w2"], params["b2"], params["g2"], params["beta2"])

    flops = (2 * BS * K * E
             + L * (4 * 2 * BS * E * E            # q/k/v/out projections
                    + 2 * HBS * E * HBS           # QK^T
                    + 2 * HBS * HBS * E           # P @ V
                    + 2 * 2 * BS * E * F))        # FFN
    transcendentals = L * (HBS * HBS + HBS + 2 * BS)
    bytes_accessed = sum(int(a.size) * a.dtype.itemsize for a in args) + BS * E * 4

    out = pl.pallas_call(
        functools.partial(fused_encoder_kernel,
                          num_heads=num_heads, ffn_chunks=ffn_chunks),
        out_shape=jax.ShapeDtypeStruct((BS, E), jnp.float32),
        grid=(1,),
        in_specs=[whole(a) for a in args],
        out_specs=pl.BlockSpec((BS, E), lambda i: (0, 0)),
        compiler_params=pltpu.CompilerParams(
            dimension_semantics=("arbitrary",)),
        cost_estimate=pl.CostEstimate(
            flops=flops, transcendentals=transcendentals,
            bytes_accessed=bytes_accessed),
    )(*args)

    # PyTorch returns (S, B, E).
    return out.reshape(B, S, E).transpose(1, 0, 2)


# ----------------------------------------------------------------------------
# Deterministic synthetic parameters (layer-stacked, kernel-ready layout)
# ----------------------------------------------------------------------------
def init_params(key, *, in_channels, patch_size, embedding_dim, dim_ff,
                num_layers, seq_len, mxu_dtype=jnp.bfloat16):
    """conv weight pre-flattened/transposed to (C*P*P, E); per-layer weights
    stacked along a leading L axis, pre-transposed for `x @ w`, stored in
    `mxu_dtype` (bf16 = native MXU operand dtype; halves weight DMA bytes)."""
    E, F = embedding_dim, dim_ff
    C, P, S, L = in_channels, patch_size, seq_len, num_layers
    K = C * P * P

    def nrm(k, shape, scale=0.02):
        return scale * jax.random.normal(k, shape, jnp.float32)

    keys = jax.random.split(key, 13)
    return {
        "conv_w": nrm(keys[0], (K, E)).astype(mxu_dtype),
        "conv_b": nrm(keys[1], (1, E)),
        # lazy nn.Parameter(torch.rand(S, E)) -> uniform [0, 1)
        "pos": jax.random.uniform(keys[2], (S, E), jnp.float32),
        "w_q": nrm(keys[3], (L, E, E)).astype(mxu_dtype),
        "w_k": nrm(keys[4], (L, E, E)).astype(mxu_dtype),
        "w_v": nrm(keys[5], (L, E, E)).astype(mxu_dtype),
        "w_o": nrm(keys[6], (L, E, E)).astype(mxu_dtype),
        "b_q": nrm(keys[7], (L, 1, E)),
        "b_k": nrm(keys[8], (L, 1, E)),
        "b_v": nrm(keys[9], (L, 1, E)),
        "b_o": nrm(keys[10], (L, 1, E)),
        "g1": jnp.ones((L, 1, E), jnp.float32),
        "beta1": jnp.zeros((L, 1, E), jnp.float32),
        "w1": nrm(keys[11], (L, E, F)).astype(mxu_dtype),
        "b1": jnp.zeros((L, 1, F), jnp.float32),
        "w2": nrm(keys[12], (L, F, E)).astype(mxu_dtype),
        "b2": jnp.zeros((L, 1, E), jnp.float32),
        "g2": jnp.ones((L, 1, E), jnp.float32),
        "beta2": jnp.zeros((L, 1, E), jnp.float32),
    }


if __name__ == "__main__":
    # x: (B=2, C=4, H=16, W=16), patch_size=4 -> S=16 patches,
    # embedding_dim=32, num_heads=4, dim_feedforward=1024, 4 layers.
    B, C, H, W = 2, 4, 16, 16
    P, E, NH, F, L = 4, 32, 4, 1024, 4
    S = (H // P) * (W // P)

    key = jax.random.PRNGKey(0)
    k_x, k_p = jax.random.split(key)
    x = jax.random.normal(k_x, (B, C, H, W), jnp.float32)
    params = init_params(k_p, in_channels=C, patch_size=P, embedding_dim=E,
                         dim_ff=F, num_layers=L, seq_len=S)

    fwd = jax.jit(functools.partial(patch_transformer_encoder,
                                    patch_size=P, num_heads=NH))
    out = jax.block_until_ready(fwd(x, params))

    assert out.shape == (S, B, E), out.shape
    assert out.dtype == jnp.float32
    assert bool(jnp.all(jnp.isfinite(out)))
    print("KERNEL_OK")
</pallas_src>

<mosaic_0001>
module attributes {stable_mosaic.version = 11 : i64} {
  func.func @fused_encoder_kernel(%arg0: i32, %arg1: memref<32x64xbf16, #tpu.memory_space<vmem>>, %arg2: memref<64x32xbf16, #tpu.memory_space<vmem>>, %arg3: memref<32x32xf32, #tpu.memory_space<vmem>>, %arg4: memref<128x32xbf16, #tpu.memory_space<vmem>>, %arg5: memref<128x128xf32, #tpu.memory_space<vmem>>, %arg6: memref<4x32x32xbf16, #tpu.memory_space<vmem>>, %arg7: memref<4x1x32xf32, #tpu.memory_space<vmem>>, %arg8: memref<4x32x32xbf16, #tpu.memory_space<vmem>>, %arg9: memref<4x1x32xf32, #tpu.memory_space<vmem>>, %arg10: memref<4x32x32xbf16, #tpu.memory_space<vmem>>, %arg11: memref<4x1x32xf32, #tpu.memory_space<vmem>>, %arg12: memref<4x32x32xbf16, #tpu.memory_space<vmem>>, %arg13: memref<4x1x32xf32, #tpu.memory_space<vmem>>, %arg14: memref<4x1x32xf32, #tpu.memory_space<vmem>>, %arg15: memref<4x1x32xf32, #tpu.memory_space<vmem>>, %arg16: memref<4x32x1024xbf16, #tpu.memory_space<vmem>>, %arg17: memref<4x1x1024xf32, #tpu.memory_space<vmem>>, %arg18: memref<4x1024x32xbf16, #tpu.memory_space<vmem>>, %arg19: memref<4x1x32xf32, #tpu.memory_space<vmem>>, %arg20: memref<4x1x32xf32, #tpu.memory_space<vmem>>, %arg21: memref<4x1x32xf32, #tpu.memory_space<vmem>>, %arg22: memref<32x32xf32, #tpu.memory_space<vmem>>) attributes {dimension_semantics = [#tpu.dimension_semantics<arbitrary>], iteration_bounds = array<i64: 1>, scalar_prefetch = 0 : i64, scratch_operands = 0 : i64, tpu.core_type = #tpu.core_type<tc>, window_params = [{pipeline_mode = #tpu.pipeline_mode<synchronous>, transform_indices = @transform_0, window_bounds = array<i64: 32, 64>}, {pipeline_mode = #tpu.pipeline_mode<synchronous>, transform_indices = @transform_1, window_bounds = array<i64: 64, 32>}, {pipeline_mode = #tpu.pipeline_mode<synchronous>, transform_indices = @transform_2, window_bounds = array<i64: 32, 32>}, {pipeline_mode = #tpu.pipeline_mode<synchronous>, transform_indices = @transform_3, window_bounds = array<i64: 128, 32>}, {pipeline_mode = #tpu.pipeline_mode<synchronous>, transform_indices = @transform_4, window_bounds = array<i64: 128, 128>}, {pipeline_mode = #tpu.pipeline_mode<synchronous>, transform_indices = @transform_5, window_bounds = array<i64: 4, 32, 32>}, {pipeline_mode = #tpu.pipeline_mode<synchronous>, transform_indices = @transform_6, window_bounds = array<i64: 4, 1, 32>}, {pipeline_mode = #tpu.pipeline_mode<synchronous>, transform_indices = @transform_7, window_bounds = array<i64: 4, 32, 32>}, {pipeline_mode = #tpu.pipeline_mode<synchronous>, transform_indices = @transform_8, window_bounds = array<i64: 4, 1, 32>}, {pipeline_mode = #tpu.pipeline_mode<synchronous>, transform_indices = @transform_9, window_bounds = array<i64: 4, 32, 32>}, {pipeline_mode = #tpu.pipeline_mode<synchronous>, transform_indices = @transform_10, window_bounds = array<i64: 4, 1, 32>}, {pipeline_mode = #tpu.pipeline_mode<synchronous>, transform_indices = @transform_11, window_bounds = array<i64: 4, 32, 32>}, {pipeline_mode = #tpu.pipeline_mode<synchronous>, transform_indices = @transform_12, window_bounds = array<i64: 4, 1, 32>}, {pipeline_mode = #tpu.pipeline_mode<synchronous>, transform_indices = @transform_13, window_bounds = array<i64: 4, 1, 32>}, {pipeline_mode = #tpu.pipeline_mode<synchronous>, transform_indices = @transform_14, window_bounds = array<i64: 4, 1, 32>}, {pipeline_mode = #tpu.pipeline_mode<synchronous>, transform_indices = @transform_15, window_bounds = array<i64: 4, 32, 1024>}, {pipeline_mode = #tpu.pipeline_mode<synchronous>, transform_indices = @transform_16, window_bounds = array<i64: 4, 1, 1024>}, {pipeline_mode = #tpu.pipeline_mode<synchronous>, transform_indices = @transform_17, window_bounds = array<i64: 4, 1024, 32>}, {pipeline_mode = #tpu.pipeline_mode<synchronous>, transform_indices = @transform_18, window_bounds = array<i64: 4, 1, 32>}, {pipeline_mode = #tpu.pipeline_mode<synchronous>, transform_indices = @transform_19, window_bounds = array<i64: 4, 1, 32>}, {pipeline_mode = #tpu.pipeline_mode<synchronous>, transform_indices = @transform_20, window_bounds = array<i64: 4, 1, 32>}, {pipeline_mode = #tpu.pipeline_mode<synchronous>, transform_indices = @transform_21, window_bounds = array<i64: 32, 32>}]} {
    %c0 = arith.constant 0 : index
    %c0_0 = arith.constant 0 : index
    %0 = vector.load %arg4[%c0, %c0_0] : memref<128x32xbf16, #tpu.memory_space<vmem>>, vector<128x32xbf16>
    %c0_1 = arith.constant 0 : index
    %c0_2 = arith.constant 0 : index
    %1 = vector.load %arg5[%c0_1, %c0_2] : memref<128x128xf32, #tpu.memory_space<vmem>>, vector<128x128xf32>
    %c0_3 = arith.constant 0 : index
    %c0_4 = arith.constant 0 : index
    %2 = vector.load %arg1[%c0_3, %c0_4] : memref<32x64xbf16, #tpu.memory_space<vmem>>, vector<32x64xbf16>
    %c0_5 = arith.constant 0 : index
    %c0_6 = arith.constant 0 : index
    %3 = vector.load %arg2[%c0_5, %c0_6] : memref<64x32xbf16, #tpu.memory_space<vmem>>, vector<64x32xbf16>
    %cst = arith.constant dense<0.000000e+00> : vector<32x32xf32>
    %4 = tpu.matmul %2, %3, %cst {dimension_numbers = #tpu.dot_dimension_numbers<[1], [0], [0], [1], [0, 0, 1, 1], [], []>} : vector<32x64xbf16>, vector<64x32xbf16>, vector<32x32xf32> -> vector<32x32xf32>
    %c0_7 = arith.constant 0 : index
    %c0_8 = arith.constant 0 : index
    %5 = vector.load %arg3[%c0_7, %c0_8] : memref<32x32xf32, #tpu.memory_space<vmem>>, vector<32x32xf32>
    %6 = arith.addf %4, %5 : vector<32x32xf32>
    %7 = arith.truncf %6 : vector<32x32xf32> to vector<32x32xbf16>
    %c0_9 = arith.constant 0 : index
    %c0_10 = arith.constant 0 : index
    %c0_11 = arith.constant 0 : index
    %8 = vector.load %arg6[%c0_9, %c0_10, %c0_11] : memref<4x32x32xbf16, #tpu.memory_space<vmem>>, vector<1x32x32xbf16>
    %9 = vector.shape_cast %8 : vector<1x32x32xbf16> to vector<32x32xbf16>
    %cst_12 = arith.constant dense<0.000000e+00> : vector<32x32xf32>
    %10 = tpu.matmul %7, %9, %cst_12 {dimension_numbers = #tpu.dot_dimension_numbers<[1], [0], [0], [1], [0, 0, 1, 1], [], []>} : vector<32x32xbf16>, vector<32x32xbf16>, vector<32x32xf32> -> vector<32x32xf32>
    %c0_13 = arith.constant 0 : index
    %c0_14 = arith.constant 0 : index
    %c0_15 = arith.constant 0 : index
    %11 = vector.load %arg7[%c0_13, %c0_14, %c0_15] : memref<4x1x32xf32, #tpu.memory_space<vmem>>, vector<1x1x32xf32>
    %12 = vector.shape_cast %11 : vector<1x1x32xf32> to vector<1x32xf32>
    %13 = vector.broadcast %12 : vector<1x32xf32> to vector<32x32xf32>
    %14 = arith.addf %10, %13 : vector<32x32xf32>
    %c0_16 = arith.constant 0 : index
    %c0_17 = arith.constant 0 : index
    %c0_18 = arith.constant 0 : index
    %15 = vector.load %arg8[%c0_16, %c0_17, %c0_18] : memref<4x32x32xbf16, #tpu.memory_space<vmem>>, vector<1x32x32xbf16>
    %16 = vector.shape_cast %15 : vector<1x32x32xbf16> to vector<32x32xbf16>
    %cst_19 = arith.constant dense<0.000000e+00> : vector<32x32xf32>
    %17 = tpu.matmul %7, %16, %cst_19 {dimension_numbers = #tpu.dot_dimension_numbers<[1], [0], [0], [1], [0, 0, 1, 1], [], []>} : vector<32x32xbf16>, vector<32x32xbf16>, vector<32x32xf32> -> vector<32x32xf32>
    %c0_20 = arith.constant 0 : index
    %c0_21 = arith.constant 0 : index
    %c0_22 = arith.constant 0 : index
    %18 = vector.load %arg9[%c0_20, %c0_21, %c0_22] : memref<4x1x32xf32, #tpu.memory_space<vmem>>, vector<1x1x32xf32>
    %19 = vector.shape_cast %18 : vector<1x1x32xf32> to vector<1x32xf32>
    %20 = vector.broadcast %19 : vector<1x32xf32> to vector<32x32xf32>
    %21 = arith.addf %17, %20 : vector<32x32xf32>
    %c0_23 = arith.constant 0 : index
    %c0_24 = arith.constant 0 : index
    %c0_25 = arith.constant 0 : index
    %22 = vector.load %arg10[%c0_23, %c0_24, %c0_25] : memref<4x32x32xbf16, #tpu.memory_space<vmem>>, vector<1x32x32xbf16>
    %23 = vector.shape_cast %22 : vector<1x32x32xbf16> to vector<32x32xbf16>
    %cst_26 = arith.constant dense<0.000000e+00> : vector<32x32xf32>
    %24 = tpu.matmul %7, %23, %cst_26 {dimension_numbers = #tpu.dot_dimension_numbers<[1], [0], [0], [1], [0, 0, 1, 1], [], []>} : vector<32x32xbf16>, vector<32x32xbf16>, vector<32x32xf32> -> vector<32x32xf32>
    %c0_27 = arith.constant 0 : index
    %c0_28 = arith.constant 0 : index
    %c0_29 = arith.constant 0 : index
    %25 = vector.load %arg11[%c0_27, %c0_28, %c0_29] : memref<4x1x32xf32, #tpu.memory_space<vmem>>, vector<1x1x32xf32>
    %26 = vector.shape_cast %25 : vector<1x1x32xf32> to vector<1x32xf32>
    %27 = vector.broadcast %26 : vector<1x32xf32> to vector<32x32xf32>
    %28 = arith.addf %24, %27 : vector<32x32xf32>
    %cst_30 = arith.constant 0.353553385 : f32
    %29 = vector.broadcast %cst_30 : f32 to vector<32x32xf32>
    %30 = arith.mulf %14, %29 : vector<32x32xf32>
    %31 = arith.truncf %30 : vector<32x32xf32> to vector<32x32xbf16>
    %32 = tpu.concatenate %31, %31, %31, %31 in 0 : vector<32x32xbf16>, vector<32x32xbf16>, vector<32x32xbf16>, vector<32x32xbf16> -> vector<128x32xbf16>
    %33 = arith.truncf %21 : vector<32x32xf32> to vector<32x32xbf16>
    %34 = tpu.concatenate %33, %33, %33, %33 in 0 : vector<32x32xbf16>, vector<32x32xbf16>, vector<32x32xbf16>, vector<32x32xbf16> -> vector<128x32xbf16>
    %35 = arith.mulf %34, %0 : vector<128x32xbf16>
    %36 = arith.truncf %28 : vector<32x32xf32> to vector<32x32xbf16>
    %37 = tpu.concatenate %36, %36, %36, %36 in 0 : vector<32x32xbf16>, vector<32x32xbf16>, vector<32x32xbf16>, vector<32x32xbf16> -> vector<128x32xbf16>
    %38 = arith.mulf %37, %0 : vector<128x32xbf16>
    "tpu.trace_start"() <{level = 10 : i32, message = "qe,ke->qk"}> : () -> ()
    %cst_31 = arith.constant dense<0.000000e+00> : vector<128x128xf32>
    %39 = tpu.matmul %32, %35, %cst_31 {dimension_numbers = #tpu.dot_dimension_numbers<[1], [1], [0], [0], [0, 0, 1, 0], [], []>} : vector<128x32xbf16>, vector<128x32xbf16>, vector<128x128xf32> -> vector<128x128xf32>
    "tpu.trace_stop"() : () -> ()
    %40 = arith.addf %39, %1 : vector<128x128xf32>
    %cst_32 = arith.constant dense<0xFF800000> : vector<128xf32>
    %41 = vector.multi_reduction <maximumf>, %40, %cst_32 [1] : vector<128x128xf32> to vector<128xf32>
    %42 = vector.shape_cast %41 : vector<128xf32> to vector<128x1xf32>
    %43 = vector.broadcast %42 : vector<128x1xf32> to vector<128x128xf32>
    %44 = arith.subf %40, %43 : vector<128x128xf32>
    %45 = math.exp %44 : vector<128x128xf32>
    %cst_33 = arith.constant dense<0.000000e+00> : vector<128xf32>
    %46 = vector.multi_reduction <add>, %45, %cst_33 [1] : vector<128x128xf32> to vector<128xf32>
    %47 = vector.shape_cast %46 : vector<128xf32> to vector<128x1xf32>
    %48 = tpu.reciprocal %47 {approx = true} : vector<128x1xf32> -> vector<128x1xf32>
    %49 = vector.broadcast %48 : vector<128x1xf32> to vector<128x128xf32>
    %50 = arith.mulf %45, %49 : vector<128x128xf32>
    %51 = arith.truncf %50 : vector<128x128xf32> to vector<128x128xbf16>
    %cst_34 = arith.constant dense<0.000000e+00> : vector<128x32xf32>
    %52 = tpu.matmul %51, %38, %cst_34 {dimension_numbers = #tpu.dot_dimension_numbers<[1], [0], [0], [1], [0, 0, 1, 1], [], []>} : vector<128x128xbf16>, vector<128x32xbf16>, vector<128x32xf32> -> vector<128x32xf32>
    %53 = vector.extract_strided_slice %52 {offsets = [0, 0], sizes = [32, 32], strides = [1, 1]} : vector<128x32xf32> to vector<32x32xf32>
    %54 = vector.extract_strided_slice %52 {offsets = [32, 0], sizes = [32, 32], strides = [1, 1]} : vector<128x32xf32> to vector<32x32xf32>
    %55 = arith.addf %53, %54 : vector<32x32xf32>
    %56 = vector.extract_strided_slice %52 {offsets = [64, 0], sizes = [32, 32], strides = [1, 1]} : vector<128x32xf32> to vector<32x32xf32>
    %57 = arith.addf %55, %56 : vector<32x32xf32>
    %58 = vector.extract_strided_slice %52 {offsets = [96, 0], sizes = [32, 32], strides = [1, 1]} : vector<128x32xf32> to vector<32x32xf32>
    %59 = arith.addf %57, %58 : vector<32x32xf32>
    %60 = arith.truncf %59 : vector<32x32xf32> to vector<32x32xbf16>
    %c0_35 = arith.constant 0 : index
    %c0_36 = arith.constant 0 : index
    %c0_37 = arith.constant 0 : index
    %61 = vector.load %arg12[%c0_35, %c0_36, %c0_37] : memref<4x32x32xbf16, #tpu.memory_space<vmem>>, vector<1x32x32xbf16>
    %62 = vector.shape_cast %61 : vector<1x32x32xbf16> to vector<32x32xbf16>
    %cst_38 = arith.constant dense<0.000000e+00> : vector<32x32xf32>
    %63 = tpu.matmul %60, %62, %cst_38 {dimension_numbers = #tpu.dot_dimension_numbers<[1], [0], [0], [1], [0, 0, 1, 1], [], []>} : vector<32x32xbf16>, vector<32x32xbf16>, vector<32x32xf32> -> vector<32x32xf32>
    %c0_39 = arith.constant 0 : index
    %c0_40 = arith.constant 0 : index
    %c0_41 = arith.constant 0 : index
    %64 = vector.load %arg13[%c0_39, %c0_40, %c0_41] : memref<4x1x32xf32, #tpu.memory_space<vmem>>, vector<1x1x32xf32>
    %65 = vector.shape_cast %64 : vector<1x1x32xf32> to vector<1x32xf32>
    %66 = vector.broadcast %65 : vector<1x32xf32> to vector<32x32xf32>
    %67 = arith.addf %63, %66 : vector<32x32xf32>
    %68 = arith.addf %6, %67 : vector<32x32xf32>
    %cst_42 = arith.constant dense<0.000000e+00> : vector<32xf32>
    %69 = vector.multi_reduction <add>, %68, %cst_42 [1] : vector<32x32xf32> to vector<32xf32>
    %70 = vector.shape_cast %69 : vector<32xf32> to vector<32x1xf32>
    %cst_43 = arith.constant 3.200000e+01 : f32
    %71 = vector.broadcast %cst_43 : f32 to vector<32x1xf32>
    %72 = arith.divf %70, %71 : vector<32x1xf32>
    %73 = vector.broadcast %72 : vector<32x1xf32> to vector<32x32xf32>
    %74 = arith.subf %68, %73 : vector<32x32xf32>
    %75 = arith.mulf %74, %74 : vector<32x32xf32>
    %cst_44 = arith.constant dense<0.000000e+00> : vector<32xf32>
    %76 = vector.multi_reduction <add>, %75, %cst_44 [1] : vector<32x32xf32> to vector<32xf32>
    %77 = vector.shape_cast %76 : vector<32xf32> to vector<32x1xf32>
    %cst_45 = arith.constant 3.200000e+01 : f32
    %78 = vector.broadcast %cst_45 : f32 to vector<32x1xf32>
    %79 = arith.divf %77, %78 : vector<32x1xf32>
    %80 = vector.broadcast %72 : vector<32x1xf32> to vector<32x32xf32>
    %81 = arith.subf %68, %80 : vector<32x32xf32>
    %cst_46 = arith.constant 9.99999974E-6 : f32
    %82 = vector.broadcast %cst_46 : f32 to vector<32x1xf32>
    %83 = arith.addf %79, %82 : vector<32x1xf32>
    %84 = math.rsqrt %83 : vector<32x1xf32>
    %85 = vector.broadcast %84 : vector<32x1xf32> to vector<32x32xf32>
    %86 = arith.mulf %81, %85 : vector<32x32xf32>
    %c0_47 = arith.constant 0 : index
    %c0_48 = arith.constant 0 : index
    %c0_49 = arith.constant 0 : index
    %87 = vector.load %arg14[%c0_47, %c0_48, %c0_49] : memref<4x1x32xf32, #tpu.memory_space<vmem>>, vector<1x1x32xf32>
    %88 = vector.shape_cast %87 : vector<1x1x32xf32> to vector<1x32xf32>
    %89 = vector.broadcast %88 : vector<1x32xf32> to vector<32x32xf32>
    %90 = arith.mulf %86, %89 : vector<32x32xf32>
    %c0_50 = arith.constant 0 : index
    %c0_51 = arith.constant 0 : index
    %c0_52 = arith.constant 0 : index
    %91 = vector.load %arg15[%c0_50, %c0_51, %c0_52] : memref<4x1x32xf32, #tpu.memory_space<vmem>>, vector<1x1x32xf32>
    %92 = vector.shape_cast %91 : vector<1x1x32xf32> to vector<1x32xf32>
    %93 = vector.broadcast %92 : vector<1x32xf32> to vector<32x32xf32>
    %94 = arith.addf %90, %93 : vector<32x32xf32>
    %95 = arith.truncf %94 : vector<32x32xf32> to vector<32x32xbf16>
    %cst_53 = arith.constant 0.000000e+00 : f32
    %96 = vector.broadcast %cst_53 : f32 to vector<32x32xf32>
    %c0_54 = arith.constant 0 : index
    %c0_55 = arith.constant 0 : index
    %c0_56 = arith.constant 0 : index
    %97 = vector.load %arg16[%c0_54, %c0_55, %c0_56] : memref<4x32x1024xbf16, #tpu.memory_space<vmem>>, vector<1x32x256xbf16>
    %98 = vector.shape_cast %97 : vector<1x32x256xbf16> to vector<32x256xbf16>
    %cst_57 = arith.constant dense<0.000000e+00> : vector<32x256xf32>
    %99 = tpu.matmul %95, %98, %cst_57 {dimension_numbers = #tpu.dot_dimension_numbers<[1], [0], [0], [1], [0, 0, 1, 1], [], []>} : vector<32x32xbf16>, vector<32x256xbf16>, vector<32x256xf32> -> vector<32x256xf32>
    %c0_58 = arith.constant 0 : index
    %c0_59 = arith.constant 0 : index
    %c0_60 = arith.constant 0 : index
    %100 = vector.load %arg17[%c0_58, %c0_59, %c0_60] : memref<4x1x1024xf32, #tpu.memory_space<vmem>>, vector<1x1x256xf32>
    %101 = vector.shape_cast %100 : vector<1x1x256xf32> to vector<1x256xf32>
    %102 = vector.broadcast %101 : vector<1x256xf32> to vector<32x256xf32>
    %103 = arith.addf %99, %102 : vector<32x256xf32>
    %cst_61 = arith.constant 0.000000e+00 : f32
    %104 = vector.broadcast %cst_61 : f32 to vector<32x256xf32>
    %105 = arith.maximumf %103, %104 : vector<32x256xf32>
    %106 = arith.truncf %105 : vector<32x256xf32> to vector<32x256xbf16>
    %c0_62 = arith.constant 0 : index
    %c0_63 = arith.constant 0 : index
    %c0_64 = arith.constant 0 : index
    %107 = vector.load %arg18[%c0_62, %c0_63, %c0_64] : memref<4x1024x32xbf16, #tpu.memory_space<vmem>>, vector<1x256x32xbf16>
    %108 = vector.shape_cast %107 : vector<1x256x32xbf16> to vector<256x32xbf16>
    %cst_65 = arith.constant dense<0.000000e+00> : vector<32x32xf32>
    %109 = tpu.matmul %106, %108, %cst_65 {dimension_numbers = #tpu.dot_dimension_numbers<[1], [0], [0], [1], [0, 0, 1, 1], [], []>} : vector<32x256xbf16>, vector<256x32xbf16>, vector<32x32xf32> -> vector<32x32xf32>
    %110 = arith.addf %96, %109 : vector<32x32xf32>
    %c0_66 = arith.constant 0 : index
    %c0_67 = arith.constant 0 : index
    %c256 = arith.constant 256 : index
    %111 = vector.load %arg16[%c0_66, %c0_67, %c256] : memref<4x32x1024xbf16, #tpu.memory_space<vmem>>, vector<1x32x256xbf16>
    %112 = vector.shape_cast %111 : vector<1x32x256xbf16> to vector<32x256xbf16>
    %cst_68 = arith.constant dense<0.000000e+00> : vector<32x256xf32>
    %113 = tpu.matmul %95, %112, %cst_68 {dimension_numbers = #tpu.dot_dimension_numbers<[1], [0], [0], [1], [0, 0, 1, 1], [], []>} : vector<32x32xbf16>, vector<32x256xbf16>, vector<32x256xf32> -> vector<32x256xf32>
    %c0_69 = arith.constant 0 : index
    %c0_70 = arith.constant 0 : index
    %c256_71 = arith.constant 256 : index
    %114 = vector.load %arg17[%c0_69, %c0_70, %c256_71] : memref<4x1x1024xf32, #tpu.memory_space<vmem>>, vector<1x1x256xf32>
    %115 = vector.shape_cast %114 : vector<1x1x256xf32> to vector<1x256xf32>
    %116 = vector.broadcast %115 : vector<1x256xf32> to vector<32x256xf32>
    %117 = arith.addf %113, %116 : vector<32x256xf32>
    %cst_72 = arith.constant 0.000000e+00 : f32
    %118 = vector.broadcast %cst_72 : f32 to vector<32x256xf32>
    %119 = arith.maximumf %117, %118 : vector<32x256xf32>
    %120 = arith.truncf %119 : vector<32x256xf32> to vector<32x256xbf16>
    %c0_73 = arith.constant 0 : index
    %c256_74 = arith.constant 256 : index
    %c0_75 = arith.constant 0 : index
    %121 = vector.load %arg18[%c0_73, %c256_74, %c0_75] : memref<4x1024x32xbf16, #tpu.memory_space<vmem>>, vector<1x256x32xbf16>
    %122 = vector.shape_cast %121 : vector<1x256x32xbf16> to vector<256x32xbf16>
    %cst_76 = arith.constant dense<0.000000e+00> : vector<32x32xf32>
    %123 = tpu.matmul %120, %122, %cst_76 {dimension_numbers = #tpu.dot_dimension_numbers<[1], [0], [0], [1], [0, 0, 1, 1], [], []>} : vector<32x256xbf16>, vector<256x32xbf16>, vector<32x32xf32> -> vector<32x32xf32>
    %124 = arith.addf %110, %123 : vector<32x32xf32>
    %c0_77 = arith.constant 0 : index
    %c0_78 = arith.constant 0 : index
    %c512 = arith.constant 512 : index
    %125 = vector.load %arg16[%c0_77, %c0_78, %c512] : memref<4x32x1024xbf16, #tpu.memory_space<vmem>>, vector<1x32x256xbf16>
    %126 = vector.shape_cast %125 : vector<1x32x256xbf16> to vector<32x256xbf16>
    %cst_79 = arith.constant dense<0.000000e+00> : vector<32x256xf32>
    %127 = tpu.matmul %95, %126, %cst_79 {dimension_numbers = #tpu.dot_dimension_numbers<[1], [0], [0], [1], [0, 0, 1, 1], [], []>} : vector<32x32xbf16>, vector<32x256xbf16>, vector<32x256xf32> -> vector<32x256xf32>
    %c0_80 = arith.constant 0 : index
    %c0_81 = arith.constant 0 : index
    %c512_82 = arith.constant 512 : index
    %128 = vector.load %arg17[%c0_80, %c0_81, %c512_82] : memref<4x1x1024xf32, #tpu.memory_space<vmem>>, vector<1x1x256xf32>
    %129 = vector.shape_cast %128 : vector<1x1x256xf32> to vector<1x256xf32>
    %130 = vector.broadcast %129 : vector<1x256xf32> to vector<32x256xf32>
    %131 = arith.addf %127, %130 : vector<32x256xf32>
    %cst_83 = arith.constant 0.000000e+00 : f32
    %132 = vector.broadcast %cst_83 : f32 to vector<32x256xf32>
    %133 = arith.maximumf %131, %132 : vector<32x256xf32>
    %134 = arith.truncf %133 : vector<32x256xf32> to vector<32x256xbf16>
    %c0_84 = arith.constant 0 : index
    %c512_85 = arith.constant 512 : index
    %c0_86 = arith.constant 0 : index
    %135 = vector.load %arg18[%c0_84, %c512_85, %c0_86] : memref<4x1024x32xbf16, #tpu.memory_space<vmem>>, vector<1x256x32xbf16>
    %136 = vector.shape_cast %135 : vector<1x256x32xbf16> to vector<256x32xbf16>
    %cst_87 = arith.constant dense<0.000000e+00> : vector<32x32xf32>
    %137 = tpu.matmul %134, %136, %cst_87 {dimension_numbers = #tpu.dot_dimension_numbers<[1], [0], [0], [1], [0, 0, 1, 1], [], []>} : vector<32x256xbf16>, vector<256x32xbf16>, vector<32x32xf32> -> vector<32x32xf32>
    %138 = arith.addf %124, %137 : vector<32x32xf32>
    %c0_88 = arith.constant 0 : index
    %c0_89 = arith.constant 0 : index
    %c768 = arith.constant 768 : index
    %139 = vector.load %arg16[%c0_88, %c0_89, %c768] : memref<4x32x1024xbf16, #tpu.memory_space<vmem>>, vector<1x32x256xbf16>
    %140 = vector.shape_cast %139 : vector<1x32x256xbf16> to vector<32x256xbf16>
    %cst_90 = arith.constant dense<0.000000e+00> : vector<32x256xf32>
    %141 = tpu.matmul %95, %140, %cst_90 {dimension_numbers = #tpu.dot_dimension_numbers<[1], [0], [0], [1], [0, 0, 1, 1], [], []>} : vector<32x32xbf16>, vector<32x256xbf16>, vector<32x256xf32> -> vector<32x256xf32>
    %c0_91 = arith.constant 0 : index
    %c0_92 = arith.constant 0 : index
    %c768_93 = arith.constant 768 : index
    %142 = vector.load %arg17[%c0_91, %c0_92, %c768_93] : memref<4x1x1024xf32, #tpu.memory_space<vmem>>, vector<1x1x256xf32>
    %143 = vector.shape_cast %142 : vector<1x1x256xf32> to vector<1x256xf32>
    %144 = vector.broadcast %143 : vector<1x256xf32> to vector<32x256xf32>
    %145 = arith.addf %141, %144 : vector<32x256xf32>
    %cst_94 = arith.constant 0.000000e+00 : f32
    %146 = vector.broadcast %cst_94 : f32 to vector<32x256xf32>
    %147 = arith.maximumf %145, %146 : vector<32x256xf32>
    %148 = arith.truncf %147 : vector<32x256xf32> to vector<32x256xbf16>
    %c0_95 = arith.constant 0 : index
    %c768_96 = arith.constant 768 : index
    %c0_97 = arith.constant 0 : index
    %149 = vector.load %arg18[%c0_95, %c768_96, %c0_97] : memref<4x1024x32xbf16, #tpu.memory_space<vmem>>, vector<1x256x32xbf16>
    %150 = vector.shape_cast %149 : vector<1x256x32xbf16> to vector<256x32xbf16>
    %cst_98 = arith.constant dense<0.000000e+00> : vector<32x32xf32>
    %151 = tpu.matmul %148, %150, %cst_98 {dimension_numbers = #tpu.dot_dimension_numbers<[1], [0], [0], [1], [0, 0, 1, 1], [], []>} : vector<32x256xbf16>, vector<256x32xbf16>, vector<32x32xf32> -> vector<32x32xf32>
    %152 = arith.addf %138, %151 : vector<32x32xf32>
    %c0_99 = arith.constant 0 : index
    %c0_100 = arith.constant 0 : index
    %c0_101 = arith.constant 0 : index
    %153 = vector.load %arg19[%c0_99, %c0_100, %c0_101] : memref<4x1x32xf32, #tpu.memory_space<vmem>>, vector<1x1x32xf32>
    %154 = vector.shape_cast %153 : vector<1x1x32xf32> to vector<1x32xf32>
    %155 = vector.broadcast %154 : vector<1x32xf32> to vector<32x32xf32>
    %156 = arith.addf %152, %155 : vector<32x32xf32>
    %157 = arith.addf %94, %156 : vector<32x32xf32>
    %cst_102 = arith.constant dense<0.000000e+00> : vector<32xf32>
    %158 = vector.multi_reduction <add>, %157, %cst_102 [1] : vector<32x32xf32> to vector<32xf32>
    %159 = vector.shape_cast %158 : vector<32xf32> to vector<32x1xf32>
    %cst_103 = arith.constant 3.200000e+01 : f32
    %160 = vector.broadcast %cst_103 : f32 to vector<32x1xf32>
    %161 = arith.divf %159, %160 : vector<32x1xf32>
    %162 = vector.broadcast %161 : vector<32x1xf32> to vector<32x32xf32>
    %163 = arith.subf %157, %162 : vector<32x32xf32>
    %164 = arith.mulf %163, %163 : vector<32x32xf32>
    %cst_104 = arith.constant dense<0.000000e+00> : vector<32xf32>
    %165 = vector.multi_reduction <add>, %164, %cst_104 [1] : vector<32x32xf32> to vector<32xf32>
    %166 = vector.shape_cast %165 : vector<32xf32> to vector<32x1xf32>
    %cst_105 = arith.constant 3.200000e+01 : f32
    %167 = vector.broadcast %cst_105 : f32 to vector<32x1xf32>
    %168 = arith.divf %166, %167 : vector<32x1xf32>
    %169 = vector.broadcast %161 : vector<32x1xf32> to vector<32x32xf32>
    %170 = arith.subf %157, %169 : vector<32x32xf32>
    %cst_106 = arith.constant 9.99999974E-6 : f32
    %171 = vector.broadcast %cst_106 : f32 to vector<32x1xf32>
    %172 = arith.addf %168, %171 : vector<32x1xf32>
    %173 = math.rsqrt %172 : vector<32x1xf32>
    %174 = vector.broadcast %173 : vector<32x1xf32> to vector<32x32xf32>
    %175 = arith.mulf %170, %174 : vector<32x32xf32>
    %c0_107 = arith.constant 0 : index
    %c0_108 = arith.constant 0 : index
    %c0_109 = arith.constant 0 : index
    %176 = vector.load %arg20[%c0_107, %c0_108, %c0_109] : memref<4x1x32xf32, #tpu.memory_space<vmem>>, vector<1x1x32xf32>
    %177 = vector.shape_cast %176 : vector<1x1x32xf32> to vector<1x32xf32>
    %178 = vector.broadcast %177 : vector<1x32xf32> to vector<32x32xf32>
    %179 = arith.mulf %175, %178 : vector<32x32xf32>
    %c0_110 = arith.constant 0 : index
    %c0_111 = arith.constant 0 : index
    %c0_112 = arith.constant 0 : index
    %180 = vector.load %arg21[%c0_110, %c0_111, %c0_112] : memref<4x1x32xf32, #tpu.memory_space<vmem>>, vector<1x1x32xf32>
    %181 = vector.shape_cast %180 : vector<1x1x32xf32> to vector<1x32xf32>
    %182 = vector.broadcast %181 : vector<1x32xf32> to vector<32x32xf32>
    %183 = arith.addf %179, %182 : vector<32x32xf32>
    %184 = arith.truncf %183 : vector<32x32xf32> to vector<32x32xbf16>
    %c1 = arith.constant 1 : index
    %c0_113 = arith.constant 0 : index
    %c0_114 = arith.constant 0 : index
    %185 = vector.load %arg6[%c1, %c0_113, %c0_114] : memref<4x32x32xbf16, #tpu.memory_space<vmem>>, vector<1x32x32xbf16>
    %186 = vector.shape_cast %185 : vector<1x32x32xbf16> to vector<32x32xbf16>
    %cst_115 = arith.constant dense<0.000000e+00> : vector<32x32xf32>
    %187 = tpu.matmul %184, %186, %cst_115 {dimension_numbers = #tpu.dot_dimension_numbers<[1], [0], [0], [1], [0, 0, 1, 1], [], []>} : vector<32x32xbf16>, vector<32x32xbf16>, vector<32x32xf32> -> vector<32x32xf32>
    %c1_116 = arith.constant 1 : index
    %c0_117 = arith.constant 0 : index
    %c0_118 = arith.constant 0 : index
    %188 = vector.load %arg7[%c1_116, %c0_117, %c0_118] : memref<4x1x32xf32, #tpu.memory_space<vmem>>, vector<1x1x32xf32>
    %189 = vector.shape_cast %188 : vector<1x1x32xf32> to vector<1x32xf32>
    %190 = vector.broadcast %189 : vector<1x32xf32> to vector<32x32xf32>
    %191 = arith.addf %187, %190 : vector<32x32xf32>
    %c1_119 = arith.constant 1 : index
    %c0_120 = arith.constant 0 : index
    %c0_121 = arith.constant 0 : index
    %192 = vector.load %arg8[%c1_119, %c0_120, %c0_121] : memref<4x32x32xbf16, #tpu.memory_space<vmem>>, vector<1x32x32xbf16>
    %193 = vector.shape_cast %192 : vector<1x32x32xbf16> to vector<32x32xbf16>
    %cst_122 = arith.constant dense<0.000000e+00> : vector<32x32xf32>
    %194 = tpu.matmul %184, %193, %cst_122 {dimension_numbers = #tpu.dot_dimension_numbers<[1], [0], [0], [1], [0, 0, 1, 1], [], []>} : vector<32x32xbf16>, vector<32x32xbf16>, vector<32x32xf32> -> vector<32x32xf32>
    %c1_123 = arith.constant 1 : index
    %c0_124 = arith.constant 0 : index
    %c0_125 = arith.constant 0 : index
    %195 = vector.load %arg9[%c1_123, %c0_124, %c0_125] : memref<4x1x32xf32, #tpu.memory_space<vmem>>, vector<1x1x32xf32>
    %196 = vector.shape_cast %195 : vector<1x1x32xf32> to vector<1x32xf32>
    %197 = vector.broadcast %196 : vector<1x32xf32> to vector<32x32xf32>
    %198 = arith.addf %194, %197 : vector<32x32xf32>
    %c1_126 = arith.constant 1 : index
    %c0_127 = arith.constant 0 : index
    %c0_128 = arith.constant 0 : index
    %199 = vector.load %arg10[%c1_126, %c0_127, %c0_128] : memref<4x32x32xbf16, #tpu.memory_space<vmem>>, vector<1x32x32xbf16>
    %200 = vector.shape_cast %199 : vector<1x32x32xbf16> to vector<32x32xbf16>
    %cst_129 = arith.constant dense<0.000000e+00> : vector<32x32xf32>
    %201 = tpu.matmul %184, %200, %cst_129 {dimension_numbers = #tpu.dot_dimension_numbers<[1], [0], [0], [1], [0, 0, 1, 1], [], []>} : vector<32x32xbf16>, vector<32x32xbf16>, vector<32x32xf32> -> vector<32x32xf32>
    %c1_130 = arith.constant 1 : index
    %c0_131 = arith.constant 0 : index
    %c0_132 = arith.constant 0 : index
    %202 = vector.load %arg11[%c1_130, %c0_131, %c0_132] : memref<4x1x32xf32, #tpu.memory_space<vmem>>, vector<1x1x32xf32>
    %203 = vector.shape_cast %202 : vector<1x1x32xf32> to vector<1x32xf32>
    %204 = vector.broadcast %203 : vector<1x32xf32> to vector<32x32xf32>
    %205 = arith.addf %201, %204 : vector<32x32xf32>
    %cst_133 = arith.constant 0.353553385 : f32
    %206 = vector.broadcast %cst_133 : f32 to vector<32x32xf32>
    %207 = arith.mulf %191, %206 : vector<32x32xf32>
    %208 = arith.truncf %207 : vector<32x32xf32> to vector<32x32xbf16>
    %209 = tpu.concatenate %208, %208, %208, %208 in 0 : vector<32x32xbf16>, vector<32x32xbf16>, vector<32x32xbf16>, vector<32x32xbf16> -> vector<128x32xbf16>
    %210 = arith.truncf %198 : vector<32x32xf32> to vector<32x32xbf16>
    %211 = tpu.concatenate %210, %210, %210, %210 in 0 : vector<32x32xbf16>, vector<32x32xbf16>, vector<32x32xbf16>, vector<32x32xbf16> -> vector<128x32xbf16>
    %212 = arith.mulf %211, %0 : vector<128x32xbf16>
    %213 = arith.truncf %205 : vector<32x32xf32> to vector<32x32xbf16>
    %214 = tpu.concatenate %213, %213, %213, %213 in 0 : vector<32x32xbf16>, vector<32x32xbf16>, vector<32x32xbf16>, vector<32x32xbf16> -> vector<128x32xbf16>
    %215 = arith.mulf %214, %0 : vector<128x32xbf16>
    "tpu.trace_start"() <{level = 10 : i32, message = "qe,ke->qk"}> : () -> ()
    %cst_134 = arith.constant dense<0.000000e+00> : vector<128x128xf32>
    %216 = tpu.matmul %209, %212, %cst_134 {dimension_numbers = #tpu.dot_dimension_numbers<[1], [1], [0], [0], [0, 0, 1, 0], [], []>} : vector<128x32xbf16>, vector<128x32xbf16>, vector<128x128xf32> -> vector<128x128xf32>
    "tpu.trace_stop"() : () -> ()
    %217 = arith.addf %216, %1 : vector<128x128xf32>
    %cst_135 = arith.constant dense<0xFF800000> : vector<128xf32>
    %218 = vector.multi_reduction <maximumf>, %217, %cst_135 [1] : vector<128x128xf32> to vector<128xf32>
    %219 = vector.shape_cast %218 : vector<128xf32> to vector<128x1xf32>
    %220 = vector.broadcast %219 : vector<128x1xf32> to vector<128x128xf32>
    %221 = arith.subf %217, %220 : vector<128x128xf32>
    %222 = math.exp %221 : vector<128x128xf32>
    %cst_136 = arith.constant dense<0.000000e+00> : vector<128xf32>
    %223 = vector.multi_reduction <add>, %222, %cst_136 [1] : vector<128x128xf32> to vector<128xf32>
    %224 = vector.shape_cast %223 : vector<128xf32> to vector<128x1xf32>
    %225 = tpu.reciprocal %224 {approx = true} : vector<128x1xf32> -> vector<128x1xf32>
    %226 = vector.broadcast %225 : vector<128x1xf32> to vector<128x128xf32>
    %227 = arith.mulf %222, %226 : vector<128x128xf32>
    %228 = arith.truncf %227 : vector<128x128xf32> to vector<128x128xbf16>
    %cst_137 = arith.constant dense<0.000000e+00> : vector<128x32xf32>
    %229 = tpu.matmul %228, %215, %cst_137 {dimension_numbers = #tpu.dot_dimension_numbers<[1], [0], [0], [1], [0, 0, 1, 1], [], []>} : vector<128x128xbf16>, vector<128x32xbf16>, vector<128x32xf32> -> vector<128x32xf32>
    %230 = vector.extract_strided_slice %229 {offsets = [0, 0], sizes = [32, 32], strides = [1, 1]} : vector<128x32xf32> to vector<32x32xf32>
    %231 = vector.extract_strided_slice %229 {offsets = [32, 0], sizes = [32, 32], strides = [1, 1]} : vector<128x32xf32> to vector<32x32xf32>
    %232 = arith.addf %230, %231 : vector<32x32xf32>
    %233 = vector.extract_strided_slice %229 {offsets = [64, 0], sizes = [32, 32], strides = [1, 1]} : vector<128x32xf32> to vector<32x32xf32>
    %234 = arith.addf %232, %233 : vector<32x32xf32>
    %235 = vector.extract_strided_slice %229 {offsets = [96, 0], sizes = [32, 32], strides = [1, 1]} : vector<128x32xf32> to vector<32x32xf32>
    %236 = arith.addf %234, %235 : vector<32x32xf32>
    %237 = arith.truncf %236 : vector<32x32xf32> to vector<32x32xbf16>
    %c1_138 = arith.constant 1 : index
    %c0_139 = arith.constant 0 : index
    %c0_140 = arith.constant 0 : index
    %238 = vector.load %arg12[%c1_138, %c0_139, %c0_140] : memref<4x32x32xbf16, #tpu.memory_space<vmem>>, vector<1x32x32xbf16>
    %239 = vector.shape_cast %238 : vector<1x32x32xbf16> to vector<32x32xbf16>
    %cst_141 = arith.constant dense<0.000000e+00> : vector<32x32xf32>
    %240 = tpu.matmul %237, %239, %cst_141 {dimension_numbers = #tpu.dot_dimension_numbers<[1], [0], [0], [1], [0, 0, 1, 1], [], []>} : vector<32x32xbf16>, vector<32x32xbf16>, vector<32x32xf32> -> vector<32x32xf32>
    %c1_142 = arith.constant 1 : index
    %c0_143 = arith.constant 0 : index
    %c0_144 = arith.constant 0 : index
    %241 = vector.load %arg13[%c1_142, %c0_143, %c0_144] : memref<4x1x32xf32, #tpu.memory_space<vmem>>, vector<1x1x32xf32>
    %242 = vector.shape_cast %241 : vector<1x1x32xf32> to vector<1x32xf32>
    %243 = vector.broadcast %242 : vector<1x32xf32> to vector<32x32xf32>
    %244 = arith.addf %240, %243 : vector<32x32xf32>
    %245 = arith.addf %183, %244 : vector<32x32xf32>
    %cst_145 = arith.constant dense<0.000000e+00> : vector<32xf32>
    %246 = vector.multi_reduction <add>, %245, %cst_145 [1] : vector<32x32xf32> to vector<32xf32>
    %247 = vector.shape_cast %246 : vector<32xf32> to vector<32x1xf32>
    %cst_146 = arith.constant 3.200000e+01 : f32
    %248 = vector.broadcast %cst_146 : f32 to vector<32x1xf32>
    %249 = arith.divf %247, %248 : vector<32x1xf32>
    %250 = vector.broadcast %249 : vector<32x1xf32> to vector<32x32xf32>
    %251 = arith.subf %245, %250 : vector<32x32xf32>
    %252 = arith.mulf %251, %251 : vector<32x32xf32>
    %cst_147 = arith.constant dense<0.000000e+00> : vector<32xf32>
    %253 = vector.multi_reduction <add>, %252, %cst_147 [1] : vector<32x32xf32> to vector<32xf32>
    %254 = vector.shape_cast %253 : vector<32xf32> to vector<32x1xf32>
    %cst_148 = arith.constant 3.200000e+01 : f32
    %255 = vector.broadcast %cst_148 : f32 to vector<32x1xf32>
    %256 = arith.divf %254, %255 : vector<32x1xf32>
    %257 = vector.broadcast %249 : vector<32x1xf32> to vector<32x32xf32>
    %258 = arith.subf %245, %257 : vector<32x32xf32>
    %cst_149 = arith.constant 9.99999974E-6 : f32
    %259 = vector.broadcast %cst_149 : f32 to vector<32x1xf32>
    %260 = arith.addf %256, %259 : vector<32x1xf32>
    %261 = math.rsqrt %260 : vector<32x1xf32>
    %262 = vector.broadcast %261 : vector<32x1xf32> to vector<32x32xf32>
    %263 = arith.mulf %258, %262 : vector<32x32xf32>
    %c1_150 = arith.constant 1 : index
    %c0_151 = arith.constant 0 : index
    %c0_152 = arith.constant 0 : index
    %264 = vector.load %arg14[%c1_150, %c0_151, %c0_152] : memref<4x1x32xf32, #tpu.memory_space<vmem>>, vector<1x1x32xf32>
    %265 = vector.shape_cast %264 : vector<1x1x32xf32> to vector<1x32xf32>
    %266 = vector.broadcast %265 : vector<1x32xf32> to vector<32x32xf32>
    %267 = arith.mulf %263, %266 : vector<32x32xf32>
    %c1_153 = arith.constant 1 : index
    %c0_154 = arith.constant 0 : index
    %c0_155 = arith.constant 0 : index
    %268 = vector.load %arg15[%c1_153, %c0_154, %c0_155] : memref<4x1x32xf32, #tpu.memory_space<vmem>>, vector<1x1x32xf32>
    %269 = vector.shape_cast %268 : vector<1x1x32xf32> to vector<1x32xf32>
    %270 = vector.broadcast %269 : vector<1x32xf32> to vector<32x32xf32>
    %271 = arith.addf %267, %270 : vector<32x32xf32>
    %272 = arith.truncf %271 : vector<32x32xf32> to vector<32x32xbf16>
    %cst_156 = arith.constant 0.000000e+00 : f32
    %273 = vector.broadcast %cst_156 : f32 to vector<32x32xf32>
    %c1_157 = arith.constant 1 : index
    %c0_158 = arith.constant 0 : index
    %c0_159 = arith.constant 0 : index
    %274 = vector.load %arg16[%c1_157, %c0_158, %c0_159] : memref<4x32x1024xbf16, #tpu.memory_space<vmem>>, vector<1x32x256xbf16>
    %275 = vector.shape_cast %274 : vector<1x32x256xbf16> to vector<32x256xbf16>
    %cst_160 = arith.constant dense<0.000000e+00> : vector<32x256xf32>
    %276 = tpu.matmul %272, %275, %cst_160 {dimension_numbers = #tpu.dot_dimension_numbers<[1], [0], [0], [1], [0, 0, 1, 1], [], []>} : vector<32x32xbf16>, vector<32x256xbf16>, vector<32x256xf32> -> vector<32x256xf32>
    %c1_161 = arith.constant 1 : index
    %c0_162 = arith.constant 0 : index
    %c0_163 = arith.constant 0 : index
    %277 = vector.load %arg17[%c1_161, %c0_162, %c0_163] : memref<4x1x1024xf32, #tpu.memory_space<vmem>>, vector<1x1x256xf32>
    %278 = vector.shape_cast %277 : vector<1x1x256xf32> to vector<1x256xf32>
    %279 = vector.broadcast %278 : vector<1x256xf32> to vector<32x256xf32>
    %280 = arith.addf %276, %279 : vector<32x256xf32>
    %cst_164 = arith.constant 0.000000e+00 : f32
    %281 = vector.broadcast %cst_164 : f32 to vector<32x256xf32>
    %282 = arith.maximumf %280, %281 : vector<32x256xf32>
    %283 = arith.truncf %282 : vector<32x256xf32> to vector<32x256xbf16>
    %c1_165 = arith.constant 1 : index
    %c0_166 = arith.constant 0 : index
    %c0_167 = arith.constant 0 : index
    %284 = vector.load %arg18[%c1_165, %c0_166, %c0_167] : memref<4x1024x32xbf16, #tpu.memory_space<vmem>>, vector<1x256x32xbf16>
    %285 = vector.shape_cast %284 : vector<1x256x32xbf16> to vector<256x32xbf16>
    %cst_168 = arith.constant dense<0.000000e+00> : vector<32x32xf32>
    %286 = tpu.matmul %283, %285, %cst_168 {dimension_numbers = #tpu.dot_dimension_numbers<[1], [0], [0], [1], [0, 0, 1, 1], [], []>} : vector<32x256xbf16>, vector<256x32xbf16>, vector<32x32xf32> -> vector<32x32xf32>
    %287 = arith.addf %273, %286 : vector<32x32xf32>
    %c1_169 = arith.constant 1 : index
    %c0_170 = arith.constant 0 : index
    %c256_171 = arith.constant 256 : index
    %288 = vector.load %arg16[%c1_169, %c0_170, %c256_171] : memref<4x32x1024xbf16, #tpu.memory_space<vmem>>, vector<1x32x256xbf16>
    %289 = vector.shape_cast %288 : vector<1x32x256xbf16> to vector<32x256xbf16>
    %cst_172 = arith.constant dense<0.000000e+00> : vector<32x256xf32>
    %290 = tpu.matmul %272, %289, %cst_172 {dimension_numbers = #tpu.dot_dimension_numbers<[1], [0], [0], [1], [0, 0, 1, 1], [], []>} : vector<32x32xbf16>, vector<32x256xbf16>, vector<32x256xf32> -> vector<32x256xf32>
    %c1_173 = arith.constant 1 : index
    %c0_174 = arith.constant 0 : index
    %c256_175 = arith.constant 256 : index
    %291 = vector.load %arg17[%c1_173, %c0_174, %c256_175] : memref<4x1x1024xf32, #tpu.memory_space<vmem>>, vector<1x1x256xf32>
    %292 = vector.shape_cast %291 : vector<1x1x256xf32> to vector<1x256xf32>
    %293 = vector.broadcast %292 : vector<1x256xf32> to vector<32x256xf32>
    %294 = arith.addf %290, %293 : vector<32x256xf32>
    %cst_176 = arith.constant 0.000000e+00 : f32
    %295 = vector.broadcast %cst_176 : f32 to vector<32x256xf32>
    %296 = arith.maximumf %294, %295 : vector<32x256xf32>
    %297 = arith.truncf %296 : vector<32x256xf32> to vector<32x256xbf16>
    %c1_177 = arith.constant 1 : index
    %c256_178 = arith.constant 256 : index
    %c0_179 = arith.constant 0 : index
    %298 = vector.load %arg18[%c1_177, %c256_178, %c0_179] : memref<4x1024x32xbf16, #tpu.memory_space<vmem>>, vector<1x256x32xbf16>
    %299 = vector.shape_cast %298 : vector<1x256x32xbf16> to vector<256x32xbf16>
    %cst_180 = arith.constant dense<0.000000e+00> : vector<32x32xf32>
    %300 = tpu.matmul %297, %299, %cst_180 {dimension_numbers = #tpu.dot_dimension_numbers<[1], [0], [0], [1], [0, 0, 1, 1], [], []>} : vector<32x256xbf16>, vector<256x32xbf16>, vector<32x32xf32> -> vector<32x32xf32>
    %301 = arith.addf %287, %300 : vector<32x32xf32>
    %c1_181 = arith.constant 1 : index
    %c0_182 = arith.constant 0 : index
    %c512_183 = arith.constant 512 : index
    %302 = vector.load %arg16[%c1_181, %c0_182, %c512_183] : memref<4x32x1024xbf16, #tpu.memory_space<vmem>>, vector<1x32x256xbf16>
    %303 = vector.shape_cast %302 : vector<1x32x256xbf16> to vector<32x256xbf16>
    %cst_184 = arith.constant dense<0.000000e+00> : vector<32x256xf32>
    %304 = tpu.matmul %272, %303, %cst_184 {dimension_numbers = #tpu.dot_dimension_numbers<[1], [0], [0], [1], [0, 0, 1, 1], [], []>} : vector<32x32xbf16>, vector<32x256xbf16>, vector<32x256xf32> -> vector<32x256xf32>
    %c1_185 = arith.constant 1 : index
    %c0_186 = arith.constant 0 : index
    %c512_187 = arith.constant 512 : index
    %305 = vector.load %arg17[%c1_185, %c0_186, %c512_187] : memref<4x1x1024xf32, #tpu.memory_space<vmem>>, vector<1x1x256xf32>
    %306 = vector.shape_cast %305 : vector<1x1x256xf32> to vector<1x256xf32>
    %307 = vector.broadcast %306 : vector<1x256xf32> to vector<32x256xf32>
    %308 = arith.addf %304, %307 : vector<32x256xf32>
    %cst_188 = arith.constant 0.000000e+00 : f32
    %309 = vector.broadcast %cst_188 : f32 to vector<32x256xf32>
    %310 = arith.maximumf %308, %309 : vector<32x256xf32>
    %311 = arith.truncf %310 : vector<32x256xf32> to vector<32x256xbf16>
    %c1_189 = arith.constant 1 : index
    %c512_190 = arith.constant 512 : index
    %c0_191 = arith.constant 0 : index
    %312 = vector.load %arg18[%c1_189, %c512_190, %c0_191] : memref<4x1024x32xbf16, #tpu.memory_space<vmem>>, vector<1x256x32xbf16>
    %313 = vector.shape_cast %312 : vector<1x256x32xbf16> to vector<256x32xbf16>
    %cst_192 = arith.constant dense<0.000000e+00> : vector<32x32xf32>
    %314 = tpu.matmul %311, %313, %cst_192 {dimension_numbers = #tpu.dot_dimension_numbers<[1], [0], [0], [1], [0, 0, 1, 1], [], []>} : vector<32x256xbf16>, vector<256x32xbf16>, vector<32x32xf32> -> vector<32x32xf32>
    %315 = arith.addf %301, %314 : vector<32x32xf32>
    %c1_193 = arith.constant 1 : index
    %c0_194 = arith.constant 0 : index
    %c768_195 = arith.constant 768 : index
    %316 = vector.load %arg16[%c1_193, %c0_194, %c768_195] : memref<4x32x1024xbf16, #tpu.memory_space<vmem>>, vector<1x32x256xbf16>
    %317 = vector.shape_cast %316 : vector<1x32x256xbf16> to vector<32x256xbf16>
    %cst_196 = arith.constant dense<0.000000e+00> : vector<32x256xf32>
    %318 = tpu.matmul %272, %317, %cst_196 {dimension_numbers = #tpu.dot_dimension_numbers<[1], [0], [0], [1], [0, 0, 1, 1], [], []>} : vector<32x32xbf16>, vector<32x256xbf16>, vector<32x256xf32> -> vector<32x256xf32>
    %c1_197 = arith.constant 1 : index
    %c0_198 = arith.constant 0 : index
    %c768_199 = arith.constant 768 : index
    %319 = vector.load %arg17[%c1_197, %c0_198, %c768_199] : memref<4x1x1024xf32, #tpu.memory_space<vmem>>, vector<1x1x256xf32>
    %320 = vector.shape_cast %319 : vector<1x1x256xf32> to vector<1x256xf32>
    %321 = vector.broadcast %320 : vector<1x256xf32> to vector<32x256xf32>
    %322 = arith.addf %318, %321 : vector<32x256xf32>
    %cst_200 = arith.constant 0.000000e+00 : f32
    %323 = vector.broadcast %cst_200 : f32 to vector<32x256xf32>
    %324 = arith.maximumf %322, %323 : vector<32x256xf32>
    %325 = arith.truncf %324 : vector<32x256xf32> to vector<32x256xbf16>
    %c1_201 = arith.constant 1 : index
    %c768_202 = arith.constant 768 : index
    %c0_203 = arith.constant 0 : index
    %326 = vector.load %arg18[%c1_201, %c768_202, %c0_203] : memref<4x1024x32xbf16, #tpu.memory_space<vmem>>, vector<1x256x32xbf16>
    %327 = vector.shape_cast %326 : vector<1x256x32xbf16> to vector<256x32xbf16>
    %cst_204 = arith.constant dense<0.000000e+00> : vector<32x32xf32>
    %328 = tpu.matmul %325, %327, %cst_204 {dimension_numbers = #tpu.dot_dimension_numbers<[1], [0], [0], [1], [0, 0, 1, 1], [], []>} : vector<32x256xbf16>, vector<256x32xbf16>, vector<32x32xf32> -> vector<32x32xf32>
    %329 = arith.addf %315, %328 : vector<32x32xf32>
    %c1_205 = arith.constant 1 : index
    %c0_206 = arith.constant 0 : index
    %c0_207 = arith.constant 0 : index
    %330 = vector.load %arg19[%c1_205, %c0_206, %c0_207] : memref<4x1x32xf32, #tpu.memory_space<vmem>>, vector<1x1x32xf32>
    %331 = vector.shape_cast %330 : vector<1x1x32xf32> to vector<1x32xf32>
    %332 = vector.broadcast %331 : vector<1x32xf32> to vector<32x32xf32>
    %333 = arith.addf %329, %332 : vector<32x32xf32>
    %334 = arith.addf %271, %333 : vector<32x32xf32>
    %cst_208 = arith.constant dense<0.000000e+00> : vector<32xf32>
    %335 = vector.multi_reduction <add>, %334, %cst_208 [1] : vector<32x32xf32> to vector<32xf32>
    %336 = vector.shape_cast %335 : vector<32xf32> to vector<32x1xf32>
    %cst_209 = arith.constant 3.200000e+01 : f32
    %337 = vector.broadcast %cst_209 : f32 to vector<32x1xf32>
    %338 = arith.divf %336, %337 : vector<32x1xf32>
    %339 = vector.broadcast %338 : vector<32x1xf32> to vector<32x32xf32>
    %340 = arith.subf %334, %339 : vector<32x32xf32>
    %341 = arith.mulf %340, %340 : vector<32x32xf32>
    %cst_210 = arith.constant dense<0.000000e+00> : vector<32xf32>
    %342 = vector.multi_reduction <add>, %341, %cst_210 [1] : vector<32x32xf32> to vector<32xf32>
    %343 = vector.shape_cast %342 : vector<32xf32> to vector<32x1xf32>
    %cst_211 = arith.constant 3.200000e+01 : f32
    %344 = vector.broadcast %cst_211 : f32 to vector<32x1xf32>
    %345 = arith.divf %343, %344 : vector<32x1xf32>
    %346 = vector.broadcast %338 : vector<32x1xf32> to vector<32x32xf32>
    %347 = arith.subf %334, %346 : vector<32x32xf32>
    %cst_212 = arith.constant 9.99999974E-6 : f32
    %348 = vector.broadcast %cst_212 : f32 to vector<32x1xf32>
    %349 = arith.addf %345, %348 : vector<32x1xf32>
    %350 = math.rsqrt %349 : vector<32x1xf32>
    %351 = vector.broadcast %350 : vector<32x1xf32> to vector<32x32xf32>
    %352 = arith.mulf %347, %351 : vector<32x32xf32>
    %c1_213 = arith.constant 1 : index
    %c0_214 = arith.constant 0 : index
    %c0_215 = arith.constant 0 : index
    %353 = vector.load %arg20[%c1_213, %c0_214, %c0_215] : memref<4x1x32xf32, #tpu.memory_space<vmem>>, vector<1x1x32xf32>
    %354 = vector.shape_cast %353 : vector<1x1x32xf32> to vector<1x32xf32>
    %355 = vector.broadcast %354 : vector<1x32xf32> to vector<32x32xf32>
    %356 = arith.mulf %352, %355 : vector<32x32xf32>
    %c1_216 = arith.constant 1 : index
    %c0_217 = arith.constant 0 : index
    %c0_218 = arith.constant 0 : index
    %357 = vector.load %arg21[%c1_216, %c0_217, %c0_218] : memref<4x1x32xf32, #tpu.memory_space<vmem>>, vector<1x1x32xf32>
    %358 = vector.shape_cast %357 : vector<1x1x32xf32> to vector<1x32xf32>
    %359 = vector.broadcast %358 : vector<1x32xf32> to vector<32x32xf32>
    %360 = arith.addf %356, %359 : vector<32x32xf32>
    %361 = arith.truncf %360 : vector<32x32xf32> to vector<32x32xbf16>
    %c2 = arith.constant 2 : index
    %c0_219 = arith.constant 0 : index
    %c0_220 = arith.constant 0 : index
    %362 = vector.load %arg6[%c2, %c0_219, %c0_220] : memref<4x32x32xbf16, #tpu.memory_space<vmem>>, vector<1x32x32xbf16>
    %363 = vector.shape_cast %362 : vector<1x32x32xbf16> to vector<32x32xbf16>
    %cst_221 = arith.constant dense<0.000000e+00> : vector<32x32xf32>
    %364 = tpu.matmul %361, %363, %cst_221 {dimension_numbers = #tpu.dot_dimension_numbers<[1], [0], [0], [1], [0, 0, 1, 1], [], []>} : vector<32x32xbf16>, vector<32x32xbf16>, vector<32x32xf32> -> vector<32x32xf32>
    %c2_222 = arith.constant 2 : index
    %c0_223 = arith.constant 0 : index
    %c0_224 = arith.constant 0 : index
    %365 = vector.load %arg7[%c2_222, %c0_223, %c0_224] : memref<4x1x32xf32, #tpu.memory_space<vmem>>, vector<1x1x32xf32>
    %366 = vector.shape_cast %365 : vector<1x1x32xf32> to vector<1x32xf32>
    %367 = vector.broadcast %366 : vector<1x32xf32> to vector<32x32xf32>
    %368 = arith.addf %364, %367 : vector<32x32xf32>
    %c2_225 = arith.constant 2 : index
    %c0_226 = arith.constant 0 : index
    %c0_227 = arith.constant 0 : index
    %369 = vector.load %arg8[%c2_225, %c0_226, %c0_227] : memref<4x32x32xbf16, #tpu.memory_space<vmem>>, vector<1x32x32xbf16>
    %370 = vector.shape_cast %369 : vector<1x32x32xbf16> to vector<32x32xbf16>
    %cst_228 = arith.constant dense<0.000000e+00> : vector<32x32xf32>
    %371 = tpu.matmul %361, %370, %cst_228 {dimension_numbers = #tpu.dot_dimension_numbers<[1], [0], [0], [1], [0, 0, 1, 1], [], []>} : vector<32x32xbf16>, vector<32x32xbf16>, vector<32x32xf32> -> vector<32x32xf32>
    %c2_229 = arith.constant 2 : index
    %c0_230 = arith.constant 0 : index
    %c0_231 = arith.constant 0 : index
    %372 = vector.load %arg9[%c2_229, %c0_230, %c0_231] : memref<4x1x32xf32, #tpu.memory_space<vmem>>, vector<1x1x32xf32>
    %373 = vector.shape_cast %372 : vector<1x1x32xf32> to vector<1x32xf32>
    %374 = vector.broadcast %373 : vector<1x32xf32> to vector<32x32xf32>
    %375 = arith.addf %371, %374 : vector<32x32xf32>
    %c2_232 = arith.constant 2 : index
    %c0_233 = arith.constant 0 : index
    %c0_234 = arith.constant 0 : index
    %376 = vector.load %arg10[%c2_232, %c0_233, %c0_234] : memref<4x32x32xbf16, #tpu.memory_space<vmem>>, vector<1x32x32xbf16>
    %377 = vector.shape_cast %376 : vector<1x32x32xbf16> to vector<32x32xbf16>
    %cst_235 = arith.constant dense<0.000000e+00> : vector<32x32xf32>
    %378 = tpu.matmul %361, %377, %cst_235 {dimension_numbers = #tpu.dot_dimension_numbers<[1], [0], [0], [1], [0, 0, 1, 1], [], []>} : vector<32x32xbf16>, vector<32x32xbf16>, vector<32x32xf32> -> vector<32x32xf32>
    %c2_236 = arith.constant 2 : index
    %c0_237 = arith.constant 0 : index
    %c0_238 = arith.constant 0 : index
    %379 = vector.load %arg11[%c2_236, %c0_237, %c0_238] : memref<4x1x32xf32, #tpu.memory_space<vmem>>, vector<1x1x32xf32>
    %380 = vector.shape_cast %379 : vector<1x1x32xf32> to vector<1x32xf32>
    %381 = vector.broadcast %380 : vector<1x32xf32> to vector<32x32xf32>
    %382 = arith.addf %378, %381 : vector<32x32xf32>
    %cst_239 = arith.constant 0.353553385 : f32
    %383 = vector.broadcast %cst_239 : f32 to vector<32x32xf32>
    %384 = arith.mulf %368, %383 : vector<32x32xf32>
    %385 = arith.truncf %384 : vector<32x32xf32> to vector<32x32xbf16>
    %386 = tpu.concatenate %385, %385, %385, %385 in 0 : vector<32x32xbf16>, vector<32x32xbf16>, vector<32x32xbf16>, vector<32x32xbf16> -> vector<128x32xbf16>
    %387 = arith.truncf %375 : vector<32x32xf32> to vector<32x32xbf16>
    %388 = tpu.concatenate %387, %387, %387, %387 in 0 : vector<32x32xbf16>, vector<32x32xbf16>, vector<32x32xbf16>, vector<32x32xbf16> -> vector<128x32xbf16>
    %389 = arith.mulf %388, %0 : vector<128x32xbf16>
    %390 = arith.truncf %382 : vector<32x32xf32> to vector<32x32xbf16>
    %391 = tpu.concatenate %390, %390, %390, %390 in 0 : vector<32x32xbf16>, vector<32x32xbf16>, vector<32x32xbf16>, vector<32x32xbf16> -> vector<128x32xbf16>
    %392 = arith.mulf %391, %0 : vector<128x32xbf16>
    "tpu.trace_start"() <{level = 10 : i32, message = "qe,ke->qk"}> : () -> ()
    %cst_240 = arith.constant dense<0.000000e+00> : vector<128x128xf32>
    %393 = tpu.matmul %386, %389, %cst_240 {dimension_numbers = #tpu.dot_dimension_numbers<[1], [1], [0], [0], [0, 0, 1, 0], [], []>} : vector<128x32xbf16>, vector<128x32xbf16>, vector<128x128xf32> -> vector<128x128xf32>
    "tpu.trace_stop"() : () -> ()
    %394 = arith.addf %393, %1 : vector<128x128xf32>
    %cst_241 = arith.constant dense<0xFF800000> : vector<128xf32>
    %395 = vector.multi_reduction <maximumf>, %394, %cst_241 [1] : vector<128x128xf32> to vector<128xf32>
    %396 = vector.shape_cast %395 : vector<128xf32> to vector<128x1xf32>
    %397 = vector.broadcast %396 : vector<128x1xf32> to vector<128x128xf32>
    %398 = arith.subf %394, %397 : vector<128x128xf32>
    %399 = math.exp %398 : vector<128x128xf32>
    %cst_242 = arith.constant dense<0.000000e+00> : vector<128xf32>
    %400 = vector.multi_reduction <add>, %399, %cst_242 [1] : vector<128x128xf32> to vector<128xf32>
    %401 = vector.shape_cast %400 : vector<128xf32> to vector<128x1xf32>
    %402 = tpu.reciprocal %401 {approx = true} : vector<128x1xf32> -> vector<128x1xf32>
    %403 = vector.broadcast %402 : vector<128x1xf32> to vector<128x128xf32>
    %404 = arith.mulf %399, %403 : vector<128x128xf32>
    %405 = arith.truncf %404 : vector<128x128xf32> to vector<128x128xbf16>
    %cst_243 = arith.constant dense<0.000000e+00> : vector<128x32xf32>
    %406 = tpu.matmul %405, %392, %cst_243 {dimension_numbers = #tpu.dot_dimension_numbers<[1], [0], [0], [1], [0, 0, 1, 1], [], []>} : vector<128x128xbf16>, vector<128x32xbf16>, vector<128x32xf32> -> vector<128x32xf32>
    %407 = vector.extract_strided_slice %406 {offsets = [0, 0], sizes = [32, 32], strides = [1, 1]} : vector<128x32xf32> to vector<32x32xf32>
    %408 = vector.extract_strided_slice %406 {offsets = [32, 0], sizes = [32, 32], strides = [1, 1]} : vector<128x32xf32> to vector<32x32xf32>
    %409 = arith.addf %407, %408 : vector<32x32xf32>
    %410 = vector.extract_strided_slice %406 {offsets = [64, 0], sizes = [32, 32], strides = [1, 1]} : vector<128x32xf32> to vector<32x32xf32>
    %411 = arith.addf %409, %410 : vector<32x32xf32>
    %412 = vector.extract_strided_slice %406 {offsets = [96, 0], sizes = [32, 32], strides = [1, 1]} : vector<128x32xf32> to vector<32x32xf32>
    %413 = arith.addf %411, %412 : vector<32x32xf32>
    %414 = arith.truncf %413 : vector<32x32xf32> to vector<32x32xbf16>
    %c2_244 = arith.constant 2 : index
    %c0_245 = arith.constant 0 : index
    %c0_246 = arith.constant 0 : index
    %415 = vector.load %arg12[%c2_244, %c0_245, %c0_246] : memref<4x32x32xbf16, #tpu.memory_space<vmem>>, vector<1x32x32xbf16>
    %416 = vector.shape_cast %415 : vector<1x32x32xbf16> to vector<32x32xbf16>
    %cst_247 = arith.constant dense<0.000000e+00> : vector<32x32xf32>
    %417 = tpu.matmul %414, %416, %cst_247 {dimension_numbers = #tpu.dot_dimension_numbers<[1], [0], [0], [1], [0, 0, 1, 1], [], []>} : vector<32x32xbf16>, vector<32x32xbf16>, vector<32x32xf32> -> vector<32x32xf32>
    %c2_248 = arith.constant 2 : index
    %c0_249 = arith.constant 0 : index
    %c0_250 = arith.constant 0 : index
    %418 = vector.load %arg13[%c2_248, %c0_249, %c0_250] : memref<4x1x32xf32, #tpu.memory_space<vmem>>, vector<1x1x32xf32>
    %419 = vector.shape_cast %418 : vector<1x1x32xf32> to vector<1x32xf32>
    %420 = vector.broadcast %419 : vector<1x32xf32> to vector<32x32xf32>
    %421 = arith.addf %417, %420 : vector<32x32xf32>
    %422 = arith.addf %360, %421 : vector<32x32xf32>
    %cst_251 = arith.constant dense<0.000000e+00> : vector<32xf32>
    %423 = vector.multi_reduction <add>, %422, %cst_251 [1] : vector<32x32xf32> to vector<32xf32>
    %424 = vector.shape_cast %423 : vector<32xf32> to vector<32x1xf32>
    %cst_252 = arith.constant 3.200000e+01 : f32
    %425 = vector.broadcast %cst_252 : f32 to vector<32x1xf32>
    %426 = arith.divf %424, %425 : vector<32x1xf32>
    %427 = vector.broadcast %426 : vector<32x1xf32> to vector<32x32xf32>
    %428 = arith.subf %422, %427 : vector<32x32xf32>
    %429 = arith.mulf %428, %428 : vector<32x32xf32>
    %cst_253 = arith.constant dense<0.000000e+00> : vector<32xf32>
    %430 = vector.multi_reduction <add>, %429, %cst_253 [1] : vector<32x32xf32> to vector<32xf32>
    %431 = vector.shape_cast %430 : vector<32xf32> to vector<32x1xf32>
    %cst_254 = arith.constant 3.200000e+01 : f32
    %432 = vector.broadcast %cst_254 : f32 to vector<32x1xf32>
    %433 = arith.divf %431, %432 : vector<32x1xf32>
    %434 = vector.broadcast %426 : vector<32x1xf32> to vector<32x32xf32>
    %435 = arith.subf %422, %434 : vector<32x32xf32>
    %cst_255 = arith.constant 9.99999974E-6 : f32
    %436 = vector.broadcast %cst_255 : f32 to vector<32x1xf32>
    %437 = arith.addf %433, %436 : vector<32x1xf32>
    %438 = math.rsqrt %437 : vector<32x1xf32>
    %439 = vector.broadcast %438 : vector<32x1xf32> to vector<32x32xf32>
    %440 = arith.mulf %435, %439 : vector<32x32xf32>
    %c2_256 = arith.constant 2 : index
    %c0_257 = arith.constant 0 : index
    %c0_258 = arith.constant 0 : index
    %441 = vector.load %arg14[%c2_256, %c0_257, %c0_258] : memref<4x1x32xf32, #tpu.memory_space<vmem>>, vector<1x1x32xf32>
    %442 = vector.shape_cast %441 : vector<1x1x32xf32> to vector<1x32xf32>
    %443 = vector.broadcast %442 : vector<1x32xf32> to vector<32x32xf32>
    %444 = arith.mulf %440, %443 : vector<32x32xf32>
    %c2_259 = arith.constant 2 : index
    %c0_260 = arith.constant 0 : index
    %c0_261 = arith.constant 0 : index
    %445 = vector.load %arg15[%c2_259, %c0_260, %c0_261] : memref<4x1x32xf32, #tpu.memory_space<vmem>>, vector<1x1x32xf32>
    %446 = vector.shape_cast %445 : vector<1x1x32xf32> to vector<1x32xf32>
    %447 = vector.broadcast %446 : vector<1x32xf32> to vector<32x32xf32>
    %448 = arith.addf %444, %447 : vector<32x32xf32>
    %449 = arith.truncf %448 : vector<32x32xf32> to vector<32x32xbf16>
    %cst_262 = arith.constant 0.000000e+00 : f32
    %450 = vector.broadcast %cst_262 : f32 to vector<32x32xf32>
    %c2_263 = arith.constant 2 : index
    %c0_264 = arith.constant 0 : index
    %c0_265 = arith.constant 0 : index
    %451 = vector.load %arg16[%c2_263, %c0_264, %c0_265] : memref<4x32x1024xbf16, #tpu.memory_space<vmem>>, vector<1x32x256xbf16>
    %452 = vector.shape_cast %451 : vector<1x32x256xbf16> to vector<32x256xbf16>
    %cst_266 = arith.constant dense<0.000000e+00> : vector<32x256xf32>
    %453 = tpu.matmul %449, %452, %cst_266 {dimension_numbers = #tpu.dot_dimension_numbers<[1], [0], [0], [1], [0, 0, 1, 1], [], []>} : vector<32x32xbf16>, vector<32x256xbf16>, vector<32x256xf32> -> vector<32x256xf32>
    %c2_267 = arith.constant 2 : index
    %c0_268 = arith.constant 0 : index
    %c0_269 = arith.constant 0 : index
    %454 = vector.load %arg17[%c2_267, %c0_268, %c0_269] : memref<4x1x1024xf32, #tpu.memory_space<vmem>>, vector<1x1x256xf32>
    %455 = vector.shape_cast %454 : vector<1x1x256xf32> to vector<1x256xf32>
    %456 = vector.broadcast %455 : vector<1x256xf32> to vector<32x256xf32>
    %457 = arith.addf %453, %456 : vector<32x256xf32>
    %cst_270 = arith.constant 0.000000e+00 : f32
    %458 = vector.broadcast %cst_270 : f32 to vector<32x256xf32>
    %459 = arith.maximumf %457, %458 : vector<32x256xf32>
    %460 = arith.truncf %459 : vector<32x256xf32> to vector<32x256xbf16>
    %c2_271 = arith.constant 2 : index
    %c0_272 = arith.constant 0 : index
    %c0_273 = arith.constant 0 : index
    %461 = vector.load %arg18[%c2_271, %c0_272, %c0_273] : memref<4x1024x32xbf16, #tpu.memory_space<vmem>>, vector<1x256x32xbf16>
    %462 = vector.shape_cast %461 : vector<1x256x32xbf16> to vector<256x32xbf16>
    %cst_274 = arith.constant dense<0.000000e+00> : vector<32x32xf32>
    %463 = tpu.matmul %460, %462, %cst_274 {dimension_numbers = #tpu.dot_dimension_numbers<[1], [0], [0], [1], [0, 0, 1, 1], [], []>} : vector<32x256xbf16>, vector<256x32xbf16>, vector<32x32xf32> -> vector<32x32xf32>
    %464 = arith.addf %450, %463 : vector<32x32xf32>
    %c2_275 = arith.constant 2 : index
    %c0_276 = arith.constant 0 : index
    %c256_277 = arith.constant 256 : index
    %465 = vector.load %arg16[%c2_275, %c0_276, %c256_277] : memref<4x32x1024xbf16, #tpu.memory_space<vmem>>, vector<1x32x256xbf16>
    %466 = vector.shape_cast %465 : vector<1x32x256xbf16> to vector<32x256xbf16>
    %cst_278 = arith.constant dense<0.000000e+00> : vector<32x256xf32>
    %467 = tpu.matmul %449, %466, %cst_278 {dimension_numbers = #tpu.dot_dimension_numbers<[1], [0], [0], [1], [0, 0, 1, 1], [], []>} : vector<32x32xbf16>, vector<32x256xbf16>, vector<32x256xf32> -> vector<32x256xf32>
    %c2_279 = arith.constant 2 : index
    %c0_280 = arith.constant 0 : index
    %c256_281 = arith.constant 256 : index
    %468 = vector.load %arg17[%c2_279, %c0_280, %c256_281] : memref<4x1x1024xf32, #tpu.memory_space<vmem>>, vector<1x1x256xf32>
    %469 = vector.shape_cast %468 : vector<1x1x256xf32> to vector<1x256xf32>
    %470 = vector.broadcast %469 : vector<1x256xf32> to vector<32x256xf32>
    %471 = arith.addf %467, %470 : vector<32x256xf32>
    %cst_282 = arith.constant 0.000000e+00 : f32
    %472 = vector.broadcast %cst_282 : f32 to vector<32x256xf32>
    %473 = arith.maximumf %471, %472 : vector<32x256xf32>
    %474 = arith.truncf %473 : vector<32x256xf32> to vector<32x256xbf16>
    %c2_283 = arith.constant 2 : index
    %c256_284 = arith.constant 256 : index
    %c0_285 = arith.constant 0 : index
    %475 = vector.load %arg18[%c2_283, %c256_284, %c0_285] : memref<4x1024x32xbf16, #tpu.memory_space<vmem>>, vector<1x256x32xbf16>
    %476 = vector.shape_cast %475 : vector<1x256x32xbf16> to vector<256x32xbf16>
    %cst_286 = arith.constant dense<0.000000e+00> : vector<32x32xf32>
    %477 = tpu.matmul %474, %476, %cst_286 {dimension_numbers = #tpu.dot_dimension_numbers<[1], [0], [0], [1], [0, 0, 1, 1], [], []>} : vector<32x256xbf16>, vector<256x32xbf16>, vector<32x32xf32> -> vector<32x32xf32>
    %478 = arith.addf %464, %477 : vector<32x32xf32>
    %c2_287 = arith.constant 2 : index
    %c0_288 = arith.constant 0 : index
    %c512_289 = arith.constant 512 : index
    %479 = vector.load %arg16[%c2_287, %c0_288, %c512_289] : memref<4x32x1024xbf16, #tpu.memory_space<vmem>>, vector<1x32x256xbf16>
    %480 = vector.shape_cast %479 : vector<1x32x256xbf16> to vector<32x256xbf16>
    %cst_290 = arith.constant dense<0.000000e+00> : vector<32x256xf32>
    %481 = tpu.matmul %449, %480, %cst_290 {dimension_numbers = #tpu.dot_dimension_numbers<[1], [0], [0], [1], [0, 0, 1, 1], [], []>} : vector<32x32xbf16>, vector<32x256xbf16>, vector<32x256xf32> -> vector<32x256xf32>
    %c2_291 = arith.constant 2 : index
    %c0_292 = arith.constant 0 : index
    %c512_293 = arith.constant 512 : index
    %482 = vector.load %arg17[%c2_291, %c0_292, %c512_293] : memref<4x1x1024xf32, #tpu.memory_space<vmem>>, vector<1x1x256xf32>
    %483 = vector.shape_cast %482 : vector<1x1x256xf32> to vector<1x256xf32>
    %484 = vector.broadcast %483 : vector<1x256xf32> to vector<32x256xf32>
    %485 = arith.addf %481, %484 : vector<32x256xf32>
    %cst_294 = arith.constant 0.000000e+00 : f32
    %486 = vector.broadcast %cst_294 : f32 to vector<32x256xf32>
    %487 = arith.maximumf %485, %486 : vector<32x256xf32>
    %488 = arith.truncf %487 : vector<32x256xf32> to vector<32x256xbf16>
    %c2_295 = arith.constant 2 : index
    %c512_296 = arith.constant 512 : index
    %c0_297 = arith.constant 0 : index
    %489 = vector.load %arg18[%c2_295, %c512_296, %c0_297] : memref<4x1024x32xbf16, #tpu.memory_space<vmem>>, vector<1x256x32xbf16>
    %490 = vector.shape_cast %489 : vector<1x256x32xbf16> to vector<256x32xbf16>
    %cst_298 = arith.constant dense<0.000000e+00> : vector<32x32xf32>
    %491 = tpu.matmul %488, %490, %cst_298 {dimension_numbers = #tpu.dot_dimension_numbers<[1], [0], [0], [1], [0, 0, 1, 1], [], []>} : vector<32x256xbf16>, vector<256x32xbf16>, vector<32x32xf32> -> vector<32x32xf32>
    %492 = arith.addf %478, %491 : vector<32x32xf32>
    %c2_299 = arith.constant 2 : index
    %c0_300 = arith.constant 0 : index
    %c768_301 = arith.constant 768 : index
    %493 = vector.load %arg16[%c2_299, %c0_300, %c768_301] : memref<4x32x1024xbf16, #tpu.memory_space<vmem>>, vector<1x32x256xbf16>
    %494 = vector.shape_cast %493 : vector<1x32x256xbf16> to vector<32x256xbf16>
    %cst_302 = arith.constant dense<0.000000e+00> : vector<32x256xf32>
    %495 = tpu.matmul %449, %494, %cst_302 {dimension_numbers = #tpu.dot_dimension_numbers<[1], [0], [0], [1], [0, 0, 1, 1], [], []>} : vector<32x32xbf16>, vector<32x256xbf16>, vector<32x256xf32> -> vector<32x256xf32>
    %c2_303 = arith.constant 2 : index
    %c0_304 = arith.constant 0 : index
    %c768_305 = arith.constant 768 : index
    %496 = vector.load %arg17[%c2_303, %c0_304, %c768_305] : memref<4x1x1024xf32, #tpu.memory_space<vmem>>, vector<1x1x256xf32>
    %497 = vector.shape_cast %496 : vector<1x1x256xf32> to vector<1x256xf32>
    %498 = vector.broadcast %497 : vector<1x256xf32> to vector<32x256xf32>
    %499 = arith.addf %495, %498 : vector<32x256xf32>
    %cst_306 = arith.constant 0.000000e+00 : f32
    %500 = vector.broadcast %cst_306 : f32 to vector<32x256xf32>
    %501 = arith.maximumf %499, %500 : vector<32x256xf32>
    %502 = arith.truncf %501 : vector<32x256xf32> to vector<32x256xbf16>
    %c2_307 = arith.constant 2 : index
    %c768_308 = arith.constant 768 : index
    %c0_309 = arith.constant 0 : index
    %503 = vector.load %arg18[%c2_307, %c768_308, %c0_309] : memref<4x1024x32xbf16, #tpu.memory_space<vmem>>, vector<1x256x32xbf16>
    %504 = vector.shape_cast %503 : vector<1x256x32xbf16> to vector<256x32xbf16>
    %cst_310 = arith.constant dense<0.000000e+00> : vector<32x32xf32>
    %505 = tpu.matmul %502, %504, %cst_310 {dimension_numbers = #tpu.dot_dimension_numbers<[1], [0], [0], [1], [0, 0, 1, 1], [], []>} : vector<32x256xbf16>, vector<256x32xbf16>, vector<32x32xf32> -> vector<32x32xf32>
    %506 = arith.addf %492, %505 : vector<32x32xf32>
    %c2_311 = arith.constant 2 : index
    %c0_312 = arith.constant 0 : index
    %c0_313 = arith.constant 0 : index
    %507 = vector.load %arg19[%c2_311, %c0_312, %c0_313] : memref<4x1x32xf32, #tpu.memory_space<vmem>>, vector<1x1x32xf32>
    %508 = vector.shape_cast %507 : vector<1x1x32xf32> to vector<1x32xf32>
    %509 = vector.broadcast %508 : vector<1x32xf32> to vector<32x32xf32>
    %510 = arith.addf %506, %509 : vector<32x32xf32>
    %511 = arith.addf %448, %510 : vector<32x32xf32>
    %cst_314 = arith.constant dense<0.000000e+00> : vector<32xf32>
    %512 = vector.multi_reduction <add>, %511, %cst_314 [1] : vector<32x32xf32> to vector<32xf32>
    %513 = vector.shape_cast %512 : vector<32xf32> to vector<32x1xf32>
    %cst_315 = arith.constant 3.200000e+01 : f32
    %514 = vector.broadcast %cst_315 : f32 to vector<32x1xf32>
    %515 = arith.divf %513, %514 : vector<32x1xf32>
    %516 = vector.broadcast %515 : vector<32x1xf32> to vector<32x32xf32>
    %517 = arith.subf %511, %516 : vector<32x32xf32>
    %518 = arith.mulf %517, %517 : vector<32x32xf32>
    %cst_316 = arith.constant dense<0.000000e+00> : vector<32xf32>
    %519 = vector.multi_reduction <add>, %518, %cst_316 [1] : vector<32x32xf32> to vector<32xf32>
    %520 = vector.shape_cast %519 : vector<32xf32> to vector<32x1xf32>
    %cst_317 = arith.constant 3.200000e+01 : f32
    %521 = vector.broadcast %cst_317 : f32 to vector<32x1xf32>
    %522 = arith.divf %520, %521 : vector<32x1xf32>
    %523 = vector.broadcast %515 : vector<32x1xf32> to vector<32x32xf32>
    %524 = arith.subf %511, %523 : vector<32x32xf32>
    %cst_318 = arith.constant 9.99999974E-6 : f32
    %525 = vector.broadcast %cst_318 : f32 to vector<32x1xf32>
    %526 = arith.addf %522, %525 : vector<32x1xf32>
    %527 = math.rsqrt %526 : vector<32x1xf32>
    %528 = vector.broadcast %527 : vector<32x1xf32> to vector<32x32xf32>
    %529 = arith.mulf %524, %528 : vector<32x32xf32>
    %c2_319 = arith.constant 2 : index
    %c0_320 = arith.constant 0 : index
    %c0_321 = arith.constant 0 : index
    %530 = vector.load %arg20[%c2_319, %c0_320, %c0_321] : memref<4x1x32xf32, #tpu.memory_space<vmem>>, vector<1x1x32xf32>
    %531 = vector.shape_cast %530 : vector<1x1x32xf32> to vector<1x32xf32>
    %532 = vector.broadcast %531 : vector<1x32xf32> to vector<32x32xf32>
    %533 = arith.mulf %529, %532 : vector<32x32xf32>
    %c2_322 = arith.constant 2 : index
    %c0_323 = arith.constant 0 : index
    %c0_324 = arith.constant 0 : index
    %534 = vector.load %arg21[%c2_322, %c0_323, %c0_324] : memref<4x1x32xf32, #tpu.memory_space<vmem>>, vector<1x1x32xf32>
    %535 = vector.shape_cast %534 : vector<1x1x32xf32> to vector<1x32xf32>
    %536 = vector.broadcast %535 : vector<1x32xf32> to vector<32x32xf32>
    %537 = arith.addf %533, %536 : vector<32x32xf32>
    %538 = arith.truncf %537 : vector<32x32xf32> to vector<32x32xbf16>
    %c3 = arith.constant 3 : index
    %c0_325 = arith.constant 0 : index
    %c0_326 = arith.constant 0 : index
    %539 = vector.load %arg6[%c3, %c0_325, %c0_326] : memref<4x32x32xbf16, #tpu.memory_space<vmem>>, vector<1x32x32xbf16>
    %540 = vector.shape_cast %539 : vector<1x32x32xbf16> to vector<32x32xbf16>
    %cst_327 = arith.constant dense<0.000000e+00> : vector<32x32xf32>
    %541 = tpu.matmul %538, %540, %cst_327 {dimension_numbers = #tpu.dot_dimension_numbers<[1], [0], [0], [1], [0, 0, 1, 1], [], []>} : vector<32x32xbf16>, vector<32x32xbf16>, vector<32x32xf32> -> vector<32x32xf32>
    %c3_328 = arith.constant 3 : index
    %c0_329 = arith.constant 0 : index
    %c0_330 = arith.constant 0 : index
    %542 = vector.load %arg7[%c3_328, %c0_329, %c0_330] : memref<4x1x32xf32, #tpu.memory_space<vmem>>, vector<1x1x32xf32>
    %543 = vector.shape_cast %542 : vector<1x1x32xf32> to vector<1x32xf32>
    %544 = vector.broadcast %543 : vector<1x32xf32> to vector<32x32xf32>
    %545 = arith.addf %541, %544 : vector<32x32xf32>
    %c3_331 = arith.constant 3 : index
    %c0_332 = arith.constant 0 : index
    %c0_333 = arith.constant 0 : index
    %546 = vector.load %arg8[%c3_331, %c0_332, %c0_333] : memref<4x32x32xbf16, #tpu.memory_space<vmem>>, vector<1x32x32xbf16>
    %547 = vector.shape_cast %546 : vector<1x32x32xbf16> to vector<32x32xbf16>
    %cst_334 = arith.constant dense<0.000000e+00> : vector<32x32xf32>
    %548 = tpu.matmul %538, %547, %cst_334 {dimension_numbers = #tpu.dot_dimension_numbers<[1], [0], [0], [1], [0, 0, 1, 1], [], []>} : vector<32x32xbf16>, vector<32x32xbf16>, vector<32x32xf32> -> vector<32x32xf32>
    %c3_335 = arith.constant 3 : index
    %c0_336 = arith.constant 0 : index
    %c0_337 = arith.constant 0 : index
    %549 = vector.load %arg9[%c3_335, %c0_336, %c0_337] : memref<4x1x32xf32, #tpu.memory_space<vmem>>, vector<1x1x32xf32>
    %550 = vector.shape_cast %549 : vector<1x1x32xf32> to vector<1x32xf32>
    %551 = vector.broadcast %550 : vector<1x32xf32> to vector<32x32xf32>
    %552 = arith.addf %548, %551 : vector<32x32xf32>
    %c3_338 = arith.constant 3 : index
    %c0_339 = arith.constant 0 : index
    %c0_340 = arith.constant 0 : index
    %553 = vector.load %arg10[%c3_338, %c0_339, %c0_340] : memref<4x32x32xbf16, #tpu.memory_space<vmem>>, vector<1x32x32xbf16>
    %554 = vector.shape_cast %553 : vector<1x32x32xbf16> to vector<32x32xbf16>
    %cst_341 = arith.constant dense<0.000000e+00> : vector<32x32xf32>
    %555 = tpu.matmul %538, %554, %cst_341 {dimension_numbers = #tpu.dot_dimension_numbers<[1], [0], [0], [1], [0, 0, 1, 1], [], []>} : vector<32x32xbf16>, vector<32x32xbf16>, vector<32x32xf32> -> vector<32x32xf32>
    %c3_342 = arith.constant 3 : index
    %c0_343 = arith.constant 0 : index
    %c0_344 = arith.constant 0 : index
    %556 = vector.load %arg11[%c3_342, %c0_343, %c0_344] : memref<4x1x32xf32, #tpu.memory_space<vmem>>, vector<1x1x32xf32>
    %557 = vector.shape_cast %556 : vector<1x1x32xf32> to vector<1x32xf32>
    %558 = vector.broadcast %557 : vector<1x32xf32> to vector<32x32xf32>
    %559 = arith.addf %555, %558 : vector<32x32xf32>
    %cst_345 = arith.constant 0.353553385 : f32
    %560 = vector.broadcast %cst_345 : f32 to vector<32x32xf32>
    %561 = arith.mulf %545, %560 : vector<32x32xf32>
    %562 = arith.truncf %561 : vector<32x32xf32> to vector<32x32xbf16>
    %563 = tpu.concatenate %562, %562, %562, %562 in 0 : vector<32x32xbf16>, vector<32x32xbf16>, vector<32x32xbf16>, vector<32x32xbf16> -> vector<128x32xbf16>
    %564 = arith.truncf %552 : vector<32x32xf32> to vector<32x32xbf16>
    %565 = tpu.concatenate %564, %564, %564, %564 in 0 : vector<32x32xbf16>, vector<32x32xbf16>, vector<32x32xbf16>, vector<32x32xbf16> -> vector<128x32xbf16>
    %566 = arith.mulf %565, %0 : vector<128x32xbf16>
    %567 = arith.truncf %559 : vector<32x32xf32> to vector<32x32xbf16>
    %568 = tpu.concatenate %567, %567, %567, %567 in 0 : vector<32x32xbf16>, vector<32x32xbf16>, vector<32x32xbf16>, vector<32x32xbf16> -> vector<128x32xbf16>
    %569 = arith.mulf %568, %0 : vector<128x32xbf16>
    "tpu.trace_start"() <{level = 10 : i32, message = "qe,ke->qk"}> : () -> ()
    %cst_346 = arith.constant dense<0.000000e+00> : vector<128x128xf32>
    %570 = tpu.matmul %563, %566, %cst_346 {dimension_numbers = #tpu.dot_dimension_numbers<[1], [1], [0], [0], [0, 0, 1, 0], [], []>} : vector<128x32xbf16>, vector<128x32xbf16>, vector<128x128xf32> -> vector<128x128xf32>
    "tpu.trace_stop"() : () -> ()
    %571 = arith.addf %570, %1 : vector<128x128xf32>
    %cst_347 = arith.constant dense<0xFF800000> : vector<128xf32>
    %572 = vector.multi_reduction <maximumf>, %571, %cst_347 [1] : vector<128x128xf32> to vector<128xf32>
    %573 = vector.shape_cast %572 : vector<128xf32> to vector<128x1xf32>
    %574 = vector.broadcast %573 : vector<128x1xf32> to vector<128x128xf32>
    %575 = arith.subf %571, %574 : vector<128x128xf32>
    %576 = math.exp %575 : vector<128x128xf32>
    %cst_348 = arith.constant dense<0.000000e+00> : vector<128xf32>
    %577 = vector.multi_reduction <add>, %576, %cst_348 [1] : vector<128x128xf32> to vector<128xf32>
    %578 = vector.shape_cast %577 : vector<128xf32> to vector<128x1xf32>
    %579 = tpu.reciprocal %578 {approx = true} : vector<128x1xf32> -> vector<128x1xf32>
    %580 = vector.broadcast %579 : vector<128x1xf32> to vector<128x128xf32>
    %581 = arith.mulf %576, %580 : vector<128x128xf32>
    %582 = arith.truncf %581 : vector<128x128xf32> to vector<128x128xbf16>
    %cst_349 = arith.constant dense<0.000000e+00> : vector<128x32xf32>
    %583 = tpu.matmul %582, %569, %cst_349 {dimension_numbers = #tpu.dot_dimension_numbers<[1], [0], [0], [1], [0, 0, 1, 1], [], []>} : vector<128x128xbf16>, vector<128x32xbf16>, vector<128x32xf32> -> vector<128x32xf32>
    %584 = vector.extract_strided_slice %583 {offsets = [0, 0], sizes = [32, 32], strides = [1, 1]} : vector<128x32xf32> to vector<32x32xf32>
    %585 = vector.extract_strided_slice %583 {offsets = [32, 0], sizes = [32, 32], strides = [1, 1]} : vector<128x32xf32> to vector<32x32xf32>
    %586 = arith.addf %584, %585 : vector<32x32xf32>
    %587 = vector.extract_strided_slice %583 {offsets = [64, 0], sizes = [32, 32], strides = [1, 1]} : vector<128x32xf32> to vector<32x32xf32>
    %588 = arith.addf %586, %587 : vector<32x32xf32>
    %589 = vector.extract_strided_slice %583 {offsets = [96, 0], sizes = [32, 32], strides = [1, 1]} : vector<128x32xf32> to vector<32x32xf32>
    %590 = arith.addf %588, %589 : vector<32x32xf32>
    %591 = arith.truncf %590 : vector<32x32xf32> to vector<32x32xbf16>
    %c3_350 = arith.constant 3 : index
    %c0_351 = arith.constant 0 : index
    %c0_352 = arith.constant 0 : index
    %592 = vector.load %arg12[%c3_350, %c0_351, %c0_352] : memref<4x32x32xbf16, #tpu.memory_space<vmem>>, vector<1x32x32xbf16>
    %593 = vector.shape_cast %592 : vector<1x32x32xbf16> to vector<32x32xbf16>
    %cst_353 = arith.constant dense<0.000000e+00> : vector<32x32xf32>
    %594 = tpu.matmul %591, %593, %cst_353 {dimension_numbers = #tpu.dot_dimension_numbers<[1], [0], [0], [1], [0, 0, 1, 1], [], []>} : vector<32x32xbf16>, vector<32x32xbf16>, vector<32x32xf32> -> vector<32x32xf32>
    %c3_354 = arith.constant 3 : index
    %c0_355 = arith.constant 0 : index
    %c0_356 = arith.constant 0 : index
    %595 = vector.load %arg13[%c3_354, %c0_355, %c0_356] : memref<4x1x32xf32, #tpu.memory_space<vmem>>, vector<1x1x32xf32>
    %596 = vector.shape_cast %595 : vector<1x1x32xf32> to vector<1x32xf32>
    %597 = vector.broadcast %596 : vector<1x32xf32> to vector<32x32xf32>
    %598 = arith.addf %594, %597 : vector<32x32xf32>
    %599 = arith.addf %537, %598 : vector<32x32xf32>
    %cst_357 = arith.constant dense<0.000000e+00> : vector<32xf32>
    %600 = vector.multi_reduction <add>, %599, %cst_357 [1] : vector<32x32xf32> to vector<32xf32>
    %601 = vector.shape_cast %600 : vector<32xf32> to vector<32x1xf32>
    %cst_358 = arith.constant 3.200000e+01 : f32
    %602 = vector.broadcast %cst_358 : f32 to vector<32x1xf32>
    %603 = arith.divf %601, %602 : vector<32x1xf32>
    %604 = vector.broadcast %603 : vector<32x1xf32> to vector<32x32xf32>
    %605 = arith.subf %599, %604 : vector<32x32xf32>
    %606 = arith.mulf %605, %605 : vector<32x32xf32>
    %cst_359 = arith.constant dense<0.000000e+00> : vector<32xf32>
    %607 = vector.multi_reduction <add>, %606, %cst_359 [1] : vector<32x32xf32> to vector<32xf32>
    %608 = vector.shape_cast %607 : vector<32xf32> to vector<32x1xf32>
    %cst_360 = arith.constant 3.200000e+01 : f32
    %609 = vector.broadcast %cst_360 : f32 to vector<32x1xf32>
    %610 = arith.divf %608, %609 : vector<32x1xf32>
    %611 = vector.broadcast %603 : vector<32x1xf32> to vector<32x32xf32>
    %612 = arith.subf %599, %611 : vector<32x32xf32>
    %cst_361 = arith.constant 9.99999974E-6 : f32
    %613 = vector.broadcast %cst_361 : f32 to vector<32x1xf32>
    %614 = arith.addf %610, %613 : vector<32x1xf32>
    %615 = math.rsqrt %614 : vector<32x1xf32>
    %616 = vector.broadcast %615 : vector<32x1xf32> to vector<32x32xf32>
    %617 = arith.mulf %612, %616 : vector<32x32xf32>
    %c3_362 = arith.constant 3 : index
    %c0_363 = arith.constant 0 : index
    %c0_364 = arith.constant 0 : index
    %618 = vector.load %arg14[%c3_362, %c0_363, %c0_364] : memref<4x1x32xf32, #tpu.memory_space<vmem>>, vector<1x1x32xf32>
    %619 = vector.shape_cast %618 : vector<1x1x32xf32> to vector<1x32xf32>
    %620 = vector.broadcast %619 : vector<1x32xf32> to vector<32x32xf32>
    %621 = arith.mulf %617, %620 : vector<32x32xf32>
    %c3_365 = arith.constant 3 : index
    %c0_366 = arith.constant 0 : index
    %c0_367 = arith.constant 0 : index
    %622 = vector.load %arg15[%c3_365, %c0_366, %c0_367] : memref<4x1x32xf32, #tpu.memory_space<vmem>>, vector<1x1x32xf32>
    %623 = vector.shape_cast %622 : vector<1x1x32xf32> to vector<1x32xf32>
    %624 = vector.broadcast %623 : vector<1x32xf32> to vector<32x32xf32>
    %625 = arith.addf %621, %624 : vector<32x32xf32>
    %626 = arith.truncf %625 : vector<32x32xf32> to vector<32x32xbf16>
    %cst_368 = arith.constant 0.000000e+00 : f32
    %627 = vector.broadcast %cst_368 : f32 to vector<32x32xf32>
    %c3_369 = arith.constant 3 : index
    %c0_370 = arith.constant 0 : index
    %c0_371 = arith.constant 0 : index
    %628 = vector.load %arg16[%c3_369, %c0_370, %c0_371] : memref<4x32x1024xbf16, #tpu.memory_space<vmem>>, vector<1x32x256xbf16>
    %629 = vector.shape_cast %628 : vector<1x32x256xbf16> to vector<32x256xbf16>
    %cst_372 = arith.constant dense<0.000000e+00> : vector<32x256xf32>
    %630 = tpu.matmul %626, %629, %cst_372 {dimension_numbers = #tpu.dot_dimension_numbers<[1], [0], [0], [1], [0, 0, 1, 1], [], []>} : vector<32x32xbf16>, vector<32x256xbf16>, vector<32x256xf32> -> vector<32x256xf32>
    %c3_373 = arith.constant 3 : index
    %c0_374 = arith.constant 0 : index
    %c0_375 = arith.constant 0 : index
    %631 = vector.load %arg17[%c3_373, %c0_374, %c0_375] : memref<4x1x1024xf32, #tpu.memory_space<vmem>>, vector<1x1x256xf32>
    %632 = vector.shape_cast %631 : vector<1x1x256xf32> to vector<1x256xf32>
    %633 = vector.broadcast %632 : vector<1x256xf32> to vector<32x256xf32>
    %634 = arith.addf %630, %633 : vector<32x256xf32>
    %cst_376 = arith.constant 0.000000e+00 : f32
    %635 = vector.broadcast %cst_376 : f32 to vector<32x256xf32>
    %636 = arith.maximumf %634, %635 : vector<32x256xf32>
    %637 = arith.truncf %636 : vector<32x256xf32> to vector<32x256xbf16>
    %c3_377 = arith.constant 3 : index
    %c0_378 = arith.constant 0 : index
    %c0_379 = arith.constant 0 : index
    %638 = vector.load %arg18[%c3_377, %c0_378, %c0_379] : memref<4x1024x32xbf16, #tpu.memory_space<vmem>>, vector<1x256x32xbf16>
    %639 = vector.shape_cast %638 : vector<1x256x32xbf16> to vector<256x32xbf16>
    %cst_380 = arith.constant dense<0.000000e+00> : vector<32x32xf32>
    %640 = tpu.matmul %637, %639, %cst_380 {dimension_numbers = #tpu.dot_dimension_numbers<[1], [0], [0], [1], [0, 0, 1, 1], [], []>} : vector<32x256xbf16>, vector<256x32xbf16>, vector<32x32xf32> -> vector<32x32xf32>
    %641 = arith.addf %627, %640 : vector<32x32xf32>
    %c3_381 = arith.constant 3 : index
    %c0_382 = arith.constant 0 : index
    %c256_383 = arith.constant 256 : index
    %642 = vector.load %arg16[%c3_381, %c0_382, %c256_383] : memref<4x32x1024xbf16, #tpu.memory_space<vmem>>, vector<1x32x256xbf16>
    %643 = vector.shape_cast %642 : vector<1x32x256xbf16> to vector<32x256xbf16>
    %cst_384 = arith.constant dense<0.000000e+00> : vector<32x256xf32>
    %644 = tpu.matmul %626, %643, %cst_384 {dimension_numbers = #tpu.dot_dimension_numbers<[1], [0], [0], [1], [0, 0, 1, 1], [], []>} : vector<32x32xbf16>, vector<32x256xbf16>, vector<32x256xf32> -> vector<32x256xf32>
    %c3_385 = arith.constant 3 : index
    %c0_386 = arith.constant 0 : index
    %c256_387 = arith.constant 256 : index
    %645 = vector.load %arg17[%c3_385, %c0_386, %c256_387] : memref<4x1x1024xf32, #tpu.memory_space<vmem>>, vector<1x1x256xf32>
    %646 = vector.shape_cast %645 : vector<1x1x256xf32> to vector<1x256xf32>
    %647 = vector.broadcast %646 : vector<1x256xf32> to vector<32x256xf32>
    %648 = arith.addf %644, %647 : vector<32x256xf32>
    %cst_388 = arith.constant 0.000000e+00 : f32
    %649 = vector.broadcast %cst_388 : f32 to vector<32x256xf32>
    %650 = arith.maximumf %648, %649 : vector<32x256xf32>
    %651 = arith.truncf %650 : vector<32x256xf32> to vector<32x256xbf16>
    %c3_389 = arith.constant 3 : index
    %c256_390 = arith.constant 256 : index
    %c0_391 = arith.constant 0 : index
    %652 = vector.load %arg18[%c3_389, %c256_390, %c0_391] : memref<4x1024x32xbf16, #tpu.memory_space<vmem>>, vector<1x256x32xbf16>
    %653 = vector.shape_cast %652 : vector<1x256x32xbf16> to vector<256x32xbf16>
    %cst_392 = arith.constant dense<0.000000e+00> : vector<32x32xf32>
    %654 = tpu.matmul %651, %653, %cst_392 {dimension_numbers = #tpu.dot_dimension_numbers<[1], [0], [0], [1], [0, 0, 1, 1], [], []>} : vector<32x256xbf16>, vector<256x32xbf16>, vector<32x32xf32> -> vector<32x32xf32>
    %655 = arith.addf %641, %654 : vector<32x32xf32>
    %c3_393 = arith.constant 3 : index
    %c0_394 = arith.constant 0 : index
    %c512_395 = arith.constant 512 : index
    %656 = vector.load %arg16[%c3_393, %c0_394, %c512_395] : memref<4x32x1024xbf16, #tpu.memory_space<vmem>>, vector<1x32x256xbf16>
    %657 = vector.shape_cast %656 : vector<1x32x256xbf16> to vector<32x256xbf16>
    %cst_396 = arith.constant dense<0.000000e+00> : vector<32x256xf32>
    %658 = tpu.matmul %626, %657, %cst_396 {dimension_numbers = #tpu.dot_dimension_numbers<[1], [0], [0], [1], [0, 0, 1, 1], [], []>} : vector<32x32xbf16>, vector<32x256xbf16>, vector<32x256xf32> -> vector<32x256xf32>
    %c3_397 = arith.constant 3 : index
    %c0_398 = arith.constant 0 : index
    %c512_399 = arith.constant 512 : index
    %659 = vector.load %arg17[%c3_397, %c0_398, %c512_399] : memref<4x1x1024xf32, #tpu.memory_space<vmem>>, vector<1x1x256xf32>
    %660 = vector.shape_cast %659 : vector<1x1x256xf32> to vector<1x256xf32>
    %661 = vector.broadcast %660 : vector<1x256xf32> to vector<32x256xf32>
    %662 = arith.addf %658, %661 : vector<32x256xf32>
    %cst_400 = arith.constant 0.000000e+00 : f32
    %663 = vector.broadcast %cst_400 : f32 to vector<32x256xf32>
    %664 = arith.maximumf %662, %663 : vector<32x256xf32>
    %665 = arith.truncf %664 : vector<32x256xf32> to vector<32x256xbf16>
    %c3_401 = arith.constant 3 : index
    %c512_402 = arith.constant 512 : index
    %c0_403 = arith.constant 0 : index
    %666 = vector.load %arg18[%c3_401, %c512_402, %c0_403] : memref<4x1024x32xbf16, #tpu.memory_space<vmem>>, vector<1x256x32xbf16>
    %667 = vector.shape_cast %666 : vector<1x256x32xbf16> to vector<256x32xbf16>
    %cst_404 = arith.constant dense<0.000000e+00> : vector<32x32xf32>
    %668 = tpu.matmul %665, %667, %cst_404 {dimension_numbers = #tpu.dot_dimension_numbers<[1], [0], [0], [1], [0, 0, 1, 1], [], []>} : vector<32x256xbf16>, vector<256x32xbf16>, vector<32x32xf32> -> vector<32x32xf32>
    %669 = arith.addf %655, %668 : vector<32x32xf32>
    %c3_405 = arith.constant 3 : index
    %c0_406 = arith.constant 0 : index
    %c768_407 = arith.constant 768 : index
    %670 = vector.load %arg16[%c3_405, %c0_406, %c768_407] : memref<4x32x1024xbf16, #tpu.memory_space<vmem>>, vector<1x32x256xbf16>
    %671 = vector.shape_cast %670 : vector<1x32x256xbf16> to vector<32x256xbf16>
    %cst_408 = arith.constant dense<0.000000e+00> : vector<32x256xf32>
    %672 = tpu.matmul %626, %671, %cst_408 {dimension_numbers = #tpu.dot_dimension_numbers<[1], [0], [0], [1], [0, 0, 1, 1], [], []>} : vector<32x32xbf16>, vector<32x256xbf16>, vector<32x256xf32> -> vector<32x256xf32>
    %c3_409 = arith.constant 3 : index
    %c0_410 = arith.constant 0 : index
    %c768_411 = arith.constant 768 : index
    %673 = vector.load %arg17[%c3_409, %c0_410, %c768_411] : memref<4x1x1024xf32, #tpu.memory_space<vmem>>, vector<1x1x256xf32>
    %674 = vector.shape_cast %673 : vector<1x1x256xf32> to vector<1x256xf32>
    %675 = vector.broadcast %674 : vector<1x256xf32> to vector<32x256xf32>
    %676 = arith.addf %672, %675 : vector<32x256xf32>
    %cst_412 = arith.constant 0.000000e+00 : f32
    %677 = vector.broadcast %cst_412 : f32 to vector<32x256xf32>
    %678 = arith.maximumf %676, %677 : vector<32x256xf32>
    %679 = arith.truncf %678 : vector<32x256xf32> to vector<32x256xbf16>
    %c3_413 = arith.constant 3 : index
    %c768_414 = arith.constant 768 : index
    %c0_415 = arith.constant 0 : index
    %680 = vector.load %arg18[%c3_413, %c768_414, %c0_415] : memref<4x1024x32xbf16, #tpu.memory_space<vmem>>, vector<1x256x32xbf16>
    %681 = vector.shape_cast %680 : vector<1x256x32xbf16> to vector<256x32xbf16>
    %cst_416 = arith.constant dense<0.000000e+00> : vector<32x32xf32>
    %682 = tpu.matmul %679, %681, %cst_416 {dimension_numbers = #tpu.dot_dimension_numbers<[1], [0], [0], [1], [0, 0, 1, 1], [], []>} : vector<32x256xbf16>, vector<256x32xbf16>, vector<32x32xf32> -> vector<32x32xf32>
    %683 = arith.addf %669, %682 : vector<32x32xf32>
    %c3_417 = arith.constant 3 : index
    %c0_418 = arith.constant 0 : index
    %c0_419 = arith.constant 0 : index
    %684 = vector.load %arg19[%c3_417, %c0_418, %c0_419] : memref<4x1x32xf32, #tpu.memory_space<vmem>>, vector<1x1x32xf32>
    %685 = vector.shape_cast %684 : vector<1x1x32xf32> to vector<1x32xf32>
    %686 = vector.broadcast %685 : vector<1x32xf32> to vector<32x32xf32>
    %687 = arith.addf %683, %686 : vector<32x32xf32>
    %688 = arith.addf %625, %687 : vector<32x32xf32>
    %cst_420 = arith.constant dense<0.000000e+00> : vector<32xf32>
    %689 = vector.multi_reduction <add>, %688, %cst_420 [1] : vector<32x32xf32> to vector<32xf32>
    %690 = vector.shape_cast %689 : vector<32xf32> to vector<32x1xf32>
    %cst_421 = arith.constant 3.200000e+01 : f32
    %691 = vector.broadcast %cst_421 : f32 to vector<32x1xf32>
    %692 = arith.divf %690, %691 : vector<32x1xf32>
    %693 = vector.broadcast %692 : vector<32x1xf32> to vector<32x32xf32>
    %694 = arith.subf %688, %693 : vector<32x32xf32>
    %695 = arith.mulf %694, %694 : vector<32x32xf32>
    %cst_422 = arith.constant dense<0.000000e+00> : vector<32xf32>
    %696 = vector.multi_reduction <add>, %695, %cst_422 [1] : vector<32x32xf32> to vector<32xf32>
    %697 = vector.shape_cast %696 : vector<32xf32> to vector<32x1xf32>
    %cst_423 = arith.constant 3.200000e+01 : f32
    %698 = vector.broadcast %cst_423 : f32 to vector<32x1xf32>
    %699 = arith.divf %697, %698 : vector<32x1xf32>
    %700 = vector.broadcast %692 : vector<32x1xf32> to vector<32x32xf32>
    %701 = arith.subf %688, %700 : vector<32x32xf32>
    %cst_424 = arith.constant 9.99999974E-6 : f32
    %702 = vector.broadcast %cst_424 : f32 to vector<32x1xf32>
    %703 = arith.addf %699, %702 : vector<32x1xf32>
    %704 = math.rsqrt %703 : vector<32x1xf32>
    %705 = vector.broadcast %704 : vector<32x1xf32> to vector<32x32xf32>
    %706 = arith.mulf %701, %705 : vector<32x32xf32>
    %c3_425 = arith.constant 3 : index
    %c0_426 = arith.constant 0 : index
    %c0_427 = arith.constant 0 : index
    %707 = vector.load %arg20[%c3_425, %c0_426, %c0_427] : memref<4x1x32xf32, #tpu.memory_space<vmem>>, vector<1x1x32xf32>
    %708 = vector.shape_cast %707 : vector<1x1x32xf32> to vector<1x32xf32>
    %709 = vector.broadcast %708 : vector<1x32xf32> to vector<32x32xf32>
    %710 = arith.mulf %706, %709 : vector<32x32xf32>
    %c3_428 = arith.constant 3 : index
    %c0_429 = arith.constant 0 : index
    %c0_430 = arith.constant 0 : index
    %711 = vector.load %arg21[%c3_428, %c0_429, %c0_430] : memref<4x1x32xf32, #tpu.memory_space<vmem>>, vector<1x1x32xf32>
    %712 = vector.shape_cast %711 : vector<1x1x32xf32> to vector<1x32xf32>
    %713 = vector.broadcast %712 : vector<1x32xf32> to vector<32x32xf32>
    %714 = arith.addf %710, %713 : vector<32x32xf32>
    %c0_431 = arith.constant 0 : index
    %c0_432 = arith.constant 0 : index
    %715 = vector.load %arg22[%c0_431, %c0_432] : memref<32x32xf32, #tpu.memory_space<vmem>>, vector<32x32xf32>
    tpu.vector_store %arg22[%c0_431, %c0_432], %714 {strides = array<i32>} : memref<32x32xf32, #tpu.memory_space<vmem>>, vector<32x32xf32>,
    return
  }
  func.func @transform_0(%arg0: i32) -> (i32, i32) {
    %c0_i32 = arith.constant 0 : i32
    %c0_i32_0 = arith.constant 0 : i32
    %c0_i32_1 = arith.constant 0 : i32
    return %c0_i32, %c0_i32_0 : i32, i32
  }
  func.func @transform_1(%arg0: i32) -> (i32, i32) {
    %c0_i32 = arith.constant 0 : i32
    %c0_i32_0 = arith.constant 0 : i32
    %c0_i32_1 = arith.constant 0 : i32
    return %c0_i32, %c0_i32_0 : i32, i32
  }
  func.func @transform_2(%arg0: i32) -> (i32, i32) {
    %c0_i32 = arith.constant 0 : i32
    %c0_i32_0 = arith.constant 0 : i32
    %c0_i32_1 = arith.constant 0 : i32
    return %c0_i32, %c0_i32_0 : i32, i32
  }
  func.func @transform_3(%arg0: i32) -> (i32, i32) {
    %c0_i32 = arith.constant 0 : i32
    %c0_i32_0 = arith.constant 0 : i32
    %c0_i32_1 = arith.constant 0 : i32
    return %c0_i32, %c0_i32_0 : i32, i32
  }
  func.func @transform_4(%arg0: i32) -> (i32, i32) {
    %c0_i32 = arith.constant 0 : i32
    %c0_i32_0 = arith.constant 0 : i32
    %c0_i32_1 = arith.constant 0 : i32
    return %c0_i32, %c0_i32_0 : i32, i32
  }
  func.func @transform_5(%arg0: i32) -> (i32, i32, i32) {
    %c0_i32 = arith.constant 0 : i32
    %c0_i32_0 = arith.constant 0 : i32
    %c0_i32_1 = arith.constant 0 : i32
    %c0_i32_2 = arith.constant 0 : i32
    return %c0_i32, %c0_i32_0, %c0_i32_1 : i32, i32, i32
  }
  func.func @transform_6(%arg0: i32) -> (i32, i32, i32) {
    %c0_i32 = arith.constant 0 : i32
    %c0_i32_0 = arith.constant 0 : i32
    %c0_i32_1 = arith.constant 0 : i32
    %c0_i32_2 = arith.constant 0 : i32
    return %c0_i32, %c0_i32_0, %c0_i32_1 : i32, i32, i32
  }
  func.func @transform_7(%arg0: i32) -> (i32, i32, i32) {
    %c0_i32 = arith.constant 0 : i32
    %c0_i32_0 = arith.constant 0 : i32
    %c0_i32_1 = arith.constant 0 : i32
    %c0_i32_2 = arith.constant 0 : i32
    return %c0_i32, %c0_i32_0, %c0_i32_1 : i32, i32, i32
  }
  func.func @transform_8(%arg0: i32) -> (i32, i32, i32) {
    %c0_i32 = arith.constant 0 : i32
    %c0_i32_0 = arith.constant 0 : i32
    %c0_i32_1 = arith.constant 0 : i32
    %c0_i32_2 = arith.constant 0 : i32
    return %c0_i32, %c0_i32_0, %c0_i32_1 : i32, i32, i32
  }
  func.func @transform_9(%arg0: i32) -> (i32, i32, i32) {
    %c0_i32 = arith.constant 0 : i32
    %c0_i32_0 = arith.constant 0 : i32
    %c0_i32_1 = arith.constant 0 : i32
    %c0_i32_2 = arith.constant 0 : i32
    return %c0_i32, %c0_i32_0, %c0_i32_1 : i32, i32, i32
  }
  func.func @transform_10(%arg0: i32) -> (i32, i32, i32) {
    %c0_i32 = arith.constant 0 : i32
    %c0_i32_0 = arith.constant 0 : i32
    %c0_i32_1 = arith.constant 0 : i32
    %c0_i32_2 = arith.constant 0 : i32
    return %c0_i32, %c0_i32_0, %c0_i32_1 : i32, i32, i32
  }
  func.func @transform_11(%arg0: i32) -> (i32, i32, i32) {
    %c0_i32 = arith.constant 0 : i32
    %c0_i32_0 = arith.constant 0 : i32
    %c0_i32_1 = arith.constant 0 : i32
    %c0_i32_2 = arith.constant 0 : i32
    return %c0_i32, %c0_i32_0, %c0_i32_1 : i32, i32, i32
  }
  func.func @transform_12(%arg0: i32) -> (i32, i32, i32) {
    %c0_i32 = arith.constant 0 : i32
    %c0_i32_0 = arith.constant 0 : i32
    %c0_i32_1 = arith.constant 0 : i32
    %c0_i32_2 = arith.constant 0 : i32
    return %c0_i32, %c0_i32_0, %c0_i32_1 : i32, i32, i32
  }
  func.func @transform_13(%arg0: i32) -> (i32, i32, i32) {
    %c0_i32 = arith.constant 0 : i32
    %c0_i32_0 = arith.constant 0 : i32
    %c0_i32_1 = arith.constant 0 : i32
    %c0_i32_2 = arith.constant 0 : i32
    return %c0_i32, %c0_i32_0, %c0_i32_1 : i32, i32, i32
  }
  func.func @transform_14(%arg0: i32) -> (i32, i32, i32) {
    %c0_i32 = arith.constant 0 : i32
    %c0_i32_0 = arith.constant 0 : i32
    %c0_i32_1 = arith.constant 0 : i32
    %c0_i32_2 = arith.constant 0 : i32
    return %c0_i32, %c0_i32_0, %c0_i32_1 : i32, i32, i32
  }
  func.func @transform_15(%arg0: i32) -> (i32, i32, i32) {
    %c0_i32 = arith.constant 0 : i32
    %c0_i32_0 = arith.constant 0 : i32
    %c0_i32_1 = arith.constant 0 : i32
    %c0_i32_2 = arith.constant 0 : i32
    return %c0_i32, %c0_i32_0, %c0_i32_1 : i32, i32, i32
  }
  func.func @transform_16(%arg0: i32) -> (i32, i32, i32) {
    %c0_i32 = arith.constant 0 : i32
    %c0_i32_0 = arith.constant 0 : i32
    %c0_i32_1 = arith.constant 0 : i32
    %c0_i32_2 = arith.constant 0 : i32
    return %c0_i32, %c0_i32_0, %c0_i32_1 : i32, i32, i32
  }
  func.func @transform_17(%arg0: i32) -> (i32, i32, i32) {
    %c0_i32 = arith.constant 0 : i32
    %c0_i32_0 = arith.constant 0 : i32
    %c0_i32_1 = arith.constant 0 : i32
    %c0_i32_2 = arith.constant 0 : i32
    return %c0_i32, %c0_i32_0, %c0_i32_1 : i32, i32, i32
  }
  func.func @transform_18(%arg0: i32) -> (i32, i32, i32) {
    %c0_i32 = arith.constant 0 : i32
    %c0_i32_0 = arith.constant 0 : i32
    %c0_i32_1 = arith.constant 0 : i32
    %c0_i32_2 = arith.constant 0 : i32
    return %c0_i32, %c0_i32_0, %c0_i32_1 : i32, i32, i32
  }
  func.func @transform_19(%arg0: i32) -> (i32, i32, i32) {
    %c0_i32 = arith.constant 0 : i32
    %c0_i32_0 = arith.constant 0 : i32
    %c0_i32_1 = arith.constant 0 : i32
    %c0_i32_2 = arith.constant 0 : i32
    return %c0_i32, %c0_i32_0, %c0_i32_1 : i32, i32, i32
  }
  func.func @transform_20(%arg0: i32) -> (i32, i32, i32) {
    %c0_i32 = arith.constant 0 : i32
    %c0_i32_0 = arith.constant 0 : i32
    %c0_i32_1 = arith.constant 0 : i32
    %c0_i32_2 = arith.constant 0 : i32
    return %c0_i32, %c0_i32_0, %c0_i32_1 : i32, i32, i32
  }
  func.func @transform_21(%arg0: i32) -> (i32, i32) {
    %c0_i32 = arith.constant 0 : i32
    %c0_i32_0 = arith.constant 0 : i32
    %c0_i32_1 = arith.constant 0 : i32
    return %c0_i32, %c0_i32_0 : i32, i32
  }
}

</mosaic_0001>

<llo_original>
// kernel: patch_transformer_encoder.1
$region0: #{patch_transformer_encoder.1}
  #allocation0 [shape = 'u32[]', space=smem, size = 0x4, offset = 0x4, fixed_abs, tag = 'smem constant byte address 0x4 - core index']
  #allocation1 [shape = 'u32[144,128]{1,0:T(1,128)}', space=vmem, size = 0x12000, scoped, tag = 'internal scratch']
  %s0 = inlined_call_operand.vmem [shape: bf16[32,64], index: 0, kind: input, shape index: {}]
  %s1 = inlined_call_operand.vmem [shape: bf16[64,32], index: 1, kind: input, shape index: {}]
  %s2 = inlined_call_operand.vmem [shape: f32[32,32], index: 2, kind: input, shape index: {}]
  %s3 = inlined_call_operand.vmem [shape: bf16[128,32], index: 3, kind: input, shape index: {}]
  %s4 = inlined_call_operand.vmem [shape: f32[128,128], index: 4, kind: input, shape index: {}]
  %s5 = inlined_call_operand.vmem [shape: bf16[4,32,32], index: 5, kind: input, shape index: {}]
  %s6 = inlined_call_operand.vmem [shape: f32[4,1,32], index: 6, kind: input, shape index: {}]
  %s7 = inlined_call_operand.vmem [shape: bf16[4,32,32], index: 7, kind: input, shape index: {}]
  %s8 = inlined_call_operand.vmem [shape: f32[4,1,32], index: 8, kind: input, shape index: {}]
  %s9 = inlined_call_operand.vmem [shape: bf16[4,32,32], index: 9, kind: input, shape index: {}]
  %s10 = inlined_call_operand.vmem [shape: f32[4,1,32], index: 10, kind: input, shape index: {}]
  %s11 = inlined_call_operand.vmem [shape: bf16[4,32,32], index: 11, kind: input, shape index: {}]
  %s12 = inlined_call_operand.vmem [shape: f32[4,1,32], index: 12, kind: input, shape index: {}]
  %s13 = inlined_call_operand.vmem [shape: f32[4,1,32], index: 13, kind: input, shape index: {}]
  %s14 = inlined_call_operand.vmem [shape: f32[4,1,32], index: 14, kind: input, shape index: {}]
  %s15 = inlined_call_operand.vmem [shape: bf16[4,32,1024], index: 15, kind: input, shape index: {}]
  %s16 = inlined_call_operand.vmem [shape: f32[4,1,1024], index: 16, kind: input, shape index: {}]
  %s17 = inlined_call_operand.vmem [shape: bf16[4,1024,32], index: 17, kind: input, shape index: {}]
  %s18 = inlined_call_operand.vmem [shape: f32[4,1,32], index: 18, kind: input, shape index: {}]
  %s19 = inlined_call_operand.vmem [shape: f32[4,1,32], index: 19, kind: input, shape index: {}]
  %s20 = inlined_call_operand.vmem [shape: f32[4,1,32], index: 20, kind: input, shape index: {}]
  %s21 = inlined_call_operand.vmem [shape: f32[32,32], index: 21, kind: output, shape index: {}]
  %s22 = sld [smem:[#allocation0]]
  $region94: #{patch_transformer_encoder.1} parent=0
    _
  %s24 = ssub.s32 1, %s22
  %s25 = scalar_select 0, %s24, %s22
  // Predicated region
  $region2: #{patch_transformer_encoder.1} parent=0 // pred_check
    _
  $region3: #{patch_transformer_encoder.1} parent=0 // pred_check_branch
    %27 = sbr.rel (0) target = $region5
  $region4: #{patch_transformer_encoder.1} parent=0 // pred_region
    _
  $region5: #{patch_transformer_encoder.1} parent=0 // pred_fallthru
    _
  // Predicated region
  $region6: #{patch_transformer_encoder.1} parent=0 // pred_check
    _
  $region7: #{patch_transformer_encoder.1} parent=0 // pred_check_branch
    %29 = sbr.rel (0) target = $region9
  $region8: #{patch_transformer_encoder.1} parent=0 // pred_region
    _
  $region9: #{patch_transformer_encoder.1} parent=0 // pred_fallthru
    _
  // Predicated region
  $region10: #{patch_transformer_encoder.1} parent=0 // pred_check
    _
  $region11: #{patch_transformer_encoder.1} parent=0 // pred_check_branch
    %31 = sbr.rel (0) target = $region13
  $region12: #{patch_transformer_encoder.1} parent=0 // pred_region
    _
  $region13: #{patch_transformer_encoder.1} parent=0 // pred_fallthru
    _
  // Predicated region
  $region14: #{patch_transformer_encoder.1} parent=0 // pred_check
    _
  $region15: #{patch_transformer_encoder.1} parent=0 // pred_check_branch
    %33 = sbr.rel (0) target = $region17
  $region16: #{patch_transformer_encoder.1} parent=0 // pred_region
    _
  $region17: #{patch_transformer_encoder.1} parent=0 // pred_fallthru
    _
  // Predicated region
  $region18: #{patch_transformer_encoder.1} parent=0 // pred_check
    _
  $region19: #{patch_transformer_encoder.1} parent=0 // pred_check_branch
    %35 = sbr.rel (0) target = $region21
  $region20: #{patch_transformer_encoder.1} parent=0 // pred_region
    _
  $region21: #{patch_transformer_encoder.1} parent=0 // pred_fallthru
    _
  // Predicated region
  $region22: #{patch_transformer_encoder.1} parent=0 // pred_check
    _
  $region23: #{patch_transformer_encoder.1} parent=0 // pred_check_branch
    %37 = sbr.rel (0) target = $region25
  $region24: #{patch_transformer_encoder.1} parent=0 // pred_region
    _
  $region25: #{patch_transformer_encoder.1} parent=0 // pred_fallthru
    _
  // Predicated region
  $region26: #{patch_transformer_encoder.1} parent=0 // pred_check
    _
  $region27: #{patch_transformer_encoder.1} parent=0 // pred_check_branch
    %39 = sbr.rel (0) target = $region29
  $region28: #{patch_transformer_encoder.1} parent=0 // pred_region
    _
  $region29: #{patch_transformer_encoder.1} parent=0 // pred_fallthru
    _
  // Predicated region
  $region30: #{patch_transformer_encoder.1} parent=0 // pred_check
    _
  $region31: #{patch_transformer_encoder.1} parent=0 // pred_check_branch
    %41 = sbr.rel (0) target = $region33
  $region32: #{patch_transformer_encoder.1} parent=0 // pred_region
    _
  $region33: #{patch_transformer_encoder.1} parent=0 // pred_fallthru
    _
  // Predicated region
  $region34: #{patch_transformer_encoder.1} parent=0 // pred_check
    _
  $region35: #{patch_transformer_encoder.1} parent=0 // pred_check_branch
    %43 = sbr.rel (0) target = $region37
  $region36: #{patch_transformer_encoder.1} parent=0 // pred_region
    _
  $region37: #{patch_transformer_encoder.1} parent=0 // pred_fallthru
    _
  // Predicated region
  $region38: #{patch_transformer_encoder.1} parent=0 // pred_check
    _
  $region39: #{patch_transformer_encoder.1} parent=0 // pred_check_branch
    %45 = sbr.rel (0) target = $region41
  $region40: #{patch_transformer_encoder.1} parent=0 // pred_region
    _
  $region41: #{patch_transformer_encoder.1} parent=0 // pred_fallthru
    _
  // Predicated region
  $region42: #{patch_transformer_encoder.1} parent=0 // pred_check
    _
  $region43: #{patch_transformer_encoder.1} parent=0 // pred_check_branch
    %47 = sbr.rel (0) target = $region45
  $region44: #{patch_transformer_encoder.1} parent=0 // pred_region
    _
  $region45: #{patch_transformer_encoder.1} parent=0 // pred_fallthru
    _
  // Predicated region
  $region46: #{patch_transformer_encoder.1} parent=0 // pred_check
    _
  $region47: #{patch_transformer_encoder.1} parent=0 // pred_check_branch
    %49 = sbr.rel (0) target = $region49
  $region48: #{patch_transformer_encoder.1} parent=0 // pred_region
    _
  $region49: #{patch_transformer_encoder.1} parent=0 // pred_fallthru
    _
  // Predicated region
  $region50: #{patch_transformer_encoder.1} parent=0 // pred_check
    _
  $region51: #{patch_transformer_encoder.1} parent=0 // pred_check_branch
    %51 = sbr.rel (0) target = $region53
  $region52: #{patch_transformer_encoder.1} parent=0 // pred_region
    _
  $region53: #{patch_transformer_encoder.1} parent=0 // pred_fallthru
    _
  // Predicated region
  $region54: #{patch_transformer_encoder.1} parent=0 // pred_check
    _
  $region55: #{patch_transformer_encoder.1} parent=0 // pred_check_branch
    %53 = sbr.rel (0) target = $region57
  $region56: #{patch_transformer_encoder.1} parent=0 // pred_region
    _
  $region57: #{patch_transformer_encoder.1} parent=0 // pred_fallthru
    _
  // Predicated region
  $region58: #{patch_transformer_encoder.1} parent=0 // pred_check
    _
  $region59: #{patch_transformer_encoder.1} parent=0 // pred_check_branch
    %55 = sbr.rel (0) target = $region61
  $region60: #{patch_transformer_encoder.1} parent=0 // pred_region
    _
  $region61: #{patch_transformer_encoder.1} parent=0 // pred_fallthru
    _
  // Predicated region
  $region62: #{patch_transformer_encoder.1} parent=0 // pred_check
    _
  $region63: #{patch_transformer_encoder.1} parent=0 // pred_check_branch
    %57 = sbr.rel (0) target = $region65
  $region64: #{patch_transformer_encoder.1} parent=0 // pred_region
    _
  $region65: #{patch_transformer_encoder.1} parent=0 // pred_fallthru
    _
  // Predicated region
  $region66: #{patch_transformer_encoder.1} parent=0 // pred_check
    _
  $region67: #{patch_transformer_encoder.1} parent=0 // pred_check_branch
    %59 = sbr.rel (0) target = $region69
  $region68: #{patch_transformer_encoder.1} parent=0 // pred_region
    _
  $region69: #{patch_transformer_encoder.1} parent=0 // pred_fallthru
    _
  // Predicated region
  $region70: #{patch_transformer_encoder.1} parent=0 // pred_check
    _
  $region71: #{patch_transformer_encoder.1} parent=0 // pred_check_branch
    %61 = sbr.rel (0) target = $region73
  $region72: #{patch_transformer_encoder.1} parent=0 // pred_region
    _
  $region73: #{patch_transformer_encoder.1} parent=0 // pred_fallthru
    _
  // Predicated region
  $region74: #{patch_transformer_encoder.1} parent=0 // pred_check
    _
  $region75: #{patch_transformer_encoder.1} parent=0 // pred_check_branch
    %63 = sbr.rel (0) target = $region77
  $region76: #{patch_transformer_encoder.1} parent=0 // pred_region
    _
  $region77: #{patch_transformer_encoder.1} parent=0 // pred_fallthru
    _
  // Predicated region
  $region78: #{patch_transformer_encoder.1} parent=0 // pred_check
    _
  $region79: #{patch_transformer_encoder.1} parent=0 // pred_check_branch
    %65 = sbr.rel (0) target = $region81
  $region80: #{patch_transformer_encoder.1} parent=0 // pred_region
    _
  $region81: #{patch_transformer_encoder.1} parent=0 // pred_fallthru
    _
  // Predicated region
  $region82: #{patch_transformer_encoder.1} parent=0 // pred_check
    _
  $region83: #{patch_transformer_encoder.1} parent=0 // pred_check_branch
    %67 = sbr.rel (0) target = $region85
  $region84: #{patch_transformer_encoder.1} parent=0 // pred_region
    _
  $region85: #{patch_transformer_encoder.1} parent=0 // pred_fallthru
    _
  %v69 = vld [vmem:[%s3] sm:$0xf]
  %v70 = vld [vmem:[%s3 + $0x4] sm:$0xf]
  %v71 = vld [vmem:[%s3 + $0x8] sm:$0xf]
  %v72 = vld [vmem:[%s3 + $0xc] sm:$0xf]
  %v73 = vld [vmem:[%s3 + $0x10] sm:$0xf]
  %v74 = vld [vmem:[%s3 + $0x14] sm:$0xf]
  %v75 = vld [vmem:[%s3 + $0x18] sm:$0xf]
  %v76 = vld [vmem:[%s3 + $0x1c] sm:$0xf]
  %v77 = vld [vmem:[%s3 + $0x20] sm:$0xf]
  %v78 = vld [vmem:[%s3 + $0x24] sm:$0xf]
  %v79 = vld [vmem:[%s3 + $0x28] sm:$0xf]
  %v80 = vld [vmem:[%s3 + $0x2c] sm:$0xf]
  %v81 = vld [vmem:[%s3 + $0x30] sm:$0xf]
  %v82 = vld [vmem:[%s3 + $0x34] sm:$0xf]
  %v83 = vld [vmem:[%s3 + $0x38] sm:$0xf]
  %v84 = vld [vmem:[%s3 + $0x3c] sm:$0xf]
  %v85 = vld [vmem:[%s4] sm:$0xff]
  %v86 = vld [vmem:[%s4 + $0x8] sm:$0xff]
  %v87 = vld [vmem:[%s4 + $0x10] sm:$0xff]
  %v88 = vld [vmem:[%s4 + $0x18] sm:$0xff]
  %v89 = vld [vmem:[%s4 + $0x20] sm:$0xff]
  %v90 = vld [vmem:[%s4 + $0x28] sm:$0xff]
  %v91 = vld [vmem:[%s4 + $0x30] sm:$0xff]
  %v92 = vld [vmem:[%s4 + $0x38] sm:$0xff]
  %v93 = vld [vmem:[%s4 + $0x40] sm:$0xff]
  %v94 = vld [vmem:[%s4 + $0x48] sm:$0xff]
  %v95 = vld [vmem:[%s4 + $0x50] sm:$0xff]
  %v96 = vld [vmem:[%s4 + $0x58] sm:$0xff]
  %v97 = vld [vmem:[%s4 + $0x60] sm:$0xff]
  %v98 = vld [vmem:[%s4 + $0x68] sm:$0xff]
  %v99 = vld [vmem:[%s4 + $0x70] sm:$0xff]
  %v100 = vld [vmem:[%s4 + $0x78] sm:$0xff]
  %v101 = vld [vmem:[%s0] sm:$0xf]
  %v102 = vld [vmem:[%s0 + $0x4] sm:$0xf]
  %v103 = vld [vmem:[%s0 + $0x8] sm:$0xf]
  %v104 = vld [vmem:[%s0 + $0xc] sm:$0xf]
  %v105 = vld [vmem:[%s1] sm:$0xf]
  %v106 = vld [vmem:[%s1 + $0x4] sm:$0xf]
  %v107 = vld [vmem:[%s1 + $0x8] sm:$0xf]
  %v108 = vld [vmem:[%s1 + $0xc] sm:$0xf]
  %v109 = vld [vmem:[%s1 + $0x10] sm:$0xf]
  %v110 = vld [vmem:[%s1 + $0x14] sm:$0xf]
  %v111 = vld [vmem:[%s1 + $0x18] sm:$0xf]
  %v112 = vld [vmem:[%s1 + $0x1c] sm:$0xf]
  %v113 = vld [vmem:[%s2] sm:$0xff]
  %v114 = vld [vmem:[%s2 + $0x8] sm:$0xff]
  %v115 = vld [vmem:[%s2 + $0x10] sm:$0xff]
  %v116 = vld [vmem:[%s2 + $0x18] sm:$0xff]
  %v121 = vunpack.c.l.b16 %v101
  %v122 = vunpack.c.l.b16 %v102
  %v123 = vunpack.c.l.b16 %v103
  %v124 = vunpack.c.l.b16 %v104
  %v125 = vpack.c.b16 %v122, %v121
  %v126 = vpack.c.b16 %v124, %v123
  %v135 = vunpack.c.l.b16 %v105
  %v136 = vunpack.c.l.b16 %v106
  %v137 = vunpack.c.l.b16 %v107
  %v138 = vunpack.c.l.b16 %v108
  %v139 = vunpack.c.l.b16 %v109
  %v140 = vunpack.c.l.b16 %v110
  %v141 = vunpack.c.l.b16 %v111
  %v142 = vunpack.c.l.b16 %v112
  %v143 = vpack.c.b16 %v136, %v135
  %v144 = vpack.c.b16 %v138, %v137
  %v145 = vpack.c.b16 %v140, %v139
  %v146 = vpack.c.b16 %v142, %v141
  %vm151 = vcmask 523264
  %v153 = vsel %vm151, %v125, 0
  %v156 = vsel %vm151, %v126, 0
  %158 = vmatprep.subr.bf16.mxu0 0
  %159 = vmatpush1.bf16.msra.mxu0 %v143
  %160 = vmatprep.subr.bf16.mxu0 0
  %161 = vmatpush1.bf16.msra.mxu0 %v144
  %162 = vmatprep.subr.bf16.mxu0 0
  %163 = vmatpush1.bf16.msra.mxu0 %v145
  %164 = vmatprep.subr.bf16.mxu0 0
  %165 = vmatpush1.bf16.msra.mxu0 %v146
  %166 = vmatprep.subr.bf16.mxu0 0
  %167 = vmatpush1.bf16.msra.mxu0 0
  %168 = vmatprep.subr.bf16.mxu0 0
  %169 = vmatpush1.bf16.msra.mxu0 0
  %170 = vmatprep.subr.bf16.mxu0 0
  %171 = vmatpush1.bf16.msra.mxu0 0
  %172 = vmatprep.subr.bf16.mxu0 0
  %173 = vmatpush1.bf16.msra.mxu0 0
  %174 = vmatprep.subr.bf16.mxu0 0
  %175 = vmatpush1.bf16.msra.mxu0 0
  %176 = vmatprep.subr.bf16.mxu0 0
  %177 = vmatpush1.bf16.msra.mxu0 0
  %178 = vmatprep.subr.bf16.mxu0 0
  %179 = vmatpush1.bf16.msra.mxu0 0
  %180 = vmatprep.subr.bf16.mxu0 0
  %181 = vmatpush1.bf16.msra.mxu0 0
  %182 = vmatprep.subr.bf16.mxu0 0
  %183 = vmatpush1.bf16.msra.mxu0 0
  %184 = vmatprep.subr.bf16.mxu0 0
  %185 = vmatpush1.bf16.msra.mxu0 0
  %186 = vmatprep.subr.bf16.mxu0 0
  %187 = vmatpush1.bf16.msra.mxu0 0
  %188 = vmatprep.subr.bf16.mxu0 0
  %189 = vmatpush1.bf16.msra.mxu0 0
  %190 = vmatprep.mubr.bf16.mxu0 0
  %191 = vmatmul.mubr.bf16.gmra.mrb[0].mxu0 %v153
  %v192 = vpop.f32.mrb[0].mxu0
  %v193 = vadd.f32 %v113, %v192
  %v194 = vpop.f32.mrb[0].mxu0
  %v195 = vpop.f32.mrb[0].mxu0
  %v196 = vadd.f32 %v114, %v195
  %v197 = vpop.f32.mrb[0].mxu0
  %198 = vmatprep.mubr.bf16.mxu0 0
  %199 = vmatmul.mubr.bf16.gmra.mrb[0].mxu0 %v156
  %v200 = vpop.f32.mrb[0].mxu0
  %v201 = vadd.f32 %v115, %v200
  %v202 = vpop.f32.mrb[0].mxu0
  %v203 = vpop.f32.mrb[0].mxu0
  %v204 = vadd.f32 %v116, %v203
  %v205 = vpop.f32.mrb[0].mxu0
  %206 = vdwg.mxu0
  %v207 = vpack.c.bf16 %v196, %v193
  %v208 = vpack.c.bf16 %v204, %v201
  %v209 = vld [vmem:[%s5] sm:$0xf]
  %v210 = vld [vmem:[%s5 + $0x4] sm:$0xf]
  %v211 = vld [vmem:[%s5 + $0x8] sm:$0xf]
  %v212 = vld [vmem:[%s5 + $0xc] sm:$0xf]
  %v213 = vld [vmem:[%s6] sm:$0x1]
  %v215 = vlaneseq
  %v216 = vshrl.u32 %v215, 7
  %v217 = vsub.s32 0, %v216
  %v218 = vrot.slane %v213, %v217
  %v224 = vunpack.c.l.b16 %v209
  %v225 = vunpack.c.l.b16 %v210
  %v226 = vunpack.c.l.b16 %v211
  %v227 = vunpack.c.l.b16 %v212
  %v228 = vpack.c.b16 %v225, %v224
  %v229 = vpack.c.b16 %v227, %v226
  %vm232 = vcmask 261120
  %v234 = vsel %vm232, %v207, 0
  %v237 = vsel %vm232, %v208, 0
  %239 = vmatprep.subr.bf16.mxu0 0
  %240 = vmatpush1.bf16.msra.mxu0 %v228
  %241 = vmatprep.subr.bf16.mxu0 0
  %242 = vmatpush1.bf16.msra.mxu0 %v229
  %243 = vmatprep.subr.bf16.mxu0 0
  %244 = vmatpush1.bf16.msra.mxu0 0
  %245 = vmatprep.subr.bf16.mxu0 0
  %246 = vmatpush1.bf16.msra.mxu0 0
  %247 = vmatprep.subr.bf16.mxu0 0
  %248 = vmatpush1.bf16.msra.mxu0 0
  %249 = vmatprep.subr.bf16.mxu0 0
  %250 = vmatpush1.bf16.msra.mxu0 0
  %251 = vmatprep.subr.bf16.mxu0 0
  %252 = vmatpush1.bf16.msra.mxu0 0
  %253 = vmatprep.subr.bf16.mxu0 0
  %254 = vmatpush1.bf16.msra.mxu0 0
  %255 = vmatprep.subr.bf16.mxu0 0
  %256 = vmatpush1.bf16.msra.mxu0 0
  %257 = vmatprep.subr.bf16.mxu0 0
  %258 = vmatpush1.bf16.msra.mxu0 0
  %259 = vmatprep.subr.bf16.mxu0 0
  %260 = vmatpush1.bf16.msra.mxu0 0
  %261 = vmatprep.subr.bf16.mxu0 0
  %262 = vmatpush1.bf16.msra.mxu0 0
  %263 = vmatprep.subr.bf16.mxu0 0
  %264 = vmatpush1.bf16.msra.mxu0 0
  %265 = vmatprep.subr.bf16.mxu0 0
  %266 = vmatpush1.bf16.msra.mxu0 0
  %267 = vmatprep.subr.bf16.mxu0 0
  %268 = vmatpush1.bf16.msra.mxu0 0
  %269 = vmatprep.subr.bf16.mxu0 0
  %270 = vmatpush1.bf16.msra.mxu0 0
  %271 = vmatprep.mubr.bf16.mxu0 0
  %272 = vmatmul.mubr.bf16.gmra.mrb[0].mxu0 %v234
  %v273 = vpop.f32.mrb[0].mxu0
  %v274 = vadd.f32 %v218, %v273
  %v275 = vpop.f32.mrb[0].mxu0
  %v276 = vpop.f32.mrb[0].mxu0
  %v277 = vadd.f32 %v218, %v276
  %v278 = vpop.f32.mrb[0].mxu0
  %279 = vmatprep.mubr.bf16.mxu0 0
  %280 = vmatmul.mubr.bf16.gmra.mrb[0].mxu0 %v237
  %v281 = vpop.f32.mrb[0].mxu0
  %v282 = vadd.f32 %v218, %v281
  %v283 = vpop.f32.mrb[0].mxu0
  %v284 = vpop.f32.mrb[0].mxu0
  %v285 = vadd.f32 %v218, %v284
  %v286 = vpop.f32.mrb[0].mxu0
  %287 = vdwg.mxu0
  %v288 = vld [vmem:[%s7] sm:$0xf]
  %v289 = vld [vmem:[%s7 + $0x4] sm:$0xf]
  %v290 = vld [vmem:[%s7 + $0x8] sm:$0xf]
  %v291 = vld [vmem:[%s7 + $0xc] sm:$0xf]
  %v292 = vld [vmem:[%s8] sm:$0x1]
  %v294 = vlaneseq
  %v295 = vshrl.u32 %v294, 7
  %v296 = vsub.s32 0, %v295
  %v297 = vrot.slane %v292, %v296
  %v303 = vunpack.c.l.b16 %v288
  %v304 = vunpack.c.l.b16 %v289
  %v305 = vunpack.c.l.b16 %v290
  %v306 = vunpack.c.l.b16 %v291
  %v307 = vpack.c.b16 %v304, %v303
  %v308 = vpack.c.b16 %v306, %v305
  %311 = vmatprep.subr.bf16.mxu0 0
  %312 = vmatpush1.bf16.msra.mxu0 %v307
  %313 = vmatprep.subr.bf16.mxu0 0
  %314 = vmatpush1.bf16.msra.mxu0 %v308
  %315 = vmatprep.subr.bf16.mxu0 0
  %316 = vmatpush1.bf16.msra.mxu0 0
  %317 = vmatprep.subr.bf16.mxu0 0
  %318 = vmatpush1.bf16.msra.mxu0 0
  %319 = vmatprep.subr.bf16.mxu0 0
  %320 = vmatpush1.bf16.msra.mxu0 0
  %321 = vmatprep.subr.bf16.mxu0 0
  %322 = vmatpush1.bf16.msra.mxu0 0
  %323 = vmatprep.subr.bf16.mxu0 0
  %324 = vmatpush1.bf16.msra.mxu0 0
  %325 = vmatprep.subr.bf16.mxu0 0
  %326 = vmatpush1.bf16.msra.mxu0 0
  %327 = vmatprep.subr.bf16.mxu0 0
  %328 = vmatpush1.bf16.msra.mxu0 0
  %329 = vmatprep.subr.bf16.mxu0 0
  %330 = vmatpush1.bf16.msra.mxu0 0
  %331 = vmatprep.subr.bf16.mxu0 0
  %332 = vmatpush1.bf16.msra.mxu0 0
  %333 = vmatprep.subr.bf16.mxu0 0
  %334 = vmatpush1.bf16.msra.mxu0 0
  %335 = vmatprep.subr.bf16.mxu0 0
  %336 = vmatpush1.bf16.msra.mxu0 0
  %337 = vmatprep.subr.bf16.mxu0 0
  %338 = vmatpush1.bf16.msra.mxu0 0
  %339 = vmatprep.subr.bf16.mxu0 0
  %340 = vmatpush1.bf16.msra.mxu0 0
  %341 = vmatprep.subr.bf16.mxu0 0
  %342 = vmatpush1.bf16.msra.mxu0 0
  %343 = vmatprep.mubr.bf16.mxu0 0
  %344 = vmatmul.mubr.bf16.gmra.mrb[0].mxu0 %v234
  %v345 = vpop.f32.mrb[0].mxu0
  %v346 = vadd.f32 %v297, %v345
  %v347 = vpop.f32.mrb[0].mxu0
  %v348 = vpop.f32.mrb[0].mxu0
  %v349 = vadd.f32 %v297, %v348
  %v350 = vpop.f32.mrb[0].mxu0
  %351 = vmatprep.mubr.bf16.mxu0 0
  %352 = vmatmul.mubr.bf16.gmra.mrb[0].mxu0 %v237
  %v353 = vpop.f32.mrb[0].mxu0
  %v354 = vadd.f32 %v297, %v353
  %v355 = vpop.f32.mrb[0].mxu0
  %v356 = vpop.f32.mrb[0].mxu0
  %v357 = vadd.f32 %v297, %v356
  %v358 = vpop.f32.mrb[0].mxu0
  %359 = vdwg.mxu0
  %v360 = vld [vmem:[%s9] sm:$0xf]
  %v361 = vld [vmem:[%s9 + $0x4] sm:$0xf]
  %v362 = vld [vmem:[%s9 + $0x8] sm:$0xf]
  %v363 = vld [vmem:[%s9 + $0xc] sm:$0xf]
  %v364 = vld [vmem:[%s10] sm:$0x1]
  %v366 = vlaneseq
  %v367 = vshrl.u32 %v366, 7
  %v368 = vsub.s32 0, %v367
  %v369 = vrot.slane %v364, %v368
  %v375 = vunpack.c.l.b16 %v360
  %v376 = vunpack.c.l.b16 %v361
  %v377 = vunpack.c.l.b16 %v362
  %v378 = vunpack.c.l.b16 %v363
  %v379 = vpack.c.b16 %v376, %v375
  %v380 = vpack.c.b16 %v378, %v377
  %383 = vmatprep.subr.bf16.mxu0 0
  %384 = vmatpush1.bf16.msra.mxu0 %v379
  %385 = vmatprep.subr.bf16.mxu0 0
  %386 = vmatpush1.bf16.msra.mxu0 %v380
  %387 = vmatprep.subr.bf16.mxu0 0
  %388 = vmatpush1.bf16.msra.mxu0 0
  %389 = vmatprep.subr.bf16.mxu0 0
  %390 = vmatpush1.bf16.msra.mxu0 0
  %391 = vmatprep.subr.bf16.mxu0 0
  %392 = vmatpush1.bf16.msra.mxu0 0
  %393 = vmatprep.subr.bf16.mxu0 0
  %394 = vmatpush1.bf16.msra.mxu0 0
  %395 = vmatprep.subr.bf16.mxu0 0
  %396 = vmatpush1.bf16.msra.mxu0 0
  %397 = vmatprep.subr.bf16.mxu0 0
  %398 = vmatpush1.bf16.msra.mxu0 0
  %399 = vmatprep.subr.bf16.mxu0 0
  %400 = vmatpush1.bf16.msra.mxu0 0
  %401 = vmatprep.subr.bf16.mxu0 0
  %402 = vmatpush1.bf16.msra.mxu0 0
  %403 = vmatprep.subr.bf16.mxu0 0
  %404 = vmatpush1.bf16.msra.mxu0 0
  %405 = vmatprep.subr.bf16.mxu0 0
  %406 = vmatpush1.bf16.msra.mxu0 0
  %407 = vmatprep.subr.bf16.mxu0 0
  %408 = vmatpush1.bf16.msra.mxu0 0
  %409 = vmatprep.subr.bf16.mxu0 0
  %410 = vmatpush1.bf16.msra.mxu0 0
  %411 = vmatprep.subr.bf16.mxu0 0
  %412 = vmatpush1.bf16.msra.mxu0 0
  %413 = vmatprep.subr.bf16.mxu0 0
  %414 = vmatpush1.bf16.msra.mxu0 0
  %415 = vmatprep.mubr.bf16.mxu0 0
  %416 = vmatmul.mubr.bf16.gmra.mrb[0].mxu0 %v234
  %v417 = vpop.f32.mrb[0].mxu0
  %v418 = vadd.f32 %v369, %v417
  %v419 = vpop.f32.mrb[0].mxu0
  %v420 = vpop.f32.mrb[0].mxu0
  %v421 = vadd.f32 %v369, %v420
  %v422 = vpop.f32.mrb[0].mxu0
  %423 = vmatprep.mubr.bf16.mxu0 0
  %424 = vmatmul.mubr.bf16.gmra.mrb[0].mxu0 %v237
  %v425 = vpop.f32.mrb[0].mxu0
  %v426 = vadd.f32 %v369, %v425
  %v427 = vpop.f32.mrb[0].mxu0
  %v428 = vpop.f32.mrb[0].mxu0
  %v429 = vadd.f32 %v369, %v428
  %v430 = vpop.f32.mrb[0].mxu0
  %431 = vdwg.mxu0
  %v432 = vmul.f32 %v274, 0.35355338
  %v433 = vmul.f32 %v277, 0.35355338
  %v434 = vmul.f32 %v282, 0.35355338
  %v435 = vmul.f32 %v285, 0.35355338
  %v436 = vpack.c.bf16 %v433, %v432
  %v437 = vpack.c.bf16 %v435, %v434
  %v438 = vpack.c.bf16 %v349, %v346
  %v439 = vpack.c.bf16 %v357, %v354
  %v456 = vunpack.c.l.b16 %v69
  %v457 = vunpack.c.l.b16 %v70
  %v458 = vunpack.c.l.b16 %v71
  %v459 = vunpack.c.l.b16 %v72
  %v460 = vunpack.c.l.b16 %v73
  %v461 = vunpack.c.l.b16 %v74
  %v462 = vunpack.c.l.b16 %v75
  %v463 = vunpack.c.l.b16 %v76
  %v464 = vunpack.c.l.b16 %v77
  %v465 = vunpack.c.l.b16 %v78
  %v466 = vunpack.c.l.b16 %v79
  %v467 = vunpack.c.l.b16 %v80
  %v468 = vunpack.c.l.b16 %v81
  %v469 = vunpack.c.l.b16 %v82
  %v470 = vunpack.c.l.b16 %v83
  %v471 = vunpack.c.l.b16 %v84
  %v472 = vpack.c.b16 %v457, %v456
  %v473 = vpack.c.b16 %v459, %v458
  %v474 = vpack.c.b16 %v461, %v460
  %v475 = vpack.c.b16 %v463, %v462
  %v476 = vpack.c.b16 %v465, %v464
  %v477 = vpack.c.b16 %v467, %v466
  %v478 = vpack.c.b16 %v469, %v468
  %v479 = vpack.c.b16 %v471, %v470
  %v488 = vmul.bf16 %v438, %v472
  %v489 = vmul.bf16 %v439, %v473
  %v490 = vmul.bf16 %v438, %v474
  %v491 = vmul.bf16 %v439, %v475
  %v492 = vmul.bf16 %v438, %v476
  %v493 = vmul.bf16 %v439, %v477
  %v494 = vmul.bf16 %v438, %v478
  %v495 = vmul.bf16 %v439, %v479
  %v496 = vpack.c.bf16 %v421, %v418
  %v497 = vpack.c.bf16 %v429, %v426
  %v498 = vmul.bf16 %v496, %v472
  %v499 = vmul.bf16 %v497, %v473
  %v500 = vmul.bf16 %v496, %v474
  %v501 = vmul.bf16 %v497, %v475
  %v502 = vmul.bf16 %v496, %v476
  %v503 = vmul.bf16 %v497, %v477
  %v504 = vmul.bf16 %v496, %v478
  %v505 = vmul.bf16 %v497, %v479
  %v507 = vsel %vm232, %v436, 0
  %v510 = vsel %vm232, %v437, 0
  %v513 = vsel %vm232, %v488, 0
  %v516 = vsel %vm232, %v489, 0
  %v519 = vsel %vm232, %v490, 0
  %v522 = vsel %vm232, %v491, 0
  %v525 = vsel %vm232, %v492, 0
  %v528 = vsel %vm232, %v493, 0
  %v531 = vsel %vm232, %v494, 0
  %v534 = vsel %vm232, %v495, 0
  %536 = vmatprep.subr.bf16.mxu0 0
  %537 = vmatpush1.bf16.xpose.msra.mxu0 %v513
  %538 = vmatprep.subr.bf16.mxu0 0
  %539 = vmatpush1.bf16.xpose.msra.mxu0 %v516
  %540 = vmatprep.subr.bf16.mxu0 0
  %541 = vmatpush1.bf16.xpose.msra.mxu0 %v519
  %542 = vmatprep.subr.bf16.mxu0 0
  %543 = vmatpush1.bf16.xpose.msra.mxu0 %v522
  %544 = vmatprep.subr.bf16.mxu0 0
  %545 = vmatpush1.bf16.xpose.msra.mxu0 %v525
  %546 = vmatprep.subr.bf16.mxu0 0
  %547 = vmatpush1.bf16.xpose.msra.mxu0 %v528
  %548 = vmatprep.subr.bf16.mxu0 0
  %549 = vmatpush1.bf16.xpose.msra.mxu0 %v531
  %550 = vmatprep.subr.bf16.mxu0 0
  %551 = vmatpush1.bf16.xpose.msra.mxu0 %v534
  %552 = vmatprep.subr.bf16.mxu0 0
  %553 = vmatpush1.bf16.xpose.msra.mxu0 0
  %554 = vmatprep.subr.bf16.mxu0 0
  %555 = vmatpush1.bf16.xpose.msra.mxu0 0
  %556 = vmatprep.subr.bf16.mxu0 0
  %557 = vmatpush1.bf16.xpose.msra.mxu0 0
  %558 = vmatprep.subr.bf16.mxu0 0
  %559 = vmatpush1.bf16.xpose.msra.mxu0 0
  %560 = vmatprep.subr.bf16.mxu0 0
  %561 = vmatpush1.bf16.xpose.msra.mxu0 0
  %562 = vmatprep.subr.bf16.mxu0 0
  %563 = vmatpush1.bf16.xpose.msra.mxu0 0
  %564 = vmatprep.subr.bf16.mxu0 0
  %565 = vmatpush1.bf16.xpose.msra.mxu0 0
  %566 = vmatprep.subr.bf16.mxu0 0
  %567 = vmatpush1.bf16.xpose.msra.mxu0 0
  %568 = vmatprep.mubr.bf16.mxu0 0
  %569 = vmatmul.mubr.bf16.gmra.mrb[0].mxu0 %v507
  %v570 = vpop.f32.mrb[0].mxu0
  %v571 = vadd.f32 %v85, %v570
  %v572 = vpop.f32.mrb[0].mxu0
  %v573 = vpop.f32.mrb[0].mxu0
  %v574 = vadd.f32 %v86, %v573
  %v575 = vpop.f32.mrb[0].mxu0
  %576 = vmatprep.mubr.bf16.mxu0 0
  %577 = vmatmul.mubr.bf16.gmra.mrb[0].mxu0 %v510
  %v578 = vpop.f32.mrb[0].mxu0
  %v579 = vadd.f32 %v87, %v578
  %v580 = vpop.f32.mrb[0].mxu0
  %v581 = vpop.f32.mrb[0].mxu0
  %v582 = vadd.f32 %v88, %v581
  %v583 = vpop.f32.mrb[0].mxu0
  %584 = vmatprep.mubr.bf16.mxu0 0
  %585 = vmatmul.mubr.bf16.gmra.mrb[0].mxu0 %v507
  %v586 = vpop.f32.mrb[0].mxu0
  %v587 = vadd.f32 %v89, %v586
  %v588 = vpop.f32.mrb[0].mxu0
  %v589 = vpop.f32.mrb[0].mxu0
  %v590 = vadd.f32 %v90, %v589
  %v591 = vpop.f32.mrb[0].mxu0
  %592 = vmatprep.mubr.bf16.mxu0 0
  %593 = vmatmul.mubr.bf16.gmra.mrb[0].mxu0 %v510
  %v594 = vpop.f32.mrb[0].mxu0
  %v595 = vadd.f32 %v91, %v594
  %v596 = vpop.f32.mrb[0].mxu0
  %v597 = vpop.f32.mrb[0].mxu0
  %v598 = vadd.f32 %v92, %v597
  %v599 = vpop.f32.mrb[0].mxu0
  %600 = vmatprep.mubr.bf16.mxu0 0
  %601 = vmatmul.mubr.bf16.gmra.mrb[0].mxu0 %v507
  %v602 = vpop.f32.mrb[0].mxu0
  %v603 = vadd.f32 %v93, %v602
  %v604 = vpop.f32.mrb[0].mxu0
  %v605 = vpop.f32.mrb[0].mxu0
  %v606 = vadd.f32 %v94, %v605
  %v607 = vpop.f32.mrb[0].mxu0
  %608 = vmatprep.mubr.bf16.mxu0 0
  %609 = vmatmul.mubr.bf16.gmra.mrb[0].mxu0 %v510
  %v610 = vpop.f32.mrb[0].mxu0
  %v611 = vadd.f32 %v95, %v610
  %v612 = vpop.f32.mrb[0].mxu0
  %v613 = vpop.f32.mrb[0].mxu0
  %v614 = vadd.f32 %v96, %v613
  %v615 = vpop.f32.mrb[0].mxu0
  %616 = vmatprep.mubr.bf16.mxu0 0
  %617 = vmatmul.mubr.bf16.gmra.mrb[0].mxu0 %v507
  %v618 = vpop.f32.mrb[0].mxu0
  %v619 = vadd.f32 %v97, %v618
  %v620 = vpop.f32.mrb[0].mxu0
  %v621 = vpop.f32.mrb[0].mxu0
  %v622 = vadd.f32 %v98, %v621
  %v623 = vpop.f32.mrb[0].mxu0
  %624 = vmatprep.mubr.bf16.mxu0 0
  %625 = vmatmul.mubr.bf16.gmra.mrb[0].mxu0 %v510
  %v626 = vpop.f32.mrb[0].mxu0
  %v627 = vadd.f32 %v99, %v626
  %v628 = vpop.f32.mrb[0].mxu0
  %v629 = vpop.f32.mrb[0].mxu0
  %v630 = vadd.f32 %v100, %v629
  %v631 = vpop.f32.mrb[0].mxu0
  %632 = vdwg.mxu0
  %633 = vmax.xlane.f32.xlu0 %v571
  %v634 = vpop.xlane.xlu0 %633
  %635 = vmax.xlane.f32.xlu0 %v574
  %v636 = vpop.xlane.xlu0 %635
  %637 = vmax.xlane.f32.xlu0 %v579
  %v638 = vpop.xlane.xlu0 %637
  %639 = vmax.xlane.f32.xlu0 %v582
  %v640 = vpop.xlane.xlu0 %639
  %641 = vmax.xlane.f32.xlu0 %v587
  %v642 = vpop.xlane.xlu0 %641
  %643 = vmax.xlane.f32.xlu0 %v590
  %v644 = vpop.xlane.xlu0 %643
  %645 = vmax.xlane.f32.xlu0 %v595
  %v646 = vpop.xlane.xlu0 %645
  %647 = vmax.xlane.f32.xlu0 %v598
  %v648 = vpop.xlane.xlu0 %647
  %649 = vmax.xlane.f32.xlu0 %v603
  %v650 = vpop.xlane.xlu0 %649
  %651 = vmax.xlane.f32.xlu0 %v606
  %v652 = vpop.xlane.xlu0 %651
  %653 = vmax.xlane.f32.xlu0 %v611
  %v654 = vpop.xlane.xlu0 %653
  %655 = vmax.xlane.f32.xlu0 %v614
  %v656 = vpop.xlane.xlu0 %655
  %657 = vmax.xlane.f32.xlu0 %v619
  %v658 = vpop.xlane.xlu0 %657
  %659 = vmax.xlane.f32.xlu0 %v622
  %v660 = vpop.xlane.xlu0 %659
  %661 = vmax.xlane.f32.xlu0 %v627
  %v662 = vpop.xlane.xlu0 %661
  %663 = vmax.xlane.f32.xlu0 %v630
  %v664 = vpop.xlane.xlu0 %663
  %v665 = vsub.f32 %v571, %v634
  %v666 = vsub.f32 %v574, %v636
  %v667 = vsub.f32 %v579, %v638
  %v668 = vsub.f32 %v582, %v640
  %v669 = vsub.f32 %v587, %v642
  %v670 = vsub.f32 %v590, %v644
  %v671 = vsub.f32 %v595, %v646
  %v672 = vsub.f32 %v598, %v648
  %v673 = vsub.f32 %v603, %v650
  %v674 = vsub.f32 %v606, %v652
  %v675 = vsub.f32 %v611, %v654
  %v676 = vsub.f32 %v614, %v656
  %v677 = vsub.f32 %v619, %v658
  %v678 = vsub.f32 %v622, %v660
  %v679 = vsub.f32 %v627, %v662
  %v680 = vsub.f32 %v630, %v664
  %v681 = vmul.f32 %v665, 1.442695
  %v682 = vpow.pop %v681
  %v683 = vmul.f32 %v666, 1.442695
  %v684 = vpow.pop %v683
  %v685 = vmul.f32 %v667, 1.442695
  %v686 = vpow.pop %v685
  %v687 = vmul.f32 %v668, 1.442695
  %v688 = vpow.pop %v687
  %v689 = vmul.f32 %v669, 1.442695
  %v690 = vpow.pop %v689
  %v691 = vmul.f32 %v670, 1.442695
  %v692 = vpow.pop %v691
  %v693 = vmul.f32 %v671, 1.442695
  %v694 = vpow.pop %v693
  %v695 = vmul.f32 %v672, 1.442695
  %v696 = vpow.pop %v695
  %v697 = vmul.f32 %v673, 1.442695
  %v698 = vpow.pop %v697
  %v699 = vmul.f32 %v674, 1.442695
  %v700 = vpow.pop %v699
  %v701 = vmul.f32 %v675, 1.442695
  %v702 = vpow.pop %v701
  %v703 = vmul.f32 %v676, 1.442695
  %v704 = vpow.pop %v703
  %v705 = vmul.f32 %v677, 1.442695
  %v706 = vpow.pop %v705
  %v707 = vmul.f32 %v678, 1.442695
  %v708 = vpow.pop %v707
  %v709 = vmul.f32 %v679, 1.442695
  %v710 = vpow.pop %v709
  %v711 = vmul.f32 %v680, 1.442695
  %v712 = vpow.pop %v711
  %713 = vadd.xlane.f32.xlu0 %v682
  %v714 = vpop.xlane.xlu0 %713
  %715 = vadd.xlane.f32.xlu0 %v684
  %v716 = vpop.xlane.xlu0 %715
  %717 = vadd.xlane.f32.xlu0 %v686
  %v718 = vpop.xlane.xlu0 %717
  %719 = vadd.xlane.f32.xlu0 %v688
  %v720 = vpop.xlane.xlu0 %719
  %721 = vadd.xlane.f32.xlu0 %v690
  %v722 = vpop.xlane.xlu0 %721
  %723 = vadd.xlane.f32.xlu0 %v692
  %v724 = vpop.xlane.xlu0 %723
  %725 = vadd.xlane.f32.xlu0 %v694
  %v726 = vpop.xlane.xlu0 %725
  %727 = vadd.xlane.f32.xlu0 %v696
  %v728 = vpop.xlane.xlu0 %727
  %729 = vadd.xlane.f32.xlu0 %v698
  %v730 = vpop.xlane.xlu0 %729
  %731 = vadd.xlane.f32.xlu0 %v700
  %v732 = vpop.xlane.xlu0 %731
  %733 = vadd.xlane.f32.xlu0 %v702
  %v734 = vpop.xlane.xlu0 %733
  %735 = vadd.xlane.f32.xlu0 %v704
  %v736 = vpop.xlane.xlu0 %735
  %737 = vadd.xlane.f32.xlu0 %v706
  %v738 = vpop.xlane.xlu0 %737
  %739 = vadd.xlane.f32.xlu0 %v708
  %v740 = vpop.xlane.xlu0 %739
  %741 = vadd.xlane.f32.xlu0 %v710
  %v742 = vpop.xlane.xlu0 %741
  %743 = vadd.xlane.f32.xlu0 %v712
  %v744 = vpop.xlane.xlu0 %743
  %v745 = vrcp.pop %v714
  %v746 = vrcp.pop %v716
  %v747 = vrcp.pop %v718
  %v748 = vrcp.pop %v720
  %v749 = vrcp.pop %v722
  %v750 = vrcp.pop %v724
  %v751 = vrcp.pop %v726
  %v752 = vrcp.pop %v728
  %v753 = vrcp.pop %v730
  %v754 = vrcp.pop %v732
  %v755 = vrcp.pop %v734
  %v756 = vrcp.pop %v736
  %v757 = vrcp.pop %v738
  %v758 = vrcp.pop %v740
  %v759 = vrcp.pop %v742
  %v760 = vrcp.pop %v744
  %v761 = vmul.f32 %v682, %v745
  %v762 = vmul.f32 %v684, %v746
  %v763 = vmul.f32 %v686, %v747
  %v764 = vmul.f32 %v688, %v748
  %v765 = vmul.f32 %v690, %v749
  %v766 = vmul.f32 %v692, %v750
  %v767 = vmul.f32 %v694, %v751
  %v768 = vmul.f32 %v696, %v752
  %v769 = vmul.f32 %v698, %v753
  %v770 = vmul.f32 %v700, %v754
  %v771 = vmul.f32 %v702, %v755
  %v772 = vmul.f32 %v704, %v756
  %v773 = vmul.f32 %v706, %v757
  %v774 = vmul.f32 %v708, %v758
  %v775 = vmul.f32 %v710, %v759
  %v776 = vmul.f32 %v712, %v760
  %v777 = vpack.c.bf16 %v762, %v761
  %v778 = vpack.c.bf16 %v764, %v763
  %v779 = vpack.c.bf16 %v766, %v765
  %v780 = vpack.c.bf16 %v768, %v767
  %v781 = vpack.c.bf16 %v770, %v769
  %v782 = vpack.c.bf16 %v772, %v771
  %v783 = vpack.c.bf16 %v774, %v773
  %v784 = vpack.c.bf16 %v776, %v775
  %785 = vmatprep.subr.bf16.mxu0 0
  %786 = vmatpush1.bf16.msra.mxu0 %v498
  %787 = vmatprep.subr.bf16.mxu0 0
  %788 = vmatpush1.bf16.msra.mxu0 %v499
  %789 = vmatprep.subr.bf16.mxu0 0
  %790 = vmatpush1.bf16.msra.mxu0 %v500
  %791 = vmatprep.subr.bf16.mxu0 0
  %792 = vmatpush1.bf16.msra.mxu0 %v501
  %793 = vmatprep.subr.bf16.mxu0 0
  %794 = vmatpush1.bf16.msra.mxu0 %v502
  %795 = vmatprep.subr.bf16.mxu0 0
  %796 = vmatpush1.bf16.msra.mxu0 %v503
  %797 = vmatprep.subr.bf16.mxu0 0
  %798 = vmatpush1.bf16.msra.mxu0 %v504
  %799 = vmatprep.subr.bf16.mxu0 0
  %800 = vmatpush1.bf16.msra.mxu0 %v505
  %801 = vmatprep.subr.bf16.mxu0 0
  %802 = vmatpush1.bf16.msra.mxu0 0
  %803 = vmatprep.subr.bf16.mxu0 0
  %804 = vmatpush1.bf16.msra.mxu0 0
  %805 = vmatprep.subr.bf16.mxu0 0
  %806 = vmatpush1.bf16.msra.mxu0 0
  %807 = vmatprep.subr.bf16.mxu0 0
  %808 = vmatpush1.bf16.msra.mxu0 0
  %809 = vmatprep.subr.bf16.mxu0 0
  %810 = vmatpush1.bf16.msra.mxu0 0
  %811 = vmatprep.subr.bf16.mxu0 0
  %812 = vmatpush1.bf16.msra.mxu0 0
  %813 = vmatprep.subr.bf16.mxu0 0
  %814 = vmatpush1.bf16.msra.mxu0 0
  %815 = vmatprep.subr.bf16.mxu0 0
  %816 = vmatpush1.bf16.msra.mxu0 0
  %817 = vmatprep.mubr.bf16.mxu0 0
  %818 = vmatmul.mubr.bf16.gmra.mrb[0].mxu0 %v777
  %v819 = vpop.f32.mrb[0].mxu0
  %v820 = vadd.f32 0.0, %v819
  %v821 = vpop.f32.mrb[0].mxu0
  %v822 = vpop.f32.mrb[0].mxu0
  %v823 = vadd.f32 0.0, %v822
  %v824 = vpop.f32.mrb[0].mxu0
  %825 = vmatprep.mubr.bf16.mxu0 0
  %826 = vmatmul.mubr.bf16.gmra.mrb[0].mxu0 %v778
  %v827 = vpop.f32.mrb[0].mxu0
  %v828 = vadd.f32 0.0, %v827
  %v829 = vpop.f32.mrb[0].mxu0
  %v830 = vpop.f32.mrb[0].mxu0
  %v831 = vadd.f32 0.0, %v830
  %v832 = vpop.f32.mrb[0].mxu0
  %833 = vmatprep.mubr.bf16.mxu0 0
  %834 = vmatmul.mubr.bf16.gmra.mrb[0].mxu0 %v779
  %v835 = vpop.f32.mrb[0].mxu0
  %v836 = vadd.f32 0.0, %v835
  %v837 = vpop.f32.mrb[0].mxu0
  %v838 = vpop.f32.mrb[0].mxu0
  %v839 = vadd.f32 0.0, %v838
  %v840 = vpop.f32.mrb[0].mxu0
  %841 = vmatprep.mubr.bf16.mxu0 0
  %842 = vmatmul.mubr.bf16.gmra.mrb[0].mxu0 %v780
  %v843 = vpop.f32.mrb[0].mxu0
  %v844 = vadd.f32 0.0, %v843
  %v845 = vpop.f32.mrb[0].mxu0
  %v846 = vpop.f32.mrb[0].mxu0
  %v847 = vadd.f32 0.0, %v846
  %v848 = vpop.f32.mrb[0].mxu0
  %849 = vmatprep.mubr.bf16.mxu0 0
  %850 = vmatmul.mubr.bf16.gmra.mrb[0].mxu0 %v781
  %v851 = vpop.f32.mrb[0].mxu0
  %v852 = vadd.f32 0.0, %v851
  %v853 = vpop.f32.mrb[0].mxu0
  %v854 = vpop.f32.mrb[0].mxu0
  %v855 = vadd.f32 0.0, %v854
  %v856 = vpop.f32.mrb[0].mxu0
  %857 = vmatprep.mubr.bf16.mxu0 0
  %858 = vmatmul.mubr.bf16.gmra.mrb[0].mxu0 %v782
  %v859 = vpop.f32.mrb[0].mxu0
  %v860 = vadd.f32 0.0, %v859
  %v861 = vpop.f32.mrb[0].mxu0
  %v862 = vpop.f32.mrb[0].mxu0
  %v863 = vadd.f32 0.0, %v862
  %v864 = vpop.f32.mrb[0].mxu0
  %865 = vmatprep.mubr.bf16.mxu0 0
  %866 = vmatmul.mubr.bf16.gmra.mrb[0].mxu0 %v783
  %v867 = vpop.f32.mrb[0].mxu0
  %v868 = vadd.f32 0.0, %v867
  %v869 = vpop.f32.mrb[0].mxu0
  %v870 = vpop.f32.mrb[0].mxu0
  %v871 = vadd.f32 0.0, %v870
  %v872 = vpop.f32.mrb[0].mxu0
  %873 = vmatprep.mubr.bf16.mxu0 0
  %874 = vmatmul.mubr.bf16.gmra.mrb[0].mxu0 %v784
  %v875 = vpop.f32.mrb[0].mxu0
  %v876 = vadd.f32 0.0, %v875
  %v877 = vpop.f32.mrb[0].mxu0
  %v878 = vpop.f32.mrb[0].mxu0
  %v879 = vadd.f32 0.0, %v878
  %v880 = vpop.f32.mrb[0].mxu0
  %881 = vdwg.mxu0
  %v882 = vadd.f32 %v820, %v836
  %v883 = vadd.f32 %v823, %v839
  %v884 = vadd.f32 %v828, %v844
  %v885 = vadd.f32 %v831, %v847
  %v886 = vadd.f32 %v882, %v852
  %v887 = vadd.f32 %v883, %v855
  %v888 = vadd.f32 %v884, %v860
  %v889 = vadd.f32 %v885, %v863
  %v890 = vadd.f32 %v886, %v868
  %v891 = vadd.f32 %v887, %v871
  %v892 = vadd.f32 %v888, %v876
  %v893 = vadd.f32 %v889, %v879
  %v894 = vpack.c.bf16 %v891, %v890
  %v895 = vpack.c.bf16 %v893, %v892
  %v896 = vld [vmem:[%s11] sm:$0xf]
  %v897 = vld [vmem:[%s11 + $0x4] sm:$0xf]
  %v898 = vld [vmem:[%s11 + $0x8] sm:$0xf]
  %v899 = vld [vmem:[%s11 + $0xc] sm:$0xf]
  %v900 = vld [vmem:[%s12] sm:$0x1]
  %v902 = vlaneseq
  %v903 = vshrl.u32 %v902, 7
  %v904 = vsub.s32 0, %v903
  %v905 = vrot.slane %v900, %v904
  %v911 = vunpack.c.l.b16 %v896
  %v912 = vunpack.c.l.b16 %v897
  %v913 = vunpack.c.l.b16 %v898
  %v914 = vunpack.c.l.b16 %v899
  %v915 = vpack.c.b16 %v912, %v911
  %v916 = vpack.c.b16 %v914, %v913
  %v920 = vsel %vm232, %v894, 0
  %v923 = vsel %vm232, %v895, 0
  %925 = vmatprep.subr.bf16.mxu0 0
  %926 = vmatpush1.bf16.msra.mxu0 %v915
  %927 = vmatprep.subr.bf16.mxu0 0
  %928 = vmatpush1.bf16.msra.mxu0 %v916
  %929 = vmatprep.subr.bf16.mxu0 0
  %930 = vmatpush1.bf16.msra.mxu0 0
  %931 = vmatprep.subr.bf16.mxu0 0
  %932 = vmatpush1.bf16.msra.mxu0 0
  %933 = vmatprep.subr.bf16.mxu0 0
  %934 = vmatpush1.bf16.msra.mxu0 0
  %935 = vmatprep.subr.bf16.mxu0 0
  %936 = vmatpush1.bf16.msra.mxu0 0
  %937 = vmatprep.subr.bf16.mxu0 0
  %938 = vmatpush1.bf16.msra.mxu0 0
  %939 = vmatprep.subr.bf16.mxu0 0
  %940 = vmatpush1.bf16.msra.mxu0 0
  %941 = vmatprep.subr.bf16.mxu0 0
  %942 = vmatpush1.bf16.msra.mxu0 0
  %943 = vmatprep.subr.bf16.mxu0 0
  %944 = vmatpush1.bf16.msra.mxu0 0
  %945 = vmatprep.subr.bf16.mxu0 0
  %946 = vmatpush1.bf16.msra.mxu0 0
  %947 = vmatprep.subr.bf16.mxu0 0
  %948 = vmatpush1.bf16.msra.mxu0 0
  %949 = vmatprep.subr.bf16.mxu0 0
  %950 = vmatpush1.bf16.msra.mxu0 0
  %951 = vmatprep.subr.bf16.mxu0 0
  %952 = vmatpush1.bf16.msra.mxu0 0
  %953 = vmatprep.subr.bf16.mxu0 0
  %954 = vmatpush1.bf16.msra.mxu0 0
  %955 = vmatprep.subr.bf16.mxu0 0
  %956 = vmatpush1.bf16.msra.mxu0 0
  %957 = vmatprep.mubr.bf16.mxu0 0
  %958 = vmatmul.mubr.bf16.gmra.mrb[0].mxu0 %v920
  %v959 = vpop.f32.mrb[0].mxu0
  %v960 = vadd.f32 %v905, %v959
  %v961 = vpop.f32.mrb[0].mxu0
  %v962 = vpop.f32.mrb[0].mxu0
  %v963 = vadd.f32 %v905, %v962
  %v964 = vpop.f32.mrb[0].mxu0
  %965 = vmatprep.mubr.bf16.mxu0 0
  %966 = vmatmul.mubr.bf16.gmra.mrb[0].mxu0 %v923
  %v967 = vpop.f32.mrb[0].mxu0
  %v968 = vadd.f32 %v905, %v967
  %v969 = vpop.f32.mrb[0].mxu0
  %v970 = vpop.f32.mrb[0].mxu0
  %v971 = vadd.f32 %v905, %v970
  %v972 = vpop.f32.mrb[0].mxu0
  %973 = vdwg.mxu0
  %v974 = vadd.f32 %v193, %v960
  %v975 = vadd.f32 %v196, %v963
  %v976 = vadd.f32 %v201, %v968
  %v977 = vadd.f32 %v204, %v971
  %v978 = vsel %vm232, %v974, 0.0
  %979 = vadd.xlane.f32.xlu0 %v978
  %v980 = vpop.xlane.xlu0 %979
  %v981 = vsel %vm232, %v975, 0.0
  %982 = vadd.xlane.f32.xlu0 %v981
  %v983 = vpop.xlane.xlu0 %982
  %v984 = vsel %vm232, %v976, 0.0
  %985 = vadd.xlane.f32.xlu0 %v984
  %v986 = vpop.xlane.xlu0 %985
  %v987 = vsel %vm232, %v977, 0.0
  %988 = vadd.xlane.f32.xlu0 %v987
  %v989 = vpop.xlane.xlu0 %988
  %v990 = vrcp.pop 32.0
  %v991 = vmul.f32 %v980, %v990
  %v992 = vmul.f32 %v983, %v990
  %v993 = vmul.f32 %v986, %v990
  %v994 = vmul.f32 %v989, %v990
  %v995 = vsub.f32 %v974, %v991
  %v996 = vsub.f32 %v975, %v992
  %v997 = vsub.f32 %v976, %v993
  %v998 = vsub.f32 %v977, %v994
  %v999 = vmul.f32 %v995, %v995
  %v1000 = vmul.f32 %v996, %v996
  %v1001 = vmul.f32 %v997, %v997
  %v1002 = vmul.f32 %v998, %v998
  %v1003 = vsel %vm232, %v999, 0.0
  %1004 = vadd.xlane.f32.xlu0 %v1003
  %v1005 = vpop.xlane.xlu0 %1004
  %v1006 = vsel %vm232, %v1000, 0.0
  %1007 = vadd.xlane.f32.xlu0 %v1006
  %v1008 = vpop.xlane.xlu0 %1007
  %v1009 = vsel %vm232, %v1001, 0.0
  %1010 = vadd.xlane.f32.xlu0 %v1009
  %v1011 = vpop.xlane.xlu0 %1010
  %v1012 = vsel %vm232, %v1002, 0.0
  %1013 = vadd.xlane.f32.xlu0 %v1012
  %v1014 = vpop.xlane.xlu0 %1013
  %v1015 = vmul.f32 %v1005, %v990
  %v1016 = vmul.f32 %v1008, %v990
  %v1017 = vmul.f32 %v1011, %v990
  %v1018 = vmul.f32 %v1014, %v990
  %v1019 = vadd.f32 %v1015, 1e-05
  %v1020 = vadd.f32 %v1016, 1e-05
  %v1021 = vadd.f32 %v1017, 1e-05
  %v1022 = vadd.f32 %v1018, 1e-05
  %v1023 = vrsqrt.pop %v1019
  %v1024 = vrsqrt.pop %v1020
  %v1025 = vrsqrt.pop %v1021
  %v1026 = vrsqrt.pop %v1022
  %v1027 = vmul.f32 %v995, %v1023
  %v1028 = vmul.f32 %v996, %v1024
  %v1029 = vmul.f32 %v997, %v1025
  %v1030 = vmul.f32 %v998, %v1026
  %v1031 = vld [vmem:[%s13] sm:$0x1]
  %v1033 = vlaneseq
  %v1034 = vshrl.u32 %v1033, 7
  %v1035 = vsub.s32 0, %v1034
  %v1036 = vrot.slane %v1031, %v1035
  %v1038 = vmul.f32 %v1027, %v1036
  %v1039 = vmul.f32 %v1028, %v1036
  %v1040 = vmul.f32 %v1029, %v1036
  %v1041 = vmul.f32 %v1030, %v1036
  %v1042 = vld [vmem:[%s14] sm:$0x1]
  %v1044 = vlaneseq
  %v1045 = vshrl.u32 %v1044, 7
  %v1046 = vsub.s32 0, %v1045
  %v1047 = vrot.slane %v1042, %v1046
  %v1049 = vadd.f32 %v1038, %v1047
  %v1050 = vadd.f32 %v1039, %v1047
  %v1051 = vadd.f32 %v1040, %v1047
  %v1052 = vadd.f32 %v1041, %v1047
  %v1053 = vpack.c.bf16 %v1050, %v1049
  %v1054 = vpack.c.bf16 %v1052, %v1051
  %v1055 = vld [vmem:[%s15] sm:$0xff]
  %v1056 = vld [vmem:[%s15 + $0x20] sm:$0xff]
  %v1057 = vld [vmem:[%s15 + $0x40] sm:$0xff]
  %v1058 = vld [vmem:[%s15 + $0x60] sm:$0xff]
  %v1059 = vld [vmem:[%s16] sm:$0x3]
  %v1061 = vlaneseq
  %v1062 = vshrl.u32 %v1061, 7
  %v1063 = vsub.s32 0, %v1062
  %v1064 = vrot.slane %v1059, %v1063
  %v1065 = vlaneseq
  %v1066 = vshrl.u32 %v1065, 7
  %v1067 = vsub.s32 1, %v1066
  %v1068 = vrot.slane %v1059, %v1067
  %v1075 = vunpack.c.l.b16 %v1055
  %v1076 = vunpack.c.h.b16 %v1055
  %v1077 = vunpack.c.l.b16 %v1056
  %v1078 = vunpack.c.h.b16 %v1056
  %v1079 = vunpack.c.l.b16 %v1057
  %v1080 = vunpack.c.h.b16 %v1057
  %v1081 = vunpack.c.l.b16 %v1058
  %v1082 = vunpack.c.h.b16 %v1058
  %v1083 = vpack.c.b16 %v1077, %v1075
  %v1084 = vpack.c.b16 %v1078, %v1076
  %v1085 = vpack.c.b16 %v1081, %v1079
  %v1086 = vpack.c.b16 %v1082, %v1080
  %v1092 = vsel %vm232, %v1053, 0
  %v1095 = vsel %vm232, %v1054, 0
  %1097 = vmatprep.subr.bf16.mxu0 %v1084
  %1098 = vmatpush1.bf16.msra.mxu0 %v1083
  %1099 = vmatprep.subr.bf16.mxu0 %v1086
  %1100 = vmatpush1.bf16.msra.mxu0 %v1085
  %1101 = vmatprep.subr.bf16.mxu0 0
  %1102 = vmatpush1.bf16.msra.mxu0 0
  %1103 = vmatprep.subr.bf16.mxu0 0
  %1104 = vmatpush1.bf16.msra.mxu0 0
  %1105 = vmatprep.subr.bf16.mxu0 0
  %1106 = vmatpush1.bf16.msra.mxu0 0
  %1107 = vmatprep.subr.bf16.mxu0 0
  %1108 = vmatpush1.bf16.msra.mxu0 0
  %1109 = vmatprep.subr.bf16.mxu0 0
  %1110 = vmatpush1.bf16.msra.mxu0 0
  %1111 = vmatprep.subr.bf16.mxu0 0
  %1112 = vmatpush1.bf16.msra.mxu0 0
  %1113 = vmatprep.subr.bf16.mxu0 0
  %1114 = vmatpush1.bf16.msra.mxu0 0
  %1115 = vmatprep.subr.bf16.mxu0 0
  %1116 = vmatpush1.bf16.msra.mxu0 0
  %1117 = vmatprep.subr.bf16.mxu0 0
  %1118 = vmatpush1.bf16.msra.mxu0 0
  %1119 = vmatprep.subr.bf16.mxu0 0
  %1120 = vmatpush1.bf16.msra.mxu0 0
  %1121 = vmatprep.subr.bf16.mxu0 0
  %1122 = vmatpush1.bf16.msra.mxu0 0
  %1123 = vmatprep.subr.bf16.mxu0 0
  %1124 = vmatpush1.bf16.msra.mxu0 0
  %1125 = vmatprep.subr.bf16.mxu0 0
  %1126 = vmatpush1.bf16.msra.mxu0 0
  %1127 = vmatprep.subr.bf16.mxu0 0
  %1128 = vmatpush1.bf16.msra.mxu0 0
  %1129 = vmatprep.mubr.bf16.mxu0 0
  %1130 = vmatmul.mubr.bf16.gmra.mrb[0].mxu0 %v1092
  %v1131 = vpop.f32.mrb[0].mxu0
  %v1132 = vadd.f32 %v1064, %v1131
  %v1133 = vpop.f32.mrb[0].mxu0
  %v1134 = vadd.f32 %v1068, %v1133
  %v1135 = vpop.f32.mrb[0].mxu0
  %v1136 = vadd.f32 %v1064, %v1135
  %v1137 = vpop.f32.mrb[0].mxu0
  %v1138 = vadd.f32 %v1068, %v1137
  %1139 = vmatprep.mubr.bf16.mxu0 0
  %1140 = vmatmul.mubr.bf16.gmra.mrb[0].mxu0 %v1095
  %v1141 = vpop.f32.mrb[0].mxu0
  %v1142 = vadd.f32 %v1064, %v1141
  %v1143 = vpop.f32.mrb[0].mxu0
  %v1144 = vadd.f32 %v1068, %v1143
  %v1145 = vpop.f32.mrb[0].mxu0
  %v1146 = vadd.f32 %v1064, %v1145
  %v1147 = vpop.f32.mrb[0].mxu0
  %v1148 = vadd.f32 %v1068, %v1147
  %1149 = vdwg.mxu0
  %v1150 = vmax.f32 %v1132, 0.0
  %v1151 = vmax.f32 %v1134, 0.0
  %v1152 = vmax.f32 %v1136, 0.0
  %v1153 = vmax.f32 %v1138, 0.0
  %v1154 = vmax.f32 %v1142, 0.0
  %v1155 = vmax.f32 %v1144, 0.0
  %v1156 = vmax.f32 %v1146, 0.0
  %v1157 = vmax.f32 %v1148, 0.0
  %v1158 = vpack.c.bf16 %v1152, %v1150
  %v1159 = vpack.c.bf16 %v1153, %v1151
  %v1160 = vpack.c.bf16 %v1156, %v1154
  %v1161 = vpack.c.bf16 %v1157, %v1155
  %v1162 = vld [vmem:[%s17] sm:$0xf]
  %v1163 = vld [vmem:[%s17 + $0x4] sm:$0xf]
  %v1164 = vld [vmem:[%s17 + $0x8] sm:$0xf]
  %v1165 = vld [vmem:[%s17 + $0xc] sm:$0xf]
  %v1166 = vld [vmem:[%s17 + $0x10] sm:$0xf]
  %v1167 = vld [vmem:[%s17 + $0x14] sm:$0xf]
  %v1168 = vld [vmem:[%s17 + $0x18] sm:$0xf]
  %v1169 = vld [vmem:[%s17 + $0x1c] sm:$0xf]
  %v1170 = vld [vmem:[%s17 + $0x20] sm:$0xf]
  %v1171 = vld [vmem:[%s17 + $0x24] sm:$0xf]
  %v1172 = vld [vmem:[%s17 + $0x28] sm:$0xf]
  %v1173 = vld [vmem:[%s17 + $0x2c] sm:$0xf]
  %v1174 = vld [vmem:[%s17 + $0x30] sm:$0xf]
  %v1175 = vld [vmem:[%s17 + $0x34] sm:$0xf]
  %v1176 = vld [vmem:[%s17 + $0x38] sm:$0xf]
  %v1177 = vld [vmem:[%s17 + $0x3c] sm:$0xf]
  %v1178 = vld [vmem:[%s17 + $0x40] sm:$0xf]
  %v1179 = vld [vmem:[%s17 + $0x44] sm:$0xf]
  %v1180 = vld [vmem:[%s17 + $0x48] sm:$0xf]
  %v1181 = vld [vmem:[%s17 + $0x4c] sm:$0xf]
  %v1182 = vld [vmem:[%s17 + $0x50] sm:$0xf]
  %v1183 = vld [vmem:[%s17 + $0x54] sm:$0xf]
  %v1184 = vld [vmem:[%s17 + $0x58] sm:$0xf]
  %v1185 = vld [vmem:[%s17 + $0x5c] sm:$0xf]
  %v1186 = vld [vmem:[%s17 + $0x60] sm:$0xf]
  %v1187 = vld [vmem:[%s17 + $0x64] sm:$0xf]
  %v1188 = vld [vmem:[%s17 + $0x68] sm:$0xf]
  %v1189 = vld [vmem:[%s17 + $0x6c] sm:$0xf]
  %v1190 = vld [vmem:[%s17 + $0x70] sm:$0xf]
  %v1191 = vld [vmem:[%s17 + $0x74] sm:$0xf]
  %v1192 = vld [vmem:[%s17 + $0x78] sm:$0xf]
  %v1193 = vld [vmem:[%s17 + $0x7c] sm:$0xf]
  %v1194 = vld [vmem:[%s15 + $0x8] sm:$0xff]
  %v1195 = vld [vmem:[%s15 + $0x28] sm:$0xff]
  %v1196 = vld [vmem:[%s15 + $0x48] sm:$0xff]
  %v1197 = vld [vmem:[%s15 + $0x68] sm:$0xff]
  %v1198 = vld [vmem:[%s16 + $0x2] sm:$0x3]
  %v1200 = vlaneseq
  %v1201 = vshrl.u32 %v1200, 7
  %v1202 = vsub.s32 0, %v1201
  %v1203 = vrot.slane %v1198, %v1202
  %v1204 = vlaneseq
  %v1205 = vshrl.u32 %v1204, 7
  %v1206 = vsub.s32 1, %v1205
  %v1207 = vrot.slane %v1198, %v1206
  %v1214 = vunpack.c.l.b16 %v1194
  %v1215 = vunpack.c.h.b16 %v1194
  %v1216 = vunpack.c.l.b16 %v1195
  %v1217 = vunpack.c.h.b16 %v1195
  %v1218 = vunpack.c.l.b16 %v1196
  %v1219 = vunpack.c.h.b16 %v1196
  %v1220 = vunpack.c.l.b16 %v1197
  %v1221 = vunpack.c.h.b16 %v1197
  %v1222 = vpack.c.b16 %v1216, %v1214
  %v1223 = vpack.c.b16 %v1217, %v1215
  %v1224 = vpack.c.b16 %v1220, %v1218
  %v1225 = vpack.c.b16 %v1221, %v1219
  %1230 = vmatprep.subr.bf16.mxu0 %v1223
  %1231 = vmatpush1.bf16.msra.mxu0 %v1222
  %1232 = vmatprep.subr.bf16.mxu0 %v1225
  %1233 = vmatpush1.bf16.msra.mxu0 %v1224
  %1234 = vmatprep.subr.bf16.mxu0 0
  %1235 = vmatpush1.bf16.msra.mxu0 0
  %1236 = vmatprep.subr.bf16.mxu0 0
  %1237 = vmatpush1.bf16.msra.mxu0 0
  %1238 = vmatprep.subr.bf16.mxu0 0
  %1239 = vmatpush1.bf16.msra.mxu0 0
  %1240 = vmatprep.subr.bf16.mxu0 0
  %1241 = vmatpush1.bf16.msra.mxu0 0
  %1242 = vmatprep.subr.bf16.mxu0 0
  %1243 = vmatpush1.bf16.msra.mxu0 0
  %1244 = vmatprep.subr.bf16.mxu0 0
  %1245 = vmatpush1.bf16.msra.mxu0 0
  %1246 = vmatprep.subr.bf16.mxu0 0
  %1247 = vmatpush1.bf16.msra.mxu0 0
  %1248 = vmatprep.subr.bf16.mxu0 0
  %1249 = vmatpush1.bf16.msra.mxu0 0
  %1250 = vmatprep.subr.bf16.mxu0 0
  %1251 = vmatpush1.bf16.msra.mxu0 0
  %1252 = vmatprep.subr.bf16.mxu0 0
  %1253 = vmatpush1.bf16.msra.mxu0 0
  %1254 = vmatprep.subr.bf16.mxu0 0
  %1255 = vmatpush1.bf16.msra.mxu0 0
  %1256 = vmatprep.subr.bf16.mxu0 0
  %1257 = vmatpush1.bf16.msra.mxu0 0
  %1258 = vmatprep.subr.bf16.mxu0 0
  %1259 = vmatpush1.bf16.msra.mxu0 0
  %1260 = vmatprep.subr.bf16.mxu0 0
  %1261 = vmatpush1.bf16.msra.mxu0 0
  %1262 = vmatprep.mubr.bf16.mxu0 0
  %1263 = vmatmul.mubr.bf16.gmra.mrb[0].mxu0 %v1092
  %v1264 = vpop.f32.mrb[0].mxu0
  %v1265 = vadd.f32 %v1203, %v1264
  %v1266 = vpop.f32.mrb[0].mxu0
  %v1267 = vadd.f32 %v1207, %v1266
  %v1268 = vpop.f32.mrb[0].mxu0
  %v1269 = vadd.f32 %v1203, %v1268
  %v1270 = vpop.f32.mrb[0].mxu0
  %v1271 = vadd.f32 %v1207, %v1270
  %1272 = vmatprep.mubr.bf16.mxu0 0
  %1273 = vmatmul.mubr.bf16.gmra.mrb[0].mxu0 %v1095
  %v1274 = vpop.f32.mrb[0].mxu0
  %v1275 = vadd.f32 %v1203, %v1274
  %v1276 = vpop.f32.mrb[0].mxu0
  %v1277 = vadd.f32 %v1207, %v1276
  %v1278 = vpop.f32.mrb[0].mxu0
  %v1279 = vadd.f32 %v1203, %v1278
  %v1280 = vpop.f32.mrb[0].mxu0
  %v1281 = vadd.f32 %v1207, %v1280
  %1282 = vdwg.mxu0
  %v1283 = vmax.f32 %v1265, 0.0
  %v1284 = vmax.f32 %v1267, 0.0
  %v1285 = vmax.f32 %v1269, 0.0
  %v1286 = vmax.f32 %v1271, 0.0
  %v1287 = vmax.f32 %v1275, 0.0
  %v1288 = vmax.f32 %v1277, 0.0
  %v1289 = vmax.f32 %v1279, 0.0
  %v1290 = vmax.f32 %v1281, 0.0
  %v1291 = vpack.c.bf16 %v1285, %v1283
  %v1292 = vpack.c.bf16 %v1286, %v1284
  %v1293 = vpack.c.bf16 %v1289, %v1287
  %v1294 = vpack.c.bf16 %v1290, %v1288
  %v1295 = vld [vmem:[%s17 + $0x80] sm:$0xf]
  %v1296 = vld [vmem:[%s17 + $0x84] sm:$0xf]
  %v1297 = vld [vmem:[%s17 + $0x88] sm:$0xf]
  %v1298 = vld [vmem:[%s17 + $0x8c] sm:$0xf]
  %v1299 = vld [vmem:[%s17 + $0x90] sm:$0xf]
  %v1300 = vld [vmem:[%s17 + $0x94] sm:$0xf]
  %v1301 = vld [vmem:[%s17 + $0x98] sm:$0xf]
  %v1302 = vld [vmem:[%s17 + $0x9c] sm:$0xf]
  %v1303 = vld [vmem:[%s17 + $0xa0] sm:$0xf]
  %v1304 = vld [vmem:[%s17 + $0xa4] sm:$0xf]
  %v1305 = vld [vmem:[%s17 + $0xa8] sm:$0xf]
  %v1306 = vld [vmem:[%s17 + $0xac] sm:$0xf]
  %v1307 = vld [vmem:[%s17 + $0xb0] sm:$0xf]
  %v1308 = vld [vmem:[%s17 + $0xb4] sm:$0xf]
  %v1309 = vld [vmem:[%s17 + $0xb8] sm:$0xf]
  %v1310 = vld [vmem:[%s17 + $0xbc] sm:$0xf]
  %v1311 = vld [vmem:[%s17 + $0xc0] sm:$0xf]
  %v1312 = vld [vmem:[%s17 + $0xc4] sm:$0xf]
  %v1313 = vld [vmem:[%s17 + $0xc8] sm:$0xf]
  %v1314 = vld [vmem:[%s17 + $0xcc] sm:$0xf]
  %v1315 = vld [vmem:[%s17 + $0xd0] sm:$0xf]
  %v1316 = vld [vmem:[%s17 + $0xd4] sm:$0xf]
  %v1317 = vld [vmem:[%s17 + $0xd8] sm:$0xf]
  %v1318 = vld [vmem:[%s17 + $0xdc] sm:$0xf]
  %v1319 = vld [vmem:[%s17 + $0xe0] sm:$0xf]
  %v1320 = vld [vmem:[%s17 + $0xe4] sm:$0xf]
  %v1321 = vld [vmem:[%s17 + $0xe8] sm:$0xf]
  %v1322 = vld [vmem:[%s17 + $0xec] sm:$0xf]
  %v1323 = vld [vmem:[%s17 + $0xf0] sm:$0xf]
  %v1324 = vld [vmem:[%s17 + $0xf4] sm:$0xf]
  %v1325 = vld [vmem:[%s17 + $0xf8] sm:$0xf]
  %v1326 = vld [vmem:[%s17 + $0xfc] sm:$0xf]
  %v1359 = vunpack.c.l.b16 %v1295
  %v1360 = vunpack.c.l.b16 %v1296
  %v1361 = vunpack.c.l.b16 %v1297
  %v1362 = vunpack.c.l.b16 %v1298
  %v1363 = vunpack.c.l.b16 %v1299
  %v1364 = vunpack.c.l.b16 %v1300
  %v1365 = vunpack.c.l.b16 %v1301
  %v1366 = vunpack.c.l.b16 %v1302
  %v1367 = vunpack.c.l.b16 %v1303
  %v1368 = vunpack.c.l.b16 %v1304
  %v1369 = vunpack.c.l.b16 %v1305
  %v1370 = vunpack.c.l.b16 %v1306
  %v1371 = vunpack.c.l.b16 %v1307
  %v1372 = vunpack.c.l.b16 %v1308
  %v1373 = vunpack.c.l.b16 %v1309
  %v1374 = vunpack.c.l.b16 %v1310
  %v1375 = vunpack.c.l.b16 %v1311
  %v1376 = vunpack.c.l.b16 %v1312
  %v1377 = vunpack.c.l.b16 %v1313
  %v1378 = vunpack.c.l.b16 %v1314
  %v1379 = vunpack.c.l.b16 %v1315
  %v1380 = vunpack.c.l.b16 %v1316
  %v1381 = vunpack.c.l.b16 %v1317
  %v1382 = vunpack.c.l.b16 %v1318
  %v1383 = vunpack.c.l.b16 %v1319
  %v1384 = vunpack.c.l.b16 %v1320
  %v1385 = vunpack.c.l.b16 %v1321
  %v1386 = vunpack.c.l.b16 %v1322
  %v1387 = vunpack.c.l.b16 %v1323
  %v1388 = vunpack.c.l.b16 %v1324
  %v1389 = vunpack.c.l.b16 %v1325
  %v1390 = vunpack.c.l.b16 %v1326
  %v1391 = vpack.c.b16 %v1360, %v1359
  %v1392 = vpack.c.b16 %v1362, %v1361
  %v1393 = vpack.c.b16 %v1364, %v1363
  %v1394 = vpack.c.b16 %v1366, %v1365
  %v1395 = vpack.c.b16 %v1368, %v1367
  %v1396 = vpack.c.b16 %v1370, %v1369
  %v1397 = vpack.c.b16 %v1372, %v1371
  %v1398 = vpack.c.b16 %v1374, %v1373
  %v1399 = vpack.c.b16 %v1376, %v1375
  %v1400 = vpack.c.b16 %v1378, %v1377
  %v1401 = vpack.c.b16 %v1380, %v1379
  %v1402 = vpack.c.b16 %v1382, %v1381
  %v1403 = vpack.c.b16 %v1384, %v1383
  %v1404 = vpack.c.b16 %v1386, %v1385
  %v1405 = vpack.c.b16 %v1388, %v1387
  %v1406 = vpack.c.b16 %v1390, %v1389
  %1423 = vmatprep.subr.bf16.mxu0 0
  %1424 = vmatpush1.bf16.msra.mxu0 %v1391
  %1425 = vmatprep.subr.bf16.mxu0 0
  %1426 = vmatpush1.bf16.msra.mxu0 %v1392
  %1427 = vmatprep.subr.bf16.mxu0 0
  %1428 = vmatpush1.bf16.msra.mxu0 %v1393
  %1429 = vmatprep.subr.bf16.mxu0 0
  %1430 = vmatpush1.bf16.msra.mxu0 %v1394
  %1431 = vmatprep.subr.bf16.mxu0 0
  %1432 = vmatpush1.bf16.msra.mxu0 %v1395
  %1433 = vmatprep.subr.bf16.mxu0 0
  %1434 = vmatpush1.bf16.msra.mxu0 %v1396
  %1435 = vmatprep.subr.bf16.mxu0 0
  %1436 = vmatpush1.bf16.msra.mxu0 %v1397
  %1437 = vmatprep.subr.bf16.mxu0 0
  %1438 = vmatpush1.bf16.msra.mxu0 %v1398
  %1439 = vmatprep.subr.bf16.mxu0 0
  %1440 = vmatpush1.bf16.msra.mxu0 %v1399
  %1441 = vmatprep.subr.bf16.mxu0 0
  %1442 = vmatpush1.bf16.msra.mxu0 %v1400
  %1443 = vmatprep.subr.bf16.mxu0 0
  %1444 = vmatpush1.bf16.msra.mxu0 %v1401
  %1445 = vmatprep.subr.bf16.mxu0 0
  %1446 = vmatpush1.bf16.msra.mxu0 %v1402
  %1447 = vmatprep.subr.bf16.mxu0 0
  %1448 = vmatpush1.bf16.msra.mxu0 %v1403
  %1449 = vmatprep.subr.bf16.mxu0 0
  %1450 = vmatpush1.bf16.msra.mxu0 %v1404
  %1451 = vmatprep.subr.bf16.mxu0 0
  %1452 = vmatpush1.bf16.msra.mxu0 %v1405
  %1453 = vmatprep.subr.bf16.mxu0 0
  %1454 = vmatpush1.bf16.msra.mxu0 %v1406
  %1455 = vmatprep.mubr.bf16.mxu0 %v1292
  %1456 = vmatmul.mubr.bf16.gmra.mrb[0].mxu0 %v1291
  %v1457 = vpop.f32.mrb[0].mxu0
  %v1458 = vadd.f32 0.0, %v1457
  %v1459 = vpop.f32.mrb[0].mxu0
  %v1460 = vpop.f32.mrb[0].mxu0
  %v1461 = vadd.f32 0.0, %v1460
  %v1462 = vpop.f32.mrb[0].mxu0
  %1463 = vmatprep.mubr.bf16.mxu0 %v1294
  %1464 = vmatmul.mubr.bf16.gmra.mrb[0].mxu0 %v1293
  %v1465 = vpop.f32.mrb[0].mxu0
  %v1466 = vadd.f32 0.0, %v1465
  %v1467 = vpop.f32.mrb[0].mxu0
  %v1468 = vpop.f32.mrb[0].mxu0
  %v1469 = vadd.f32 0.0, %v1468
  %v1470 = vpop.f32.mrb[0].mxu0
  %1471 = vdwg.mxu0
  %v1504 = vunpack.c.l.b16 %v1162
  %v1505 = vunpack.c.l.b16 %v1163
  %v1506 = vunpack.c.l.b16 %v1164
  %v1507 = vunpack.c.l.b16 %v1165
  %v1508 = vunpack.c.l.b16 %v1166
  %v1509 = vunpack.c.l.b16 %v1167
  %v1510 = vunpack.c.l.b16 %v1168
  %v1511 = vunpack.c.l.b16 %v1169
  %v1512 = vunpack.c.l.b16 %v1170
  %v1513 = vunpack.c.l.b16 %v1171
  %v1514 = vunpack.c.l.b16 %v1172
  %v1515 = vunpack.c.l.b16 %v1173
  %v1516 = vunpack.c.l.b16 %v1174
  %v1517 = vunpack.c.l.b16 %v1175
  %v1518 = vunpack.c.l.b16 %v1176
  %v1519 = vunpack.c.l.b16 %v1177
  %v1520 = vunpack.c.l.b16 %v1178
  %v1521 = vunpack.c.l.b16 %v1179
  %v1522 = vunpack.c.l.b16 %v1180
  %v1523 = vunpack.c.l.b16 %v1181
  %v1524 = vunpack.c.l.b16 %v1182
  %v1525 = vunpack.c.l.b16 %v1183
  %v1526 = vunpack.c.l.b16 %v1184
  %v1527 = vunpack.c.l.b16 %v1185
  %v1528 = vunpack.c.l.b16 %v1186
  %v1529 = vunpack.c.l.b16 %v1187
  %v1530 = vunpack.c.l.b16 %v1188
  %v1531 = vunpack.c.l.b16 %v1189
  %v1532 = vunpack.c.l.b16 %v1190
  %v1533 = vunpack.c.l.b16 %v1191
  %v1534 = vunpack.c.l.b16 %v1192
  %v1535 = vunpack.c.l.b16 %v1193
  %v1536 = vpack.c.b16 %v1505, %v1504
  %v1537 = vpack.c.b16 %v1507, %v1506
  %v1538 = vpack.c.b16 %v1509, %v1508
  %v1539 = vpack.c.b16 %v1511, %v1510
  %v1540 = vpack.c.b16 %v1513, %v1512
  %v1541 = vpack.c.b16 %v1515, %v1514
  %v1542 = vpack.c.b16 %v1517, %v1516
  %v1543 = vpack.c.b16 %v1519, %v1518
  %v1544 = vpack.c.b16 %v1521, %v1520
  %v1545 = vpack.c.b16 %v1523, %v1522
  %v1546 = vpack.c.b16 %v1525, %v1524
  %v1547 = vpack.c.b16 %v1527, %v1526
  %v1548 = vpack.c.b16 %v1529, %v1528
  %v1549 = vpack.c.b16 %v1531, %v1530
  %v1550 = vpack.c.b16 %v1533, %v1532
  %v1551 = vpack.c.b16 %v1535, %v1534
  %1568 = vmatprep.subr.bf16.mxu0 0
  %1569 = vmatpush1.bf16.msra.mxu0 %v1536
  %1570 = vmatprep.subr.bf16.mxu0 0
  %1571 = vmatpush1.bf16.msra.mxu0 %v1537
  %1572 = vmatprep.subr.bf16.mxu0 0
  %1573 = vmatpush1.bf16.msra.mxu0 %v1538
  %1574 = vmatprep.subr.bf16.mxu0 0
  %1575 = vmatpush1.bf16.msra.mxu0 %v1539
  %1576 = vmatprep.subr.bf16.mxu0 0
  %1577 = vmatpush1.bf16.msra.mxu0 %v1540
  %1578 = vmatprep.subr.bf16.mxu0 0
  %1579 = vmatpush1.bf16.msra.mxu0 %v1541
  %1580 = vmatprep.subr.bf16.mxu0 0
  %1581 = vmatpush1.bf16.msra.mxu0 %v1542
  %1582 = vmatprep.subr.bf16.mxu0 0
  %1583 = vmatpush1.bf16.msra.mxu0 %v1543
  %1584 = vmatprep.subr.bf16.mxu0 0
  %1585 = vmatpush1.bf16.msra.mxu0 %v1544
  %1586 = vmatprep.subr.bf16.mxu0 0
  %1587 = vmatpush1.bf16.msra.mxu0 %v1545
  %1588 = vmatprep.subr.bf16.mxu0 0
  %1589 = vmatpush1.bf16.msra.mxu0 %v1546
  %1590 = vmatprep.subr.bf16.mxu0 0
  %1591 = vmatpush1.bf16.msra.mxu0 %v1547
  %1592 = vmatprep.subr.bf16.mxu0 0
  %1593 = vmatpush1.bf16.msra.mxu0 %v1548
  %1594 = vmatprep.subr.bf16.mxu0 0
  %1595 = vmatpush1.bf16.msra.mxu0 %v1549
  %1596 = vmatprep.subr.bf16.mxu0 0
  %1597 = vmatpush1.bf16.msra.mxu0 %v1550
  %1598 = vmatprep.subr.bf16.mxu0 0
  %1599 = vmatpush1.bf16.msra.mxu0 %v1551
  %1600 = vmatprep.mubr.bf16.mxu0 %v1159
  %1601 = vmatmul.mubr.bf16.gmra.mrb[0].mxu0 %v1158
  %v1602 = vpop.f32.mrb[0].mxu0
  %v1603 = vadd.f32 %v1458, %v1602
  %v1604 = vpop.f32.mrb[0].mxu0
  %v1605 = vpop.f32.mrb[0].mxu0
  %v1606 = vadd.f32 %v1461, %v1605
  %v1607 = vpop.f32.mrb[0].mxu0
  %1608 = vmatprep.mubr.bf16.mxu0 %v1161
  %1609 = vmatmul.mubr.bf16.gmra.mrb[0].mxu0 %v1160
  %v1610 = vpop.f32.mrb[0].mxu0
  %v1611 = vadd.f32 %v1466, %v1610
  %v1612 = vpop.f32.mrb[0].mxu0
  %v1613 = vpop.f32.mrb[0].mxu0
  %v1614 = vadd.f32 %v1469, %v1613
  %v1615 = vpop.f32.mrb[0].mxu0
  %1616 = vdwg.mxu0
  %v1617 = vld [vmem:[%s15 + $0x10] sm:$0xff]
  %v1618 = vld [vmem:[%s15 + $0x30] sm:$0xff]
  %v1619 = vld [vmem:[%s15 + $0x50] sm:$0xff]
  %v1620 = vld [vmem:[%s15 + $0x70] sm:$0xff]
  %v1621 = vld [vmem:[%s16 + $0x4] sm:$0x3]
  %v1623 = vlaneseq
  %v1624 = vshrl.u32 %v1623, 7
  %v1625 = vsub.s32 0, %v1624
  %v1626 = vrot.slane %v1621, %v1625
  %v1627 = vlaneseq
  %v1628 = vshrl.u32 %v1627, 7
  %v1629 = vsub.s32 1, %v1628
  %v1630 = vrot.slane %v1621, %v1629
  %v1637 = vunpack.c.l.b16 %v1617
  %v1638 = vunpack.c.h.b16 %v1617
  %v1639 = vunpack.c.l.b16 %v1618
  %v1640 = vunpack.c.h.b16 %v1618
  %v1641 = vunpack.c.l.b16 %v1619
  %v1642 = vunpack.c.h.b16 %v1619
  %v1643 = vunpack.c.l.b16 %v1620
  %v1644 = vunpack.c.h.b16 %v1620
  %v1645 = vpack.c.b16 %v1639, %v1637
  %v1646 = vpack.c.b16 %v1640, %v1638
  %v1647 = vpack.c.b16 %v1643, %v1641
  %v1648 = vpack.c.b16 %v1644, %v1642
  %1653 = vmatprep.subr.bf16.mxu0 %v1646
  %1654 = vmatpush1.bf16.msra.mxu0 %v1645
  %1655 = vmatprep.subr.bf16.mxu0 %v1648
  %1656 = vmatpush1.bf16.msra.mxu0 %v1647
  %1657 = vmatprep.subr.bf16.mxu0 0
  %1658 = vmatpush1.bf16.msra.mxu0 0
  %1659 = vmatprep.subr.bf16.mxu0 0
  %1660 = vmatpush1.bf16.msra.mxu0 0
  %1661 = vmatprep.subr.bf16.mxu0 0
  %1662 = vmatpush1.bf16.msra.mxu0 0
  %1663 = vmatprep.subr.bf16.mxu0 0
  %1664 = vmatpush1.bf16.msra.mxu0 0
  %1665 = vmatprep.subr.bf16.mxu0 0
  %1666 = vmatpush1.bf16.msra.mxu0 0
  %1667 = vmatprep.subr.bf16.mxu0 0
  %1668 = vmatpush1.bf16.msra.mxu0 0
  %1669 = vmatprep.subr.bf16.mxu0 0
  %1670 = vmatpush1.bf16.msra.mxu0 0
  %1671 = vmatprep.subr.bf16.mxu0 0
  %1672 = vmatpush1.bf16.msra.mxu0 0
  %1673 = vmatprep.subr.bf16.mxu0 0
  %1674 = vmatpush1.bf16.msra.mxu0 0
  %1675 = vmatprep.subr.bf16.mxu0 0
  %1676 = vmatpush1.bf16.msra.mxu0 0
  %1677 = vmatprep.subr.bf16.mxu0 0
  %1678 = vmatpush1.bf16.msra.mxu0 0
  %1679 = vmatprep.subr.bf16.mxu0 0
  %1680 = vmatpush1.bf16.msra.mxu0 0
  %1681 = vmatprep.subr.bf16.mxu0 0
  %1682 = vmatpush1.bf16.msra.mxu0 0
  %1683 = vmatprep.subr.bf16.mxu0 0
  %1684 = vmatpush1.bf16.msra.mxu0 0
  %1685 = vmatprep.mubr.bf16.mxu0 0
  %1686 = vmatmul.mubr.bf16.gmra.mrb[0].mxu0 %v1092
  %v1687 = vpop.f32.mrb[0].mxu0
  %v1688 = vadd.f32 %v1626, %v1687
  %v1689 = vpop.f32.mrb[0].mxu0
  %v1690 = vadd.f32 %v1630, %v1689
  %v1691 = vpop.f32.mrb[0].mxu0
  %v1692 = vadd.f32 %v1626, %v1691
  %v1693 = vpop.f32.mrb[0].mxu0
  %v1694 = vadd.f32 %v1630, %v1693
  %1695 = vmatprep.mubr.bf16.mxu0 0
  %1696 = vmatmul.mubr.bf16.gmra.mrb[0].mxu0 %v1095
  %v1697 = vpop.f32.mrb[0].mxu0
  %v1698 = vadd.f32 %v1626, %v1697
  %v1699 = vpop.f32.mrb[0].mxu0
  %v1700 = vadd.f32 %v1630, %v1699
  %v1701 = vpop.f32.mrb[0].mxu0
  %v1702 = vadd.f32 %v1626, %v1701
  %v1703 = vpop.f32.mrb[0].mxu0
  %v1704 = vadd.f32 %v1630, %v1703
  %1705 = vdwg.mxu0
  %v1706 = vmax.f32 %v1688, 0.0
  %v1707 = vmax.f32 %v1690, 0.0
  %v1708 = vmax.f32 %v1692, 0.0
  %v1709 = vmax.f32 %v1694, 0.0
  %v1710 = vmax.f32 %v1698, 0.0
  %v1711 = vmax.f32 %v1700, 0.0
  %v1712 = vmax.f32 %v1702, 0.0
  %v1713 = vmax.f32 %v1704, 0.0
  %v1714 = vpack.c.bf16 %v1708, %v1706
  %v1715 = vpack.c.bf16 %v1709, %v1707
  %v1716 = vpack.c.bf16 %v1712, %v1710
  %v1717 = vpack.c.bf16 %v1713, %v1711
  %v1718 = vld [vmem:[%s17 + $0x100] sm:$0xf]
  %v1719 = vld [vmem:[%s17 + $0x104] sm:$0xf]
  %v1720 = vld [vmem:[%s17 + $0x108] sm:$0xf]
  %v1721 = vld [vmem:[%s17 + $0x10c] sm:$0xf]
  %v1722 = vld [vmem:[%s17 + $0x110] sm:$0xf]
  %v1723 = vld [vmem:[%s17 + $0x114] sm:$0xf]
  %v1724 = vld [vmem:[%s17 + $0x118] sm:$0xf]
  %v1725 = vld [vmem:[%s17 + $0x11c] sm:$0xf]
  %v1726 = vld [vmem:[%s17 + $0x120] sm:$0xf]
  %v1727 = vld [vmem:[%s17 + $0x124] sm:$0xf]
  %v1728 = vld [vmem:[%s17 + $0x128] sm:$0xf]
  %v1729 = vld [vmem:[%s17 + $0x12c] sm:$0xf]
  %v1730 = vld [vmem:[%s17 + $0x130] sm:$0xf]
  %v1731 = vld [vmem:[%s17 + $0x134] sm:$0xf]
  %v1732 = vld [vmem:[%s17 + $0x138] sm:$0xf]
  %v1733 = vld [vmem:[%s17 + $0x13c] sm:$0xf]
  %v1734 = vld [vmem:[%s17 + $0x140] sm:$0xf]
  %v1735 = vld [vmem:[%s17 + $0x144] sm:$0xf]
  %v1736 = vld [vmem:[%s17 + $0x148] sm:$0xf]
  %v1737 = vld [vmem:[%s17 + $0x14c] sm:$0xf]
  %v1738 = vld [vmem:[%s17 + $0x150] sm:$0xf]
  %v1739 = vld [vmem:[%s17 + $0x154] sm:$0xf]
  %v1740 = vld [vmem:[%s17 + $0x158] sm:$0xf]
  %v1741 = vld [vmem:[%s17 + $0x15c] sm:$0xf]
  %v1742 = vld [vmem:[%s17 + $0x160] sm:$0xf]
  %v1743 = vld [vmem:[%s17 + $0x164] sm:$0xf]
  %v1744 = vld [vmem:[%s17 + $0x168] sm:$0xf]
  %v1745 = vld [vmem:[%s17 + $0x16c] sm:$0xf]
  %v1746 = vld [vmem:[%s17 + $0x170] sm:$0xf]
  %v1747 = vld [vmem:[%s17 + $0x174] sm:$0xf]
  %v1748 = vld [vmem:[%s17 + $0x178] sm:$0xf]
  %v1749 = vld [vmem:[%s17 + $0x17c] sm:$0xf]
  %v1782 = vunpack.c.l.b16 %v1718
  %v1783 = vunpack.c.l.b16 %v1719
  %v1784 = vunpack.c.l.b16 %v1720
  %v1785 = vunpack.c.l.b16 %v1721
  %v1786 = vunpack.c.l.b16 %v1722
  %v1787 = vunpack.c.l.b16 %v1723
  %v1788 = vunpack.c.l.b16 %v1724
  %v1789 = vunpack.c.l.b16 %v1725
  %v1790 = vunpack.c.l.b16 %v1726
  %v1791 = vunpack.c.l.b16 %v1727
  %v1792 = vunpack.c.l.b16 %v1728
  %v1793 = vunpack.c.l.b16 %v1729
  %v1794 = vunpack.c.l.b16 %v1730
  %v1795 = vunpack.c.l.b16 %v1731
  %v1796 = vunpack.c.l.b16 %v1732
  %v1797 = vunpack.c.l.b16 %v1733
  %v1798 = vunpack.c.l.b16 %v1734
  %v1799 = vunpack.c.l.b16 %v1735
  %v1800 = vunpack.c.l.b16 %v1736
  %v1801 = vunpack.c.l.b16 %v1737
  %v1802 = vunpack.c.l.b16 %v1738
  %v1803 = vunpack.c.l.b16 %v1739
  %v1804 = vunpack.c.l.b16 %v1740
  %v1805 = vunpack.c.l.b16 %v1741
  %v1806 = vunpack.c.l.b16 %v1742
  %v1807 = vunpack.c.l.b16 %v1743
  %v1808 = vunpack.c.l.b16 %v1744
  %v1809 = vunpack.c.l.b16 %v1745
  %v1810 = vunpack.c.l.b16 %v1746
  %v1811 = vunpack.c.l.b16 %v1747
  %v1812 = vunpack.c.l.b16 %v1748
  %v1813 = vunpack.c.l.b16 %v1749
  %v1814 = vpack.c.b16 %v1783, %v1782
  %v1815 = vpack.c.b16 %v1785, %v1784
  %v1816 = vpack.c.b16 %v1787, %v1786
  %v1817 = vpack.c.b16 %v1789, %v1788
  %v1818 = vpack.c.b16 %v1791, %v1790
  %v1819 = vpack.c.b16 %v1793, %v1792
  %v1820 = vpack.c.b16 %v1795, %v1794
  %v1821 = vpack.c.b16 %v1797, %v1796
  %v1822 = vpack.c.b16 %v1799, %v1798
  %v1823 = vpack.c.b16 %v1801, %v1800
  %v1824 = vpack.c.b16 %v1803, %v1802
  %v1825 = vpack.c.b16 %v1805, %v1804
  %v1826 = vpack.c.b16 %v1807, %v1806
  %v1827 = vpack.c.b16 %v1809, %v1808
  %v1828 = vpack.c.b16 %v1811, %v1810
  %v1829 = vpack.c.b16 %v1813, %v1812
  %1846 = vmatprep.subr.bf16.mxu0 0
  %1847 = vmatpush1.bf16.msra.mxu0 %v1814
  %1848 = vmatprep.subr.bf16.mxu0 0
  %1849 = vmatpush1.bf16.msra.mxu0 %v1815
  %1850 = vmatprep.subr.bf16.mxu0 0
  %1851 = vmatpush1.bf16.msra.mxu0 %v1816
  %1852 = vmatprep.subr.bf16.mxu0 0
  %1853 = vmatpush1.bf16.msra.mxu0 %v1817
  %1854 = vmatprep.subr.bf16.mxu0 0
  %1855 = vmatpush1.bf16.msra.mxu0 %v1818
  %1856 = vmatprep.subr.bf16.mxu0 0
  %1857 = vmatpush1.bf16.msra.mxu0 %v1819
  %1858 = vmatprep.subr.bf16.mxu0 0
  %1859 = vmatpush1.bf16.msra.mxu0 %v1820
  %1860 = vmatprep.subr.bf16.mxu0 0
  %1861 = vmatpush1.bf16.msra.mxu0 %v1821
  %1862 = vmatprep.subr.bf16.mxu0 0
  %1863 = vmatpush1.bf16.msra.mxu0 %v1822
  %1864 = vmatprep.subr.bf16.mxu0 0
  %1865 = vmatpush1.bf16.msra.mxu0 %v1823
  %1866 = vmatprep.subr.bf16.mxu0 0
  %1867 = vmatpush1.bf16.msra.mxu0 %v1824
  %1868 = vmatprep.subr.bf16.mxu0 0
  %1869 = vmatpush1.bf16.msra.mxu0 %v1825
  %1870 = vmatprep.subr.bf16.mxu0 0
  %1871 = vmatpush1.bf16.msra.mxu0 %v1826
  %1872 = vmatprep.subr.bf16.mxu0 0
  %1873 = vmatpush1.bf16.msra.mxu0 %v1827
  %1874 = vmatprep.subr.bf16.mxu0 0
  %1875 = vmatpush1.bf16.msra.mxu0 %v1828
  %1876 = vmatprep.subr.bf16.mxu0 0
  %1877 = vmatpush1.bf16.msra.mxu0 %v1829
  %1878 = vmatprep.mubr.bf16.mxu0 %v1715
  %1879 = vmatmul.mubr.bf16.gmra.mrb[0].mxu0 %v1714
  %v1880 = vpop.f32.mrb[0].mxu0
  %v1881 = vadd.f32 0.0, %v1880
  %v1882 = vpop.f32.mrb[0].mxu0
  %v1883 = vpop.f32.mrb[0].mxu0
  %v1884 = vadd.f32 0.0, %v1883
  %v1885 = vpop.f32.mrb[0].mxu0
  %1886 = vmatprep.mubr.bf16.mxu0 %v1717
  %1887 = vmatmul.mubr.bf16.gmra.mrb[0].mxu0 %v1716
  %v1888 = vpop.f32.mrb[0].mxu0
  %v1889 = vadd.f32 0.0, %v1888
  %v1890 = vpop.f32.mrb[0].mxu0
  %v1891 = vpop.f32.mrb[0].mxu0
  %v1892 = vadd.f32 0.0, %v1891
  %v1893 = vpop.f32.mrb[0].mxu0
  %1894 = vdwg.mxu0
  %v1895 = vadd.f32 %v1603, %v1881
  %v1896 = vadd.f32 %v1606, %v1884
  %v1897 = vadd.f32 %v1611, %v1889
  %v1898 = vadd.f32 %v1614, %v1892
  %v1899 = vld [vmem:[%s15 + $0x18] sm:$0xff]
  %v1900 = vld [vmem:[%s15 + $0x38] sm:$0xff]
  %v1901 = vld [vmem:[%s15 + $0x58] sm:$0xff]
  %v1902 = vld [vmem:[%s15 + $0x78] sm:$0xff]
  %v1903 = vld [vmem:[%s16 + $0x6] sm:$0x3]
  %v1905 = vlaneseq
  %v1906 = vshrl.u32 %v1905, 7
  %v1907 = vsub.s32 0, %v1906
  %v1908 = vrot.slane %v1903, %v1907
  %v1909 = vlaneseq
  %v1910 = vshrl.u32 %v1909, 7
  %v1911 = vsub.s32 1, %v1910
  %v1912 = vrot.slane %v1903, %v1911
  %v1919 = vunpack.c.l.b16 %v1899
  %v1920 = vunpack.c.h.b16 %v1899
  %v1921 = vunpack.c.l.b16 %v1900
  %v1922 = vunpack.c.h.b16 %v1900
  %v1923 = vunpack.c.l.b16 %v1901
  %v1924 = vunpack.c.h.b16 %v1901
  %v1925 = vunpack.c.l.b16 %v1902
  %v1926 = vunpack.c.h.b16 %v1902
  %v1927 = vpack.c.b16 %v1921, %v1919
  %v1928 = vpack.c.b16 %v1922, %v1920
  %v1929 = vpack.c.b16 %v1925, %v1923
  %v1930 = vpack.c.b16 %v1926, %v1924
  %1935 = vmatprep.subr.bf16.mxu0 %v1928
  %1936 = vmatpush1.bf16.msra.mxu0 %v1927
  %1937 = vmatprep.subr.bf16.mxu0 %v1930
  %1938 = vmatpush1.bf16.msra.mxu0 %v1929
  %1939 = vmatprep.subr.bf16.mxu0 0
  %1940 = vmatpush1.bf16.msra.mxu0 0
  %1941 = vmatprep.subr.bf16.mxu0 0
  %1942 = vmatpush1.bf16.msra.mxu0 0
  %1943 = vmatprep.subr.bf16.mxu0 0
  %1944 = vmatpush1.bf16.msra.mxu0 0
  %1945 = vmatprep.subr.bf16.mxu0 0
  %1946 = vmatpush1.bf16.msra.mxu0 0
  %1947 = vmatprep.subr.bf16.mxu0 0
  %1948 = vmatpush1.bf16.msra.mxu0 0
  %1949 = vmatprep.subr.bf16.mxu0 0
  %1950 = vmatpush1.bf16.msra.mxu0 0
  %1951 = vmatprep.subr.bf16.mxu0 0
  %1952 = vmatpush1.bf16.msra.mxu0 0
  %1953 = vmatprep.subr.bf16.mxu0 0
  %1954 = vmatpush1.bf16.msra.mxu0 0
  %1955 = vmatprep.subr.bf16.mxu0 0
  %1956 = vmatpush1.bf16.msra.mxu0 0
  %1957 = vmatprep.subr.bf16.mxu0 0
  %1958 = vmatpush1.bf16.msra.mxu0 0
  %1959 = vmatprep.subr.bf16.mxu0 0
  %1960 = vmatpush1.bf16.msra.mxu0 0
  %1961 = vmatprep.subr.bf16.mxu0 0
  %1962 = vmatpush1.bf16.msra.mxu0 0
  %1963 = vmatprep.subr.bf16.mxu0 0
  %1964 = vmatpush1.bf16.msra.mxu0 0
  %1965 = vmatprep.subr.bf16.mxu0 0
  %1966 = vmatpush1.bf16.msra.mxu0 0
  %1967 = vmatprep.mubr.bf16.mxu0 0
  %1968 = vmatmul.mubr.bf16.gmra.mrb[0].mxu0 %v1092
  %v1969 = vpop.f32.mrb[0].mxu0
  %v1970 = vadd.f32 %v1908, %v1969
  %v1971 = vpop.f32.mrb[0].mxu0
  %v1972 = vadd.f32 %v1912, %v1971
  %v1973 = vpop.f32.mrb[0].mxu0
  %v1974 = vadd.f32 %v1908, %v1973
  %v1975 = vpop.f32.mrb[0].mxu0
  %v1976 = vadd.f32 %v1912, %v1975
  %1977 = vmatprep.mubr.bf16.mxu0 0
  %1978 = vmatmul.mubr.bf16.gmra.mrb[0].mxu0 %v1095
  %v1979 = vpop.f32.mrb[0].mxu0
  %v1980 = vadd.f32 %v1908, %v1979
  %v1981 = vpop.f32.mrb[0].mxu0
  %v1982 = vadd.f32 %v1912, %v1981
  %v1983 = vpop.f32.mrb[0].mxu0
  %v1984 = vadd.f32 %v1908, %v1983
  %v1985 = vpop.f32.mrb[0].mxu0
  %v1986 = vadd.f32 %v1912, %v1985
  %1987 = vdwg.mxu0
  %v1988 = vmax.f32 %v1970, 0.0
  %v1989 = vmax.f32 %v1972, 0.0
  %v1990 = vmax.f32 %v1974, 0.0
  %v1991 = vmax.f32 %v1976, 0.0
  %v1992 = vmax.f32 %v1980, 0.0
  %v1993 = vmax.f32 %v1982, 0.0
  %v1994 = vmax.f32 %v1984, 0.0
  %v1995 = vmax.f32 %v1986, 0.0
  %v1996 = vpack.c.bf16 %v1990, %v1988
  %v1997 = vpack.c.bf16 %v1991, %v1989
  %v1998 = vpack.c.bf16 %v1994, %v1992
  %v1999 = vpack.c.bf16 %v1995, %v1993
  %v2000 = vld [vmem:[%s17 + $0x180] sm:$0xf]
  %v2001 = vld [vmem:[%s17 + $0x184] sm:$0xf]
  %v2002 = vld [vmem:[%s17 + $0x188] sm:$0xf]
  %v2003 = vld [vmem:[%s17 + $0x18c] sm:$0xf]
  %v2004 = vld [vmem:[%s17 + $0x190] sm:$0xf]
  %v2005 = vld [vmem:[%s17 + $0x194] sm:$0xf]
  %v2006 = vld [vmem:[%s17 + $0x198] sm:$0xf]
  %v2007 = vld [vmem:[%s17 + $0x19c] sm:$0xf]
  %v2008 = vld [vmem:[%s17 + $0x1a0] sm:$0xf]
  %v2009 = vld [vmem:[%s17 + $0x1a4] sm:$0xf]
  %v2010 = vld [vmem:[%s17 + $0x1a8] sm:$0xf]
  %v2011 = vld [vmem:[%s17 + $0x1ac] sm:$0xf]
  %v2012 = vld [vmem:[%s17 + $0x1b0] sm:$0xf]
  %v2013 = vld [vmem:[%s17 + $0x1b4] sm:$0xf]
  %v2014 = vld [vmem:[%s17 + $0x1b8] sm:$0xf]
  %v2015 = vld [vmem:[%s17 + $0x1bc] sm:$0xf]
  %v2016 = vld [vmem:[%s17 + $0x1c0] sm:$0xf]
  %v2017 = vld [vmem:[%s17 + $0x1c4] sm:$0xf]
  %v2018 = vld [vmem:[%s17 + $0x1c8] sm:$0xf]
  %v2019 = vld [vmem:[%s17 + $0x1cc] sm:$0xf]
  %v2020 = vld [vmem:[%s17 + $0x1d0] sm:$0xf]
  %v2021 = vld [vmem:[%s17 + $0x1d4] sm:$0xf]
  %v2022 = vld [vmem:[%s17 + $0x1d8] sm:$0xf]
  %v2023 = vld [vmem:[%s17 + $0x1dc] sm:$0xf]
  %v2024 = vld [vmem:[%s17 + $0x1e0] sm:$0xf]
  %v2025 = vld [vmem:[%s17 + $0x1e4] sm:$0xf]
  %v2026 = vld [vmem:[%s17 + $0x1e8] sm:$0xf]
  %v2027 = vld [vmem:[%s17 + $0x1ec] sm:$0xf]
  %v2028 = vld [vmem:[%s17 + $0x1f0] sm:$0xf]
  %v2029 = vld [vmem:[%s17 + $0x1f4] sm:$0xf]
  %v2030 = vld [vmem:[%s17 + $0x1f8] sm:$0xf]
  %v2031 = vld [vmem:[%s17 + $0x1fc] sm:$0xf]
  %v2064 = vunpack.c.l.b16 %v2000
  %v2065 = vunpack.c.l.b16 %v2001
  %v2066 = vunpack.c.l.b16 %v2002
  %v2067 = vunpack.c.l.b16 %v2003
  %v2068 = vunpack.c.l.b16 %v2004
  %v2069 = vunpack.c.l.b16 %v2005
  %v2070 = vunpack.c.l.b16 %v2006
  %v2071 = vunpack.c.l.b16 %v2007
  %v2072 = vunpack.c.l.b16 %v2008
  %v2073 = vunpack.c.l.b16 %v2009
  %v2074 = vunpack.c.l.b16 %v2010
  %v2075 = vunpack.c.l.b16 %v2011
  %v2076 = vunpack.c.l.b16 %v2012
  %v2077 = vunpack.c.l.b16 %v2013
  %v2078 = vunpack.c.l.b16 %v2014
  %v2079 = vunpack.c.l.b16 %v2015
  %v2080 = vunpack.c.l.b16 %v2016
  %v2081 = vunpack.c.l.b16 %v2017
  %v2082 = vunpack.c.l.b16 %v2018
  %v2083 = vunpack.c.l.b16 %v2019
  %v2084 = vunpack.c.l.b16 %v2020
  %v2085 = vunpack.c.l.b16 %v2021
  %v2086 = vunpack.c.l.b16 %v2022
  %v2087 = vunpack.c.l.b16 %v2023
  %v2088 = vunpack.c.l.b16 %v2024
  %v2089 = vunpack.c.l.b16 %v2025
  %v2090 = vunpack.c.l.b16 %v2026
  %v2091 = vunpack.c.l.b16 %v2027
  %v2092 = vunpack.c.l.b16 %v2028
  %v2093 = vunpack.c.l.b16 %v2029
  %v2094 = vunpack.c.l.b16 %v2030
  %v2095 = vunpack.c.l.b16 %v2031
  %v2096 = vpack.c.b16 %v2065, %v2064
  %v2097 = vpack.c.b16 %v2067, %v2066
  %v2098 = vpack.c.b16 %v2069, %v2068
  %v2099 = vpack.c.b16 %v2071, %v2070
  %v2100 = vpack.c.b16 %v2073, %v2072
  %v2101 = vpack.c.b16 %v2075, %v2074
  %v2102 = vpack.c.b16 %v2077, %v2076
  %v2103 = vpack.c.b16 %v2079, %v2078
  %v2104 = vpack.c.b16 %v2081, %v2080
  %v2105 = vpack.c.b16 %v2083, %v2082
  %v2106 = vpack.c.b16 %v2085, %v2084
  %v2107 = vpack.c.b16 %v2087, %v2086
  %v2108 = vpack.c.b16 %v2089, %v2088
  %v2109 = vpack.c.b16 %v2091, %v2090
  %v2110 = vpack.c.b16 %v2093, %v2092
  %v2111 = vpack.c.b16 %v2095, %v2094
  %2128 = vmatprep.subr.bf16.mxu0 0
  %2129 = vmatpush1.bf16.msra.mxu0 %v2096
  %2130 = vmatprep.subr.bf16.mxu0 0
  %2131 = vmatpush1.bf16.msra.mxu0 %v2097
  %2132 = vmatprep.subr.bf16.mxu0 0
  %2133 = vmatpush1.bf16.msra.mxu0 %v2098
  %2134 = vmatprep.subr.bf16.mxu0 0
  %2135 = vmatpush1.bf16.msra.mxu0 %v2099
  %2136 = vmatprep.subr.bf16.mxu0 0
  %2137 = vmatpush1.bf16.msra.mxu0 %v2100
  %2138 = vmatprep.subr.bf16.mxu0 0
  %2139 = vmatpush1.bf16.msra.mxu0 %v2101
  %2140 = vmatprep.subr.bf16.mxu0 0
  %2141 = vmatpush1.bf16.msra.mxu0 %v2102
  %2142 = vmatprep.subr.bf16.mxu0 0
  %2143 = vmatpush1.bf16.msra.mxu0 %v2103
  %2144 = vmatprep.subr.bf16.mxu0 0
  %2145 = vmatpush1.bf16.msra.mxu0 %v2104
  %2146 = vmatprep.subr.bf16.mxu0 0
  %2147 = vmatpush1.bf16.msra.mxu0 %v2105
  %2148 = vmatprep.subr.bf16.mxu0 0
  %2149 = vmatpush1.bf16.msra.mxu0 %v2106
  %2150 = vmatprep.subr.bf16.mxu0 0
  %2151 = vmatpush1.bf16.msra.mxu0 %v2107
  %2152 = vmatprep.subr.bf16.mxu0 0
  %2153 = vmatpush1.bf16.msra.mxu0 %v2108
  %2154 = vmatprep.subr.bf16.mxu0 0
  %2155 = vmatpush1.bf16.msra.mxu0 %v2109
  %2156 = vmatprep.subr.bf16.mxu0 0
  %2157 = vmatpush1.bf16.msra.mxu0 %v2110
  %2158 = vmatprep.subr.bf16.mxu0 0
  %2159 = vmatpush1.bf16.msra.mxu0 %v2111
  %2160 = vmatprep.mubr.bf16.mxu0 %v1997
  %2161 = vmatmul.mubr.bf16.gmra.mrb[0].mxu0 %v1996
  %v2162 = vpop.f32.mrb[0].mxu0
  %v2163 = vadd.f32 0.0, %v2162
  %v2164 = vpop.f32.mrb[0].mxu0
  %v2165 = vpop.f32.mrb[0].mxu0
  %v2166 = vadd.f32 0.0, %v2165
  %v2167 = vpop.f32.mrb[0].mxu0
  %2168 = vmatprep.mubr.bf16.mxu0 %v1999
  %2169 = vmatmul.mubr.bf16.gmra.mrb[0].mxu0 %v1998
  %v2170 = vpop.f32.mrb[0].mxu0
  %v2171 = vadd.f32 0.0, %v2170
  %v2172 = vpop.f32.mrb[0].mxu0
  %v2173 = vpop.f32.mrb[0].mxu0
  %v2174 = vadd.f32 0.0, %v2173
  %v2175 = vpop.f32.mrb[0].mxu0
  %2176 = vdwg.mxu0
  %v2177 = vadd.f32 %v1895, %v2163
  %v2178 = vadd.f32 %v1896, %v2166
  %v2179 = vadd.f32 %v1897, %v2171
  %v2180 = vadd.f32 %v1898, %v2174
  %v2181 = vld [vmem:[%s18] sm:$0x1]
  %v2183 = vlaneseq
  %v2184 = vshrl.u32 %v2183, 7
  %v2185 = vsub.s32 0, %v2184
  %v2186 = vrot.slane %v2181, %v2185
  %v2188 = vadd.f32 %v2177, %v2186
  %v2189 = vadd.f32 %v2178, %v2186
  %v2190 = vadd.f32 %v2179, %v2186
  %v2191 = vadd.f32 %v2180, %v2186
  %v2192 = vadd.f32 %v1049, %v2188
  %v2193 = vadd.f32 %v1050, %v2189
  %v2194 = vadd.f32 %v1051, %v2190
  %v2195 = vadd.f32 %v1052, %v2191
  %v2196 = vsel %vm232, %v2192, 0.0
  %2197 = vadd.xlane.f32.xlu0 %v2196
  %v2198 = vpop.xlane.xlu0 %2197
  %v2199 = vsel %vm232, %v2193, 0.0
  %2200 = vadd.xlane.f32.xlu0 %v2199
  %v2201 = vpop.xlane.xlu0 %2200
  %v2202 = vsel %vm232, %v2194, 0.0
  %2203 = vadd.xlane.f32.xlu0 %v2202
  %v2204 = vpop.xlane.xlu0 %2203
  %v2205 = vsel %vm232, %v2195, 0.0
  %2206 = vadd.xlane.f32.xlu0 %v2205
  %v2207 = vpop.xlane.xlu0 %2206
  %v2208 = vmul.f32 %v2198, %v990
  %v2209 = vmul.f32 %v2201, %v990
  %v2210 = vmul.f32 %v2204, %v990
  %v2211 = vmul.f32 %v2207, %v990
  %v2212 = vsub.f32 %v2192, %v2208
  %v2213 = vsub.f32 %v2193, %v2209
  %v2214 = vsub.f32 %v2194, %v2210
  %v2215 = vsub.f32 %v2195, %v2211
  %v2216 = vmul.f32 %v2212, %v2212
  %v2217 = vmul.f32 %v2213, %v2213
  %v2218 = vmul.f32 %v2214, %v2214
  %v2219 = vmul.f32 %v2215, %v2215
  %v2220 = vsel %vm232, %v2216, 0.0
  %2221 = vadd.xlane.f32.xlu0 %v2220
  %v2222 = vpop.xlane.xlu0 %2221
  %v2223 = vsel %vm232, %v2217, 0.0
  %2224 = vadd.xlane.f32.xlu0 %v2223
  %v2225 = vpop.xlane.xlu0 %2224
  %v2226 = vsel %vm232, %v2218, 0.0
  %2227 = vadd.xlane.f32.xlu0 %v2226
  %v2228 = vpop.xlane.xlu0 %2227
  %v2229 = vsel %vm232, %v2219, 0.0
  %2230 = vadd.xlane.f32.xlu0 %v2229
  %v2231 = vpop.xlane.xlu0 %2230
  %v2232 = vmul.f32 %v2222, %v990
  %v2233 = vmul.f32 %v2225, %v990
  %v2234 = vmul.f32 %v2228, %v990
  %v2235 = vmul.f32 %v2231, %v990
  %v2236 = vadd.f32 %v2232, 1e-05
  %v2237 = vadd.f32 %v2233, 1e-05
  %v2238 = vadd.f32 %v2234, 1e-05
  %v2239 = vadd.f32 %v2235, 1e-05
  %v2240 = vrsqrt.pop %v2236
  %v2241 = vrsqrt.pop %v2237
  %v2242 = vrsqrt.pop %v2238
  %v2243 = vrsqrt.pop %v2239
  %v2244 = vmul.f32 %v2212, %v2240
  %v2245 = vmul.f32 %v2213, %v2241
  %v2246 = vmul.f32 %v2214, %v2242
  %v2247 = vmul.f32 %v2215, %v2243
  %v2248 = vld [vmem:[%s19] sm:$0x1]
  %v2250 = vlaneseq
  %v2251 = vshrl.u32 %v2250, 7
  %v2252 = vsub.s32 0, %v2251
  %v2253 = vrot.slane %v2248, %v2252
  %v2255 = vmul.f32 %v2244, %v2253
  %v2256 = vmul.f32 %v2245, %v2253
  %v2257 = vmul.f32 %v2246, %v2253
  %v2258 = vmul.f32 %v2247, %v2253
  %v2259 = vld [vmem:[%s20] sm:$0x1]
  %v2261 = vlaneseq
  %v2262 = vshrl.u32 %v2261, 7
  %v2263 = vsub.s32 0, %v2262
  %v2264 = vrot.slane %v2259, %v2263
  %v2266 = vadd.f32 %v2255, %v2264
  %v2267 = vadd.f32 %v2256, %v2264
  %v2268 = vadd.f32 %v2257, %v2264
  %v2269 = vadd.f32 %v2258, %v2264
  %v2270 = vpack.c.bf16 %v2267, %v2266
  %v2271 = vpack.c.bf16 %v2269, %v2268
  %s2272 = scalar_lea.vmem %s5, 16
  %v2273 = vld [vmem:[%s2272] sm:$0xf]
  %v2274 = vld [vmem:[%s2272 + $0x4] sm:$0xf]
  %v2275 = vld [vmem:[%s2272 + $0x8] sm:$0xf]
  %v2276 = vld [vmem:[%s2272 + $0xc] sm:$0xf]
  %s2277 = scalar_lea.vmem %s6, 1
  %v2278 = vld [vmem:[%s2277] sm:$0x1]
  %v2280 = vlaneseq
  %v2281 = vshrl.u32 %v2280, 7
  %v2282 = vsub.s32 0, %v2281
  %v2283 = vrot.slane %v2278, %v2282
  %v2289 = vunpack.c.l.b16 %v2273
  %v2290 = vunpack.c.l.b16 %v2274
  %v2291 = vunpack.c.l.b16 %v2275
  %v2292 = vunpack.c.l.b16 %v2276
  %v2293 = vpack.c.b16 %v2290, %v2289
  %v2294 = vpack.c.b16 %v2292, %v2291
  %v2298 = vsel %vm232, %v2270, 0
  %v2301 = vsel %vm232, %v2271, 0
  %2303 = vmatprep.subr.bf16.mxu0 0
  %2304 = vmatpush1.bf16.msra.mxu0 %v2293
  %2305 = vmatprep.subr.bf16.mxu0 0
  %2306 = vmatpush1.bf16.msra.mxu0 %v2294
  %2307 = vmatprep.subr.bf16.mxu0 0
  %2308 = vmatpush1.bf16.msra.mxu0 0
  %2309 = vmatprep.subr.bf16.mxu0 0
  %2310 = vmatpush1.bf16.msra.mxu0 0
  %2311 = vmatprep.subr.bf16.mxu0 0
  %2312 = vmatpush1.bf16.msra.mxu0 0
  %2313 = vmatprep.subr.bf16.mxu0 0
  %2314 = vmatpush1.bf16.msra.mxu0 0
  %2315 = vmatprep.subr.bf16.mxu0 0
  %2316 = vmatpush1.bf16.msra.mxu0 0
  %2317 = vmatprep.subr.bf16.mxu0 0
  %2318 = vmatpush1.bf16.msra.mxu0 0
  %2319 = vmatprep.subr.bf16.mxu0 0
  %2320 = vmatpush1.bf16.msra.mxu0 0
  %2321 = vmatprep.subr.bf16.mxu0 0
  %2322 = vmatpush1.bf16.msra.mxu0 0
  %2323 = vmatprep.subr.bf16.mxu0 0
  %2324 = vmatpush1.bf16.msra.mxu0 0
  %2325 = vmatprep.subr.bf16.mxu0 0
  %2326 = vmatpush1.bf16.msra.mxu0 0
  %2327 = vmatprep.subr.bf16.mxu0 0
  %2328 = vmatpush1.bf16.msra.mxu0 0
  %2329 = vmatprep.subr.bf16.mxu0 0
  %2330 = vmatpush1.bf16.msra.mxu0 0
  %2331 = vmatprep.subr.bf16.mxu0 0
  %2332 = vmatpush1.bf16.msra.mxu0 0
  %2333 = vmatprep.subr.bf16.mxu0 0
  %2334 = vmatpush1.bf16.msra.mxu0 0
  %2335 = vmatprep.mubr.bf16.mxu0 0
  %2336 = vmatmul.mubr.bf16.gmra.mrb[0].mxu0 %v2298
  %v2337 = vpop.f32.mrb[0].mxu0
  %v2338 = vadd.f32 %v2283, %v2337
  %v2339 = vpop.f32.mrb[0].mxu0
  %v2340 = vpop.f32.mrb[0].mxu0
  %v2341 = vadd.f32 %v2283, %v2340
  %v2342 = vpop.f32.mrb[0].mxu0
  %2343 = vmatprep.mubr.bf16.mxu0 0
  %2344 = vmatmul.mubr.bf16.gmra.mrb[0].mxu0 %v2301
  %v2345 = vpop.f32.mrb[0].mxu0
  %v2346 = vadd.f32 %v2283, %v2345
  %v2347 = vpop.f32.mrb[0].mxu0
  %v2348 = vpop.f32.mrb[0].mxu0
  %v2349 = vadd.f32 %v2283, %v2348
  %v2350 = vpop.f32.mrb[0].mxu0
  %2351 = vdwg.mxu0
  %s2352 = scalar_lea.vmem %s7, 16
  %v2353 = vld [vmem:[%s2352] sm:$0xf]
  %v2354 = vld [vmem:[%s2352 + $0x4] sm:$0xf]
  %v2355 = vld [vmem:[%s2352 + $0x8] sm:$0xf]
  %v2356 = vld [vmem:[%s2352 + $0xc] sm:$0xf]
  %s2357 = scalar_lea.vmem %s8, 1
  %v2358 = vld [vmem:[%s2357] sm:$0x1]
  %v2360 = vlaneseq
  %v2361 = vshrl.u32 %v2360, 7
  %v2362 = vsub.s32 0, %v2361
  %v2363 = vrot.slane %v2358, %v2362
  %v2369 = vunpack.c.l.b16 %v2353
  %v2370 = vunpack.c.l.b16 %v2354
  %v2371 = vunpack.c.l.b16 %v2355
  %v2372 = vunpack.c.l.b16 %v2356
  %v2373 = vpack.c.b16 %v2370, %v2369
  %v2374 = vpack.c.b16 %v2372, %v2371
  %2377 = vmatprep.subr.bf16.mxu0 0
  %2378 = vmatpush1.bf16.msra.mxu0 %v2373
  %2379 = vmatprep.subr.bf16.mxu0 0
  %2380 = vmatpush1.bf16.msra.mxu0 %v2374
  %2381 = vmatprep.subr.bf16.mxu0 0
  %2382 = vmatpush1.bf16.msra.mxu0 0
  %2383 = vmatprep.subr.bf16.mxu0 0
  %2384 = vmatpush1.bf16.msra.mxu0 0
  %2385 = vmatprep.subr.bf16.mxu0 0
  %2386 = vmatpush1.bf16.msra.mxu0 0
  %2387 = vmatprep.subr.bf16.mxu0 0
  %2388 = vmatpush1.bf16.msra.mxu0 0
  %2389 = vmatprep.subr.bf16.mxu0 0
  %2390 = vmatpush1.bf16.msra.mxu0 0
  %2391 = vmatprep.subr.bf16.mxu0 0
  %2392 = vmatpush1.bf16.msra.mxu0 0
  %2393 = vmatprep.subr.bf16.mxu0 0
  %2394 = vmatpush1.bf16.msra.mxu0 0
  %2395 = vmatprep.subr.bf16.mxu0 0
  %2396 = vmatpush1.bf16.msra.mxu0 0
  %2397 = vmatprep.subr.bf16.mxu0 0
  %2398 = vmatpush1.bf16.msra.mxu0 0
  %2399 = vmatprep.subr.bf16.mxu0 0
  %2400 = vmatpush1.bf16.msra.mxu0 0
  %2401 = vmatprep.subr.bf16.mxu0 0
  %2402 = vmatpush1.bf16.msra.mxu0 0
  %2403 = vmatprep.subr.bf16.mxu0 0
  %2404 = vmatpush1.bf16.msra.mxu0 0
  %2405 = vmatprep.subr.bf16.mxu0 0
  %2406 = vmatpush1.bf16.msra.mxu0 0
  %2407 = vmatprep.subr.bf16.mxu0 0
  %2408 = vmatpush1.bf16.msra.mxu0 0
  %2409 = vmatprep.mubr.bf16.mxu0 0
  %2410 = vmatmul.mubr.bf16.gmra.mrb[0].mxu0 %v2298
  %v2411 = vpop.f32.mrb[0].mxu0
  %v2412 = vadd.f32 %v2363, %v2411
  %v2413 = vpop.f32.mrb[0].mxu0
  %v2414 = vpop.f32.mrb[0].mxu0
  %v2415 = vadd.f32 %v2363, %v2414
  %v2416 = vpop.f32.mrb[0].mxu0
  %2417 = vmatprep.mubr.bf16.mxu0 0
  %2418 = vmatmul.mubr.bf16.gmra.mrb[0].mxu0 %v2301
  %v2419 = vpop.f32.mrb[0].mxu0
  %v2420 = vadd.f32 %v2363, %v2419
  %v2421 = vpop.f32.mrb[0].mxu0
  %v2422 = vpop.f32.mrb[0].mxu0
  %v2423 = vadd.f32 %v2363, %v2422
  %v2424 = vpop.f32.mrb[0].mxu0
  %2425 = vdwg.mxu0
  %s2426 = scalar_lea.vmem %s9, 16
  %v2427 = vld [vmem:[%s2426] sm:$0xf]
  %v2428 = vld [vmem:[%s2426 + $0x4] sm:$0xf]
  %v2429 = vld [vmem:[%s2426 + $0x8] sm:$0xf]
  %v2430 = vld [vmem:[%s2426 + $0xc] sm:$0xf]
  %s2431 = scalar_lea.vmem %s10, 1
  %v2432 = vld [vmem:[%s2431] sm:$0x1]
  %v2434 = vlaneseq
  %v2435 = vshrl.u32 %v2434, 7
  %v2436 = vsub.s32 0, %v2435
  %v2437 = vrot.slane %v2432, %v2436
  %v2443 = vunpack.c.l.b16 %v2427
  %v2444 = vunpack.c.l.b16 %v2428
  %v2445 = vunpack.c.l.b16 %v2429
  %v2446 = vunpack.c.l.b16 %v2430
  %v2447 = vpack.c.b16 %v2444, %v2443
  %v2448 = vpack.c.b16 %v2446, %v2445
  %2451 = vmatprep.subr.bf16.mxu0 0
  %2452 = vmatpush1.bf16.msra.mxu0 %v2447
  %2453 = vmatprep.subr.bf16.mxu0 0
  %2454 = vmatpush1.bf16.msra.mxu0 %v2448
  %2455 = vmatprep.subr.bf16.mxu0 0
  %2456 = vmatpush1.bf16.msra.mxu0 0
  %2457 = vmatprep.subr.bf16.mxu0 0
  %2458 = vmatpush1.bf16.msra.mxu0 0
  %2459 = vmatprep.subr.bf16.mxu0 0
  %2460 = vmatpush1.bf16.msra.mxu0 0
  %2461 = vmatprep.subr.bf16.mxu0 0
  %2462 = vmatpush1.bf16.msra.mxu0 0
  %2463 = vmatprep.subr.bf16.mxu0 0
  %2464 = vmatpush1.bf16.msra.mxu0 0
  %2465 = vmatprep.subr.bf16.mxu0 0
  %2466 = vmatpush1.bf16.msra.mxu0 0
  %2467 = vmatprep.subr.bf16.mxu0 0
  %2468 = vmatpush1.bf16.msra.mxu0 0
  %2469 = vmatprep.subr.bf16.mxu0 0
  %2470 = vmatpush1.bf16.msra.mxu0 0
  %2471 = vmatprep.subr.bf16.mxu0 0
  %2472 = vmatpush1.bf16.msra.mxu0 0
  %2473 = vmatprep.subr.bf16.mxu0 0
  %2474 = vmatpush1.bf16.msra.mxu0 0
  %2475 = vmatprep.subr.bf16.mxu0 0
  %2476 = vmatpush1.bf16.msra.mxu0 0
  %2477 = vmatprep.subr.bf16.mxu0 0
  %2478 = vmatpush1.bf16.msra.mxu0 0
  %2479 = vmatprep.subr.bf16.mxu0 0
  %2480 = vmatpush1.bf16.msra.mxu0 0
  %2481 = vmatprep.subr.bf16.mxu0 0
  %2482 = vmatpush1.bf16.msra.mxu0 0
  %2483 = vmatprep.mubr.bf16.mxu0 0
  %2484 = vmatmul.mubr.bf16.gmra.mrb[0].mxu0 %v2298
  %v2485 = vpop.f32.mrb[0].mxu0
  %v2486 = vadd.f32 %v2437, %v2485
  %v2487 = vpop.f32.mrb[0].mxu0
  %v2488 = vpop.f32.mrb[0].mxu0
  %v2489 = vadd.f32 %v2437, %v2488
  %v2490 = vpop.f32.mrb[0].mxu0
  %2491 = vmatprep.mubr.bf16.mxu0 0
  %2492 = vmatmul.mubr.bf16.gmra.mrb[0].mxu0 %v2301
  %v2493 = vpop.f32.mrb[0].mxu0
  %v2494 = vadd.f32 %v2437, %v2493
  %v2495 = vpop.f32.mrb[0].mxu0
  %v2496 = vpop.f32.mrb[0].mxu0
  %v2497 = vadd.f32 %v2437, %v2496
  %v2498 = vpop.f32.mrb[0].mxu0
  %2499 = vdwg.mxu0
  %v2500 = vmul.f32 %v2338, 0.35355338
  %v2501 = vmul.f32 %v2341, 0.35355338
  %v2502 = vmul.f32 %v2346, 0.35355338
  %v2503 = vmul.f32 %v2349, 0.35355338
  %v2504 = vpack.c.bf16 %v2501, %v2500
  %v2505 = vpack.c.bf16 %v2503, %v2502
  %v2506 = vpack.c.bf16 %v2415, %v2412
  %v2507 = vpack.c.bf16 %v2423, %v2420
  %v2508 = vmul.bf16 %v2506, %v472
  %v2509 = vmul.bf16 %v2507, %v473
  %v2510 = vmul.bf16 %v2506, %v474
  %v2511 = vmul.bf16 %v2507, %v475
  %v2512 = vmul.bf16 %v2506, %v476
  %v2513 = vmul.bf16 %v2507, %v477
  %v2514 = vmul.bf16 %v2506, %v478
  %v2515 = vmul.bf16 %v2507, %v479
  %v2516 = vpack.c.bf16 %v2489, %v2486
  %v2517 = vpack.c.bf16 %v2497, %v2494
  %v2518 = vmul.bf16 %v2516, %v472
  %v2519 = vmul.bf16 %v2517, %v473
  %v2520 = vmul.bf16 %v2516, %v474
  %v2521 = vmul.bf16 %v2517, %v475
  %v2522 = vmul.bf16 %v2516, %v476
  %v2523 = vmul.bf16 %v2517, %v477
  %v2524 = vmul.bf16 %v2516, %v478
  %v2525 = vmul.bf16 %v2517, %v479
  %v2527 = vsel %vm232, %v2504, 0
  %v2530 = vsel %vm232, %v2505, 0
  %v2533 = vsel %vm232, %v2508, 0
  %v2536 = vsel %vm232, %v2509, 0
  %v2539 = vsel %vm232, %v2510, 0
  %v2542 = vsel %vm232, %v2511, 0
  %v2545 = vsel %vm232, %v2512, 0
  %v2548 = vsel %vm232, %v2513, 0
  %v2551 = vsel %vm232, %v2514, 0
  %v2554 = vsel %vm232, %v2515, 0
  %2556 = vmatprep.subr.bf16.mxu0 0
  %2557 = vmatpush1.bf16.xpose.msra.mxu0 %v2533
  %2558 = vmatprep.subr.bf16.mxu0 0
  %2559 = vmatpush1.bf16.xpose.msra.mxu0 %v2536
  %2560 = vmatprep.subr.bf16.mxu0 0
  %2561 = vmatpush1.bf16.xpose.msra.mxu0 %v2539
  %2562 = vmatprep.subr.bf16.mxu0 0
  %2563 = vmatpush1.bf16.xpose.msra.mxu0 %v2542
  %2564 = vmatprep.subr.bf16.mxu0 0
  %2565 = vmatpush1.bf16.xpose.msra.mxu0 %v2545
  %2566 = vmatprep.subr.bf16.mxu0 0
  %2567 = vmatpush1.bf16.xpose.msra.mxu0 %v2548
  %2568 = vmatprep.subr.bf16.mxu0 0
  %2569 = vmatpush1.bf16.xpose.msra.mxu0 %v2551
  %2570 = vmatprep.subr.bf16.mxu0 0
  %2571 = vmatpush1.bf16.xpose.msra.mxu0 %v2554
  %2572 = vmatprep.subr.bf16.mxu0 0
  %2573 = vmatpush1.bf16.xpose.msra.mxu0 0
  %2574 = vmatprep.subr.bf16.mxu0 0
  %2575 = vmatpush1.bf16.xpose.msra.mxu0 0
  %2576 = vmatprep.subr.bf16.mxu0 0
  %2577 = vmatpush1.bf16.xpose.msra.mxu0 0
  %2578 = vmatprep.subr.bf16.mxu0 0
  %2579 = vmatpush1.bf16.xpose.msra.mxu0 0
  %2580 = vmatprep.subr.bf16.mxu0 0
  %2581 = vmatpush1.bf16.xpose.msra.mxu0 0
  %2582 = vmatprep.subr.bf16.mxu0 0
  %2583 = vmatpush1.bf16.xpose.msra.mxu0 0
  %2584 = vmatprep.subr.bf16.mxu0 0
  %2585 = vmatpush1.bf16.xpose.msra.mxu0 0
  %2586 = vmatprep.subr.bf16.mxu0 0
  %2587 = vmatpush1.bf16.xpose.msra.mxu0 0
  %2588 = vmatprep.mubr.bf16.mxu0 0
  %2589 = vmatmul.mubr.bf16.gmra.mrb[0].mxu0 %v2527
  %v2590 = vpop.f32.mrb[0].mxu0
  %v2591 = vadd.f32 %v85, %v2590
  %v2592 = vpop.f32.mrb[0].mxu0
  %v2593 = vpop.f32.mrb[0].mxu0
  %v2594 = vadd.f32 %v86, %v2593
  %v2595 = vpop.f32.mrb[0].mxu0
  %2596 = vmatprep.mubr.bf16.mxu0 0
  %2597 = vmatmul.mubr.bf16.gmra.mrb[0].mxu0 %v2530
  %v2598 = vpop.f32.mrb[0].mxu0
  %v2599 = vadd.f32 %v87, %v2598
  %v2600 = vpop.f32.mrb[0].mxu0
  %v2601 = vpop.f32.mrb[0].mxu0
  %v2602 = vadd.f32 %v88, %v2601
  %v2603 = vpop.f32.mrb[0].mxu0
  %2604 = vmatprep.mubr.bf16.mxu0 0
  %2605 = vmatmul.mubr.bf16.gmra.mrb[0].mxu0 %v2527
  %v2606 = vpop.f32.mrb[0].mxu0
  %v2607 = vadd.f32 %v89, %v2606
  %v2608 = vpop.f32.mrb[0].mxu0
  %v2609 = vpop.f32.mrb[0].mxu0
  %v2610 = vadd.f32 %v90, %v2609
  %v2611 = vpop.f32.mrb[0].mxu0
  %2612 = vmatprep.mubr.bf16.mxu0 0
  %2613 = vmatmul.mubr.bf16.gmra.mrb[0].mxu0 %v2530
  %v2614 = vpop.f32.mrb[0].mxu0
  %v2615 = vadd.f32 %v91, %v2614
  %v2616 = vpop.f32.mrb[0].mxu0
  %v2617 = vpop.f32.mrb[0].mxu0
  %v2618 = vadd.f32 %v92, %v2617
  %v2619 = vpop.f32.mrb[0].mxu0
  %2620 = vmatprep.mubr.bf16.mxu0 0
  %2621 = vmatmul.mubr.bf16.gmra.mrb[0].mxu0 %v2527
  %v2622 = vpop.f32.mrb[0].mxu0
  %v2623 = vadd.f32 %v93, %v2622
  %v2624 = vpop.f32.mrb[0].mxu0
  %v2625 = vpop.f32.mrb[0].mxu0
  %v2626 = vadd.f32 %v94, %v2625
  %v2627 = vpop.f32.mrb[0].mxu0
  %2628 = vmatprep.mubr.bf16.mxu0 0
  %2629 = vmatmul.mubr.bf16.gmra.mrb[0].mxu0 %v2530
  %v2630 = vpop.f32.mrb[0].mxu0
  %v2631 = vadd.f32 %v95, %v2630
  %v2632 = vpop.f32.mrb[0].mxu0
  %v2633 = vpop.f32.mrb[0].mxu0
  %v2634 = vadd.f32 %v96, %v2633
  %v2635 = vpop.f32.mrb[0].mxu0
  %2636 = vmatprep.mubr.bf16.mxu0 0
  %2637 = vmatmul.mubr.bf16.gmra.mrb[0].mxu0 %v2527
  %v2638 = vpop.f32.mrb[0].mxu0
  %v2639 = vadd.f32 %v97, %v2638
  %v2640 = vpop.f32.mrb[0].mxu0
  %v2641 = vpop.f32.mrb[0].mxu0
  %v2642 = vadd.f32 %v98, %v2641
  %v2643 = vpop.f32.mrb[0].mxu0
  %2644 = vmatprep.mubr.bf16.mxu0 0
  %2645 = vmatmul.mubr.bf16.gmra.mrb[0].mxu0 %v2530
  %v2646 = vpop.f32.mrb[0].mxu0
  %v2647 = vadd.f32 %v99, %v2646
  %v2648 = vpop.f32.mrb[0].mxu0
  %v2649 = vpop.f32.mrb[0].mxu0
  %v2650 = vadd.f32 %v100, %v2649
  %v2651 = vpop.f32.mrb[0].mxu0
  %2652 = vdwg.mxu0
  %2653 = vmax.xlane.f32.xlu0 %v2591
  %v2654 = vpop.xlane.xlu0 %2653
  %2655 = vmax.xlane.f32.xlu0 %v2594
  %v2656 = vpop.xlane.xlu0 %2655
  %2657 = vmax.xlane.f32.xlu0 %v2599
  %v2658 = vpop.xlane.xlu0 %2657
  %2659 = vmax.xlane.f32.xlu0 %v2602
  %v2660 = vpop.xlane.xlu0 %2659
  %2661 = vmax.xlane.f32.xlu0 %v2607
  %v2662 = vpop.xlane.xlu0 %2661
  %2663 = vmax.xlane.f32.xlu0 %v2610
  %v2664 = vpop.xlane.xlu0 %2663
  %2665 = vmax.xlane.f32.xlu0 %v2615
  %v2666 = vpop.xlane.xlu0 %2665
  %2667 = vmax.xlane.f32.xlu0 %v2618
  %v2668 = vpop.xlane.xlu0 %2667
  %2669 = vmax.xlane.f32.xlu0 %v2623
  %v2670 = vpop.xlane.xlu0 %2669
  %2671 = vmax.xlane.f32.xlu0 %v2626
  %v2672 = vpop.xlane.xlu0 %2671
  %2673 = vmax.xlane.f32.xlu0 %v2631
  %v2674 = vpop.xlane.xlu0 %2673
  %2675 = vmax.xlane.f32.xlu0 %v2634
  %v2676 = vpop.xlane.xlu0 %2675
  %2677 = vmax.xlane.f32.xlu0 %v2639
  %v2678 = vpop.xlane.xlu0 %2677
  %2679 = vmax.xlane.f32.xlu0 %v2642
  %v2680 = vpop.xlane.xlu0 %2679
  %2681 = vmax.xlane.f32.xlu0 %v2647
  %v2682 = vpop.xlane.xlu0 %2681
  %2683 = vmax.xlane.f32.xlu0 %v2650
  %v2684 = vpop.xlane.xlu0 %2683
  %v2685 = vsub.f32 %v2591, %v2654
  %v2686 = vsub.f32 %v2594, %v2656
  %v2687 = vsub.f32 %v2599, %v2658
  %v2688 = vsub.f32 %v2602, %v2660
  %v2689 = vsub.f32 %v2607, %v2662
  %v2690 = vsub.f32 %v2610, %v2664
  %v2691 = vsub.f32 %v2615, %v2666
  %v2692 = vsub.f32 %v2618, %v2668
  %v2693 = vsub.f32 %v2623, %v2670
  %v2694 = vsub.f32 %v2626, %v2672
  %v2695 = vsub.f32 %v2631, %v2674
  %v2696 = vsub.f32 %v2634, %v2676
  %v2697 = vsub.f32 %v2639, %v2678
  %v2698 = vsub.f32 %v2642, %v2680
  %v2699 = vsub.f32 %v2647, %v2682
  %v2700 = vsub.f32 %v2650, %v2684
  %v2701 = vmul.f32 %v2685, 1.442695
  %v2702 = vpow.pop %v2701
  %v2703 = vmul.f32 %v2686, 1.442695
  %v2704 = vpow.pop %v2703
  %v2705 = vmul.f32 %v2687, 1.442695
  %v2706 = vpow.pop %v2705
  %v2707 = vmul.f32 %v2688, 1.442695
  %v2708 = vpow.pop %v2707
  %v2709 = vmul.f32 %v2689, 1.442695
  %v2710 = vpow.pop %v2709
  %v2711 = vmul.f32 %v2690, 1.442695
  %v2712 = vpow.pop %v2711
  %v2713 = vmul.f32 %v2691, 1.442695
  %v2714 = vpow.pop %v2713
  %v2715 = vmul.f32 %v2692, 1.442695
  %v2716 = vpow.pop %v2715
  %v2717 = vmul.f32 %v2693, 1.442695
  %v2718 = vpow.pop %v2717
  %v2719 = vmul.f32 %v2694, 1.442695
  %v2720 = vpow.pop %v2719
  %v2721 = vmul.f32 %v2695, 1.442695
  %v2722 = vpow.pop %v2721
  %v2723 = vmul.f32 %v2696, 1.442695
  %v2724 = vpow.pop %v2723
  %v2725 = vmul.f32 %v2697, 1.442695
  %v2726 = vpow.pop %v2725
  %v2727 = vmul.f32 %v2698, 1.442695
  %v2728 = vpow.pop %v2727
  %v2729 = vmul.f32 %v2699, 1.442695
  %v2730 = vpow.pop %v2729
  %v2731 = vmul.f32 %v2700, 1.442695
  %v2732 = vpow.pop %v2731
  %2733 = vadd.xlane.f32.xlu0 %v2702
  %v2734 = vpop.xlane.xlu0 %2733
  %2735 = vadd.xlane.f32.xlu0 %v2704
  %v2736 = vpop.xlane.xlu0 %2735
  %2737 = vadd.xlane.f32.xlu0 %v2706
  %v2738 = vpop.xlane.xlu0 %2737
  %2739 = vadd.xlane.f32.xlu0 %v2708
  %v2740 = vpop.xlane.xlu0 %2739
  %2741 = vadd.xlane.f32.xlu0 %v2710
  %v2742 = vpop.xlane.xlu0 %2741
  %2743 = vadd.xlane.f32.xlu0 %v2712
  %v2744 = vpop.xlane.xlu0 %2743
  %2745 = vadd.xlane.f32.xlu0 %v2714
  %v2746 = vpop.xlane.xlu0 %2745
  %2747 = vadd.xlane.f32.xlu0 %v2716
  %v2748 = vpop.xlane.xlu0 %2747
  %2749 = vadd.xlane.f32.xlu0 %v2718
  %v2750 = vpop.xlane.xlu0 %2749
  %2751 = vadd.xlane.f32.xlu0 %v2720
  %v2752 = vpop.xlane.xlu0 %2751
  %2753 = vadd.xlane.f32.xlu0 %v2722
  %v2754 = vpop.xlane.xlu0 %2753
  %2755 = vadd.xlane.f32.xlu0 %v2724
  %v2756 = vpop.xlane.xlu0 %2755
  %2757 = vadd.xlane.f32.xlu0 %v2726
  %v2758 = vpop.xlane.xlu0 %2757
  %2759 = vadd.xlane.f32.xlu0 %v2728
  %v2760 = vpop.xlane.xlu0 %2759
  %2761 = vadd.xlane.f32.xlu0 %v2730
  %v2762 = vpop.xlane.xlu0 %2761
  %2763 = vadd.xlane.f32.xlu0 %v2732
  %v2764 = vpop.xlane.xlu0 %2763
  %v2765 = vrcp.pop %v2734
  %v2766 = vrcp.pop %v2736
  %v2767 = vrcp.pop %v2738
  %v2768 = vrcp.pop %v2740
  %v2769 = vrcp.pop %v2742
  %v2770 = vrcp.pop %v2744
  %v2771 = vrcp.pop %v2746
  %v2772 = vrcp.pop %v2748
  %v2773 = vrcp.pop %v2750
  %v2774 = vrcp.pop %v2752
  %v2775 = vrcp.pop %v2754
  %v2776 = vrcp.pop %v2756
  %v2777 = vrcp.pop %v2758
  %v2778 = vrcp.pop %v2760
  %v2779 = vrcp.pop %v2762
  %v2780 = vrcp.pop %v2764
  %v2781 = vmul.f32 %v2702, %v2765
  %v2782 = vmul.f32 %v2704, %v2766
  %v2783 = vmul.f32 %v2706, %v2767
  %v2784 = vmul.f32 %v2708, %v2768
  %v2785 = vmul.f32 %v2710, %v2769
  %v2786 = vmul.f32 %v2712, %v2770
  %v2787 = vmul.f32 %v2714, %v2771
  %v2788 = vmul.f32 %v2716, %v2772
  %v2789 = vmul.f32 %v2718, %v2773
  %v2790 = vmul.f32 %v2720, %v2774
  %v2791 = vmul.f32 %v2722, %v2775
  %v2792 = vmul.f32 %v2724, %v2776
  %v2793 = vmul.f32 %v2726, %v2777
  %v2794 = vmul.f32 %v2728, %v2778
  %v2795 = vmul.f32 %v2730, %v2779
  %v2796 = vmul.f32 %v2732, %v2780
  %v2797 = vpack.c.bf16 %v2782, %v2781
  %v2798 = vpack.c.bf16 %v2784, %v2783
  %v2799 = vpack.c.bf16 %v2786, %v2785
  %v2800 = vpack.c.bf16 %v2788, %v2787
  %v2801 = vpack.c.bf16 %v2790, %v2789
  %v2802 = vpack.c.bf16 %v2792, %v2791
  %v2803 = vpack.c.bf16 %v2794, %v2793
  %v2804 = vpack.c.bf16 %v2796, %v2795
  %2805 = vmatprep.subr.bf16.mxu0 0
  %2806 = vmatpush1.bf16.msra.mxu0 %v2518
  %2807 = vmatprep.subr.bf16.mxu0 0
  %2808 = vmatpush1.bf16.msra.mxu0 %v2519
  %2809 = vmatprep.subr.bf16.mxu0 0
  %2810 = vmatpush1.bf16.msra.mxu0 %v2520
  %2811 = vmatprep.subr.bf16.mxu0 0
  %2812 = vmatpush1.bf16.msra.mxu0 %v2521
  %2813 = vmatprep.subr.bf16.mxu0 0
  %2814 = vmatpush1.bf16.msra.mxu0 %v2522
  %2815 = vmatprep.subr.bf16.mxu0 0
  %2816 = vmatpush1.bf16.msra.mxu0 %v2523
  %2817 = vmatprep.subr.bf16.mxu0 0
  %2818 = vmatpush1.bf16.msra.mxu0 %v2524
  %2819 = vmatprep.subr.bf16.mxu0 0
  %2820 = vmatpush1.bf16.msra.mxu0 %v2525
  %2821 = vmatprep.subr.bf16.mxu0 0
  %2822 = vmatpush1.bf16.msra.mxu0 0
  %2823 = vmatprep.subr.bf16.mxu0 0
  %2824 = vmatpush1.bf16.msra.mxu0 0
  %2825 = vmatprep.subr.bf16.mxu0 0
  %2826 = vmatpush1.bf16.msra.mxu0 0
  %2827 = vmatprep.subr.bf16.mxu0 0
  %2828 = vmatpush1.bf16.msra.mxu0 0
  %2829 = vmatprep.subr.bf16.mxu0 0
  %2830 = vmatpush1.bf16.msra.mxu0 0
  %2831 = vmatprep.subr.bf16.mxu0 0
  %2832 = vmatpush1.bf16.msra.mxu0 0
  %2833 = vmatprep.subr.bf16.mxu0 0
  %2834 = vmatpush1.bf16.msra.mxu0 0
  %2835 = vmatprep.subr.bf16.mxu0 0
  %2836 = vmatpush1.bf16.msra.mxu0 0
  %2837 = vmatprep.mubr.bf16.mxu0 0
  %2838 = vmatmul.mubr.bf16.gmra.mrb[0].mxu0 %v2797
  %v2839 = vpop.f32.mrb[0].mxu0
  %v2840 = vadd.f32 0.0, %v2839
  %v2841 = vpop.f32.mrb[0].mxu0
  %v2842 = vpop.f32.mrb[0].mxu0
  %v2843 = vadd.f32 0.0, %v2842
  %v2844 = vpop.f32.mrb[0].mxu0
  %2845 = vmatprep.mubr.bf16.mxu0 0
  %2846 = vmatmul.mubr.bf16.gmra.mrb[0].mxu0 %v2798
  %v2847 = vpop.f32.mrb[0].mxu0
  %v2848 = vadd.f32 0.0, %v2847
  %v2849 = vpop.f32.mrb[0].mxu0
  %v2850 = vpop.f32.mrb[0].mxu0
  %v2851 = vadd.f32 0.0, %v2850
  %v2852 = vpop.f32.mrb[0].mxu0
  %2853 = vmatprep.mubr.bf16.mxu0 0
  %2854 = vmatmul.mubr.bf16.gmra.mrb[0].mxu0 %v2799
  %v2855 = vpop.f32.mrb[0].mxu0
  %v2856 = vadd.f32 0.0, %v2855
  %v2857 = vpop.f32.mrb[0].mxu0
  %v2858 = vpop.f32.mrb[0].mxu0
  %v2859 = vadd.f32 0.0, %v2858
  %v2860 = vpop.f32.mrb[0].mxu0
  %2861 = vmatprep.mubr.bf16.mxu0 0
  %2862 = vmatmul.mubr.bf16.gmra.mrb[0].mxu0 %v2800
  %v2863 = vpop.f32.mrb[0].mxu0
  %v2864 = vadd.f32 0.0, %v2863
  %v2865 = vpop.f32.mrb[0].mxu0
  %v2866 = vpop.f32.mrb[0].mxu0
  %v2867 = vadd.f32 0.0, %v2866
  %v2868 = vpop.f32.mrb[0].mxu0
  %2869 = vmatprep.mubr.bf16.mxu0 0
  %2870 = vmatmul.mubr.bf16.gmra.mrb[0].mxu0 %v2801
  %v2871 = vpop.f32.mrb[0].mxu0
  %v2872 = vadd.f32 0.0, %v2871
  %v2873 = vpop.f32.mrb[0].mxu0
  %v2874 = vpop.f32.mrb[0].mxu0
  %v2875 = vadd.f32 0.0, %v2874
  %v2876 = vpop.f32.mrb[0].mxu0
  %2877 = vmatprep.mubr.bf16.mxu0 0
  %2878 = vmatmul.mubr.bf16.gmra.mrb[0].mxu0 %v2802
  %v2879 = vpop.f32.mrb[0].mxu0
  %v2880 = vadd.f32 0.0, %v2879
  %v2881 = vpop.f32.mrb[0].mxu0
  %v2882 = vpop.f32.mrb[0].mxu0
  %v2883 = vadd.f32 0.0, %v2882
  %v2884 = vpop.f32.mrb[0].mxu0
  %2885 = vmatprep.mubr.bf16.mxu0 0
  %2886 = vmatmul.mubr.bf16.gmra.mrb[0].mxu0 %v2803
  %v2887 = vpop.f32.mrb[0].mxu0
  %v2888 = vadd.f32 0.0, %v2887
  %v2889 = vpop.f32.mrb[0].mxu0
  %v2890 = vpop.f32.mrb[0].mxu0
  %v2891 = vadd.f32 0.0, %v2890
  %v2892 = vpop.f32.mrb[0].mxu0
  %2893 = vmatprep.mubr.bf16.mxu0 0
  %2894 = vmatmul.mubr.bf16.gmra.mrb[0].mxu0 %v2804
  %v2895 = vpop.f32.mrb[0].mxu0
  %v2896 = vadd.f32 0.0, %v2895
  %v2897 = vpop.f32.mrb[0].mxu0
  %v2898 = vpop.f32.mrb[0].mxu0
  %v2899 = vadd.f32 0.0, %v2898
  %v2900 = vpop.f32.mrb[0].mxu0
  %2901 = vdwg.mxu0
  %v2902 = vadd.f32 %v2840, %v2856
  %v2903 = vadd.f32 %v2843, %v2859
  %v2904 = vadd.f32 %v2848, %v2864
  %v2905 = vadd.f32 %v2851, %v2867
  %v2906 = vadd.f32 %v2902, %v2872
  %v2907 = vadd.f32 %v2903, %v2875
  %v2908 = vadd.f32 %v2904, %v2880
  %v2909 = vadd.f32 %v2905, %v2883
  %v2910 = vadd.f32 %v2906, %v2888
  %v2911 = vadd.f32 %v2907, %v2891
  %v2912 = vadd.f32 %v2908, %v2896
  %v2913 = vadd.f32 %v2909, %v2899
  %v2914 = vpack.c.bf16 %v2911, %v2910
  %v2915 = vpack.c.bf16 %v2913, %v2912
  %s2916 = scalar_lea.vmem %s11, 16
  %v2917 = vld [vmem:[%s2916] sm:$0xf]
  %v2918 = vld [vmem:[%s2916 + $0x4] sm:$0xf]
  %v2919 = vld [vmem:[%s2916 + $0x8] sm:$0xf]
  %v2920 = vld [vmem:[%s2916 + $0xc] sm:$0xf]
  %s2921 = scalar_lea.vmem %s12, 1
  %v2922 = vld [vmem:[%s2921] sm:$0x1]
  %v2924 = vlaneseq
  %v2925 = vshrl.u32 %v2924, 7
  %v2926 = vsub.s32 0, %v2925
  %v2927 = vrot.slane %v2922, %v2926
  %v2933 = vunpack.c.l.b16 %v2917
  %v2934 = vunpack.c.l.b16 %v2918
  %v2935 = vunpack.c.l.b16 %v2919
  %v2936 = vunpack.c.l.b16 %v2920
  %v2937 = vpack.c.b16 %v2934, %v2933
  %v2938 = vpack.c.b16 %v2936, %v2935
  %v2942 = vsel %vm232, %v2914, 0
  %v2945 = vsel %vm232, %v2915, 0
  %2947 = vmatprep.subr.bf16.mxu0 0
  %2948 = vmatpush1.bf16.msra.mxu0 %v2937
  %2949 = vmatprep.subr.bf16.mxu0 0
  %2950 = vmatpush1.bf16.msra.mxu0 %v2938
  %2951 = vmatprep.subr.bf16.mxu0 0
  %2952 = vmatpush1.bf16.msra.mxu0 0
  %2953 = vmatprep.subr.bf16.mxu0 0
  %2954 = vmatpush1.bf16.msra.mxu0 0
  %2955 = vmatprep.subr.bf16.mxu0 0
  %2956 = vmatpush1.bf16.msra.mxu0 0
  %2957 = vmatprep.subr.bf16.mxu0 0
  %2958 = vmatpush1.bf16.msra.mxu0 0
  %2959 = vmatprep.subr.bf16.mxu0 0
  %2960 = vmatpush1.bf16.msra.mxu0 0
  %2961 = vmatprep.subr.bf16.mxu0 0
  %2962 = vmatpush1.bf16.msra.mxu0 0
  %2963 = vmatprep.subr.bf16.mxu0 0
  %2964 = vmatpush1.bf16.msra.mxu0 0
  %2965 = vmatprep.subr.bf16.mxu0 0
  %2966 = vmatpush1.bf16.msra.mxu0 0
  %2967 = vmatprep.subr.bf16.mxu0 0
  %2968 = vmatpush1.bf16.msra.mxu0 0
  %2969 = vmatprep.subr.bf16.mxu0 0
  %2970 = vmatpush1.bf16.msra.mxu0 0
  %2971 = vmatprep.subr.bf16.mxu0 0
  %2972 = vmatpush1.bf16.msra.mxu0 0
  %2973 = vmatprep.subr.bf16.mxu0 0
  %2974 = vmatpush1.bf16.msra.mxu0 0
  %2975 = vmatprep.subr.bf16.mxu0 0
  %2976 = vmatpush1.bf16.msra.mxu0 0
  %2977 = vmatprep.subr.bf16.mxu0 0
  %2978 = vmatpush1.bf16.msra.mxu0 0
  %2979 = vmatprep.mubr.bf16.mxu0 0
  %2980 = vmatmul.mubr.bf16.gmra.mrb[0].mxu0 %v2942
  %v2981 = vpop.f32.mrb[0].mxu0
  %v2982 = vadd.f32 %v2927, %v2981
  %v2983 = vpop.f32.mrb[0].mxu0
  %v2984 = vpop.f32.mrb[0].mxu0
  %v2985 = vadd.f32 %v2927, %v2984
  %v2986 = vpop.f32.mrb[0].mxu0
  %2987 = vmatprep.mubr.bf16.mxu0 0
  %2988 = vmatmul.mubr.bf16.gmra.mrb[0].mxu0 %v2945
  %v2989 = vpop.f32.mrb[0].mxu0
  %v2990 = vadd.f32 %v2927, %v2989
  %v2991 = vpop.f32.mrb[0].mxu0
  %v2992 = vpop.f32.mrb[0].mxu0
  %v2993 = vadd.f32 %v2927, %v2992
  %v2994 = vpop.f32.mrb[0].mxu0
  %2995 = vdwg.mxu0
  %v2996 = vadd.f32 %v2266, %v2982
  %v2997 = vadd.f32 %v2267, %v2985
  %v2998 = vadd.f32 %v2268, %v2990
  %v2999 = vadd.f32 %v2269, %v2993
  %v3000 = vsel %vm232, %v2996, 0.0
  %3001 = vadd.xlane.f32.xlu0 %v3000
  %v3002 = vpop.xlane.xlu0 %3001
  %v3003 = vsel %vm232, %v2997, 0.0
  %3004 = vadd.xlane.f32.xlu0 %v3003
  %v3005 = vpop.xlane.xlu0 %3004
  %v3006 = vsel %vm232, %v2998, 0.0
  %3007 = vadd.xlane.f32.xlu0 %v3006
  %v3008 = vpop.xlane.xlu0 %3007
  %v3009 = vsel %vm232, %v2999, 0.0
  %3010 = vadd.xlane.f32.xlu0 %v3009
  %v3011 = vpop.xlane.xlu0 %3010
  %v3012 = vmul.f32 %v3002, %v990
  %v3013 = vmul.f32 %v3005, %v990
  %v3014 = vmul.f32 %v3008, %v990
  %v3015 = vmul.f32 %v3011, %v990
  %v3016 = vsub.f32 %v2996, %v3012
  %v3017 = vsub.f32 %v2997, %v3013
  %v3018 = vsub.f32 %v2998, %v3014
  %v3019 = vsub.f32 %v2999, %v3015
  %v3020 = vmul.f32 %v3016, %v3016
  %v3021 = vmul.f32 %v3017, %v3017
  %v3022 = vmul.f32 %v3018, %v3018
  %v3023 = vmul.f32 %v3019, %v3019
  %v3024 = vsel %vm232, %v3020, 0.0
  %3025 = vadd.xlane.f32.xlu0 %v3024
  %v3026 = vpop.xlane.xlu0 %3025
  %v3027 = vsel %vm232, %v3021, 0.0
  %3028 = vadd.xlane.f32.xlu0 %v3027
  %v3029 = vpop.xlane.xlu0 %3028
  %v3030 = vsel %vm232, %v3022, 0.0
  %3031 = vadd.xlane.f32.xlu0 %v3030
  %v3032 = vpop.xlane.xlu0 %3031
  %v3033 = vsel %vm232, %v3023, 0.0
  %3034 = vadd.xlane.f32.xlu0 %v3033
  %v3035 = vpop.xlane.xlu0 %3034
  %v3036 = vmul.f32 %v3026, %v990
  %v3037 = vmul.f32 %v3029, %v990
  %v3038 = vmul.f32 %v3032, %v990
  %v3039 = vmul.f32 %v3035, %v990
  %v3040 = vadd.f32 %v3036, 1e-05
  %v3041 = vadd.f32 %v3037, 1e-05
  %v3042 = vadd.f32 %v3038, 1e-05
  %v3043 = vadd.f32 %v3039, 1e-05
  %v3044 = vrsqrt.pop %v3040
  %v3045 = vrsqrt.pop %v3041
  %v3046 = vrsqrt.pop %v3042
  %v3047 = vrsqrt.pop %v3043
  %v3048 = vmul.f32 %v3016, %v3044
  %v3049 = vmul.f32 %v3017, %v3045
  %v3050 = vmul.f32 %v3018, %v3046
  %v3051 = vmul.f32 %v3019, %v3047
  %s3052 = scalar_lea.vmem %s13, 1
  %v3053 = vld [vmem:[%s3052] sm:$0x1]
  %v3055 = vlaneseq
  %v3056 = vshrl.u32 %v3055, 7
  %v3057 = vsub.s32 0, %v3056
  %v3058 = vrot.slane %v3053, %v3057
  %v3060 = vmul.f32 %v3048, %v3058
  %v3061 = vmul.f32 %v3049, %v3058
  %v3062 = vmul.f32 %v3050, %v3058
  %v3063 = vmul.f32 %v3051, %v3058
  %s3064 = scalar_lea.vmem %s14, 1
  %v3065 = vld [vmem:[%s3064] sm:$0x1]
  %v3067 = vlaneseq
  %v3068 = vshrl.u32 %v3067, 7
  %v3069 = vsub.s32 0, %v3068
  %v3070 = vrot.slane %v3065, %v3069
  %v3072 = vadd.f32 %v3060, %v3070
  %v3073 = vadd.f32 %v3061, %v3070
  %v3074 = vadd.f32 %v3062, %v3070
  %v3075 = vadd.f32 %v3063, %v3070
  %v3076 = vpack.c.bf16 %v3073, %v3072
  %v3077 = vpack.c.bf16 %v3075, %v3074
  %s3078 = scalar_lea.vmem %s15, 128
  %v3079 = vld [vmem:[%s3078] sm:$0xff]
  %v3080 = vld [vmem:[%s3078 + $0x20] sm:$0xff]
  %v3081 = vld [vmem:[%s3078 + $0x40] sm:$0xff]
  %v3082 = vld [vmem:[%s3078 + $0x60] sm:$0xff]
  %s3083 = scalar_lea.vmem %s16, 8
  %v3084 = vld [vmem:[%s3083] sm:$0x3]
  %v3086 = vlaneseq
  %v3087 = vshrl.u32 %v3086, 7
  %v3088 = vsub.s32 0, %v3087
  %v3089 = vrot.slane %v3084, %v3088
  %v3090 = vlaneseq
  %v3091 = vshrl.u32 %v3090, 7
  %v3092 = vsub.s32 1, %v3091
  %v3093 = vrot.slane %v3084, %v3092
  %v3100 = vunpack.c.l.b16 %v3079
  %v3101 = vunpack.c.h.b16 %v3079
  %v3102 = vunpack.c.l.b16 %v3080
  %v3103 = vunpack.c.h.b16 %v3080
  %v3104 = vunpack.c.l.b16 %v3081
  %v3105 = vunpack.c.h.b16 %v3081
  %v3106 = vunpack.c.l.b16 %v3082
  %v3107 = vunpack.c.h.b16 %v3082
  %v3108 = vpack.c.b16 %v3102, %v3100
  %v3109 = vpack.c.b16 %v3103, %v3101
  %v3110 = vpack.c.b16 %v3106, %v3104
  %v3111 = vpack.c.b16 %v3107, %v3105
  %v3117 = vsel %vm232, %v3076, 0
  %v3120 = vsel %vm232, %v3077, 0
  %3122 = vmatprep.subr.bf16.mxu0 %v3109
  %3123 = vmatpush1.bf16.msra.mxu0 %v3108
  %3124 = vmatprep.subr.bf16.mxu0 %v3111
  %3125 = vmatpush1.bf16.msra.mxu0 %v3110
  %3126 = vmatprep.subr.bf16.mxu0 0
  %3127 = vmatpush1.bf16.msra.mxu0 0
  %3128 = vmatprep.subr.bf16.mxu0 0
  %3129 = vmatpush1.bf16.msra.mxu0 0
  %3130 = vmatprep.subr.bf16.mxu0 0
  %3131 = vmatpush1.bf16.msra.mxu0 0
  %3132 = vmatprep.subr.bf16.mxu0 0
  %3133 = vmatpush1.bf16.msra.mxu0 0
  %3134 = vmatprep.subr.bf16.mxu0 0
  %3135 = vmatpush1.bf16.msra.mxu0 0
  %3136 = vmatprep.subr.bf16.mxu0 0
  %3137 = vmatpush1.bf16.msra.mxu0 0
  %3138 = vmatprep.subr.bf16.mxu0 0
  %3139 = vmatpush1.bf16.msra.mxu0 0
  %3140 = vmatprep.subr.bf16.mxu0 0
  %3141 = vmatpush1.bf16.msra.mxu0 0
  %3142 = vmatprep.subr.bf16.mxu0 0
  %3143 = vmatpush1.bf16.msra.mxu0 0
  %3144 = vmatprep.subr.bf16.mxu0 0
  %3145 = vmatpush1.bf16.msra.mxu0 0
  %3146 = vmatprep.subr.bf16.mxu0 0
  %3147 = vmatpush1.bf16.msra.mxu0 0
  %3148 = vmatprep.subr.bf16.mxu0 0
  %3149 = vmatpush1.bf16.msra.mxu0 0
  %3150 = vmatprep.subr.bf16.mxu0 0
  %3151 = vmatpush1.bf16.msra.mxu0 0
  %3152 = vmatprep.subr.bf16.mxu0 0
  %3153 = vmatpush1.bf16.msra.mxu0 0
  %3154 = vmatprep.mubr.bf16.mxu0 0
  %3155 = vmatmul.mubr.bf16.gmra.mrb[0].mxu0 %v3117
  %v3156 = vpop.f32.mrb[0].mxu0
  %v3157 = vadd.f32 %v3089, %v3156
  %v3158 = vpop.f32.mrb[0].mxu0
  %v3159 = vadd.f32 %v3093, %v3158
  %v3160 = vpop.f32.mrb[0].mxu0
  %v3161 = vadd.f32 %v3089, %v3160
  %v3162 = vpop.f32.mrb[0].mxu0
  %v3163 = vadd.f32 %v3093, %v3162
  %3164 = vmatprep.mubr.bf16.mxu0 0
  %3165 = vmatmul.mubr.bf16.gmra.mrb[0].mxu0 %v3120
  %v3166 = vpop.f32.mrb[0].mxu0
  %v3167 = vadd.f32 %v3089, %v3166
  %v3168 = vpop.f32.mrb[0].mxu0
  %v3169 = vadd.f32 %v3093, %v3168
  %v3170 = vpop.f32.mrb[0].mxu0
  %v3171 = vadd.f32 %v3089, %v3170
  %v3172 = vpop.f32.mrb[0].mxu0
  %v3173 = vadd.f32 %v3093, %v3172
  %3174 = vdwg.mxu0
  %v3175 = vmax.f32 %v3157, 0.0
  %v3176 = vmax.f32 %v3159, 0.0
  %v3177 = vmax.f32 %v3161, 0.0
  %v3178 = vmax.f32 %v3163, 0.0
  %v3179 = vmax.f32 %v3167, 0.0
  %v3180 = vmax.f32 %v3169, 0.0
  %v3181 = vmax.f32 %v3171, 0.0
  %v3182 = vmax.f32 %v3173, 0.0
  %v3183 = vpack.c.bf16 %v3177, %v3175
  %v3184 = vpack.c.bf16 %v3178, %v3176
  %v3185 = vpack.c.bf16 %v3181, %v3179
  %v3186 = vpack.c.bf16 %v3182, %v3180
  %s3187 = scalar_lea.vmem %s17, 512
  %v3188 = vld [vmem:[%s3187] sm:$0xf]
  %v3189 = vld [vmem:[%s3187 + $0x4] sm:$0xf]
  %v3190 = vld [vmem:[%s3187 + $0x8] sm:$0xf]
  %v3191 = vld [vmem:[%s3187 + $0xc] sm:$0xf]
  %v3192 = vld [vmem:[%s3187 + $0x10] sm:$0xf]
  %v3193 = vld [vmem:[%s3187 + $0x14] sm:$0xf]
  %v3194 = vld [vmem:[%s3187 + $0x18] sm:$0xf]
  %v3195 = vld [vmem:[%s3187 + $0x1c] sm:$0xf]
  %v3196 = vld [vmem:[%s3187 + $0x20] sm:$0xf]
  %v3197 = vld [vmem:[%s3187 + $0x24] sm:$0xf]
  %v3198 = vld [vmem:[%s3187 + $0x28] sm:$0xf]
  %v3199 = vld [vmem:[%s3187 + $0x2c] sm:$0xf]
  %v3200 = vld [vmem:[%s3187 + $0x30] sm:$0xf]
  %v3201 = vld [vmem:[%s3187 + $0x34] sm:$0xf]
  %v3202 = vld [vmem:[%s3187 + $0x38] sm:$0xf]
  %v3203 = vld [vmem:[%s3187 + $0x3c] sm:$0xf]
  %v3204 = vld [vmem:[%s3187 + $0x40] sm:$0xf]
  %v3205 = vld [vmem:[%s3187 + $0x44] sm:$0xf]
  %v3206 = vld [vmem:[%s3187 + $0x48] sm:$0xf]
  %v3207 = vld [vmem:[%s3187 + $0x4c] sm:$0xf]
  %v3208 = vld [vmem:[%s3187 + $0x50] sm:$0xf]
  %v3209 = vld [vmem:[%s3187 + $0x54] sm:$0xf]
  %v3210 = vld [vmem:[%s3187 + $0x58] sm:$0xf]
  %v3211 = vld [vmem:[%s3187 + $0x5c] sm:$0xf]
  %v3212 = vld [vmem:[%s3187 + $0x60] sm:$0xf]
  %v3213 = vld [vmem:[%s3187 + $0x64] sm:$0xf]
  %v3214 = vld [vmem:[%s3187 + $0x68] sm:$0xf]
  %v3215 = vld [vmem:[%s3187 + $0x6c] sm:$0xf]
  %v3216 = vld [vmem:[%s3187 + $0x70] sm:$0xf]
  %v3217 = vld [vmem:[%s3187 + $0x74] sm:$0xf]
  %v3218 = vld [vmem:[%s3187 + $0x78] sm:$0xf]
  %v3219 = vld [vmem:[%s3187 + $0x7c] sm:$0xf]
  %v3220 = vld [vmem:[%s3078 + $0x8] sm:$0xff]
  %v3221 = vld [vmem:[%s3078 + $0x28] sm:$0xff]
  %v3222 = vld [vmem:[%s3078 + $0x48] sm:$0xff]
  %v3223 = vld [vmem:[%s3078 + $0x68] sm:$0xff]
  %v3224 = vld [vmem:[%s3083 + $0x2] sm:$0x3]
  %v3226 = vlaneseq
  %v3227 = vshrl.u32 %v3226, 7
  %v3228 = vsub.s32 0, %v3227
  %v3229 = vrot.slane %v3224, %v3228
  %v3230 = vlaneseq
  %v3231 = vshrl.u32 %v3230, 7
  %v3232 = vsub.s32 1, %v3231
  %v3233 = vrot.slane %v3224, %v3232
  %v3240 = vunpack.c.l.b16 %v3220
  %v3241 = vunpack.c.h.b16 %v3220
  %v3242 = vunpack.c.l.b16 %v3221
  %v3243 = vunpack.c.h.b16 %v3221
  %v3244 = vunpack.c.l.b16 %v3222
  %v3245 = vunpack.c.h.b16 %v3222
  %v3246 = vunpack.c.l.b16 %v3223
  %v3247 = vunpack.c.h.b16 %v3223
  %v3248 = vpack.c.b16 %v3242, %v3240
  %v3249 = vpack.c.b16 %v3243, %v3241
  %v3250 = vpack.c.b16 %v3246, %v3244
  %v3251 = vpack.c.b16 %v3247, %v3245
  %3256 = vmatprep.subr.bf16.mxu0 %v3249
  %3257 = vmatpush1.bf16.msra.mxu0 %v3248
  %3258 = vmatprep.subr.bf16.mxu0 %v3251
  %3259 = vmatpush1.bf16.msra.mxu0 %v3250
  %3260 = vmatprep.subr.bf16.mxu0 0
  %3261 = vmatpush1.bf16.msra.mxu0 0
  %3262 = vmatprep.subr.bf16.mxu0 0
  %3263 = vmatpush1.bf16.msra.mxu0 0
  %3264 = vmatprep.subr.bf16.mxu0 0
  %3265 = vmatpush1.bf16.msra.mxu0 0
  %3266 = vmatprep.subr.bf16.mxu0 0
  %3267 = vmatpush1.bf16.msra.mxu0 0
  %3268 = vmatprep.subr.bf16.mxu0 0
  %3269 = vmatpush1.bf16.msra.mxu0 0
  %3270 = vmatprep.subr.bf16.mxu0 0
  %3271 = vmatpush1.bf16.msra.mxu0 0
  %3272 = vmatprep.subr.bf16.mxu0 0
  %3273 = vmatpush1.bf16.msra.mxu0 0
  %3274 = vmatprep.subr.bf16.mxu0 0
  %3275 = vmatpush1.bf16.msra.mxu0 0
  %3276 = vmatprep.subr.bf16.mxu0 0
  %3277 = vmatpush1.bf16.msra.mxu0 0
  %3278 = vmatprep.subr.bf16.mxu0 0
  %3279 = vmatpush1.bf16.msra.mxu0 0
  %3280 = vmatprep.subr.bf16.mxu0 0
  %3281 = vmatpush1.bf16.msra.mxu0 0
  %3282 = vmatprep.subr.bf16.mxu0 0
  %3283 = vmatpush1.bf16.msra.mxu0 0
  %3284 = vmatprep.subr.bf16.mxu0 0
  %3285 = vmatpush1.bf16.msra.mxu0 0
  %3286 = vmatprep.subr.bf16.mxu0 0
  %3287 = vmatpush1.bf16.msra.mxu0 0
  %3288 = vmatprep.mubr.bf16.mxu0 0
  %3289 = vmatmul.mubr.bf16.gmra.mrb[0].mxu0 %v3117
  %v3290 = vpop.f32.mrb[0].mxu0
  %v3291 = vadd.f32 %v3229, %v3290
  %v3292 = vpop.f32.mrb[0].mxu0
  %v3293 = vadd.f32 %v3233, %v3292
  %v3294 = vpop.f32.mrb[0].mxu0
  %v3295 = vadd.f32 %v3229, %v3294
  %v3296 = vpop.f32.mrb[0].mxu0
  %v3297 = vadd.f32 %v3233, %v3296
  %3298 = vmatprep.mubr.bf16.mxu0 0
  %3299 = vmatmul.mubr.bf16.gmra.mrb[0].mxu0 %v3120
  %v3300 = vpop.f32.mrb[0].mxu0
  %v3301 = vadd.f32 %v3229, %v3300
  %v3302 = vpop.f32.mrb[0].mxu0
  %v3303 = vadd.f32 %v3233, %v3302
  %v3304 = vpop.f32.mrb[0].mxu0
  %v3305 = vadd.f32 %v3229, %v3304
  %v3306 = vpop.f32.mrb[0].mxu0
  %v3307 = vadd.f32 %v3233, %v3306
  %3308 = vdwg.mxu0
  %v3309 = vmax.f32 %v3291, 0.0
  %v3310 = vmax.f32 %v3293, 0.0
  %v3311 = vmax.f32 %v3295, 0.0
  %v3312 = vmax.f32 %v3297, 0.0
  %v3313 = vmax.f32 %v3301, 0.0
  %v3314 = vmax.f32 %v3303, 0.0
  %v3315 = vmax.f32 %v3305, 0.0
  %v3316 = vmax.f32 %v3307, 0.0
  %v3317 = vpack.c.bf16 %v3311, %v3309
  %v3318 = vpack.c.bf16 %v3312, %v3310
  %v3319 = vpack.c.bf16 %v3315, %v3313
  %v3320 = vpack.c.bf16 %v3316, %v3314
  %v3321 = vld [vmem:[%s3187 + $0x80] sm:$0xf]
  %v3322 = vld [vmem:[%s3187 + $0x84] sm:$0xf]
  %v3323 = vld [vmem:[%s3187 + $0x88] sm:$0xf]
  %v3324 = vld [vmem:[%s3187 + $0x8c] sm:$0xf]
  %v3325 = vld [vmem:[%s3187 + $0x90] sm:$0xf]
  %v3326 = vld [vmem:[%s3187 + $0x94] sm:$0xf]
  %v3327 = vld [vmem:[%s3187 + $0x98] sm:$0xf]
  %v3328 = vld [vmem:[%s3187 + $0x9c] sm:$0xf]
  %v3329 = vld [vmem:[%s3187 + $0xa0] sm:$0xf]
  %v3330 = vld [vmem:[%s3187 + $0xa4] sm:$0xf]
  %v3331 = vld [vmem:[%s3187 + $0xa8] sm:$0xf]
  %v3332 = vld [vmem:[%s3187 + $0xac] sm:$0xf]
  %v3333 = vld [vmem:[%s3187 + $0xb0] sm:$0xf]
  %v3334 = vld [vmem:[%s3187 + $0xb4] sm:$0xf]
  %v3335 = vld [vmem:[%s3187 + $0xb8] sm:$0xf]
  %v3336 = vld [vmem:[%s3187 + $0xbc] sm:$0xf]
  %v3337 = vld [vmem:[%s3187 + $0xc0] sm:$0xf]
  %v3338 = vld [vmem:[%s3187 + $0xc4] sm:$0xf]
  %v3339 = vld [vmem:[%s3187 + $0xc8] sm:$0xf]
  %v3340 = vld [vmem:[%s3187 + $0xcc] sm:$0xf]
  %v3341 = vld [vmem:[%s3187 + $0xd0] sm:$0xf]
  %v3342 = vld [vmem:[%s3187 + $0xd4] sm:$0xf]
  %v3343 = vld [vmem:[%s3187 + $0xd8] sm:$0xf]
  %v3344 = vld [vmem:[%s3187 + $0xdc] sm:$0xf]
  %v3345 = vld [vmem:[%s3187 + $0xe0] sm:$0xf]
  %v3346 = vld [vmem:[%s3187 + $0xe4] sm:$0xf]
  %v3347 = vld [vmem:[%s3187 + $0xe8] sm:$0xf]
  %v3348 = vld [vmem:[%s3187 + $0xec] sm:$0xf]
  %v3349 = vld [vmem:[%s3187 + $0xf0] sm:$0xf]
  %v3350 = vld [vmem:[%s3187 + $0xf4] sm:$0xf]
  %v3351 = vld [vmem:[%s3187 + $0xf8] sm:$0xf]
  %v3352 = vld [vmem:[%s3187 + $0xfc] sm:$0xf]
  %v3385 = vunpack.c.l.b16 %v3321
  %v3386 = vunpack.c.l.b16 %v3322
  %v3387 = vunpack.c.l.b16 %v3323
  %v3388 = vunpack.c.l.b16 %v3324
  %v3389 = vunpack.c.l.b16 %v3325
  %v3390 = vunpack.c.l.b16 %v3326
  %v3391 = vunpack.c.l.b16 %v3327
  %v3392 = vunpack.c.l.b16 %v3328
  %v3393 = vunpack.c.l.b16 %v3329
  %v3394 = vunpack.c.l.b16 %v3330
  %v3395 = vunpack.c.l.b16 %v3331
  %v3396 = vunpack.c.l.b16 %v3332
  %v3397 = vunpack.c.l.b16 %v3333
  %v3398 = vunpack.c.l.b16 %v3334
  %v3399 = vunpack.c.l.b16 %v3335
  %v3400 = vunpack.c.l.b16 %v3336
  %v3401 = vunpack.c.l.b16 %v3337
  %v3402 = vunpack.c.l.b16 %v3338
  %v3403 = vunpack.c.l.b16 %v3339
  %v3404 = vunpack.c.l.b16 %v3340
  %v3405 = vunpack.c.l.b16 %v3341
  %v3406 = vunpack.c.l.b16 %v3342
  %v3407 = vunpack.c.l.b16 %v3343
  %v3408 = vunpack.c.l.b16 %v3344
  %v3409 = vunpack.c.l.b16 %v3345
  %v3410 = vunpack.c.l.b16 %v3346
  %v3411 = vunpack.c.l.b16 %v3347
  %v3412 = vunpack.c.l.b16 %v3348
  %v3413 = vunpack.c.l.b16 %v3349
  %v3414 = vunpack.c.l.b16 %v3350
  %v3415 = vunpack.c.l.b16 %v3351
  %v3416 = vunpack.c.l.b16 %v3352
  %v3417 = vpack.c.b16 %v3386, %v3385
  %v3418 = vpack.c.b16 %v3388, %v3387
  %v3419 = vpack.c.b16 %v3390, %v3389
  %v3420 = vpack.c.b16 %v3392, %v3391
  %v3421 = vpack.c.b16 %v3394, %v3393
  %v3422 = vpack.c.b16 %v3396, %v3395
  %v3423 = vpack.c.b16 %v3398, %v3397
  %v3424 = vpack.c.b16 %v3400, %v3399
  %v3425 = vpack.c.b16 %v3402, %v3401
  %v3426 = vpack.c.b16 %v3404, %v3403
  %v3427 = vpack.c.b16 %v3406, %v3405
  %v3428 = vpack.c.b16 %v3408, %v3407
  %v3429 = vpack.c.b16 %v3410, %v3409
  %v3430 = vpack.c.b16 %v3412, %v3411
  %v3431 = vpack.c.b16 %v3414, %v3413
  %v3432 = vpack.c.b16 %v3416, %v3415
  %3449 = vmatprep.subr.bf16.mxu0 0
  %3450 = vmatpush1.bf16.msra.mxu0 %v3417
  %3451 = vmatprep.subr.bf16.mxu0 0
  %3452 = vmatpush1.bf16.msra.mxu0 %v3418
  %3453 = vmatprep.subr.bf16.mxu0 0
  %3454 = vmatpush1.bf16.msra.mxu0 %v3419
  %3455 = vmatprep.subr.bf16.mxu0 0
  %3456 = vmatpush1.bf16.msra.mxu0 %v3420
  %3457 = vmatprep.subr.bf16.mxu0 0
  %3458 = vmatpush1.bf16.msra.mxu0 %v3421
  %3459 = vmatprep.subr.bf16.mxu0 0
  %3460 = vmatpush1.bf16.msra.mxu0 %v3422
  %3461 = vmatprep.subr.bf16.mxu0 0
  %3462 = vmatpush1.bf16.msra.mxu0 %v3423
  %3463 = vmatprep.subr.bf16.mxu0 0
  %3464 = vmatpush1.bf16.msra.mxu0 %v3424
  %3465 = vmatprep.subr.bf16.mxu0 0
  %3466 = vmatpush1.bf16.msra.mxu0 %v3425
  %3467 = vmatprep.subr.bf16.mxu0 0
  %3468 = vmatpush1.bf16.msra.mxu0 %v3426
  %3469 = vmatprep.subr.bf16.mxu0 0
  %3470 = vmatpush1.bf16.msra.mxu0 %v3427
  %3471 = vmatprep.subr.bf16.mxu0 0
  %3472 = vmatpush1.bf16.msra.mxu0 %v3428
  %3473 = vmatprep.subr.bf16.mxu0 0
  %3474 = vmatpush1.bf16.msra.mxu0 %v3429
  %3475 = vmatprep.subr.bf16.mxu0 0
  %3476 = vmatpush1.bf16.msra.mxu0 %v3430
  %3477 = vmatprep.subr.bf16.mxu0 0
  %3478 = vmatpush1.bf16.msra.mxu0 %v3431
  %3479 = vmatprep.subr.bf16.mxu0 0
  %3480 = vmatpush1.bf16.msra.mxu0 %v3432
  %3481 = vmatprep.mubr.bf16.mxu0 %v3318
  %3482 = vmatmul.mubr.bf16.gmra.mrb[0].mxu0 %v3317
  %v3483 = vpop.f32.mrb[0].mxu0
  %v3484 = vadd.f32 0.0, %v3483
  %v3485 = vpop.f32.mrb[0].mxu0
  %v3486 = vpop.f32.mrb[0].mxu0
  %v3487 = vadd.f32 0.0, %v3486
  %v3488 = vpop.f32.mrb[0].mxu0
  %3489 = vmatprep.mubr.bf16.mxu0 %v3320
  %3490 = vmatmul.mubr.bf16.gmra.mrb[0].mxu0 %v3319
  %v3491 = vpop.f32.mrb[0].mxu0
  %v3492 = vadd.f32 0.0, %v3491
  %v3493 = vpop.f32.mrb[0].mxu0
  %v3494 = vpop.f32.mrb[0].mxu0
  %v3495 = vadd.f32 0.0, %v3494
  %v3496 = vpop.f32.mrb[0].mxu0
  %3497 = vdwg.mxu0
  %v3530 = vunpack.c.l.b16 %v3188
  %v3531 = vunpack.c.l.b16 %v3189
  %v3532 = vunpack.c.l.b16 %v3190
  %v3533 = vunpack.c.l.b16 %v3191
  %v3534 = vunpack.c.l.b16 %v3192
  %v3535 = vunpack.c.l.b16 %v3193
  %v3536 = vunpack.c.l.b16 %v3194
  %v3537 = vunpack.c.l.b16 %v3195
  %v3538 = vunpack.c.l.b16 %v3196
  %v3539 = vunpack.c.l.b16 %v3197
  %v3540 = vunpack.c.l.b16 %v3198
  %v3541 = vunpack.c.l.b16 %v3199
  %v3542 = vunpack.c.l.b16 %v3200
  %v3543 = vunpack.c.l.b16 %v3201
  %v3544 = vunpack.c.l.b16 %v3202
  %v3545 = vunpack.c.l.b16 %v3203
  %v3546 = vunpack.c.l.b16 %v3204
  %v3547 = vunpack.c.l.b16 %v3205
  %v3548 = vunpack.c.l.b16 %v3206
  %v3549 = vunpack.c.l.b16 %v3207
  %v3550 = vunpack.c.l.b16 %v3208
  %v3551 = vunpack.c.l.b16 %v3209
  %v3552 = vunpack.c.l.b16 %v3210
  %v3553 = vunpack.c.l.b16 %v3211
  %v3554 = vunpack.c.l.b16 %v3212
  %v3555 = vunpack.c.l.b16 %v3213
  %v3556 = vunpack.c.l.b16 %v3214
  %v3557 = vunpack.c.l.b16 %v3215
  %v3558 = vunpack.c.l.b16 %v3216
  %v3559 = vunpack.c.l.b16 %v3217
  %v3560 = vunpack.c.l.b16 %v3218
  %v3561 = vunpack.c.l.b16 %v3219
  %v3562 = vpack.c.b16 %v3531, %v3530
  %v3563 = vpack.c.b16 %v3533, %v3532
  %v3564 = vpack.c.b16 %v3535, %v3534
  %v3565 = vpack.c.b16 %v3537, %v3536
  %v3566 = vpack.c.b16 %v3539, %v3538
  %v3567 = vpack.c.b16 %v3541, %v3540
  %v3568 = vpack.c.b16 %v3543, %v3542
  %v3569 = vpack.c.b16 %v3545, %v3544
  %v3570 = vpack.c.b16 %v3547, %v3546
  %v3571 = vpack.c.b16 %v3549, %v3548
  %v3572 = vpack.c.b16 %v3551, %v3550
  %v3573 = vpack.c.b16 %v3553, %v3552
  %v3574 = vpack.c.b16 %v3555, %v3554
  %v3575 = vpack.c.b16 %v3557, %v3556
  %v3576 = vpack.c.b16 %v3559, %v3558
  %v3577 = vpack.c.b16 %v3561, %v3560
  %3594 = vmatprep.subr.bf16.mxu0 0
  %3595 = vmatpush1.bf16.msra.mxu0 %v3562
  %3596 = vmatprep.subr.bf16.mxu0 0
  %3597 = vmatpush1.bf16.msra.mxu0 %v3563
  %3598 = vmatprep.subr.bf16.mxu0 0
  %3599 = vmatpush1.bf16.msra.mxu0 %v3564
  %3600 = vmatprep.subr.bf16.mxu0 0
  %3601 = vmatpush1.bf16.msra.mxu0 %v3565
  %3602 = vmatprep.subr.bf16.mxu0 0
  %3603 = vmatpush1.bf16.msra.mxu0 %v3566
  %3604 = vmatprep.subr.bf16.mxu0 0
  %3605 = vmatpush1.bf16.msra.mxu0 %v3567
  %3606 = vmatprep.subr.bf16.mxu0 0
  %3607 = vmatpush1.bf16.msra.mxu0 %v3568
  %3608 = vmatprep.subr.bf16.mxu0 0
  %3609 = vmatpush1.bf16.msra.mxu0 %v3569
  %3610 = vmatprep.subr.bf16.mxu0 0
  %3611 = vmatpush1.bf16.msra.mxu0 %v3570
  %3612 = vmatprep.subr.bf16.mxu0 0
  %3613 = vmatpush1.bf16.msra.mxu0 %v3571
  %3614 = vmatprep.subr.bf16.mxu0 0
  %3615 = vmatpush1.bf16.msra.mxu0 %v3572
  %3616 = vmatprep.subr.bf16.mxu0 0
  %3617 = vmatpush1.bf16.msra.mxu0 %v3573
  %3618 = vmatprep.subr.bf16.mxu0 0
  %3619 = vmatpush1.bf16.msra.mxu0 %v3574
  %3620 = vmatprep.subr.bf16.mxu0 0
  %3621 = vmatpush1.bf16.msra.mxu0 %v3575
  %3622 = vmatprep.subr.bf16.mxu0 0
  %3623 = vmatpush1.bf16.msra.mxu0 %v3576
  %3624 = vmatprep.subr.bf16.mxu0 0
  %3625 = vmatpush1.bf16.msra.mxu0 %v3577
  %3626 = vmatprep.mubr.bf16.mxu0 %v3184
  %3627 = vmatmul.mubr.bf16.gmra.mrb[0].mxu0 %v3183
  %v3628 = vpop.f32.mrb[0].mxu0
  %v3629 = vadd.f32 %v3484, %v3628
  %v3630 = vpop.f32.mrb[0].mxu0
  %v3631 = vpop.f32.mrb[0].mxu0
  %v3632 = vadd.f32 %v3487, %v3631
  %v3633 = vpop.f32.mrb[0].mxu0
  %3634 = vmatprep.mubr.bf16.mxu0 %v3186
  %3635 = vmatmul.mubr.bf16.gmra.mrb[0].mxu0 %v3185
  %v3636 = vpop.f32.mrb[0].mxu0
  %v3637 = vadd.f32 %v3492, %v3636
  %v3638 = vpop.f32.mrb[0].mxu0
  %v3639 = vpop.f32.mrb[0].mxu0
  %v3640 = vadd.f32 %v3495, %v3639
  %v3641 = vpop.f32.mrb[0].mxu0
  %3642 = vdwg.mxu0
  %v3643 = vld [vmem:[%s3078 + $0x10] sm:$0xff]
  %v3644 = vld [vmem:[%s3078 + $0x30] sm:$0xff]
  %v3645 = vld [vmem:[%s3078 + $0x50] sm:$0xff]
  %v3646 = vld [vmem:[%s3078 + $0x70] sm:$0xff]
  %v3647 = vld [vmem:[%s3083 + $0x4] sm:$0x3]
  %v3649 = vlaneseq
  %v3650 = vshrl.u32 %v3649, 7
  %v3651 = vsub.s32 0, %v3650
  %v3652 = vrot.slane %v3647, %v3651
  %v3653 = vlaneseq
  %v3654 = vshrl.u32 %v3653, 7
  %v3655 = vsub.s32 1, %v3654
  %v3656 = vrot.slane %v3647, %v3655
  %v3663 = vunpack.c.l.b16 %v3643
  %v3664 = vunpack.c.h.b16 %v3643
  %v3665 = vunpack.c.l.b16 %v3644
  %v3666 = vunpack.c.h.b16 %v3644
  %v3667 = vunpack.c.l.b16 %v3645
  %v3668 = vunpack.c.h.b16 %v3645
  %v3669 = vunpack.c.l.b16 %v3646
  %v3670 = vunpack.c.h.b16 %v3646
  %v3671 = vpack.c.b16 %v3665, %v3663
  %v3672 = vpack.c.b16 %v3666, %v3664
  %v3673 = vpack.c.b16 %v3669, %v3667
  %v3674 = vpack.c.b16 %v3670, %v3668
  %3679 = vmatprep.subr.bf16.mxu0 %v3672
  %3680 = vmatpush1.bf16.msra.mxu0 %v3671
  %3681 = vmatprep.subr.bf16.mxu0 %v3674
  %3682 = vmatpush1.bf16.msra.mxu0 %v3673
  %3683 = vmatprep.subr.bf16.mxu0 0
  %3684 = vmatpush1.bf16.msra.mxu0 0
  %3685 = vmatprep.subr.bf16.mxu0 0
  %3686 = vmatpush1.bf16.msra.mxu0 0
  %3687 = vmatprep.subr.bf16.mxu0 0
  %3688 = vmatpush1.bf16.msra.mxu0 0
  %3689 = vmatprep.subr.bf16.mxu0 0
  %3690 = vmatpush1.bf16.msra.mxu0 0
  %3691 = vmatprep.subr.bf16.mxu0 0
  %3692 = vmatpush1.bf16.msra.mxu0 0
  %3693 = vmatprep.subr.bf16.mxu0 0
  %3694 = vmatpush1.bf16.msra.mxu0 0
  %3695 = vmatprep.subr.bf16.mxu0 0
  %3696 = vmatpush1.bf16.msra.mxu0 0
  %3697 = vmatprep.subr.bf16.mxu0 0
  %3698 = vmatpush1.bf16.msra.mxu0 0
  %3699 = vmatprep.subr.bf16.mxu0 0
  %3700 = vmatpush1.bf16.msra.mxu0 0
  %3701 = vmatprep.subr.bf16.mxu0 0
  %3702 = vmatpush1.bf16.msra.mxu0 0
  %3703 = vmatprep.subr.bf16.mxu0 0
  %3704 = vmatpush1.bf16.msra.mxu0 0
  %3705 = vmatprep.subr.bf16.mxu0 0
  %3706 = vmatpush1.bf16.msra.mxu0 0
  %3707 = vmatprep.subr.bf16.mxu0 0
  %3708 = vmatpush1.bf16.msra.mxu0 0
  %3709 = vmatprep.subr.bf16.mxu0 0
  %3710 = vmatpush1.bf16.msra.mxu0 0
  %3711 = vmatprep.mubr.bf16.mxu0 0
  %3712 = vmatmul.mubr.bf16.gmra.mrb[0].mxu0 %v3117
  %v3713 = vpop.f32.mrb[0].mxu0
  %v3714 = vadd.f32 %v3652, %v3713
  %v3715 = vpop.f32.mrb[0].mxu0
  %v3716 = vadd.f32 %v3656, %v3715
  %v3717 = vpop.f32.mrb[0].mxu0
  %v3718 = vadd.f32 %v3652, %v3717
  %v3719 = vpop.f32.mrb[0].mxu0
  %v3720 = vadd.f32 %v3656, %v3719
  %3721 = vmatprep.mubr.bf16.mxu0 0
  %3722 = vmatmul.mubr.bf16.gmra.mrb[0].mxu0 %v3120
  %v3723 = vpop.f32.mrb[0].mxu0
  %v3724 = vadd.f32 %v3652, %v3723
  %v3725 = vpop.f32.mrb[0].mxu0
  %v3726 = vadd.f32 %v3656, %v3725
  %v3727 = vpop.f32.mrb[0].mxu0
  %v3728 = vadd.f32 %v3652, %v3727
  %v3729 = vpop.f32.mrb[0].mxu0
  %v3730 = vadd.f32 %v3656, %v3729
  %3731 = vdwg.mxu0
  %v3732 = vmax.f32 %v3714, 0.0
  %v3733 = vmax.f32 %v3716, 0.0
  %v3734 = vmax.f32 %v3718, 0.0
  %v3735 = vmax.f32 %v3720, 0.0
  %v3736 = vmax.f32 %v3724, 0.0
  %v3737 = vmax.f32 %v3726, 0.0
  %v3738 = vmax.f32 %v3728, 0.0
  %v3739 = vmax.f32 %v3730, 0.0
  %v3740 = vpack.c.bf16 %v3734, %v3732
  %v3741 = vpack.c.bf16 %v3735, %v3733
  %v3742 = vpack.c.bf16 %v3738, %v3736
  %v3743 = vpack.c.bf16 %v3739, %v3737
  %v3744 = vld [vmem:[%s3187 + $0x100] sm:$0xf]
  %v3745 = vld [vmem:[%s3187 + $0x104] sm:$0xf]
  %v3746 = vld [vmem:[%s3187 + $0x108] sm:$0xf]
  %v3747 = vld [vmem:[%s3187 + $0x10c] sm:$0xf]
  %v3748 = vld [vmem:[%s3187 + $0x110] sm:$0xf]
  %v3749 = vld [vmem:[%s3187 + $0x114] sm:$0xf]
  %v3750 = vld [vmem:[%s3187 + $0x118] sm:$0xf]
  %v3751 = vld [vmem:[%s3187 + $0x11c] sm:$0xf]
  %v3752 = vld [vmem:[%s3187 + $0x120] sm:$0xf]
  %v3753 = vld [vmem:[%s3187 + $0x124] sm:$0xf]
  %v3754 = vld [vmem:[%s3187 + $0x128] sm:$0xf]
  %v3755 = vld [vmem:[%s3187 + $0x12c] sm:$0xf]
  %v3756 = vld [vmem:[%s3187 + $0x130] sm:$0xf]
  %v3757 = vld [vmem:[%s3187 + $0x134] sm:$0xf]
  %v3758 = vld [vmem:[%s3187 + $0x138] sm:$0xf]
  %v3759 = vld [vmem:[%s3187 + $0x13c] sm:$0xf]
  %v3760 = vld [vmem:[%s3187 + $0x140] sm:$0xf]
  %v3761 = vld [vmem:[%s3187 + $0x144] sm:$0xf]
  %v3762 = vld [vmem:[%s3187 + $0x148] sm:$0xf]
  %v3763 = vld [vmem:[%s3187 + $0x14c] sm:$0xf]
  %v3764 = vld [vmem:[%s3187 + $0x150] sm:$0xf]
  %v3765 = vld [vmem:[%s3187 + $0x154] sm:$0xf]
  %v3766 = vld [vmem:[%s3187 + $0x158] sm:$0xf]
  %v3767 = vld [vmem:[%s3187 + $0x15c] sm:$0xf]
  %v3768 = vld [vmem:[%s3187 + $0x160] sm:$0xf]
  %v3769 = vld [vmem:[%s3187 + $0x164] sm:$0xf]
  %v3770 = vld [vmem:[%s3187 + $0x168] sm:$0xf]
  %v3771 = vld [vmem:[%s3187 + $0x16c] sm:$0xf]
  %v3772 = vld [vmem:[%s3187 + $0x170] sm:$0xf]
  %v3773 = vld [vmem:[%s3187 + $0x174] sm:$0xf]
  %v3774 = vld [vmem:[%s3187 + $0x178] sm:$0xf]
  %v3775 = vld [vmem:[%s3187 + $0x17c] sm:$0xf]
  %v3808 = vunpack.c.l.b16 %v3744
  %v3809 = vunpack.c.l.b16 %v3745
  %v3810 = vunpack.c.l.b16 %v3746
  %v3811 = vunpack.c.l.b16 %v3747
  %v3812 = vunpack.c.l.b16 %v3748
  %v3813 = vunpack.c.l.b16 %v3749
  %v3814 = vunpack.c.l.b16 %v3750
  %v3815 = vunpack.c.l.b16 %v3751
  %v3816 = vunpack.c.l.b16 %v3752
  %v3817 = vunpack.c.l.b16 %v3753
  %v3818 = vunpack.c.l.b16 %v3754
  %v3819 = vunpack.c.l.b16 %v3755
  %v3820 = vunpack.c.l.b16 %v3756
  %v3821 = vunpack.c.l.b16 %v3757
  %v3822 = vunpack.c.l.b16 %v3758
  %v3823 = vunpack.c.l.b16 %v3759
  %v3824 = vunpack.c.l.b16 %v3760
  %v3825 = vunpack.c.l.b16 %v3761
  %v3826 = vunpack.c.l.b16 %v3762
  %v3827 = vunpack.c.l.b16 %v3763
  %v3828 = vunpack.c.l.b16 %v3764
  %v3829 = vunpack.c.l.b16 %v3765
  %v3830 = vunpack.c.l.b16 %v3766
  %v3831 = vunpack.c.l.b16 %v3767
  %v3832 = vunpack.c.l.b16 %v3768
  %v3833 = vunpack.c.l.b16 %v3769
  %v3834 = vunpack.c.l.b16 %v3770
  %v3835 = vunpack.c.l.b16 %v3771
  %v3836 = vunpack.c.l.b16 %v3772
  %v3837 = vunpack.c.l.b16 %v3773
  %v3838 = vunpack.c.l.b16 %v3774
  %v3839 = vunpack.c.l.b16 %v3775
  %v3840 = vpack.c.b16 %v3809, %v3808
  %v3841 = vpack.c.b16 %v3811, %v3810
  %v3842 = vpack.c.b16 %v3813, %v3812
  %v3843 = vpack.c.b16 %v3815, %v3814
  %v3844 = vpack.c.b16 %v3817, %v3816
  %v3845 = vpack.c.b16 %v3819, %v3818
  %v3846 = vpack.c.b16 %v3821, %v3820
  %v3847 = vpack.c.b16 %v3823, %v3822
  %v3848 = vpack.c.b16 %v3825, %v3824
  %v3849 = vpack.c.b16 %v3827, %v3826
  %v3850 = vpack.c.b16 %v3829, %v3828
  %v3851 = vpack.c.b16 %v3831, %v3830
  %v3852 = vpack.c.b16 %v3833, %v3832
  %v3853 = vpack.c.b16 %v3835, %v3834
  %v3854 = vpack.c.b16 %v3837, %v3836
  %v3855 = vpack.c.b16 %v3839, %v3838
  %3872 = vmatprep.subr.bf16.mxu0 0
  %3873 = vmatpush1.bf16.msra.mxu0 %v3840
  %3874 = vmatprep.subr.bf16.mxu0 0
  %3875 = vmatpush1.bf16.msra.mxu0 %v3841
  %3876 = vmatprep.subr.bf16.mxu0 0
  %3877 = vmatpush1.bf16.msra.mxu0 %v3842
  %3878 = vmatprep.subr.bf16.mxu0 0
  %3879 = vmatpush1.bf16.msra.mxu0 %v3843
  %3880 = vmatprep.subr.bf16.mxu0 0
  %3881 = vmatpush1.bf16.msra.mxu0 %v3844
  %3882 = vmatprep.subr.bf16.mxu0 0
  %3883 = vmatpush1.bf16.msra.mxu0 %v3845
  %3884 = vmatprep.subr.bf16.mxu0 0
  %3885 = vmatpush1.bf16.msra.mxu0 %v3846
  %3886 = vmatprep.subr.bf16.mxu0 0
  %3887 = vmatpush1.bf16.msra.mxu0 %v3847
  %3888 = vmatprep.subr.bf16.mxu0 0
  %3889 = vmatpush1.bf16.msra.mxu0 %v3848
  %3890 = vmatprep.subr.bf16.mxu0 0
  %3891 = vmatpush1.bf16.msra.mxu0 %v3849
  %3892 = vmatprep.subr.bf16.mxu0 0
  %3893 = vmatpush1.bf16.msra.mxu0 %v3850
  %3894 = vmatprep.subr.bf16.mxu0 0
  %3895 = vmatpush1.bf16.msra.mxu0 %v3851
  %3896 = vmatprep.subr.bf16.mxu0 0
  %3897 = vmatpush1.bf16.msra.mxu0 %v3852
  %3898 = vmatprep.subr.bf16.mxu0 0
  %3899 = vmatpush1.bf16.msra.mxu0 %v3853
  %3900 = vmatprep.subr.bf16.mxu0 0
  %3901 = vmatpush1.bf16.msra.mxu0 %v3854
  %3902 = vmatprep.subr.bf16.mxu0 0
  %3903 = vmatpush1.bf16.msra.mxu0 %v3855
  %3904 = vmatprep.mubr.bf16.mxu0 %v3741
  %3905 = vmatmul.mubr.bf16.gmra.mrb[0].mxu0 %v3740
  %v3906 = vpop.f32.mrb[0].mxu0
  %v3907 = vadd.f32 0.0, %v3906
  %v3908 = vpop.f32.mrb[0].mxu0
  %v3909 = vpop.f32.mrb[0].mxu0
  %v3910 = vadd.f32 0.0, %v3909
  %v3911 = vpop.f32.mrb[0].mxu0
  %3912 = vmatprep.mubr.bf16.mxu0 %v3743
  %3913 = vmatmul.mubr.bf16.gmra.mrb[0].mxu0 %v3742
  %v3914 = vpop.f32.mrb[0].mxu0
  %v3915 = vadd.f32 0.0, %v3914
  %v3916 = vpop.f32.mrb[0].mxu0
  %v3917 = vpop.f32.mrb[0].mxu0
  %v3918 = vadd.f32 0.0, %v3917
  %v3919 = vpop.f32.mrb[0].mxu0
  %3920 = vdwg.mxu0
  %v3921 = vadd.f32 %v3629, %v3907
  %v3922 = vadd.f32 %v3632, %v3910
  %v3923 = vadd.f32 %v3637, %v3915
  %v3924 = vadd.f32 %v3640, %v3918
  %v3925 = vld [vmem:[%s3078 + $0x18] sm:$0xff]
  %v3926 = vld [vmem:[%s3078 + $0x38] sm:$0xff]
  %v3927 = vld [vmem:[%s3078 + $0x58] sm:$0xff]
  %v3928 = vld [vmem:[%s3078 + $0x78] sm:$0xff]
  %v3929 = vld [vmem:[%s3083 + $0x6] sm:$0x3]
  %v3931 = vlaneseq
  %v3932 = vshrl.u32 %v3931, 7
  %v3933 = vsub.s32 0, %v3932
  %v3934 = vrot.slane %v3929, %v3933
  %v3935 = vlaneseq
  %v3936 = vshrl.u32 %v3935, 7
  %v3937 = vsub.s32 1, %v3936
  %v3938 = vrot.slane %v3929, %v3937
  %v3945 = vunpack.c.l.b16 %v3925
  %v3946 = vunpack.c.h.b16 %v3925
  %v3947 = vunpack.c.l.b16 %v3926
  %v3948 = vunpack.c.h.b16 %v3926
  %v3949 = vunpack.c.l.b16 %v3927
  %v3950 = vunpack.c.h.b16 %v3927
  %v3951 = vunpack.c.l.b16 %v3928
  %v3952 = vunpack.c.h.b16 %v3928
  %v3953 = vpack.c.b16 %v3947, %v3945
  %v3954 = vpack.c.b16 %v3948, %v3946
  %v3955 = vpack.c.b16 %v3951, %v3949
  %v3956 = vpack.c.b16 %v3952, %v3950
  %3961 = vmatprep.subr.bf16.mxu0 %v3954
  %3962 = vmatpush1.bf16.msra.mxu0 %v3953
  %3963 = vmatprep.subr.bf16.mxu0 %v3956
  %3964 = vmatpush1.bf16.msra.mxu0 %v3955
  %3965 = vmatprep.subr.bf16.mxu0 0
  %3966 = vmatpush1.bf16.msra.mxu0 0
  %3967 = vmatprep.subr.bf16.mxu0 0
  %3968 = vmatpush1.bf16.msra.mxu0 0
  %3969 = vmatprep.subr.bf16.mxu0 0
  %3970 = vmatpush1.bf16.msra.mxu0 0
  %3971 = vmatprep.subr.bf16.mxu0 0
  %3972 = vmatpush1.bf16.msra.mxu0 0
  %3973 = vmatprep.subr.bf16.mxu0 0
  %3974 = vmatpush1.bf16.msra.mxu0 0
  %3975 = vmatprep.subr.bf16.mxu0 0
  %3976 = vmatpush1.bf16.msra.mxu0 0
  %3977 = vmatprep.subr.bf16.mxu0 0
  %3978 = vmatpush1.bf16.msra.mxu0 0
  %3979 = vmatprep.subr.bf16.mxu0 0
  %3980 = vmatpush1.bf16.msra.mxu0 0
  %3981 = vmatprep.subr.bf16.mxu0 0
  %3982 = vmatpush1.bf16.msra.mxu0 0
  %3983 = vmatprep.subr.bf16.mxu0 0
  %3984 = vmatpush1.bf16.msra.mxu0 0
  %3985 = vmatprep.subr.bf16.mxu0 0
  %3986 = vmatpush1.bf16.msra.mxu0 0
  %3987 = vmatprep.subr.bf16.mxu0 0
  %3988 = vmatpush1.bf16.msra.mxu0 0
  %3989 = vmatprep.subr.bf16.mxu0 0
  %3990 = vmatpush1.bf16.msra.mxu0 0
  %3991 = vmatprep.subr.bf16.mxu0 0
  %3992 = vmatpush1.bf16.msra.mxu0 0
  %3993 = vmatprep.mubr.bf16.mxu0 0
  %3994 = vmatmul.mubr.bf16.gmra.mrb[0].mxu0 %v3117
  %v3995 = vpop.f32.mrb[0].mxu0
  %v3996 = vadd.f32 %v3934, %v3995
  %v3997 = vpop.f32.mrb[0].mxu0
  %v3998 = vadd.f32 %v3938, %v3997
  %v3999 = vpop.f32.mrb[0].mxu0
  %v4000 = vadd.f32 %v3934, %v3999
  %v4001 = vpop.f32.mrb[0].mxu0
  %v4002 = vadd.f32 %v3938, %v4001
  %4003 = vmatprep.mubr.bf16.mxu0 0
  %4004 = vmatmul.mubr.bf16.gmra.mrb[0].mxu0 %v3120
  %v4005 = vpop.f32.mrb[0].mxu0
  %v4006 = vadd.f32 %v3934, %v4005
  %v4007 = vpop.f32.mrb[0].mxu0
  %v4008 = vadd.f32 %v3938, %v4007
  %v4009 = vpop.f32.mrb[0].mxu0
  %v4010 = vadd.f32 %v3934, %v4009
  %v4011 = vpop.f32.mrb[0].mxu0
  %v4012 = vadd.f32 %v3938, %v4011
  %4013 = vdwg.mxu0
  %v4014 = vmax.f32 %v3996, 0.0
  %v4015 = vmax.f32 %v3998, 0.0
  %v4016 = vmax.f32 %v4000, 0.0
  %v4017 = vmax.f32 %v4002, 0.0
  %v4018 = vmax.f32 %v4006, 0.0
  %v4019 = vmax.f32 %v4008, 0.0
  %v4020 = vmax.f32 %v4010, 0.0
  %v4021 = vmax.f32 %v4012, 0.0
  %v4022 = vpack.c.bf16 %v4016, %v4014
  %v4023 = vpack.c.bf16 %v4017, %v4015
  %v4024 = vpack.c.bf16 %v4020, %v4018
  %v4025 = vpack.c.bf16 %v4021, %v4019
  %v4026 = vld [vmem:[%s3187 + $0x180] sm:$0xf]
  %v4027 = vld [vmem:[%s3187 + $0x184] sm:$0xf]
  %v4028 = vld [vmem:[%s3187 + $0x188] sm:$0xf]
  %v4029 = vld [vmem:[%s3187 + $0x18c] sm:$0xf]
  %v4030 = vld [vmem:[%s3187 + $0x190] sm:$0xf]
  %v4031 = vld [vmem:[%s3187 + $0x194] sm:$0xf]
  %v4032 = vld [vmem:[%s3187 + $0x198] sm:$0xf]
  %v4033 = vld [vmem:[%s3187 + $0x19c] sm:$0xf]
  %v4034 = vld [vmem:[%s3187 + $0x1a0] sm:$0xf]
  %v4035 = vld [vmem:[%s3187 + $0x1a4] sm:$0xf]
  %v4036 = vld [vmem:[%s3187 + $0x1a8] sm:$0xf]
  %v4037 = vld [vmem:[%s3187 + $0x1ac] sm:$0xf]
  %v4038 = vld [vmem:[%s3187 + $0x1b0] sm:$0xf]
  %v4039 = vld [vmem:[%s3187 + $0x1b4] sm:$0xf]
  %v4040 = vld [vmem:[%s3187 + $0x1b8] sm:$0xf]
  %v4041 = vld [vmem:[%s3187 + $0x1bc] sm:$0xf]
  %v4042 = vld [vmem:[%s3187 + $0x1c0] sm:$0xf]
  %v4043 = vld [vmem:[%s3187 + $0x1c4] sm:$0xf]
  %v4044 = vld [vmem:[%s3187 + $0x1c8] sm:$0xf]
  %v4045 = vld [vmem:[%s3187 + $0x1cc] sm:$0xf]
  %v4046 = vld [vmem:[%s3187 + $0x1d0] sm:$0xf]
  %v4047 = vld [vmem:[%s3187 + $0x1d4] sm:$0xf]
  %v4048 = vld [vmem:[%s3187 + $0x1d8] sm:$0xf]
  %v4049 = vld [vmem:[%s3187 + $0x1dc] sm:$0xf]
  %v4050 = vld [vmem:[%s3187 + $0x1e0] sm:$0xf]
  %v4051 = vld [vmem:[%s3187 + $0x1e4] sm:$0xf]
  %v4052 = vld [vmem:[%s3187 + $0x1e8] sm:$0xf]
  %v4053 = vld [vmem:[%s3187 + $0x1ec] sm:$0xf]
  %v4054 = vld [vmem:[%s3187 + $0x1f0] sm:$0xf]
  %v4055 = vld [vmem:[%s3187 + $0x1f4] sm:$0xf]
  %v4056 = vld [vmem:[%s3187 + $0x1f8] sm:$0xf]
  %v4057 = vld [vmem:[%s3187 + $0x1fc] sm:$0xf]
  %v4090 = vunpack.c.l.b16 %v4026
  %v4091 = vunpack.c.l.b16 %v4027
  %v4092 = vunpack.c.l.b16 %v4028
  %v4093 = vunpack.c.l.b16 %v4029
  %v4094 = vunpack.c.l.b16 %v4030
  %v4095 = vunpack.c.l.b16 %v4031
  %v4096 = vunpack.c.l.b16 %v4032
  %v4097 = vunpack.c.l.b16 %v4033
  %v4098 = vunpack.c.l.b16 %v4034
  %v4099 = vunpack.c.l.b16 %v4035
  %v4100 = vunpack.c.l.b16 %v4036
  %v4101 = vunpack.c.l.b16 %v4037
  %v4102 = vunpack.c.l.b16 %v4038
  %v4103 = vunpack.c.l.b16 %v4039
  %v4104 = vunpack.c.l.b16 %v4040
  %v4105 = vunpack.c.l.b16 %v4041
  %v4106 = vunpack.c.l.b16 %v4042
  %v4107 = vunpack.c.l.b16 %v4043
  %v4108 = vunpack.c.l.b16 %v4044
  %v4109 = vunpack.c.l.b16 %v4045
  %v4110 = vunpack.c.l.b16 %v4046
  %v4111 = vunpack.c.l.b16 %v4047
  %v4112 = vunpack.c.l.b16 %v4048
  %v4113 = vunpack.c.l.b16 %v4049
  %v4114 = vunpack.c.l.b16 %v4050
  %v4115 = vunpack.c.l.b16 %v4051
  %v4116 = vunpack.c.l.b16 %v4052
  %v4117 = vunpack.c.l.b16 %v4053
  %v4118 = vunpack.c.l.b16 %v4054
  %v4119 = vunpack.c.l.b16 %v4055
  %v4120 = vunpack.c.l.b16 %v4056
  %v4121 = vunpack.c.l.b16 %v4057
  %v4122 = vpack.c.b16 %v4091, %v4090
  %v4123 = vpack.c.b16 %v4093, %v4092
  %v4124 = vpack.c.b16 %v4095, %v4094
  %v4125 = vpack.c.b16 %v4097, %v4096
  %v4126 = vpack.c.b16 %v4099, %v4098
  %v4127 = vpack.c.b16 %v4101, %v4100
  %v4128 = vpack.c.b16 %v4103, %v4102
  %v4129 = vpack.c.b16 %v4105, %v4104
  %v4130 = vpack.c.b16 %v4107, %v4106
  %v4131 = vpack.c.b16 %v4109, %v4108
  %v4132 = vpack.c.b16 %v4111, %v4110
  %v4133 = vpack.c.b16 %v4113, %v4112
  %v4134 = vpack.c.b16 %v4115, %v4114
  %v4135 = vpack.c.b16 %v4117, %v4116
  %v4136 = vpack.c.b16 %v4119, %v4118
  %v4137 = vpack.c.b16 %v4121, %v4120
  %4154 = vmatprep.subr.bf16.mxu0 0
  %4155 = vmatpush1.bf16.msra.mxu0 %v4122
  %4156 = vmatprep.subr.bf16.mxu0 0
  %4157 = vmatpush1.bf16.msra.mxu0 %v4123
  %4158 = vmatprep.subr.bf16.mxu0 0
  %4159 = vmatpush1.bf16.msra.mxu0 %v4124
  %4160 = vmatprep.subr.bf16.mxu0 0
  %4161 = vmatpush1.bf16.msra.mxu0 %v4125
  %4162 = vmatprep.subr.bf16.mxu0 0
  %4163 = vmatpush1.bf16.msra.mxu0 %v4126
  %4164 = vmatprep.subr.bf16.mxu0 0
  %4165 = vmatpush1.bf16.msra.mxu0 %v4127
  %4166 = vmatprep.subr.bf16.mxu0 0
  %4167 = vmatpush1.bf16.msra.mxu0 %v4128
  %4168 = vmatprep.subr.bf16.mxu0 0
  %4169 = vmatpush1.bf16.msra.mxu0 %v4129
  %4170 = vmatprep.subr.bf16.mxu0 0
  %4171 = vmatpush1.bf16.msra.mxu0 %v4130
  %4172 = vmatprep.subr.bf16.mxu0 0
  %4173 = vmatpush1.bf16.msra.mxu0 %v4131
  %4174 = vmatprep.subr.bf16.mxu0 0
  %4175 = vmatpush1.bf16.msra.mxu0 %v4132
  %4176 = vmatprep.subr.bf16.mxu0 0
  %4177 = vmatpush1.bf16.msra.mxu0 %v4133
  %4178 = vmatprep.subr.bf16.mxu0 0
  %4179 = vmatpush1.bf16.msra.mxu0 %v4134
  %4180 = vmatprep.subr.bf16.mxu0 0
  %4181 = vmatpush1.bf16.msra.mxu0 %v4135
  %4182 = vmatprep.subr.bf16.mxu0 0
  %4183 = vmatpush1.bf16.msra.mxu0 %v4136
  %4184 = vmatprep.subr.bf16.mxu0 0
  %4185 = vmatpush1.bf16.msra.mxu0 %v4137
  %4186 = vmatprep.mubr.bf16.mxu0 %v4023
  %4187 = vmatmul.mubr.bf16.gmra.mrb[0].mxu0 %v4022
  %v4188 = vpop.f32.mrb[0].mxu0
  %v4189 = vadd.f32 0.0, %v4188
  %v4190 = vpop.f32.mrb[0].mxu0
  %v4191 = vpop.f32.mrb[0].mxu0
  %v4192 = vadd.f32 0.0, %v4191
  %v4193 = vpop.f32.mrb[0].mxu0
  %4194 = vmatprep.mubr.bf16.mxu0 %v4025
  %4195 = vmatmul.mubr.bf16.gmra.mrb[0].mxu0 %v4024
  %v4196 = vpop.f32.mrb[0].mxu0
  %v4197 = vadd.f32 0.0, %v4196
  %v4198 = vpop.f32.mrb[0].mxu0
  %v4199 = vpop.f32.mrb[0].mxu0
  %v4200 = vadd.f32 0.0, %v4199
  %v4201 = vpop.f32.mrb[0].mxu0
  %4202 = vdwg.mxu0
  %v4203 = vadd.f32 %v3921, %v4189
  %v4204 = vadd.f32 %v3922, %v4192
  %v4205 = vadd.f32 %v3923, %v4197
  %v4206 = vadd.f32 %v3924, %v4200
  %s4207 = scalar_lea.vmem %s18, 1
  %v4208 = vld [vmem:[%s4207] sm:$0x1]
  %v4210 = vlaneseq
  %v4211 = vshrl.u32 %v4210, 7
  %v4212 = vsub.s32 0, %v4211
  %v4213 = vrot.slane %v4208, %v4212
  %v4215 = vadd.f32 %v4203, %v4213
  %v4216 = vadd.f32 %v4204, %v4213
  %v4217 = vadd.f32 %v4205, %v4213
  %v4218 = vadd.f32 %v4206, %v4213
  %v4219 = vadd.f32 %v3072, %v4215
  %v4220 = vadd.f32 %v3073, %v4216
  %v4221 = vadd.f32 %v3074, %v4217
  %v4222 = vadd.f32 %v3075, %v4218
  %v4223 = vsel %vm232, %v4219, 0.0
  %4224 = vadd.xlane.f32.xlu0 %v4223
  %v4225 = vpop.xlane.xlu0 %4224
  %v4226 = vsel %vm232, %v4220, 0.0
  %4227 = vadd.xlane.f32.xlu0 %v4226
  %v4228 = vpop.xlane.xlu0 %4227
  %v4229 = vsel %vm232, %v4221, 0.0
  %4230 = vadd.xlane.f32.xlu0 %v4229
  %v4231 = vpop.xlane.xlu0 %4230
  %v4232 = vsel %vm232, %v4222, 0.0
  %4233 = vadd.xlane.f32.xlu0 %v4232
  %v4234 = vpop.xlane.xlu0 %4233
  %v4235 = vmul.f32 %v4225, %v990
  %v4236 = vmul.f32 %v4228, %v990
  %v4237 = vmul.f32 %v4231, %v990
  %v4238 = vmul.f32 %v4234, %v990
  %v4239 = vsub.f32 %v4219, %v4235
  %v4240 = vsub.f32 %v4220, %v4236
  %v4241 = vsub.f32 %v4221, %v4237
  %v4242 = vsub.f32 %v4222, %v4238
  %v4243 = vmul.f32 %v4239, %v4239
  %v4244 = vmul.f32 %v4240, %v4240
  %v4245 = vmul.f32 %v4241, %v4241
  %v4246 = vmul.f32 %v4242, %v4242
  %v4247 = vsel %vm232, %v4243, 0.0
  %4248 = vadd.xlane.f32.xlu0 %v4247
  %v4249 = vpop.xlane.xlu0 %4248
  %v4250 = vsel %vm232, %v4244, 0.0
  %4251 = vadd.xlane.f32.xlu0 %v4250
  %v4252 = vpop.xlane.xlu0 %4251
  %v4253 = vsel %vm232, %v4245, 0.0
  %4254 = vadd.xlane.f32.xlu0 %v4253
  %v4255 = vpop.xlane.xlu0 %4254
  %v4256 = vsel %vm232, %v4246, 0.0
  %4257 = vadd.xlane.f32.xlu0 %v4256
  %v4258 = vpop.xlane.xlu0 %4257
  %v4259 = vmul.f32 %v4249, %v990
  %v4260 = vmul.f32 %v4252, %v990
  %v4261 = vmul.f32 %v4255, %v990
  %v4262 = vmul.f32 %v4258, %v990
  %v4263 = vadd.f32 %v4259, 1e-05
  %v4264 = vadd.f32 %v4260, 1e-05
  %v4265 = vadd.f32 %v4261, 1e-05
  %v4266 = vadd.f32 %v4262, 1e-05
  %v4267 = vrsqrt.pop %v4263
  %v4268 = vrsqrt.pop %v4264
  %v4269 = vrsqrt.pop %v4265
  %v4270 = vrsqrt.pop %v4266
  %v4271 = vmul.f32 %v4239, %v4267
  %v4272 = vmul.f32 %v4240, %v4268
  %v4273 = vmul.f32 %v4241, %v4269
  %v4274 = vmul.f32 %v4242, %v4270
  %s4275 = scalar_lea.vmem %s19, 1
  %v4276 = vld [vmem:[%s4275] sm:$0x1]
  %v4278 = vlaneseq
  %v4279 = vshrl.u32 %v4278, 7
  %v4280 = vsub.s32 0, %v4279
  %v4281 = vrot.slane %v4276, %v4280
  %v4283 = vmul.f32 %v4271, %v4281
  %v4284 = vmul.f32 %v4272, %v4281
  %v4285 = vmul.f32 %v4273, %v4281
  %v4286 = vmul.f32 %v4274, %v4281
  %s4287 = scalar_lea.vmem %s20, 1
  %v4288 = vld [vmem:[%s4287] sm:$0x1]
  %v4290 = vlaneseq
  %v4291 = vshrl.u32 %v4290, 7
  %v4292 = vsub.s32 0, %v4291
  %v4293 = vrot.slane %v4288, %v4292
  %v4295 = vadd.f32 %v4283, %v4293
  %v4296 = vadd.f32 %v4284, %v4293
  %v4297 = vadd.f32 %v4285, %v4293
  %v4298 = vadd.f32 %v4286, %v4293
  %v4299 = vpack.c.bf16 %v4296, %v4295
  %v4300 = vpack.c.bf16 %v4298, %v4297
  %s4301 = scalar_lea.vmem %s5, 32
  %v4302 = vld [vmem:[%s4301] sm:$0xf]
  %v4303 = vld [vmem:[%s4301 + $0x4] sm:$0xf]
  %v4304 = vld [vmem:[%s4301 + $0x8] sm:$0xf]
  %v4305 = vld [vmem:[%s4301 + $0xc] sm:$0xf]
  %s4306 = scalar_lea.vmem %s6, 2
  %v4307 = vld [vmem:[%s4306] sm:$0x1]
  %v4309 = vlaneseq
  %v4310 = vshrl.u32 %v4309, 7
  %v4311 = vsub.s32 0, %v4310
  %v4312 = vrot.slane %v4307, %v4311
  %v4318 = vunpack.c.l.b16 %v4302
  %v4319 = vunpack.c.l.b16 %v4303
  %v4320 = vunpack.c.l.b16 %v4304
  %v4321 = vunpack.c.l.b16 %v4305
  %v4322 = vpack.c.b16 %v4319, %v4318
  %v4323 = vpack.c.b16 %v4321, %v4320
  %v4327 = vsel %vm232, %v4299, 0
  %v4330 = vsel %vm232, %v4300, 0
  %4332 = vmatprep.subr.bf16.mxu0 0
  %4333 = vmatpush1.bf16.msra.mxu0 %v4322
  %4334 = vmatprep.subr.bf16.mxu0 0
  %4335 = vmatpush1.bf16.msra.mxu0 %v4323
  %4336 = vmatprep.subr.bf16.mxu0 0
  %4337 = vmatpush1.bf16.msra.mxu0 0
  %4338 = vmatprep.subr.bf16.mxu0 0
  %4339 = vmatpush1.bf16.msra.mxu0 0
  %4340 = vmatprep.subr.bf16.mxu0 0
  %4341 = vmatpush1.bf16.msra.mxu0 0
  %4342 = vmatprep.subr.bf16.mxu0 0
  %4343 = vmatpush1.bf16.msra.mxu0 0
  %4344 = vmatprep.subr.bf16.mxu0 0
  %4345 = vmatpush1.bf16.msra.mxu0 0
  %4346 = vmatprep.subr.bf16.mxu0 0
  %4347 = vmatpush1.bf16.msra.mxu0 0
  %4348 = vmatprep.subr.bf16.mxu0 0
  %4349 = vmatpush1.bf16.msra.mxu0 0
  %4350 = vmatprep.subr.bf16.mxu0 0
  %4351 = vmatpush1.bf16.msra.mxu0 0
  %4352 = vmatprep.subr.bf16.mxu0 0
  %4353 = vmatpush1.bf16.msra.mxu0 0
  %4354 = vmatprep.subr.bf16.mxu0 0
  %4355 = vmatpush1.bf16.msra.mxu0 0
  %4356 = vmatprep.subr.bf16.mxu0 0
  %4357 = vmatpush1.bf16.msra.mxu0 0
  %4358 = vmatprep.subr.bf16.mxu0 0
  %4359 = vmatpush1.bf16.msra.mxu0 0
  %4360 = vmatprep.subr.bf16.mxu0 0
  %4361 = vmatpush1.bf16.msra.mxu0 0
  %4362 = vmatprep.subr.bf16.mxu0 0
  %4363 = vmatpush1.bf16.msra.mxu0 0
  %4364 = vmatprep.mubr.bf16.mxu0 0
  %4365 = vmatmul.mubr.bf16.gmra.mrb[0].mxu0 %v4327
  %v4366 = vpop.f32.mrb[0].mxu0
  %v4367 = vadd.f32 %v4312, %v4366
  %v4368 = vpop.f32.mrb[0].mxu0
  %v4369 = vpop.f32.mrb[0].mxu0
  %v4370 = vadd.f32 %v4312, %v4369
  %v4371 = vpop.f32.mrb[0].mxu0
  %4372 = vmatprep.mubr.bf16.mxu0 0
  %4373 = vmatmul.mubr.bf16.gmra.mrb[0].mxu0 %v4330
  %v4374 = vpop.f32.mrb[0].mxu0
  %v4375 = vadd.f32 %v4312, %v4374
  %v4376 = vpop.f32.mrb[0].mxu0
  %v4377 = vpop.f32.mrb[0].mxu0
  %v4378 = vadd.f32 %v4312, %v4377
  %v4379 = vpop.f32.mrb[0].mxu0
  %4380 = vdwg.mxu0
  %s4381 = scalar_lea.vmem %s7, 32
  %v4382 = vld [vmem:[%s4381] sm:$0xf]
  %v4383 = vld [vmem:[%s4381 + $0x4] sm:$0xf]
  %v4384 = vld [vmem:[%s4381 + $0x8] sm:$0xf]
  %v4385 = vld [vmem:[%s4381 + $0xc] sm:$0xf]
  %s4386 = scalar_lea.vmem %s8, 2
  %v4387 = vld [vmem:[%s4386] sm:$0x1]
  %v4389 = vlaneseq
  %v4390 = vshrl.u32 %v4389, 7
  %v4391 = vsub.s32 0, %v4390
  %v4392 = vrot.slane %v4387, %v4391
  %v4398 = vunpack.c.l.b16 %v4382
  %v4399 = vunpack.c.l.b16 %v4383
  %v4400 = vunpack.c.l.b16 %v4384
  %v4401 = vunpack.c.l.b16 %v4385
  %v4402 = vpack.c.b16 %v4399, %v4398
  %v4403 = vpack.c.b16 %v4401, %v4400
  %4406 = vmatprep.subr.bf16.mxu0 0
  %4407 = vmatpush1.bf16.msra.mxu0 %v4402
  %4408 = vmatprep.subr.bf16.mxu0 0
  %4409 = vmatpush1.bf16.msra.mxu0 %v4403
  %4410 = vmatprep.subr.bf16.mxu0 0
  %4411 = vmatpush1.bf16.msra.mxu0 0
  %4412 = vmatprep.subr.bf16.mxu0 0
  %4413 = vmatpush1.bf16.msra.mxu0 0
  %4414 = vmatprep.subr.bf16.mxu0 0
  %4415 = vmatpush1.bf16.msra.mxu0 0
  %4416 = vmatprep.subr.bf16.mxu0 0
  %4417 = vmatpush1.bf16.msra.mxu0 0
  %4418 = vmatprep.subr.bf16.mxu0 0
  %4419 = vmatpush1.bf16.msra.mxu0 0
  %4420 = vmatprep.subr.bf16.mxu0 0
  %4421 = vmatpush1.bf16.msra.mxu0 0
  %4422 = vmatprep.subr.bf16.mxu0 0
  %4423 = vmatpush1.bf16.msra.mxu0 0
  %4424 = vmatprep.subr.bf16.mxu0 0
  %4425 = vmatpush1.bf16.msra.mxu0 0
  %4426 = vmatprep.subr.bf16.mxu0 0
  %4427 = vmatpush1.bf16.msra.mxu0 0
  %4428 = vmatprep.subr.bf16.mxu0 0
  %4429 = vmatpush1.bf16.msra.mxu0 0
  %4430 = vmatprep.subr.bf16.mxu0 0
  %4431 = vmatpush1.bf16.msra.mxu0 0
  %4432 = vmatprep.subr.bf16.mxu0 0
  %4433 = vmatpush1.bf16.msra.mxu0 0
  %4434 = vmatprep.subr.bf16.mxu0 0
  %4435 = vmatpush1.bf16.msra.mxu0 0
  %4436 = vmatprep.subr.bf16.mxu0 0
  %4437 = vmatpush1.bf16.msra.mxu0 0
  %4438 = vmatprep.mubr.bf16.mxu0 0
  %4439 = vmatmul.mubr.bf16.gmra.mrb[0].mxu0 %v4327
  %v4440 = vpop.f32.mrb[0].mxu0
  %v4441 = vadd.f32 %v4392, %v4440
  %v4442 = vpop.f32.mrb[0].mxu0
  %v4443 = vpop.f32.mrb[0].mxu0
  %v4444 = vadd.f32 %v4392, %v4443
  %v4445 = vpop.f32.mrb[0].mxu0
  %4446 = vmatprep.mubr.bf16.mxu0 0
  %4447 = vmatmul.mubr.bf16.gmra.mrb[0].mxu0 %v4330
  %v4448 = vpop.f32.mrb[0].mxu0
  %v4449 = vadd.f32 %v4392, %v4448
  %v4450 = vpop.f32.mrb[0].mxu0
  %v4451 = vpop.f32.mrb[0].mxu0
  %v4452 = vadd.f32 %v4392, %v4451
  %v4453 = vpop.f32.mrb[0].mxu0
  %4454 = vdwg.mxu0
  %s4455 = scalar_lea.vmem %s9, 32
  %v4456 = vld [vmem:[%s4455] sm:$0xf]
  %v4457 = vld [vmem:[%s4455 + $0x4] sm:$0xf]
  %v4458 = vld [vmem:[%s4455 + $0x8] sm:$0xf]
  %v4459 = vld [vmem:[%s4455 + $0xc] sm:$0xf]
  %s4460 = scalar_lea.vmem %s10, 2
  %v4461 = vld [vmem:[%s4460] sm:$0x1]
  %v4463 = vlaneseq
  %v4464 = vshrl.u32 %v4463, 7
  %v4465 = vsub.s32 0, %v4464
  %v4466 = vrot.slane %v4461, %v4465
  %v4472 = vunpack.c.l.b16 %v4456
  %v4473 = vunpack.c.l.b16 %v4457
  %v4474 = vunpack.c.l.b16 %v4458
  %v4475 = vunpack.c.l.b16 %v4459
  %v4476 = vpack.c.b16 %v4473, %v4472
  %v4477 = vpack.c.b16 %v4475, %v4474
  %4480 = vmatprep.subr.bf16.mxu0 0
  %4481 = vmatpush1.bf16.msra.mxu0 %v4476
  %4482 = vmatprep.subr.bf16.mxu0 0
  %4483 = vmatpush1.bf16.msra.mxu0 %v4477
  %4484 = vmatprep.subr.bf16.mxu0 0
  %4485 = vmatpush1.bf16.msra.mxu0 0
  %4486 = vmatprep.subr.bf16.mxu0 0
  %4487 = vmatpush1.bf16.msra.mxu0 0
  %4488 = vmatprep.subr.bf16.mxu0 0
  %4489 = vmatpush1.bf16.msra.mxu0 0
  %4490 = vmatprep.subr.bf16.mxu0 0
  %4491 = vmatpush1.bf16.msra.mxu0 0
  %4492 = vmatprep.subr.bf16.mxu0 0
  %4493 = vmatpush1.bf16.msra.mxu0 0
  %4494 = vmatprep.subr.bf16.mxu0 0
  %4495 = vmatpush1.bf16.msra.mxu0 0
  %4496 = vmatprep.subr.bf16.mxu0 0
  %4497 = vmatpush1.bf16.msra.mxu0 0
  %4498 = vmatprep.subr.bf16.mxu0 0
  %4499 = vmatpush1.bf16.msra.mxu0 0
  %4500 = vmatprep.subr.bf16.mxu0 0
  %4501 = vmatpush1.bf16.msra.mxu0 0
  %4502 = vmatprep.subr.bf16.mxu0 0
  %4503 = vmatpush1.bf16.msra.mxu0 0
  %4504 = vmatprep.subr.bf16.mxu0 0
  %4505 = vmatpush1.bf16.msra.mxu0 0
  %4506 = vmatprep.subr.bf16.mxu0 0
  %4507 = vmatpush1.bf16.msra.mxu0 0
  %4508 = vmatprep.subr.bf16.mxu0 0
  %4509 = vmatpush1.bf16.msra.mxu0 0
  %4510 = vmatprep.subr.bf16.mxu0 0
  %4511 = vmatpush1.bf16.msra.mxu0 0
  %4512 = vmatprep.mubr.bf16.mxu0 0
  %4513 = vmatmul.mubr.bf16.gmra.mrb[0].mxu0 %v4327
  %v4514 = vpop.f32.mrb[0].mxu0
  %v4515 = vadd.f32 %v4466, %v4514
  %v4516 = vpop.f32.mrb[0].mxu0
  %v4517 = vpop.f32.mrb[0].mxu0
  %v4518 = vadd.f32 %v4466, %v4517
  %v4519 = vpop.f32.mrb[0].mxu0
  %4520 = vmatprep.mubr.bf16.mxu0 0
  %4521 = vmatmul.mubr.bf16.gmra.mrb[0].mxu0 %v4330
  %v4522 = vpop.f32.mrb[0].mxu0
  %v4523 = vadd.f32 %v4466, %v4522
  %v4524 = vpop.f32.mrb[0].mxu0
  %v4525 = vpop.f32.mrb[0].mxu0
  %v4526 = vadd.f32 %v4466, %v4525
  %v4527 = vpop.f32.mrb[0].mxu0
  %4528 = vdwg.mxu0
  %v4529 = vmul.f32 %v4367, 0.35355338
  %v4530 = vmul.f32 %v4370, 0.35355338
  %v4531 = vmul.f32 %v4375, 0.35355338
  %v4532 = vmul.f32 %v4378, 0.35355338
  %v4533 = vpack.c.bf16 %v4530, %v4529
  %v4534 = vpack.c.bf16 %v4532, %v4531
  %v4535 = vpack.c.bf16 %v4444, %v4441
  %v4536 = vpack.c.bf16 %v4452, %v4449
  %v4537 = vmul.bf16 %v4535, %v472
  %v4538 = vmul.bf16 %v4536, %v473
  %v4539 = vmul.bf16 %v4535, %v474
  %v4540 = vmul.bf16 %v4536, %v475
  %v4541 = vmul.bf16 %v4535, %v476
  %v4542 = vmul.bf16 %v4536, %v477
  %v4543 = vmul.bf16 %v4535, %v478
  %v4544 = vmul.bf16 %v4536, %v479
  %v4545 = vpack.c.bf16 %v4518, %v4515
  %v4546 = vpack.c.bf16 %v4526, %v4523
  %v4547 = vmul.bf16 %v4545, %v472
  %v4548 = vmul.bf16 %v4546, %v473
  %v4549 = vmul.bf16 %v4545, %v474
  %v4550 = vmul.bf16 %v4546, %v475
  %v4551 = vmul.bf16 %v4545, %v476
  %v4552 = vmul.bf16 %v4546, %v477
  %v4553 = vmul.bf16 %v4545, %v478
  %v4554 = vmul.bf16 %v4546, %v479
  %v4556 = vsel %vm232, %v4533, 0
  %v4559 = vsel %vm232, %v4534, 0
  %v4562 = vsel %vm232, %v4537, 0
  %v4565 = vsel %vm232, %v4538, 0
  %v4568 = vsel %vm232, %v4539, 0
  %v4571 = vsel %vm232, %v4540, 0
  %v4574 = vsel %vm232, %v4541, 0
  %v4577 = vsel %vm232, %v4542, 0
  %v4580 = vsel %vm232, %v4543, 0
  %v4583 = vsel %vm232, %v4544, 0
  %4585 = vmatprep.subr.bf16.mxu0 0
  %4586 = vmatpush1.bf16.xpose.msra.mxu0 %v4562
  %4587 = vmatprep.subr.bf16.mxu0 0
  %4588 = vmatpush1.bf16.xpose.msra.mxu0 %v4565
  %4589 = vmatprep.subr.bf16.mxu0 0
  %4590 = vmatpush1.bf16.xpose.msra.mxu0 %v4568
  %4591 = vmatprep.subr.bf16.mxu0 0
  %4592 = vmatpush1.bf16.xpose.msra.mxu0 %v4571
  %4593 = vmatprep.subr.bf16.mxu0 0
  %4594 = vmatpush1.bf16.xpose.msra.mxu0 %v4574
  %4595 = vmatprep.subr.bf16.mxu0 0
  %4596 = vmatpush1.bf16.xpose.msra.mxu0 %v4577
  %4597 = vmatprep.subr.bf16.mxu0 0
  %4598 = vmatpush1.bf16.xpose.msra.mxu0 %v4580
  %4599 = vmatprep.subr.bf16.mxu0 0
  %4600 = vmatpush1.bf16.xpose.msra.mxu0 %v4583
  %4601 = vmatprep.subr.bf16.mxu0 0
  %4602 = vmatpush1.bf16.xpose.msra.mxu0 0
  %4603 = vmatprep.subr.bf16.mxu0 0
  %4604 = vmatpush1.bf16.xpose.msra.mxu0 0
  %4605 = vmatprep.subr.bf16.mxu0 0
  %4606 = vmatpush1.bf16.xpose.msra.mxu0 0
  %4607 = vmatprep.subr.bf16.mxu0 0
  %4608 = vmatpush1.bf16.xpose.msra.mxu0 0
  %4609 = vmatprep.subr.bf16.mxu0 0
  %4610 = vmatpush1.bf16.xpose.msra.mxu0 0
  %4611 = vmatprep.subr.bf16.mxu0 0
  %4612 = vmatpush1.bf16.xpose.msra.mxu0 0
  %4613 = vmatprep.subr.bf16.mxu0 0
  %4614 = vmatpush1.bf16.xpose.msra.mxu0 0
  %4615 = vmatprep.subr.bf16.mxu0 0
  %4616 = vmatpush1.bf16.xpose.msra.mxu0 0
  %4617 = vmatprep.mubr.bf16.mxu0 0
  %4618 = vmatmul.mubr.bf16.gmra.mrb[0].mxu0 %v4556
  %v4619 = vpop.f32.mrb[0].mxu0
  %v4620 = vadd.f32 %v85, %v4619
  %v4621 = vpop.f32.mrb[0].mxu0
  %v4622 = vpop.f32.mrb[0].mxu0
  %v4623 = vadd.f32 %v86, %v4622
  %v4624 = vpop.f32.mrb[0].mxu0
  %4625 = vmatprep.mubr.bf16.mxu0 0
  %4626 = vmatmul.mubr.bf16.gmra.mrb[0].mxu0 %v4559
  %v4627 = vpop.f32.mrb[0].mxu0
  %v4628 = vadd.f32 %v87, %v4627
  %v4629 = vpop.f32.mrb[0].mxu0
  %v4630 = vpop.f32.mrb[0].mxu0
  %v4631 = vadd.f32 %v88, %v4630
  %v4632 = vpop.f32.mrb[0].mxu0
  %4633 = vmatprep.mubr.bf16.mxu0 0
  %4634 = vmatmul.mubr.bf16.gmra.mrb[0].mxu0 %v4556
  %v4635 = vpop.f32.mrb[0].mxu0
  %v4636 = vadd.f32 %v89, %v4635
  %v4637 = vpop.f32.mrb[0].mxu0
  %v4638 = vpop.f32.mrb[0].mxu0
  %v4639 = vadd.f32 %v90, %v4638
  %v4640 = vpop.f32.mrb[0].mxu0
  %4641 = vmatprep.mubr.bf16.mxu0 0
  %4642 = vmatmul.mubr.bf16.gmra.mrb[0].mxu0 %v4559
  %v4643 = vpop.f32.mrb[0].mxu0
  %v4644 = vadd.f32 %v91, %v4643
  %v4645 = vpop.f32.mrb[0].mxu0
  %v4646 = vpop.f32.mrb[0].mxu0
  %v4647 = vadd.f32 %v92, %v4646
  %v4648 = vpop.f32.mrb[0].mxu0
  %4649 = vmatprep.mubr.bf16.mxu0 0
  %4650 = vmatmul.mubr.bf16.gmra.mrb[0].mxu0 %v4556
  %v4651 = vpop.f32.mrb[0].mxu0
  %v4652 = vadd.f32 %v93, %v4651
  %v4653 = vpop.f32.mrb[0].mxu0
  %v4654 = vpop.f32.mrb[0].mxu0
  %v4655 = vadd.f32 %v94, %v4654
  %v4656 = vpop.f32.mrb[0].mxu0
  %4657 = vmatprep.mubr.bf16.mxu0 0
  %4658 = vmatmul.mubr.bf16.gmra.mrb[0].mxu0 %v4559
  %v4659 = vpop.f32.mrb[0].mxu0
  %v4660 = vadd.f32 %v95, %v4659
  %v4661 = vpop.f32.mrb[0].mxu0
  %v4662 = vpop.f32.mrb[0].mxu0
  %v4663 = vadd.f32 %v96, %v4662
  %v4664 = vpop.f32.mrb[0].mxu0
  %4665 = vmatprep.mubr.bf16.mxu0 0
  %4666 = vmatmul.mubr.bf16.gmra.mrb[0].mxu0 %v4556
  %v4667 = vpop.f32.mrb[0].mxu0
  %v4668 = vadd.f32 %v97, %v4667
  %v4669 = vpop.f32.mrb[0].mxu0
  %v4670 = vpop.f32.mrb[0].mxu0
  %v4671 = vadd.f32 %v98, %v4670
  %v4672 = vpop.f32.mrb[0].mxu0
  %4673 = vmatprep.mubr.bf16.mxu0 0
  %4674 = vmatmul.mubr.bf16.gmra.mrb[0].mxu0 %v4559
  %v4675 = vpop.f32.mrb[0].mxu0
  %v4676 = vadd.f32 %v99, %v4675
  %v4677 = vpop.f32.mrb[0].mxu0
  %v4678 = vpop.f32.mrb[0].mxu0
  %v4679 = vadd.f32 %v100, %v4678
  %v4680 = vpop.f32.mrb[0].mxu0
  %4681 = vdwg.mxu0
  %4682 = vmax.xlane.f32.xlu0 %v4620
  %v4683 = vpop.xlane.xlu0 %4682
  %4684 = vmax.xlane.f32.xlu0 %v4623
  %v4685 = vpop.xlane.xlu0 %4684
  %4686 = vmax.xlane.f32.xlu0 %v4628
  %v4687 = vpop.xlane.xlu0 %4686
  %4688 = vmax.xlane.f32.xlu0 %v4631
  %v4689 = vpop.xlane.xlu0 %4688
  %4690 = vmax.xlane.f32.xlu0 %v4636
  %v4691 = vpop.xlane.xlu0 %4690
  %4692 = vmax.xlane.f32.xlu0 %v4639
  %v4693 = vpop.xlane.xlu0 %4692
  %4694 = vmax.xlane.f32.xlu0 %v4644
  %v4695 = vpop.xlane.xlu0 %4694
  %4696 = vmax.xlane.f32.xlu0 %v4647
  %v4697 = vpop.xlane.xlu0 %4696
  %4698 = vmax.xlane.f32.xlu0 %v4652
  %v4699 = vpop.xlane.xlu0 %4698
  %4700 = vmax.xlane.f32.xlu0 %v4655
  %v4701 = vpop.xlane.xlu0 %4700
  %4702 = vmax.xlane.f32.xlu0 %v4660
  %v4703 = vpop.xlane.xlu0 %4702
  %4704 = vmax.xlane.f32.xlu0 %v4663
  %v4705 = vpop.xlane.xlu0 %4704
  %4706 = vmax.xlane.f32.xlu0 %v4668
  %v4707 = vpop.xlane.xlu0 %4706
  %4708 = vmax.xlane.f32.xlu0 %v4671
  %v4709 = vpop.xlane.xlu0 %4708
  %4710 = vmax.xlane.f32.xlu0 %v4676
  %v4711 = vpop.xlane.xlu0 %4710
  %4712 = vmax.xlane.f32.xlu0 %v4679
  %v4713 = vpop.xlane.xlu0 %4712
  %v4714 = vsub.f32 %v4620, %v4683
  %v4715 = vsub.f32 %v4623, %v4685
  %v4716 = vsub.f32 %v4628, %v4687
  %v4717 = vsub.f32 %v4631, %v4689
  %v4718 = vsub.f32 %v4636, %v4691
  %v4719 = vsub.f32 %v4639, %v4693
  %v4720 = vsub.f32 %v4644, %v4695
  %v4721 = vsub.f32 %v4647, %v4697
  %v4722 = vsub.f32 %v4652, %v4699
  %v4723 = vsub.f32 %v4655, %v4701
  %v4724 = vsub.f32 %v4660, %v4703
  %v4725 = vsub.f32 %v4663, %v4705
  %v4726 = vsub.f32 %v4668, %v4707
  %v4727 = vsub.f32 %v4671, %v4709
  %v4728 = vsub.f32 %v4676, %v4711
  %v4729 = vsub.f32 %v4679, %v4713
  %v4730 = vmul.f32 %v4714, 1.442695
  %v4731 = vpow.pop %v4730
  %v4732 = vmul.f32 %v4715, 1.442695
  %v4733 = vpow.pop %v4732
  %v4734 = vmul.f32 %v4716, 1.442695
  %v4735 = vpow.pop %v4734
  %v4736 = vmul.f32 %v4717, 1.442695
  %v4737 = vpow.pop %v4736
  %v4738 = vmul.f32 %v4718, 1.442695
  %v4739 = vpow.pop %v4738
  %v4740 = vmul.f32 %v4719, 1.442695
  %v4741 = vpow.pop %v4740
  %v4742 = vmul.f32 %v4720, 1.442695
  %v4743 = vpow.pop %v4742
  %v4744 = vmul.f32 %v4721, 1.442695
  %v4745 = vpow.pop %v4744
  %v4746 = vmul.f32 %v4722, 1.442695
  %v4747 = vpow.pop %v4746
  %v4748 = vmul.f32 %v4723, 1.442695
  %v4749 = vpow.pop %v4748
  %v4750 = vmul.f32 %v4724, 1.442695
  %v4751 = vpow.pop %v4750
  %v4752 = vmul.f32 %v4725, 1.442695
  %v4753 = vpow.pop %v4752
  %v4754 = vmul.f32 %v4726, 1.442695
  %v4755 = vpow.pop %v4754
  %v4756 = vmul.f32 %v4727, 1.442695
  %v4757 = vpow.pop %v4756
  %v4758 = vmul.f32 %v4728, 1.442695
  %v4759 = vpow.pop %v4758
  %v4760 = vmul.f32 %v4729, 1.442695
  %v4761 = vpow.pop %v4760
  %4762 = vadd.xlane.f32.xlu0 %v4731
  %v4763 = vpop.xlane.xlu0 %4762
  %4764 = vadd.xlane.f32.xlu0 %v4733
  %v4765 = vpop.xlane.xlu0 %4764
  %4766 = vadd.xlane.f32.xlu0 %v4735
  %v4767 = vpop.xlane.xlu0 %4766
  %4768 = vadd.xlane.f32.xlu0 %v4737
  %v4769 = vpop.xlane.xlu0 %4768
  %4770 = vadd.xlane.f32.xlu0 %v4739
  %v4771 = vpop.xlane.xlu0 %4770
  %4772 = vadd.xlane.f32.xlu0 %v4741
  %v4773 = vpop.xlane.xlu0 %4772
  %4774 = vadd.xlane.f32.xlu0 %v4743
  %v4775 = vpop.xlane.xlu0 %4774
  %4776 = vadd.xlane.f32.xlu0 %v4745
  %v4777 = vpop.xlane.xlu0 %4776
  %4778 = vadd.xlane.f32.xlu0 %v4747
  %v4779 = vpop.xlane.xlu0 %4778
  %4780 = vadd.xlane.f32.xlu0 %v4749
  %v4781 = vpop.xlane.xlu0 %4780
  %4782 = vadd.xlane.f32.xlu0 %v4751
  %v4783 = vpop.xlane.xlu0 %4782
  %4784 = vadd.xlane.f32.xlu0 %v4753
  %v4785 = vpop.xlane.xlu0 %4784
  %4786 = vadd.xlane.f32.xlu0 %v4755
  %v4787 = vpop.xlane.xlu0 %4786
  %4788 = vadd.xlane.f32.xlu0 %v4757
  %v4789 = vpop.xlane.xlu0 %4788
  %4790 = vadd.xlane.f32.xlu0 %v4759
  %v4791 = vpop.xlane.xlu0 %4790
  %4792 = vadd.xlane.f32.xlu0 %v4761
  %v4793 = vpop.xlane.xlu0 %4792
  %v4794 = vrcp.pop %v4763
  %v4795 = vrcp.pop %v4765
  %v4796 = vrcp.pop %v4767
  %v4797 = vrcp.pop %v4769
  %v4798 = vrcp.pop %v4771
  %v4799 = vrcp.pop %v4773
  %v4800 = vrcp.pop %v4775
  %v4801 = vrcp.pop %v4777
  %v4802 = vrcp.pop %v4779
  %v4803 = vrcp.pop %v4781
  %v4804 = vrcp.pop %v4783
  %v4805 = vrcp.pop %v4785
  %v4806 = vrcp.pop %v4787
  %v4807 = vrcp.pop %v4789
  %v4808 = vrcp.pop %v4791
  %v4809 = vrcp.pop %v4793
  %v4810 = vmul.f32 %v4731, %v4794
  %v4811 = vmul.f32 %v4733, %v4795
  %v4812 = vmul.f32 %v4735, %v4796
  %v4813 = vmul.f32 %v4737, %v4797
  %v4814 = vmul.f32 %v4739, %v4798
  %v4815 = vmul.f32 %v4741, %v4799
  %v4816 = vmul.f32 %v4743, %v4800
  %v4817 = vmul.f32 %v4745, %v4801
  %v4818 = vmul.f32 %v4747, %v4802
  %v4819 = vmul.f32 %v4749, %v4803
  %v4820 = vmul.f32 %v4751, %v4804
  %v4821 = vmul.f32 %v4753, %v4805
  %v4822 = vmul.f32 %v4755, %v4806
  %v4823 = vmul.f32 %v4757, %v4807
  %v4824 = vmul.f32 %v4759, %v4808
  %v4825 = vmul.f32 %v4761, %v4809
  %v4826 = vpack.c.bf16 %v4811, %v4810
  %v4827 = vpack.c.bf16 %v4813, %v4812
  %v4828 = vpack.c.bf16 %v4815, %v4814
  %v4829 = vpack.c.bf16 %v4817, %v4816
  %v4830 = vpack.c.bf16 %v4819, %v4818
  %v4831 = vpack.c.bf16 %v4821, %v4820
  %v4832 = vpack.c.bf16 %v4823, %v4822
  %v4833 = vpack.c.bf16 %v4825, %v4824
  %4834 = vmatprep.subr.bf16.mxu0 0
  %4835 = vmatpush1.bf16.msra.mxu0 %v4547
  %4836 = vmatprep.subr.bf16.mxu0 0
  %4837 = vmatpush1.bf16.msra.mxu0 %v4548
  %4838 = vmatprep.subr.bf16.mxu0 0
  %4839 = vmatpush1.bf16.msra.mxu0 %v4549
  %4840 = vmatprep.subr.bf16.mxu0 0
  %4841 = vmatpush1.bf16.msra.mxu0 %v4550
  %4842 = vmatprep.subr.bf16.mxu0 0
  %4843 = vmatpush1.bf16.msra.mxu0 %v4551
  %4844 = vmatprep.subr.bf16.mxu0 0
  %4845 = vmatpush1.bf16.msra.mxu0 %v4552
  %4846 = vmatprep.subr.bf16.mxu0 0
  %4847 = vmatpush1.bf16.msra.mxu0 %v4553
  %4848 = vmatprep.subr.bf16.mxu0 0
  %4849 = vmatpush1.bf16.msra.mxu0 %v4554
  %4850 = vmatprep.subr.bf16.mxu0 0
  %4851 = vmatpush1.bf16.msra.mxu0 0
  %4852 = vmatprep.subr.bf16.mxu0 0
  %4853 = vmatpush1.bf16.msra.mxu0 0
  %4854 = vmatprep.subr.bf16.mxu0 0
  %4855 = vmatpush1.bf16.msra.mxu0 0
  %4856 = vmatprep.subr.bf16.mxu0 0
  %4857 = vmatpush1.bf16.msra.mxu0 0
  %4858 = vmatprep.subr.bf16.mxu0 0
  %4859 = vmatpush1.bf16.msra.mxu0 0
  %4860 = vmatprep.subr.bf16.mxu0 0
  %4861 = vmatpush1.bf16.msra.mxu0 0
  %4862 = vmatprep.subr.bf16.mxu0 0
  %4863 = vmatpush1.bf16.msra.mxu0 0
  %4864 = vmatprep.subr.bf16.mxu0 0
  %4865 = vmatpush1.bf16.msra.mxu0 0
  %4866 = vmatprep.mubr.bf16.mxu0 0
  %4867 = vmatmul.mubr.bf16.gmra.mrb[0].mxu0 %v4826
  %v4868 = vpop.f32.mrb[0].mxu0
  %v4869 = vadd.f32 0.0, %v4868
  %v4870 = vpop.f32.mrb[0].mxu0
  %v4871 = vpop.f32.mrb[0].mxu0
  %v4872 = vadd.f32 0.0, %v4871
  %v4873 = vpop.f32.mrb[0].mxu0
  %4874 = vmatprep.mubr.bf16.mxu0 0
  %4875 = vmatmul.mubr.bf16.gmra.mrb[0].mxu0 %v4827
  %v4876 = vpop.f32.mrb[0].mxu0
  %v4877 = vadd.f32 0.0, %v4876
  %v4878 = vpop.f32.mrb[0].mxu0
  %v4879 = vpop.f32.mrb[0].mxu0
  %v4880 = vadd.f32 0.0, %v4879
  %v4881 = vpop.f32.mrb[0].mxu0
  %4882 = vmatprep.mubr.bf16.mxu0 0
  %4883 = vmatmul.mubr.bf16.gmra.mrb[0].mxu0 %v4828
  %v4884 = vpop.f32.mrb[0].mxu0
  %v4885 = vadd.f32 0.0, %v4884
  %v4886 = vpop.f32.mrb[0].mxu0
  %v4887 = vpop.f32.mrb[0].mxu0
  %v4888 = vadd.f32 0.0, %v4887
  %v4889 = vpop.f32.mrb[0].mxu0
  %4890 = vmatprep.mubr.bf16.mxu0 0
  %4891 = vmatmul.mubr.bf16.gmra.mrb[0].mxu0 %v4829
  %v4892 = vpop.f32.mrb[0].mxu0
  %v4893 = vadd.f32 0.0, %v4892
  %v4894 = vpop.f32.mrb[0].mxu0
  %v4895 = vpop.f32.mrb[0].mxu0
  %v4896 = vadd.f32 0.0, %v4895
  %v4897 = vpop.f32.mrb[0].mxu0
  %4898 = vmatprep.mubr.bf16.mxu0 0
  %4899 = vmatmul.mubr.bf16.gmra.mrb[0].mxu0 %v4830
  %v4900 = vpop.f32.mrb[0].mxu0
  %v4901 = vadd.f32 0.0, %v4900
  %v4902 = vpop.f32.mrb[0].mxu0
  %v4903 = vpop.f32.mrb[0].mxu0
  %v4904 = vadd.f32 0.0, %v4903
  %v4905 = vpop.f32.mrb[0].mxu0
  %4906 = vmatprep.mubr.bf16.mxu0 0
  %4907 = vmatmul.mubr.bf16.gmra.mrb[0].mxu0 %v4831
  %v4908 = vpop.f32.mrb[0].mxu0
  %v4909 = vadd.f32 0.0, %v4908
  %v4910 = vpop.f32.mrb[0].mxu0
  %v4911 = vpop.f32.mrb[0].mxu0
  %v4912 = vadd.f32 0.0, %v4911
  %v4913 = vpop.f32.mrb[0].mxu0
  %4914 = vmatprep.mubr.bf16.mxu0 0
  %4915 = vmatmul.mubr.bf16.gmra.mrb[0].mxu0 %v4832
  %v4916 = vpop.f32.mrb[0].mxu0
  %v4917 = vadd.f32 0.0, %v4916
  %v4918 = vpop.f32.mrb[0].mxu0
  %v4919 = vpop.f32.mrb[0].mxu0
  %v4920 = vadd.f32 0.0, %v4919
  %v4921 = vpop.f32.mrb[0].mxu0
  %4922 = vmatprep.mubr.bf16.mxu0 0
  %4923 = vmatmul.mubr.bf16.gmra.mrb[0].mxu0 %v4833
  %v4924 = vpop.f32.mrb[0].mxu0
  %v4925 = vadd.f32 0.0, %v4924
  %v4926 = vpop.f32.mrb[0].mxu0
  %v4927 = vpop.f32.mrb[0].mxu0
  %v4928 = vadd.f32 0.0, %v4927
  %v4929 = vpop.f32.mrb[0].mxu0
  %4930 = vdwg.mxu0
  %v4931 = vadd.f32 %v4869, %v4885
  %v4932 = vadd.f32 %v4872, %v4888
  %v4933 = vadd.f32 %v4877, %v4893
  %v4934 = vadd.f32 %v4880, %v4896
  %v4935 = vadd.f32 %v4931, %v4901
  %v4936 = vadd.f32 %v4932, %v4904
  %v4937 = vadd.f32 %v4933, %v4909
  %v4938 = vadd.f32 %v4934, %v4912
  %v4939 = vadd.f32 %v4935, %v4917
  %v4940 = vadd.f32 %v4936, %v4920
  %v4941 = vadd.f32 %v4937, %v4925
  %v4942 = vadd.f32 %v4938, %v4928
  %v4943 = vpack.c.bf16 %v4940, %v4939
  %v4944 = vpack.c.bf16 %v4942, %v4941
  %s4945 = scalar_lea.vmem %s11, 32
  %v4946 = vld [vmem:[%s4945] sm:$0xf]
  %v4947 = vld [vmem:[%s4945 + $0x4] sm:$0xf]
  %v4948 = vld [vmem:[%s4945 + $0x8] sm:$0xf]
  %v4949 = vld [vmem:[%s4945 + $0xc] sm:$0xf]
  %s4950 = scalar_lea.vmem %s12, 2
  %v4951 = vld [vmem:[%s4950] sm:$0x1]
  %v4953 = vlaneseq
  %v4954 = vshrl.u32 %v4953, 7
  %v4955 = vsub.s32 0, %v4954
  %v4956 = vrot.slane %v4951, %v4955
  %v4962 = vunpack.c.l.b16 %v4946
  %v4963 = vunpack.c.l.b16 %v4947
  %v4964 = vunpack.c.l.b16 %v4948
  %v4965 = vunpack.c.l.b16 %v4949
  %v4966 = vpack.c.b16 %v4963, %v4962
  %v4967 = vpack.c.b16 %v4965, %v4964
  %v4971 = vsel %vm232, %v4943, 0
  %v4974 = vsel %vm232, %v4944, 0
  %4976 = vmatprep.subr.bf16.mxu0 0
  %4977 = vmatpush1.bf16.msra.mxu0 %v4966
  %4978 = vmatprep.subr.bf16.mxu0 0
  %4979 = vmatpush1.bf16.msra.mxu0 %v4967
  %4980 = vmatprep.subr.bf16.mxu0 0
  %4981 = vmatpush1.bf16.msra.mxu0 0
  %4982 = vmatprep.subr.bf16.mxu0 0
  %4983 = vmatpush1.bf16.msra.mxu0 0
  %4984 = vmatprep.subr.bf16.mxu0 0
  %4985 = vmatpush1.bf16.msra.mxu0 0
  %4986 = vmatprep.subr.bf16.mxu0 0
  %4987 = vmatpush1.bf16.msra.mxu0 0
  %4988 = vmatprep.subr.bf16.mxu0 0
  %4989 = vmatpush1.bf16.msra.mxu0 0
  %4990 = vmatprep.subr.bf16.mxu0 0
  %4991 = vmatpush1.bf16.msra.mxu0 0
  %4992 = vmatprep.subr.bf16.mxu0 0
  %4993 = vmatpush1.bf16.msra.mxu0 0
  %4994 = vmatprep.subr.bf16.mxu0 0
  %4995 = vmatpush1.bf16.msra.mxu0 0
  %4996 = vmatprep.subr.bf16.mxu0 0
  %4997 = vmatpush1.bf16.msra.mxu0 0
  %4998 = vmatprep.subr.bf16.mxu0 0
  %4999 = vmatpush1.bf16.msra.mxu0 0
  %5000 = vmatprep.subr.bf16.mxu0 0
  %5001 = vmatpush1.bf16.msra.mxu0 0
  %5002 = vmatprep.subr.bf16.mxu0 0
  %5003 = vmatpush1.bf16.msra.mxu0 0
  %5004 = vmatprep.subr.bf16.mxu0 0
  %5005 = vmatpush1.bf16.msra.mxu0 0
  %5006 = vmatprep.subr.bf16.mxu0 0
  %5007 = vmatpush1.bf16.msra.mxu0 0
  %5008 = vmatprep.mubr.bf16.mxu0 0
  %5009 = vmatmul.mubr.bf16.gmra.mrb[0].mxu0 %v4971
  %v5010 = vpop.f32.mrb[0].mxu0
  %v5011 = vadd.f32 %v4956, %v5010
  %v5012 = vpop.f32.mrb[0].mxu0
  %v5013 = vpop.f32.mrb[0].mxu0
  %v5014 = vadd.f32 %v4956, %v5013
  %v5015 = vpop.f32.mrb[0].mxu0
  %5016 = vmatprep.mubr.bf16.mxu0 0
  %5017 = vmatmul.mubr.bf16.gmra.mrb[0].mxu0 %v4974
  %v5018 = vpop.f32.mrb[0].mxu0
  %v5019 = vadd.f32 %v4956, %v5018
  %v5020 = vpop.f32.mrb[0].mxu0
  %v5021 = vpop.f32.mrb[0].mxu0
  %v5022 = vadd.f32 %v4956, %v5021
  %v5023 = vpop.f32.mrb[0].mxu0
  %5024 = vdwg.mxu0
  %v5025 = vadd.f32 %v4295, %v5011
  %v5026 = vadd.f32 %v4296, %v5014
  %v5027 = vadd.f32 %v4297, %v5019
  %v5028 = vadd.f32 %v4298, %v5022
  %v5029 = vsel %vm232, %v5025, 0.0
  %5030 = vadd.xlane.f32.xlu0 %v5029
  %v5031 = vpop.xlane.xlu0 %5030
  %v5032 = vsel %vm232, %v5026, 0.0
  %5033 = vadd.xlane.f32.xlu0 %v5032
  %v5034 = vpop.xlane.xlu0 %5033
  %v5035 = vsel %vm232, %v5027, 0.0
  %5036 = vadd.xlane.f32.xlu0 %v5035
  %v5037 = vpop.xlane.xlu0 %5036
  %v5038 = vsel %vm232, %v5028, 0.0
  %5039 = vadd.xlane.f32.xlu0 %v5038
  %v5040 = vpop.xlane.xlu0 %5039
  %v5041 = vmul.f32 %v5031, %v990
  %v5042 = vmul.f32 %v5034, %v990
  %v5043 = vmul.f32 %v5037, %v990
  %v5044 = vmul.f32 %v5040, %v990
  %v5045 = vsub.f32 %v5025, %v5041
  %v5046 = vsub.f32 %v5026, %v5042
  %v5047 = vsub.f32 %v5027, %v5043
  %v5048 = vsub.f32 %v5028, %v5044
  %v5049 = vmul.f32 %v5045, %v5045
  %v5050 = vmul.f32 %v5046, %v5046
  %v5051 = vmul.f32 %v5047, %v5047
  %v5052 = vmul.f32 %v5048, %v5048
  %v5053 = vsel %vm232, %v5049, 0.0
  %5054 = vadd.xlane.f32.xlu0 %v5053
  %v5055 = vpop.xlane.xlu0 %5054
  %v5056 = vsel %vm232, %v5050, 0.0
  %5057 = vadd.xlane.f32.xlu0 %v5056
  %v5058 = vpop.xlane.xlu0 %5057
  %v5059 = vsel %vm232, %v5051, 0.0
  %5060 = vadd.xlane.f32.xlu0 %v5059
  %v5061 = vpop.xlane.xlu0 %5060
  %v5062 = vsel %vm232, %v5052, 0.0
  %5063 = vadd.xlane.f32.xlu0 %v5062
  %v5064 = vpop.xlane.xlu0 %5063
  %v5065 = vmul.f32 %v5055, %v990
  %v5066 = vmul.f32 %v5058, %v990
  %v5067 = vmul.f32 %v5061, %v990
  %v5068 = vmul.f32 %v5064, %v990
  %v5069 = vadd.f32 %v5065, 1e-05
  %v5070 = vadd.f32 %v5066, 1e-05
  %v5071 = vadd.f32 %v5067, 1e-05
  %v5072 = vadd.f32 %v5068, 1e-05
  %v5073 = vrsqrt.pop %v5069
  %v5074 = vrsqrt.pop %v5070
  %v5075 = vrsqrt.pop %v5071
  %v5076 = vrsqrt.pop %v5072
  %v5077 = vmul.f32 %v5045, %v5073
  %v5078 = vmul.f32 %v5046, %v5074
  %v5079 = vmul.f32 %v5047, %v5075
  %v5080 = vmul.f32 %v5048, %v5076
  %s5081 = scalar_lea.vmem %s13, 2
  %v5082 = vld [vmem:[%s5081] sm:$0x1]
  %v5084 = vlaneseq
  %v5085 = vshrl.u32 %v5084, 7
  %v5086 = vsub.s32 0, %v5085
  %v5087 = vrot.slane %v5082, %v5086
  %v5089 = vmul.f32 %v5077, %v5087
  %v5090 = vmul.f32 %v5078, %v5087
  %v5091 = vmul.f32 %v5079, %v5087
  %v5092 = vmul.f32 %v5080, %v5087
  %s5093 = scalar_lea.vmem %s14, 2
  %v5094 = vld [vmem:[%s5093] sm:$0x1]
  %v5096 = vlaneseq
  %v5097 = vshrl.u32 %v5096, 7
  %v5098 = vsub.s32 0, %v5097
  %v5099 = vrot.slane %v5094, %v5098
  %v5101 = vadd.f32 %v5089, %v5099
  %v5102 = vadd.f32 %v5090, %v5099
  %v5103 = vadd.f32 %v5091, %v5099
  %v5104 = vadd.f32 %v5092, %v5099
  %v5105 = vpack.c.bf16 %v5102, %v5101
  %v5106 = vpack.c.bf16 %v5104, %v5103
  %s5107 = scalar_lea.vmem %s15, 256
  %v5108 = vld [vmem:[%s5107] sm:$0xff]
  %v5109 = vld [vmem:[%s5107 + $0x20] sm:$0xff]
  %v5110 = vld [vmem:[%s5107 + $0x40] sm:$0xff]
  %v5111 = vld [vmem:[%s5107 + $0x60] sm:$0xff]
  %s5112 = scalar_lea.vmem %s16, 16
  %v5113 = vld [vmem:[%s5112] sm:$0x3]
  %v5115 = vlaneseq
  %v5116 = vshrl.u32 %v5115, 7
  %v5117 = vsub.s32 0, %v5116
  %v5118 = vrot.slane %v5113, %v5117
  %v5119 = vlaneseq
  %v5120 = vshrl.u32 %v5119, 7
  %v5121 = vsub.s32 1, %v5120
  %v5122 = vrot.slane %v5113, %v5121
  %v5129 = vunpack.c.l.b16 %v5108
  %v5130 = vunpack.c.h.b16 %v5108
  %v5131 = vunpack.c.l.b16 %v5109
  %v5132 = vunpack.c.h.b16 %v5109
  %v5133 = vunpack.c.l.b16 %v5110
  %v5134 = vunpack.c.h.b16 %v5110
  %v5135 = vunpack.c.l.b16 %v5111
  %v5136 = vunpack.c.h.b16 %v5111
  %v5137 = vpack.c.b16 %v5131, %v5129
  %v5138 = vpack.c.b16 %v5132, %v5130
  %v5139 = vpack.c.b16 %v5135, %v5133
  %v5140 = vpack.c.b16 %v5136, %v5134
  %v5146 = vsel %vm232, %v5105, 0
  %v5149 = vsel %vm232, %v5106, 0
  %5151 = vmatprep.subr.bf16.mxu0 %v5138
  %5152 = vmatpush1.bf16.msra.mxu0 %v5137
  %5153 = vmatprep.subr.bf16.mxu0 %v5140
  %5154 = vmatpush1.bf16.msra.mxu0 %v5139
  %5155 = vmatprep.subr.bf16.mxu0 0
  %5156 = vmatpush1.bf16.msra.mxu0 0
  %5157 = vmatprep.subr.bf16.mxu0 0
  %5158 = vmatpush1.bf16.msra.mxu0 0
  %5159 = vmatprep.subr.bf16.mxu0 0
  %5160 = vmatpush1.bf16.msra.mxu0 0
  %5161 = vmatprep.subr.bf16.mxu0 0
  %5162 = vmatpush1.bf16.msra.mxu0 0
  %5163 = vmatprep.subr.bf16.mxu0 0
  %5164 = vmatpush1.bf16.msra.mxu0 0
  %5165 = vmatprep.subr.bf16.mxu0 0
  %5166 = vmatpush1.bf16.msra.mxu0 0
  %5167 = vmatprep.subr.bf16.mxu0 0
  %5168 = vmatpush1.bf16.msra.mxu0 0
  %5169 = vmatprep.subr.bf16.mxu0 0
  %5170 = vmatpush1.bf16.msra.mxu0 0
  %5171 = vmatprep.subr.bf16.mxu0 0
  %5172 = vmatpush1.bf16.msra.mxu0 0
  %5173 = vmatprep.subr.bf16.mxu0 0
  %5174 = vmatpush1.bf16.msra.mxu0 0
  %5175 = vmatprep.subr.bf16.mxu0 0
  %5176 = vmatpush1.bf16.msra.mxu0 0
  %5177 = vmatprep.subr.bf16.mxu0 0
  %5178 = vmatpush1.bf16.msra.mxu0 0
  %5179 = vmatprep.subr.bf16.mxu0 0
  %5180 = vmatpush1.bf16.msra.mxu0 0
  %5181 = vmatprep.subr.bf16.mxu0 0
  %5182 = vmatpush1.bf16.msra.mxu0 0
  %5183 = vmatprep.mubr.bf16.mxu0 0
  %5184 = vmatmul.mubr.bf16.gmra.mrb[0].mxu0 %v5146
  %v5185 = vpop.f32.mrb[0].mxu0
  %v5186 = vadd.f32 %v5118, %v5185
  %v5187 = vpop.f32.mrb[0].mxu0
  %v5188 = vadd.f32 %v5122, %v5187
  %v5189 = vpop.f32.mrb[0].mxu0
  %v5190 = vadd.f32 %v5118, %v5189
  %v5191 = vpop.f32.mrb[0].mxu0
  %v5192 = vadd.f32 %v5122, %v5191
  %5193 = vmatprep.mubr.bf16.mxu0 0
  %5194 = vmatmul.mubr.bf16.gmra.mrb[0].mxu0 %v5149
  %v5195 = vpop.f32.mrb[0].mxu0
  %v5196 = vadd.f32 %v5118, %v5195
  %v5197 = vpop.f32.mrb[0].mxu0
  %v5198 = vadd.f32 %v5122, %v5197
  %v5199 = vpop.f32.mrb[0].mxu0
  %v5200 = vadd.f32 %v5118, %v5199
  %v5201 = vpop.f32.mrb[0].mxu0
  %v5202 = vadd.f32 %v5122, %v5201
  %5203 = vdwg.mxu0
  %v5204 = vmax.f32 %v5186, 0.0
  %v5205 = vmax.f32 %v5188, 0.0
  %v5206 = vmax.f32 %v5190, 0.0
  %v5207 = vmax.f32 %v5192, 0.0
  %v5208 = vmax.f32 %v5196, 0.0
  %v5209 = vmax.f32 %v5198, 0.0
  %v5210 = vmax.f32 %v5200, 0.0
  %v5211 = vmax.f32 %v5202, 0.0
  %v5212 = vpack.c.bf16 %v5206, %v5204
  %v5213 = vpack.c.bf16 %v5207, %v5205
  %v5214 = vpack.c.bf16 %v5210, %v5208
  %v5215 = vpack.c.bf16 %v5211, %v5209
  %s5216 = scalar_lea.vmem %s17, 1024
  %v5217 = vld [vmem:[%s5216] sm:$0xf]
  %v5218 = vld [vmem:[%s5216 + $0x4] sm:$0xf]
  %v5219 = vld [vmem:[%s5216 + $0x8] sm:$0xf]
  %v5220 = vld [vmem:[%s5216 + $0xc] sm:$0xf]
  %v5221 = vld [vmem:[%s5216 + $0x10] sm:$0xf]
  %v5222 = vld [vmem:[%s5216 + $0x14] sm:$0xf]
  %v5223 = vld [vmem:[%s5216 + $0x18] sm:$0xf]
  %v5224 = vld [vmem:[%s5216 + $0x1c] sm:$0xf]
  %v5225 = vld [vmem:[%s5216 + $0x20] sm:$0xf]
  %v5226 = vld [vmem:[%s5216 + $0x24] sm:$0xf]
  %v5227 = vld [vmem:[%s5216 + $0x28] sm:$0xf]
  %v5228 = vld [vmem:[%s5216 + $0x2c] sm:$0xf]
  %v5229 = vld [vmem:[%s5216 + $0x30] sm:$0xf]
  %v5230 = vld [vmem:[%s5216 + $0x34] sm:$0xf]
  %v5231 = vld [vmem:[%s5216 + $0x38] sm:$0xf]
  %v5232 = vld [vmem:[%s5216 + $0x3c] sm:$0xf]
  %v5233 = vld [vmem:[%s5216 + $0x40] sm:$0xf]
  %v5234 = vld [vmem:[%s5216 + $0x44] sm:$0xf]
  %v5235 = vld [vmem:[%s5216 + $0x48] sm:$0xf]
  %v5236 = vld [vmem:[%s5216 + $0x4c] sm:$0xf]
  %v5237 = vld [vmem:[%s5216 + $0x50] sm:$0xf]
  %v5238 = vld [vmem:[%s5216 + $0x54] sm:$0xf]
  %v5239 = vld [vmem:[%s5216 + $0x58] sm:$0xf]
  %v5240 = vld [vmem:[%s5216 + $0x5c] sm:$0xf]
  %v5241 = vld [vmem:[%s5216 + $0x60] sm:$0xf]
  %v5242 = vld [vmem:[%s5216 + $0x64] sm:$0xf]
  %v5243 = vld [vmem:[%s5216 + $0x68] sm:$0xf]
  %v5244 = vld [vmem:[%s5216 + $0x6c] sm:$0xf]
  %v5245 = vld [vmem:[%s5216 + $0x70] sm:$0xf]
  %v5246 = vld [vmem:[%s5216 + $0x74] sm:$0xf]
  %v5247 = vld [vmem:[%s5216 + $0x78] sm:$0xf]
  %v5248 = vld [vmem:[%s5216 + $0x7c] sm:$0xf]
  %v5249 = vld [vmem:[%s5107 + $0x8] sm:$0xff]
  %v5250 = vld [vmem:[%s5107 + $0x28] sm:$0xff]
  %v5251 = vld [vmem:[%s5107 + $0x48] sm:$0xff]
  %v5252 = vld [vmem:[%s5107 + $0x68] sm:$0xff]
  %v5253 = vld [vmem:[%s5112 + $0x2] sm:$0x3]
  %v5255 = vlaneseq
  %v5256 = vshrl.u32 %v5255, 7
  %v5257 = vsub.s32 0, %v5256
  %v5258 = vrot.slane %v5253, %v5257
  %v5259 = vlaneseq
  %v5260 = vshrl.u32 %v5259, 7
  %v5261 = vsub.s32 1, %v5260
  %v5262 = vrot.slane %v5253, %v5261
  %v5269 = vunpack.c.l.b16 %v5249
  %v5270 = vunpack.c.h.b16 %v5249
  %v5271 = vunpack.c.l.b16 %v5250
  %v5272 = vunpack.c.h.b16 %v5250
  %v5273 = vunpack.c.l.b16 %v5251
  %v5274 = vunpack.c.h.b16 %v5251
  %v5275 = vunpack.c.l.b16 %v5252
  %v5276 = vunpack.c.h.b16 %v5252
  %v5277 = vpack.c.b16 %v5271, %v5269
  %v5278 = vpack.c.b16 %v5272, %v5270
  %v5279 = vpack.c.b16 %v5275, %v5273
  %v5280 = vpack.c.b16 %v5276, %v5274
  %5285 = vmatprep.subr.bf16.mxu0 %v5278
  %5286 = vmatpush1.bf16.msra.mxu0 %v5277
  %5287 = vmatprep.subr.bf16.mxu0 %v5280
  %5288 = vmatpush1.bf16.msra.mxu0 %v5279
  %5289 = vmatprep.subr.bf16.mxu0 0
  %5290 = vmatpush1.bf16.msra.mxu0 0
  %5291 = vmatprep.subr.bf16.mxu0 0
  %5292 = vmatpush1.bf16.msra.mxu0 0
  %5293 = vmatprep.subr.bf16.mxu0 0
  %5294 = vmatpush1.bf16.msra.mxu0 0
  %5295 = vmatprep.subr.bf16.mxu0 0
  %5296 = vmatpush1.bf16.msra.mxu0 0
  %5297 = vmatprep.subr.bf16.mxu0 0
  %5298 = vmatpush1.bf16.msra.mxu0 0
  %5299 = vmatprep.subr.bf16.mxu0 0
  %5300 = vmatpush1.bf16.msra.mxu0 0
  %5301 = vmatprep.subr.bf16.mxu0 0
  %5302 = vmatpush1.bf16.msra.mxu0 0
  %5303 = vmatprep.subr.bf16.mxu0 0
  %5304 = vmatpush1.bf16.msra.mxu0 0
  %5305 = vmatprep.subr.bf16.mxu0 0
  %5306 = vmatpush1.bf16.msra.mxu0 0
  %5307 = vmatprep.subr.bf16.mxu0 0
  %5308 = vmatpush1.bf16.msra.mxu0 0
  %5309 = vmatprep.subr.bf16.mxu0 0
  %5310 = vmatpush1.bf16.msra.mxu0 0
  %5311 = vmatprep.subr.bf16.mxu0 0
  %5312 = vmatpush1.bf16.msra.mxu0 0
  %5313 = vmatprep.subr.bf16.mxu0 0
  %5314 = vmatpush1.bf16.msra.mxu0 0
  %5315 = vmatprep.subr.bf16.mxu0 0
  %5316 = vmatpush1.bf16.msra.mxu0 0
  %5317 = vmatprep.mubr.bf16.mxu0 0
  %5318 = vmatmul.mubr.bf16.gmra.mrb[0].mxu0 %v5146
  %v5319 = vpop.f32.mrb[0].mxu0
  %v5320 = vadd.f32 %v5258, %v5319
  %v5321 = vpop.f32.mrb[0].mxu0
  %v5322 = vadd.f32 %v5262, %v5321
  %v5323 = vpop.f32.mrb[0].mxu0
  %v5324 = vadd.f32 %v5258, %v5323
  %v5325 = vpop.f32.mrb[0].mxu0
  %v5326 = vadd.f32 %v5262, %v5325
  %5327 = vmatprep.mubr.bf16.mxu0 0
  %5328 = vmatmul.mubr.bf16.gmra.mrb[0].mxu0 %v5149
  %v5329 = vpop.f32.mrb[0].mxu0
  %v5330 = vadd.f32 %v5258, %v5329
  %v5331 = vpop.f32.mrb[0].mxu0
  %v5332 = vadd.f32 %v5262, %v5331
  %v5333 = vpop.f32.mrb[0].mxu0
  %v5334 = vadd.f32 %v5258, %v5333
  %v5335 = vpop.f32.mrb[0].mxu0
  %v5336 = vadd.f32 %v5262, %v5335
  %5337 = vdwg.mxu0
  %v5338 = vmax.f32 %v5320, 0.0
  %v5339 = vmax.f32 %v5322, 0.0
  %v5340 = vmax.f32 %v5324, 0.0
  %v5341 = vmax.f32 %v5326, 0.0
  %v5342 = vmax.f32 %v5330, 0.0
  %v5343 = vmax.f32 %v5332, 0.0
  %v5344 = vmax.f32 %v5334, 0.0
  %v5345 = vmax.f32 %v5336, 0.0
  %v5346 = vpack.c.bf16 %v5340, %v5338
  %v5347 = vpack.c.bf16 %v5341, %v5339
  %v5348 = vpack.c.bf16 %v5344, %v5342
  %v5349 = vpack.c.bf16 %v5345, %v5343
  %v5350 = vld [vmem:[%s5216 + $0x80] sm:$0xf]
  %v5351 = vld [vmem:[%s5216 + $0x84] sm:$0xf]
  %v5352 = vld [vmem:[%s5216 + $0x88] sm:$0xf]
  %v5353 = vld [vmem:[%s5216 + $0x8c] sm:$0xf]
  %v5354 = vld [vmem:[%s5216 + $0x90] sm:$0xf]
  %v5355 = vld [vmem:[%s5216 + $0x94] sm:$0xf]
  %v5356 = vld [vmem:[%s5216 + $0x98] sm:$0xf]
  %v5357 = vld [vmem:[%s5216 + $0x9c] sm:$0xf]
  %v5358 = vld [vmem:[%s5216 + $0xa0] sm:$0xf]
  %v5359 = vld [vmem:[%s5216 + $0xa4] sm:$0xf]
  %v5360 = vld [vmem:[%s5216 + $0xa8] sm:$0xf]
  %v5361 = vld [vmem:[%s5216 + $0xac] sm:$0xf]
  %v5362 = vld [vmem:[%s5216 + $0xb0] sm:$0xf]
  %v5363 = vld [vmem:[%s5216 + $0xb4] sm:$0xf]
  %v5364 = vld [vmem:[%s5216 + $0xb8] sm:$0xf]
  %v5365 = vld [vmem:[%s5216 + $0xbc] sm:$0xf]
  %v5366 = vld [vmem:[%s5216 + $0xc0] sm:$0xf]
  %v5367 = vld [vmem:[%s5216 + $0xc4] sm:$0xf]
  %v5368 = vld [vmem:[%s5216 + $0xc8] sm:$0xf]
  %v5369 = vld [vmem:[%s5216 + $0xcc] sm:$0xf]
  %v5370 = vld [vmem:[%s5216 + $0xd0] sm:$0xf]
  %v5371 = vld [vmem:[%s5216 + $0xd4] sm:$0xf]
  %v5372 = vld [vmem:[%s5216 + $0xd8] sm:$0xf]
  %v5373 = vld [vmem:[%s5216 + $0xdc] sm:$0xf]
  %v5374 = vld [vmem:[%s5216 + $0xe0] sm:$0xf]
  %v5375 = vld [vmem:[%s5216 + $0xe4] sm:$0xf]
  %v5376 = vld [vmem:[%s5216 + $0xe8] sm:$0xf]
  %v5377 = vld [vmem:[%s5216 + $0xec] sm:$0xf]
  %v5378 = vld [vmem:[%s5216 + $0xf0] sm:$0xf]
  %v5379 = vld [vmem:[%s5216 + $0xf4] sm:$0xf]
  %v5380 = vld [vmem:[%s5216 + $0xf8] sm:$0xf]
  %v5381 = vld [vmem:[%s5216 + $0xfc] sm:$0xf]
  %v5414 = vunpack.c.l.b16 %v5350
  %v5415 = vunpack.c.l.b16 %v5351
  %v5416 = vunpack.c.l.b16 %v5352
  %v5417 = vunpack.c.l.b16 %v5353
  %v5418 = vunpack.c.l.b16 %v5354
  %v5419 = vunpack.c.l.b16 %v5355
  %v5420 = vunpack.c.l.b16 %v5356
  %v5421 = vunpack.c.l.b16 %v5357
  %v5422 = vunpack.c.l.b16 %v5358
  %v5423 = vunpack.c.l.b16 %v5359
  %v5424 = vunpack.c.l.b16 %v5360
  %v5425 = vunpack.c.l.b16 %v5361
  %v5426 = vunpack.c.l.b16 %v5362
  %v5427 = vunpack.c.l.b16 %v5363
  %v5428 = vunpack.c.l.b16 %v5364
  %v5429 = vunpack.c.l.b16 %v5365
  %v5430 = vunpack.c.l.b16 %v5366
  %v5431 = vunpack.c.l.b16 %v5367
  %v5432 = vunpack.c.l.b16 %v5368
  %v5433 = vunpack.c.l.b16 %v5369
  %v5434 = vunpack.c.l.b16 %v5370
  %v5435 = vunpack.c.l.b16 %v5371
  %v5436 = vunpack.c.l.b16 %v5372
  %v5437 = vunpack.c.l.b16 %v5373
  %v5438 = vunpack.c.l.b16 %v5374
  %v5439 = vunpack.c.l.b16 %v5375
  %v5440 = vunpack.c.l.b16 %v5376
  %v5441 = vunpack.c.l.b16 %v5377
  %v5442 = vunpack.c.l.b16 %v5378
  %v5443 = vunpack.c.l.b16 %v5379
  %v5444 = vunpack.c.l.b16 %v5380
  %v5445 = vunpack.c.l.b16 %v5381
  %v5446 = vpack.c.b16 %v5415, %v5414
  %v5447 = vpack.c.b16 %v5417, %v5416
  %v5448 = vpack.c.b16 %v5419, %v5418
  %v5449 = vpack.c.b16 %v5421, %v5420
  %v5450 = vpack.c.b16 %v5423, %v5422
  %v5451 = vpack.c.b16 %v5425, %v5424
  %v5452 = vpack.c.b16 %v5427, %v5426
  %v5453 = vpack.c.b16 %v5429, %v5428
  %v5454 = vpack.c.b16 %v5431, %v5430
  %v5455 = vpack.c.b16 %v5433, %v5432
  %v5456 = vpack.c.b16 %v5435, %v5434
  %v5457 = vpack.c.b16 %v5437, %v5436
  %v5458 = vpack.c.b16 %v5439, %v5438
  %v5459 = vpack.c.b16 %v5441, %v5440
  %v5460 = vpack.c.b16 %v5443, %v5442
  %v5461 = vpack.c.b16 %v5445, %v5444
  %5478 = vmatprep.subr.bf16.mxu0 0
  %5479 = vmatpush1.bf16.msra.mxu0 %v5446
  %5480 = vmatprep.subr.bf16.mxu0 0
  %5481 = vmatpush1.bf16.msra.mxu0 %v5447
  %5482 = vmatprep.subr.bf16.mxu0 0
  %5483 = vmatpush1.bf16.msra.mxu0 %v5448
  %5484 = vmatprep.subr.bf16.mxu0 0
  %5485 = vmatpush1.bf16.msra.mxu0 %v5449
  %5486 = vmatprep.subr.bf16.mxu0 0
  %5487 = vmatpush1.bf16.msra.mxu0 %v5450
  %5488 = vmatprep.subr.bf16.mxu0 0
  %5489 = vmatpush1.bf16.msra.mxu0 %v5451
  %5490 = vmatprep.subr.bf16.mxu0 0
  %5491 = vmatpush1.bf16.msra.mxu0 %v5452
  %5492 = vmatprep.subr.bf16.mxu0 0
  %5493 = vmatpush1.bf16.msra.mxu0 %v5453
  %5494 = vmatprep.subr.bf16.mxu0 0
  %5495 = vmatpush1.bf16.msra.mxu0 %v5454
  %5496 = vmatprep.subr.bf16.mxu0 0
  %5497 = vmatpush1.bf16.msra.mxu0 %v5455
  %5498 = vmatprep.subr.bf16.mxu0 0
  %5499 = vmatpush1.bf16.msra.mxu0 %v5456
  %5500 = vmatprep.subr.bf16.mxu0 0
  %5501 = vmatpush1.bf16.msra.mxu0 %v5457
  %5502 = vmatprep.subr.bf16.mxu0 0
  %5503 = vmatpush1.bf16.msra.mxu0 %v5458
  %5504 = vmatprep.subr.bf16.mxu0 0
  %5505 = vmatpush1.bf16.msra.mxu0 %v5459
  %5506 = vmatprep.subr.bf16.mxu0 0
  %5507 = vmatpush1.bf16.msra.mxu0 %v5460
  %5508 = vmatprep.subr.bf16.mxu0 0
  %5509 = vmatpush1.bf16.msra.mxu0 %v5461
  %5510 = vmatprep.mubr.bf16.mxu0 %v5347
  %5511 = vmatmul.mubr.bf16.gmra.mrb[0].mxu0 %v5346
  %v5512 = vpop.f32.mrb[0].mxu0
  %v5513 = vadd.f32 0.0, %v5512
  %v5514 = vpop.f32.mrb[0].mxu0
  %v5515 = vpop.f32.mrb[0].mxu0
  %v5516 = vadd.f32 0.0, %v5515
  %v5517 = vpop.f32.mrb[0].mxu0
  %5518 = vmatprep.mubr.bf16.mxu0 %v5349
  %5519 = vmatmul.mubr.bf16.gmra.mrb[0].mxu0 %v5348
  %v5520 = vpop.f32.mrb[0].mxu0
  %v5521 = vadd.f32 0.0, %v5520
  %v5522 = vpop.f32.mrb[0].mxu0
  %v5523 = vpop.f32.mrb[0].mxu0
  %v5524 = vadd.f32 0.0, %v5523
  %v5525 = vpop.f32.mrb[0].mxu0
  %5526 = vdwg.mxu0
  %v5559 = vunpack.c.l.b16 %v5217
  %v5560 = vunpack.c.l.b16 %v5218
  %v5561 = vunpack.c.l.b16 %v5219
  %v5562 = vunpack.c.l.b16 %v5220
  %v5563 = vunpack.c.l.b16 %v5221
  %v5564 = vunpack.c.l.b16 %v5222
  %v5565 = vunpack.c.l.b16 %v5223
  %v5566 = vunpack.c.l.b16 %v5224
  %v5567 = vunpack.c.l.b16 %v5225
  %v5568 = vunpack.c.l.b16 %v5226
  %v5569 = vunpack.c.l.b16 %v5227
  %v5570 = vunpack.c.l.b16 %v5228
  %v5571 = vunpack.c.l.b16 %v5229
  %v5572 = vunpack.c.l.b16 %v5230
  %v5573 = vunpack.c.l.b16 %v5231
  %v5574 = vunpack.c.l.b16 %v5232
  %v5575 = vunpack.c.l.b16 %v5233
  %v5576 = vunpack.c.l.b16 %v5234
  %v5577 = vunpack.c.l.b16 %v5235
  %v5578 = vunpack.c.l.b16 %v5236
  %v5579 = vunpack.c.l.b16 %v5237
  %v5580 = vunpack.c.l.b16 %v5238
  %v5581 = vunpack.c.l.b16 %v5239
  %v5582 = vunpack.c.l.b16 %v5240
  %v5583 = vunpack.c.l.b16 %v5241
  %v5584 = vunpack.c.l.b16 %v5242
  %v5585 = vunpack.c.l.b16 %v5243
  %v5586 = vunpack.c.l.b16 %v5244
  %v5587 = vunpack.c.l.b16 %v5245
  %v5588 = vunpack.c.l.b16 %v5246
  %v5589 = vunpack.c.l.b16 %v5247
  %v5590 = vunpack.c.l.b16 %v5248
  %v5591 = vpack.c.b16 %v5560, %v5559
  %v5592 = vpack.c.b16 %v5562, %v5561
  %v5593 = vpack.c.b16 %v5564, %v5563
  %v5594 = vpack.c.b16 %v5566, %v5565
  %v5595 = vpack.c.b16 %v5568, %v5567
  %v5596 = vpack.c.b16 %v5570, %v5569
  %v5597 = vpack.c.b16 %v5572, %v5571
  %v5598 = vpack.c.b16 %v5574, %v5573
  %v5599 = vpack.c.b16 %v5576, %v5575
  %v5600 = vpack.c.b16 %v5578, %v5577
  %v5601 = vpack.c.b16 %v5580, %v5579
  %v5602 = vpack.c.b16 %v5582, %v5581
  %v5603 = vpack.c.b16 %v5584, %v5583
  %v5604 = vpack.c.b16 %v5586, %v5585
  %v5605 = vpack.c.b16 %v5588, %v5587
  %v5606 = vpack.c.b16 %v5590, %v5589
  %5623 = vmatprep.subr.bf16.mxu0 0
  %5624 = vmatpush1.bf16.msra.mxu0 %v5591
  %5625 = vmatprep.subr.bf16.mxu0 0
  %5626 = vmatpush1.bf16.msra.mxu0 %v5592
  %5627 = vmatprep.subr.bf16.mxu0 0
  %5628 = vmatpush1.bf16.msra.mxu0 %v5593
  %5629 = vmatprep.subr.bf16.mxu0 0
  %5630 = vmatpush1.bf16.msra.mxu0 %v5594
  %5631 = vmatprep.subr.bf16.mxu0 0
  %5632 = vmatpush1.bf16.msra.mxu0 %v5595
  %5633 = vmatprep.subr.bf16.mxu0 0
  %5634 = vmatpush1.bf16.msra.mxu0 %v5596
  %5635 = vmatprep.subr.bf16.mxu0 0
  %5636 = vmatpush1.bf16.msra.mxu0 %v5597
  %5637 = vmatprep.subr.bf16.mxu0 0
  %5638 = vmatpush1.bf16.msra.mxu0 %v5598
  %5639 = vmatprep.subr.bf16.mxu0 0
  %5640 = vmatpush1.bf16.msra.mxu0 %v5599
  %5641 = vmatprep.subr.bf16.mxu0 0
  %5642 = vmatpush1.bf16.msra.mxu0 %v5600
  %5643 = vmatprep.subr.bf16.mxu0 0
  %5644 = vmatpush1.bf16.msra.mxu0 %v5601
  %5645 = vmatprep.subr.bf16.mxu0 0
  %5646 = vmatpush1.bf16.msra.mxu0 %v5602
  %5647 = vmatprep.subr.bf16.mxu0 0
  %5648 = vmatpush1.bf16.msra.mxu0 %v5603
  %5649 = vmatprep.subr.bf16.mxu0 0
  %5650 = vmatpush1.bf16.msra.mxu0 %v5604
  %5651 = vmatprep.subr.bf16.mxu0 0
  %5652 = vmatpush1.bf16.msra.mxu0 %v5605
  %5653 = vmatprep.subr.bf16.mxu0 0
  %5654 = vmatpush1.bf16.msra.mxu0 %v5606
  %5655 = vmatprep.mubr.bf16.mxu0 %v5213
  %5656 = vmatmul.mubr.bf16.gmra.mrb[0].mxu0 %v5212
  %v5657 = vpop.f32.mrb[0].mxu0
  %v5658 = vadd.f32 %v5513, %v5657
  %v5659 = vpop.f32.mrb[0].mxu0
  %v5660 = vpop.f32.mrb[0].mxu0
  %v5661 = vadd.f32 %v5516, %v5660
  %v5662 = vpop.f32.mrb[0].mxu0
  %5663 = vmatprep.mubr.bf16.mxu0 %v5215
  %5664 = vmatmul.mubr.bf16.gmra.mrb[0].mxu0 %v5214
  %v5665 = vpop.f32.mrb[0].mxu0
  %v5666 = vadd.f32 %v5521, %v5665
  %v5667 = vpop.f32.mrb[0].mxu0
  %v5668 = vpop.f32.mrb[0].mxu0
  %v5669 = vadd.f32 %v5524, %v5668
  %v5670 = vpop.f32.mrb[0].mxu0
  %5671 = vdwg.mxu0
  %v5672 = vld [vmem:[%s5107 + $0x10] sm:$0xff]
  %v5673 = vld [vmem:[%s5107 + $0x30] sm:$0xff]
  %v5674 = vld [vmem:[%s5107 + $0x50] sm:$0xff]
  %v5675 = vld [vmem:[%s5107 + $0x70] sm:$0xff]
  %v5676 = vld [vmem:[%s5112 + $0x4] sm:$0x3]
  %v5678 = vlaneseq
  %v5679 = vshrl.u32 %v5678, 7
  %v5680 = vsub.s32 0, %v5679
  %v5681 = vrot.slane %v5676, %v5680
  %v5682 = vlaneseq
  %v5683 = vshrl.u32 %v5682, 7
  %v5684 = vsub.s32 1, %v5683
  %v5685 = vrot.slane %v5676, %v5684
  %v5692 = vunpack.c.l.b16 %v5672
  %v5693 = vunpack.c.h.b16 %v5672
  %v5694 = vunpack.c.l.b16 %v5673
  %v5695 = vunpack.c.h.b16 %v5673
  %v5696 = vunpack.c.l.b16 %v5674
  %v5697 = vunpack.c.h.b16 %v5674
  %v5698 = vunpack.c.l.b16 %v5675
  %v5699 = vunpack.c.h.b16 %v5675
  %v5700 = vpack.c.b16 %v5694, %v5692
  %v5701 = vpack.c.b16 %v5695, %v5693
  %v5702 = vpack.c.b16 %v5698, %v5696
  %v5703 = vpack.c.b16 %v5699, %v5697
  %5708 = vmatprep.subr.bf16.mxu0 %v5701
  %5709 = vmatpush1.bf16.msra.mxu0 %v5700
  %5710 = vmatprep.subr.bf16.mxu0 %v5703
  %5711 = vmatpush1.bf16.msra.mxu0 %v5702
  %5712 = vmatprep.subr.bf16.mxu0 0
  %5713 = vmatpush1.bf16.msra.mxu0 0
  %5714 = vmatprep.subr.bf16.mxu0 0
  %5715 = vmatpush1.bf16.msra.mxu0 0
  %5716 = vmatprep.subr.bf16.mxu0 0
  %5717 = vmatpush1.bf16.msra.mxu0 0
  %5718 = vmatprep.subr.bf16.mxu0 0
  %5719 = vmatpush1.bf16.msra.mxu0 0
  %5720 = vmatprep.subr.bf16.mxu0 0
  %5721 = vmatpush1.bf16.msra.mxu0 0
  %5722 = vmatprep.subr.bf16.mxu0 0
  %5723 = vmatpush1.bf16.msra.mxu0 0
  %5724 = vmatprep.subr.bf16.mxu0 0
  %5725 = vmatpush1.bf16.msra.mxu0 0
  %5726 = vmatprep.subr.bf16.mxu0 0
  %5727 = vmatpush1.bf16.msra.mxu0 0
  %5728 = vmatprep.subr.bf16.mxu0 0
  %5729 = vmatpush1.bf16.msra.mxu0 0
  %5730 = vmatprep.subr.bf16.mxu0 0
  %5731 = vmatpush1.bf16.msra.mxu0 0
  %5732 = vmatprep.subr.bf16.mxu0 0
  %5733 = vmatpush1.bf16.msra.mxu0 0
  %5734 = vmatprep.subr.bf16.mxu0 0
  %5735 = vmatpush1.bf16.msra.mxu0 0
  %5736 = vmatprep.subr.bf16.mxu0 0
  %5737 = vmatpush1.bf16.msra.mxu0 0
  %5738 = vmatprep.subr.bf16.mxu0 0
  %5739 = vmatpush1.bf16.msra.mxu0 0
  %5740 = vmatprep.mubr.bf16.mxu0 0
  %5741 = vmatmul.mubr.bf16.gmra.mrb[0].mxu0 %v5146
  %v5742 = vpop.f32.mrb[0].mxu0
  %v5743 = vadd.f32 %v5681, %v5742
  %v5744 = vpop.f32.mrb[0].mxu0
  %v5745 = vadd.f32 %v5685, %v5744
  %v5746 = vpop.f32.mrb[0].mxu0
  %v5747 = vadd.f32 %v5681, %v5746
  %v5748 = vpop.f32.mrb[0].mxu0
  %v5749 = vadd.f32 %v5685, %v5748
  %5750 = vmatprep.mubr.bf16.mxu0 0
  %5751 = vmatmul.mubr.bf16.gmra.mrb[0].mxu0 %v5149
  %v5752 = vpop.f32.mrb[0].mxu0
  %v5753 = vadd.f32 %v5681, %v5752
  %v5754 = vpop.f32.mrb[0].mxu0
  %v5755 = vadd.f32 %v5685, %v5754
  %v5756 = vpop.f32.mrb[0].mxu0
  %v5757 = vadd.f32 %v5681, %v5756
  %v5758 = vpop.f32.mrb[0].mxu0
  %v5759 = vadd.f32 %v5685, %v5758
  %5760 = vdwg.mxu0
  %v5761 = vmax.f32 %v5743, 0.0
  %v5762 = vmax.f32 %v5745, 0.0
  %v5763 = vmax.f32 %v5747, 0.0
  %v5764 = vmax.f32 %v5749, 0.0
  %v5765 = vmax.f32 %v5753, 0.0
  %v5766 = vmax.f32 %v5755, 0.0
  %v5767 = vmax.f32 %v5757, 0.0
  %v5768 = vmax.f32 %v5759, 0.0
  %v5769 = vpack.c.bf16 %v5763, %v5761
  %v5770 = vpack.c.bf16 %v5764, %v5762
  %v5771 = vpack.c.bf16 %v5767, %v5765
  %v5772 = vpack.c.bf16 %v5768, %v5766
  %v5773 = vld [vmem:[%s5216 + $0x100] sm:$0xf]
  %v5774 = vld [vmem:[%s5216 + $0x104] sm:$0xf]
  %v5775 = vld [vmem:[%s5216 + $0x108] sm:$0xf]
  %v5776 = vld [vmem:[%s5216 + $0x10c] sm:$0xf]
  %v5777 = vld [vmem:[%s5216 + $0x110] sm:$0xf]
  %v5778 = vld [vmem:[%s5216 + $0x114] sm:$0xf]
  %v5779 = vld [vmem:[%s5216 + $0x118] sm:$0xf]
  %v5780 = vld [vmem:[%s5216 + $0x11c] sm:$0xf]
  %v5781 = vld [vmem:[%s5216 + $0x120] sm:$0xf]
  %v5782 = vld [vmem:[%s5216 + $0x124] sm:$0xf]
  %v5783 = vld [vmem:[%s5216 + $0x128] sm:$0xf]
  %v5784 = vld [vmem:[%s5216 + $0x12c] sm:$0xf]
  %v5785 = vld [vmem:[%s5216 + $0x130] sm:$0xf]
  %v5786 = vld [vmem:[%s5216 + $0x134] sm:$0xf]
  %v5787 = vld [vmem:[%s5216 + $0x138] sm:$0xf]
  %v5788 = vld [vmem:[%s5216 + $0x13c] sm:$0xf]
  %v5789 = vld [vmem:[%s5216 + $0x140] sm:$0xf]
  %v5790 = vld [vmem:[%s5216 + $0x144] sm:$0xf]
  %v5791 = vld [vmem:[%s5216 + $0x148] sm:$0xf]
  %v5792 = vld [vmem:[%s5216 + $0x14c] sm:$0xf]
  %v5793 = vld [vmem:[%s5216 + $0x150] sm:$0xf]
  %v5794 = vld [vmem:[%s5216 + $0x154] sm:$0xf]
  %v5795 = vld [vmem:[%s5216 + $0x158] sm:$0xf]
  %v5796 = vld [vmem:[%s5216 + $0x15c] sm:$0xf]
  %v5797 = vld [vmem:[%s5216 + $0x160] sm:$0xf]
  %v5798 = vld [vmem:[%s5216 + $0x164] sm:$0xf]
  %v5799 = vld [vmem:[%s5216 + $0x168] sm:$0xf]
  %v5800 = vld [vmem:[%s5216 + $0x16c] sm:$0xf]
  %v5801 = vld [vmem:[%s5216 + $0x170] sm:$0xf]
  %v5802 = vld [vmem:[%s5216 + $0x174] sm:$0xf]
  %v5803 = vld [vmem:[%s5216 + $0x178] sm:$0xf]
  %v5804 = vld [vmem:[%s5216 + $0x17c] sm:$0xf]
  %v5837 = vunpack.c.l.b16 %v5773
  %v5838 = vunpack.c.l.b16 %v5774
  %v5839 = vunpack.c.l.b16 %v5775
  %v5840 = vunpack.c.l.b16 %v5776
  %v5841 = vunpack.c.l.b16 %v5777
  %v5842 = vunpack.c.l.b16 %v5778
  %v5843 = vunpack.c.l.b16 %v5779
  %v5844 = vunpack.c.l.b16 %v5780
  %v5845 = vunpack.c.l.b16 %v5781
  %v5846 = vunpack.c.l.b16 %v5782
  %v5847 = vunpack.c.l.b16 %v5783
  %v5848 = vunpack.c.l.b16 %v5784
  %v5849 = vunpack.c.l.b16 %v5785
  %v5850 = vunpack.c.l.b16 %v5786
  %v5851 = vunpack.c.l.b16 %v5787
  %v5852 = vunpack.c.l.b16 %v5788
  %v5853 = vunpack.c.l.b16 %v5789
  %v5854 = vunpack.c.l.b16 %v5790
  %v5855 = vunpack.c.l.b16 %v5791
  %v5856 = vunpack.c.l.b16 %v5792
  %v5857 = vunpack.c.l.b16 %v5793
  %v5858 = vunpack.c.l.b16 %v5794
  %v5859 = vunpack.c.l.b16 %v5795
  %v5860 = vunpack.c.l.b16 %v5796
  %v5861 = vunpack.c.l.b16 %v5797
  %v5862 = vunpack.c.l.b16 %v5798
  %v5863 = vunpack.c.l.b16 %v5799
  %v5864 = vunpack.c.l.b16 %v5800
  %v5865 = vunpack.c.l.b16 %v5801
  %v5866 = vunpack.c.l.b16 %v5802
  %v5867 = vunpack.c.l.b16 %v5803
  %v5868 = vunpack.c.l.b16 %v5804
  %v5869 = vpack.c.b16 %v5838, %v5837
  %v5870 = vpack.c.b16 %v5840, %v5839
  %v5871 = vpack.c.b16 %v5842, %v5841
  %v5872 = vpack.c.b16 %v5844, %v5843
  %v5873 = vpack.c.b16 %v5846, %v5845
  %v5874 = vpack.c.b16 %v5848, %v5847
  %v5875 = vpack.c.b16 %v5850, %v5849
  %v5876 = vpack.c.b16 %v5852, %v5851
  %v5877 = vpack.c.b16 %v5854, %v5853
  %v5878 = vpack.c.b16 %v5856, %v5855
  %v5879 = vpack.c.b16 %v5858, %v5857
  %v5880 = vpack.c.b16 %v5860, %v5859
  %v5881 = vpack.c.b16 %v5862, %v5861
  %v5882 = vpack.c.b16 %v5864, %v5863
  %v5883 = vpack.c.b16 %v5866, %v5865
  %v5884 = vpack.c.b16 %v5868, %v5867
  %5901 = vmatprep.subr.bf16.mxu0 0
  %5902 = vmatpush1.bf16.msra.mxu0 %v5869
  %5903 = vmatprep.subr.bf16.mxu0 0
  %5904 = vmatpush1.bf16.msra.mxu0 %v5870
  %5905 = vmatprep.subr.bf16.mxu0 0
  %5906 = vmatpush1.bf16.msra.mxu0 %v5871
  %5907 = vmatprep.subr.bf16.mxu0 0
  %5908 = vmatpush1.bf16.msra.mxu0 %v5872
  %5909 = vmatprep.subr.bf16.mxu0 0
  %5910 = vmatpush1.bf16.msra.mxu0 %v5873
  %5911 = vmatprep.subr.bf16.mxu0 0
  %5912 = vmatpush1.bf16.msra.mxu0 %v5874
  %5913 = vmatprep.subr.bf16.mxu0 0
  %5914 = vmatpush1.bf16.msra.mxu0 %v5875
  %5915 = vmatprep.subr.bf16.mxu0 0
  %5916 = vmatpush1.bf16.msra.mxu0 %v5876
  %5917 = vmatprep.subr.bf16.mxu0 0
  %5918 = vmatpush1.bf16.msra.mxu0 %v5877
  %5919 = vmatprep.subr.bf16.mxu0 0
  %5920 = vmatpush1.bf16.msra.mxu0 %v5878
  %5921 = vmatprep.subr.bf16.mxu0 0
  %5922 = vmatpush1.bf16.msra.mxu0 %v5879
  %5923 = vmatprep.subr.bf16.mxu0 0
  %5924 = vmatpush1.bf16.msra.mxu0 %v5880
  %5925 = vmatprep.subr.bf16.mxu0 0
  %5926 = vmatpush1.bf16.msra.mxu0 %v5881
  %5927 = vmatprep.subr.bf16.mxu0 0
  %5928 = vmatpush1.bf16.msra.mxu0 %v5882
  %5929 = vmatprep.subr.bf16.mxu0 0
  %5930 = vmatpush1.bf16.msra.mxu0 %v5883
  %5931 = vmatprep.subr.bf16.mxu0 0
  %5932 = vmatpush1.bf16.msra.mxu0 %v5884
  %5933 = vmatprep.mubr.bf16.mxu0 %v5770
  %5934 = vmatmul.mubr.bf16.gmra.mrb[0].mxu0 %v5769
  %v5935 = vpop.f32.mrb[0].mxu0
  %v5936 = vadd.f32 0.0, %v5935
  %v5937 = vpop.f32.mrb[0].mxu0
  %v5938 = vpop.f32.mrb[0].mxu0
  %v5939 = vadd.f32 0.0, %v5938
  %v5940 = vpop.f32.mrb[0].mxu0
  %5941 = vmatprep.mubr.bf16.mxu0 %v5772
  %5942 = vmatmul.mubr.bf16.gmra.mrb[0].mxu0 %v5771
  %v5943 = vpop.f32.mrb[0].mxu0
  %v5944 = vadd.f32 0.0, %v5943
  %v5945 = vpop.f32.mrb[0].mxu0
  %v5946 = vpop.f32.mrb[0].mxu0
  %v5947 = vadd.f32 0.0, %v5946
  %v5948 = vpop.f32.mrb[0].mxu0
  %5949 = vdwg.mxu0
  %v5950 = vadd.f32 %v5658, %v5936
  %v5951 = vadd.f32 %v5661, %v5939
  %v5952 = vadd.f32 %v5666, %v5944
  %v5953 = vadd.f32 %v5669, %v5947
  %v5954 = vld [vmem:[%s5107 + $0x18] sm:$0xff]
  %v5955 = vld [vmem:[%s5107 + $0x38] sm:$0xff]
  %v5956 = vld [vmem:[%s5107 + $0x58] sm:$0xff]
  %v5957 = vld [vmem:[%s5107 + $0x78] sm:$0xff]
  %v5958 = vld [vmem:[%s5112 + $0x6] sm:$0x3]
  %v5960 = vlaneseq
  %v5961 = vshrl.u32 %v5960, 7
  %v5962 = vsub.s32 0, %v5961
  %v5963 = vrot.slane %v5958, %v5962
  %v5964 = vlaneseq
  %v5965 = vshrl.u32 %v5964, 7
  %v5966 = vsub.s32 1, %v5965
  %v5967 = vrot.slane %v5958, %v5966
  %v5974 = vunpack.c.l.b16 %v5954
  %v5975 = vunpack.c.h.b16 %v5954
  %v5976 = vunpack.c.l.b16 %v5955
  %v5977 = vunpack.c.h.b16 %v5955
  %v5978 = vunpack.c.l.b16 %v5956
  %v5979 = vunpack.c.h.b16 %v5956
  %v5980 = vunpack.c.l.b16 %v5957
  %v5981 = vunpack.c.h.b16 %v5957
  %v5982 = vpack.c.b16 %v5976, %v5974
  %v5983 = vpack.c.b16 %v5977, %v5975
  %v5984 = vpack.c.b16 %v5980, %v5978
  %v5985 = vpack.c.b16 %v5981, %v5979
  %5990 = vmatprep.subr.bf16.mxu0 %v5983
  %5991 = vmatpush1.bf16.msra.mxu0 %v5982
  %5992 = vmatprep.subr.bf16.mxu0 %v5985
  %5993 = vmatpush1.bf16.msra.mxu0 %v5984
  %5994 = vmatprep.subr.bf16.mxu0 0
  %5995 = vmatpush1.bf16.msra.mxu0 0
  %5996 = vmatprep.subr.bf16.mxu0 0
  %5997 = vmatpush1.bf16.msra.mxu0 0
  %5998 = vmatprep.subr.bf16.mxu0 0
  %5999 = vmatpush1.bf16.msra.mxu0 0
  %6000 = vmatprep.subr.bf16.mxu0 0
  %6001 = vmatpush1.bf16.msra.mxu0 0
  %6002 = vmatprep.subr.bf16.mxu0 0
  %6003 = vmatpush1.bf16.msra.mxu0 0
  %6004 = vmatprep.subr.bf16.mxu0 0
  %6005 = vmatpush1.bf16.msra.mxu0 0
  %6006 = vmatprep.subr.bf16.mxu0 0
  %6007 = vmatpush1.bf16.msra.mxu0 0
  %6008 = vmatprep.subr.bf16.mxu0 0
  %6009 = vmatpush1.bf16.msra.mxu0 0
  %6010 = vmatprep.subr.bf16.mxu0 0
  %6011 = vmatpush1.bf16.msra.mxu0 0
  %6012 = vmatprep.subr.bf16.mxu0 0
  %6013 = vmatpush1.bf16.msra.mxu0 0
  %6014 = vmatprep.subr.bf16.mxu0 0
  %6015 = vmatpush1.bf16.msra.mxu0 0
  %6016 = vmatprep.subr.bf16.mxu0 0
  %6017 = vmatpush1.bf16.msra.mxu0 0
  %6018 = vmatprep.subr.bf16.mxu0 0
  %6019 = vmatpush1.bf16.msra.mxu0 0
  %6020 = vmatprep.subr.bf16.mxu0 0
  %6021 = vmatpush1.bf16.msra.mxu0 0
  %6022 = vmatprep.mubr.bf16.mxu0 0
  %6023 = vmatmul.mubr.bf16.gmra.mrb[0].mxu0 %v5146
  %v6024 = vpop.f32.mrb[0].mxu0
  %v6025 = vadd.f32 %v5963, %v6024
  %v6026 = vpop.f32.mrb[0].mxu0
  %v6027 = vadd.f32 %v5967, %v6026
  %v6028 = vpop.f32.mrb[0].mxu0
  %v6029 = vadd.f32 %v5963, %v6028
  %v6030 = vpop.f32.mrb[0].mxu0
  %v6031 = vadd.f32 %v5967, %v6030
  %6032 = vmatprep.mubr.bf16.mxu0 0
  %6033 = vmatmul.mubr.bf16.gmra.mrb[0].mxu0 %v5149
  %v6034 = vpop.f32.mrb[0].mxu0
  %v6035 = vadd.f32 %v5963, %v6034
  %v6036 = vpop.f32.mrb[0].mxu0
  %v6037 = vadd.f32 %v5967, %v6036
  %v6038 = vpop.f32.mrb[0].mxu0
  %v6039 = vadd.f32 %v5963, %v6038
  %v6040 = vpop.f32.mrb[0].mxu0
  %v6041 = vadd.f32 %v5967, %v6040
  %6042 = vdwg.mxu0
  %v6043 = vmax.f32 %v6025, 0.0
  %v6044 = vmax.f32 %v6027, 0.0
  %v6045 = vmax.f32 %v6029, 0.0
  %v6046 = vmax.f32 %v6031, 0.0
  %v6047 = vmax.f32 %v6035, 0.0
  %v6048 = vmax.f32 %v6037, 0.0
  %v6049 = vmax.f32 %v6039, 0.0
  %v6050 = vmax.f32 %v6041, 0.0
  %v6051 = vpack.c.bf16 %v6045, %v6043
  %v6052 = vpack.c.bf16 %v6046, %v6044
  %v6053 = vpack.c.bf16 %v6049, %v6047
  %v6054 = vpack.c.bf16 %v6050, %v6048
  %v6055 = vld [vmem:[%s5216 + $0x180] sm:$0xf]
  %v6056 = vld [vmem:[%s5216 + $0x184] sm:$0xf]
  %v6057 = vld [vmem:[%s5216 + $0x188] sm:$0xf]
  %v6058 = vld [vmem:[%s5216 + $0x18c] sm:$0xf]
  %v6059 = vld [vmem:[%s5216 + $0x190] sm:$0xf]
  %v6060 = vld [vmem:[%s5216 + $0x194] sm:$0xf]
  %v6061 = vld [vmem:[%s5216 + $0x198] sm:$0xf]
  %v6062 = vld [vmem:[%s5216 + $0x19c] sm:$0xf]
  %v6063 = vld [vmem:[%s5216 + $0x1a0] sm:$0xf]
  %v6064 = vld [vmem:[%s5216 + $0x1a4] sm:$0xf]
  %v6065 = vld [vmem:[%s5216 + $0x1a8] sm:$0xf]
  %v6066 = vld [vmem:[%s5216 + $0x1ac] sm:$0xf]
  %v6067 = vld [vmem:[%s5216 + $0x1b0] sm:$0xf]
  %v6068 = vld [vmem:[%s5216 + $0x1b4] sm:$0xf]
  %v6069 = vld [vmem:[%s5216 + $0x1b8] sm:$0xf]
  %v6070 = vld [vmem:[%s5216 + $0x1bc] sm:$0xf]
  %v6071 = vld [vmem:[%s5216 + $0x1c0] sm:$0xf]
  %v6072 = vld [vmem:[%s5216 + $0x1c4] sm:$0xf]
  %v6073 = vld [vmem:[%s5216 + $0x1c8] sm:$0xf]
  %v6074 = vld [vmem:[%s5216 + $0x1cc] sm:$0xf]
  %v6075 = vld [vmem:[%s5216 + $0x1d0] sm:$0xf]
  %v6076 = vld [vmem:[%s5216 + $0x1d4] sm:$0xf]
  %v6077 = vld [vmem:[%s5216 + $0x1d8] sm:$0xf]
  %v6078 = vld [vmem:[%s5216 + $0x1dc] sm:$0xf]
  %v6079 = vld [vmem:[%s5216 + $0x1e0] sm:$0xf]
  %v6080 = vld [vmem:[%s5216 + $0x1e4] sm:$0xf]
  %v6081 = vld [vmem:[%s5216 + $0x1e8] sm:$0xf]
  %v6082 = vld [vmem:[%s5216 + $0x1ec] sm:$0xf]
  %v6083 = vld [vmem:[%s5216 + $0x1f0] sm:$0xf]
  %v6084 = vld [vmem:[%s5216 + $0x1f4] sm:$0xf]
  %v6085 = vld [vmem:[%s5216 + $0x1f8] sm:$0xf]
  %v6086 = vld [vmem:[%s5216 + $0x1fc] sm:$0xf]
  %v6119 = vunpack.c.l.b16 %v6055
  %v6120 = vunpack.c.l.b16 %v6056
  %v6121 = vunpack.c.l.b16 %v6057
  %v6122 = vunpack.c.l.b16 %v6058
  %v6123 = vunpack.c.l.b16 %v6059
  %v6124 = vunpack.c.l.b16 %v6060
  %v6125 = vunpack.c.l.b16 %v6061
  %v6126 = vunpack.c.l.b16 %v6062
  %v6127 = vunpack.c.l.b16 %v6063
  %v6128 = vunpack.c.l.b16 %v6064
  %v6129 = vunpack.c.l.b16 %v6065
  %v6130 = vunpack.c.l.b16 %v6066
  %v6131 = vunpack.c.l.b16 %v6067
  %v6132 = vunpack.c.l.b16 %v6068
  %v6133 = vunpack.c.l.b16 %v6069
  %v6134 = vunpack.c.l.b16 %v6070
  %v6135 = vunpack.c.l.b16 %v6071
  %v6136 = vunpack.c.l.b16 %v6072
  %v6137 = vunpack.c.l.b16 %v6073
  %v6138 = vunpack.c.l.b16 %v6074
  %v6139 = vunpack.c.l.b16 %v6075
  %v6140 = vunpack.c.l.b16 %v6076
  %v6141 = vunpack.c.l.b16 %v6077
  %v6142 = vunpack.c.l.b16 %v6078
  %v6143 = vunpack.c.l.b16 %v6079
  %v6144 = vunpack.c.l.b16 %v6080
  %v6145 = vunpack.c.l.b16 %v6081
  %v6146 = vunpack.c.l.b16 %v6082
  %v6147 = vunpack.c.l.b16 %v6083
  %v6148 = vunpack.c.l.b16 %v6084
  %v6149 = vunpack.c.l.b16 %v6085
  %v6150 = vunpack.c.l.b16 %v6086
  %v6151 = vpack.c.b16 %v6120, %v6119
  %v6152 = vpack.c.b16 %v6122, %v6121
  %v6153 = vpack.c.b16 %v6124, %v6123
  %v6154 = vpack.c.b16 %v6126, %v6125
  %v6155 = vpack.c.b16 %v6128, %v6127
  %v6156 = vpack.c.b16 %v6130, %v6129
  %v6157 = vpack.c.b16 %v6132, %v6131
  %v6158 = vpack.c.b16 %v6134, %v6133
  %v6159 = vpack.c.b16 %v6136, %v6135
  %v6160 = vpack.c.b16 %v6138, %v6137
  %v6161 = vpack.c.b16 %v6140, %v6139
  %v6162 = vpack.c.b16 %v6142, %v6141
  %v6163 = vpack.c.b16 %v6144, %v6143
  %v6164 = vpack.c.b16 %v6146, %v6145
  %v6165 = vpack.c.b16 %v6148, %v6147
  %v6166 = vpack.c.b16 %v6150, %v6149
  %6183 = vmatprep.subr.bf16.mxu0 0
  %6184 = vmatpush1.bf16.msra.mxu0 %v6151
  %6185 = vmatprep.subr.bf16.mxu0 0
  %6186 = vmatpush1.bf16.msra.mxu0 %v6152
  %6187 = vmatprep.subr.bf16.mxu0 0
  %6188 = vmatpush1.bf16.msra.mxu0 %v6153
  %6189 = vmatprep.subr.bf16.mxu0 0
  %6190 = vmatpush1.bf16.msra.mxu0 %v6154
  %6191 = vmatprep.subr.bf16.mxu0 0
  %6192 = vmatpush1.bf16.msra.mxu0 %v6155
  %6193 = vmatprep.subr.bf16.mxu0 0
  %6194 = vmatpush1.bf16.msra.mxu0 %v6156
  %6195 = vmatprep.subr.bf16.mxu0 0
  %6196 = vmatpush1.bf16.msra.mxu0 %v6157
  %6197 = vmatprep.subr.bf16.mxu0 0
  %6198 = vmatpush1.bf16.msra.mxu0 %v6158
  %6199 = vmatprep.subr.bf16.mxu0 0
  %6200 = vmatpush1.bf16.msra.mxu0 %v6159
  %6201 = vmatprep.subr.bf16.mxu0 0
  %6202 = vmatpush1.bf16.msra.mxu0 %v6160
  %6203 = vmatprep.subr.bf16.mxu0 0
  %6204 = vmatpush1.bf16.msra.mxu0 %v6161
  %6205 = vmatprep.subr.bf16.mxu0 0
  %6206 = vmatpush1.bf16.msra.mxu0 %v6162
  %6207 = vmatprep.subr.bf16.mxu0 0
  %6208 = vmatpush1.bf16.msra.mxu0 %v6163
  %6209 = vmatprep.subr.bf16.mxu0 0
  %6210 = vmatpush1.bf16.msra.mxu0 %v6164
  %6211 = vmatprep.subr.bf16.mxu0 0
  %6212 = vmatpush1.bf16.msra.mxu0 %v6165
  %6213 = vmatprep.subr.bf16.mxu0 0
  %6214 = vmatpush1.bf16.msra.mxu0 %v6166
  %6215 = vmatprep.mubr.bf16.mxu0 %v6052
  %6216 = vmatmul.mubr.bf16.gmra.mrb[0].mxu0 %v6051
  %v6217 = vpop.f32.mrb[0].mxu0
  %v6218 = vadd.f32 0.0, %v6217
  %v6219 = vpop.f32.mrb[0].mxu0
  %v6220 = vpop.f32.mrb[0].mxu0
  %v6221 = vadd.f32 0.0, %v6220
  %v6222 = vpop.f32.mrb[0].mxu0
  %6223 = vmatprep.mubr.bf16.mxu0 %v6054
  %6224 = vmatmul.mubr.bf16.gmra.mrb[0].mxu0 %v6053
  %v6225 = vpop.f32.mrb[0].mxu0
  %v6226 = vadd.f32 0.0, %v6225
  %v6227 = vpop.f32.mrb[0].mxu0
  %v6228 = vpop.f32.mrb[0].mxu0
  %v6229 = vadd.f32 0.0, %v6228
  %v6230 = vpop.f32.mrb[0].mxu0
  %6231 = vdwg.mxu0
  %v6232 = vadd.f32 %v5950, %v6218
  %v6233 = vadd.f32 %v5951, %v6221
  %v6234 = vadd.f32 %v5952, %v6226
  %v6235 = vadd.f32 %v5953, %v6229
  %s6236 = scalar_lea.vmem %s18, 2
  %v6237 = vld [vmem:[%s6236] sm:$0x1]
  %v6239 = vlaneseq
  %v6240 = vshrl.u32 %v6239, 7
  %v6241 = vsub.s32 0, %v6240
  %v6242 = vrot.slane %v6237, %v6241
  %v6244 = vadd.f32 %v6232, %v6242
  %v6245 = vadd.f32 %v6233, %v6242
  %v6246 = vadd.f32 %v6234, %v6242
  %v6247 = vadd.f32 %v6235, %v6242
  %v6248 = vadd.f32 %v5101, %v6244
  %v6249 = vadd.f32 %v5102, %v6245
  %v6250 = vadd.f32 %v5103, %v6246
  %v6251 = vadd.f32 %v5104, %v6247
  %v6252 = vsel %vm232, %v6248, 0.0
  %6253 = vadd.xlane.f32.xlu0 %v6252
  %v6254 = vpop.xlane.xlu0 %6253
  %v6255 = vsel %vm232, %v6249, 0.0
  %6256 = vadd.xlane.f32.xlu0 %v6255
  %v6257 = vpop.xlane.xlu0 %6256
  %v6258 = vsel %vm232, %v6250, 0.0
  %6259 = vadd.xlane.f32.xlu0 %v6258
  %v6260 = vpop.xlane.xlu0 %6259
  %v6261 = vsel %vm232, %v6251, 0.0
  %6262 = vadd.xlane.f32.xlu0 %v6261
  %v6263 = vpop.xlane.xlu0 %6262
  %v6264 = vmul.f32 %v6254, %v990
  %v6265 = vmul.f32 %v6257, %v990
  %v6266 = vmul.f32 %v6260, %v990
  %v6267 = vmul.f32 %v6263, %v990
  %v6268 = vsub.f32 %v6248, %v6264
  %v6269 = vsub.f32 %v6249, %v6265
  %v6270 = vsub.f32 %v6250, %v6266
  %v6271 = vsub.f32 %v6251, %v6267
  %v6272 = vmul.f32 %v6268, %v6268
  %v6273 = vmul.f32 %v6269, %v6269
  %v6274 = vmul.f32 %v6270, %v6270
  %v6275 = vmul.f32 %v6271, %v6271
  %v6276 = vsel %vm232, %v6272, 0.0
  %6277 = vadd.xlane.f32.xlu0 %v6276
  %v6278 = vpop.xlane.xlu0 %6277
  %v6279 = vsel %vm232, %v6273, 0.0
  %6280 = vadd.xlane.f32.xlu0 %v6279
  %v6281 = vpop.xlane.xlu0 %6280
  %v6282 = vsel %vm232, %v6274, 0.0
  %6283 = vadd.xlane.f32.xlu0 %v6282
  %v6284 = vpop.xlane.xlu0 %6283
  %v6285 = vsel %vm232, %v6275, 0.0
  %6286 = vadd.xlane.f32.xlu0 %v6285
  %v6287 = vpop.xlane.xlu0 %6286
  %v6288 = vmul.f32 %v6278, %v990
  %v6289 = vmul.f32 %v6281, %v990
  %v6290 = vmul.f32 %v6284, %v990
  %v6291 = vmul.f32 %v6287, %v990
  %v6292 = vadd.f32 %v6288, 1e-05
  %v6293 = vadd.f32 %v6289, 1e-05
  %v6294 = vadd.f32 %v6290, 1e-05
  %v6295 = vadd.f32 %v6291, 1e-05
  %v6296 = vrsqrt.pop %v6292
  %v6297 = vrsqrt.pop %v6293
  %v6298 = vrsqrt.pop %v6294
  %v6299 = vrsqrt.pop %v6295
  %v6300 = vmul.f32 %v6268, %v6296
  %v6301 = vmul.f32 %v6269, %v6297
  %v6302 = vmul.f32 %v6270, %v6298
  %v6303 = vmul.f32 %v6271, %v6299
  %s6304 = scalar_lea.vmem %s19, 2
  %v6305 = vld [vmem:[%s6304] sm:$0x1]
  %v6307 = vlaneseq
  %v6308 = vshrl.u32 %v6307, 7
  %v6309 = vsub.s32 0, %v6308
  %v6310 = vrot.slane %v6305, %v6309
  %v6312 = vmul.f32 %v6300, %v6310
  %v6313 = vmul.f32 %v6301, %v6310
  %v6314 = vmul.f32 %v6302, %v6310
  %v6315 = vmul.f32 %v6303, %v6310
  %s6316 = scalar_lea.vmem %s20, 2
  %v6317 = vld [vmem:[%s6316] sm:$0x1]
  %v6319 = vlaneseq
  %v6320 = vshrl.u32 %v6319, 7
  %v6321 = vsub.s32 0, %v6320
  %v6322 = vrot.slane %v6317, %v6321
  %v6324 = vadd.f32 %v6312, %v6322
  %v6325 = vadd.f32 %v6313, %v6322
  %v6326 = vadd.f32 %v6314, %v6322
  %v6327 = vadd.f32 %v6315, %v6322
  %v6328 = vpack.c.bf16 %v6325, %v6324
  %v6329 = vpack.c.bf16 %v6327, %v6326
  %s6330 = scalar_lea.vmem %s5, 48
  %v6331 = vld [vmem:[%s6330] sm:$0xf]
  %v6332 = vld [vmem:[%s6330 + $0x4] sm:$0xf]
  %v6333 = vld [vmem:[%s6330 + $0x8] sm:$0xf]
  %v6334 = vld [vmem:[%s6330 + $0xc] sm:$0xf]
  %s6335 = scalar_lea.vmem %s6, 3
  %v6336 = vld [vmem:[%s6335] sm:$0x1]
  %v6338 = vlaneseq
  %v6339 = vshrl.u32 %v6338, 7
  %v6340 = vsub.s32 0, %v6339
  %v6341 = vrot.slane %v6336, %v6340
  %v6347 = vunpack.c.l.b16 %v6331
  %v6348 = vunpack.c.l.b16 %v6332
  %v6349 = vunpack.c.l.b16 %v6333
  %v6350 = vunpack.c.l.b16 %v6334
  %v6351 = vpack.c.b16 %v6348, %v6347
  %v6352 = vpack.c.b16 %v6350, %v6349
  %v6356 = vsel %vm232, %v6328, 0
  %v6359 = vsel %vm232, %v6329, 0
  %6361 = vmatprep.subr.bf16.mxu0 0
  %6362 = vmatpush1.bf16.msra.mxu0 %v6351
  %6363 = vmatprep.subr.bf16.mxu0 0
  %6364 = vmatpush1.bf16.msra.mxu0 %v6352
  %6365 = vmatprep.subr.bf16.mxu0 0
  %6366 = vmatpush1.bf16.msra.mxu0 0
  %6367 = vmatprep.subr.bf16.mxu0 0
  %6368 = vmatpush1.bf16.msra.mxu0 0
  %6369 = vmatprep.subr.bf16.mxu0 0
  %6370 = vmatpush1.bf16.msra.mxu0 0
  %6371 = vmatprep.subr.bf16.mxu0 0
  %6372 = vmatpush1.bf16.msra.mxu0 0
  %6373 = vmatprep.subr.bf16.mxu0 0
  %6374 = vmatpush1.bf16.msra.mxu0 0
  %6375 = vmatprep.subr.bf16.mxu0 0
  %6376 = vmatpush1.bf16.msra.mxu0 0
  %6377 = vmatprep.subr.bf16.mxu0 0
  %6378 = vmatpush1.bf16.msra.mxu0 0
  %6379 = vmatprep.subr.bf16.mxu0 0
  %6380 = vmatpush1.bf16.msra.mxu0 0
  %6381 = vmatprep.subr.bf16.mxu0 0
  %6382 = vmatpush1.bf16.msra.mxu0 0
  %6383 = vmatprep.subr.bf16.mxu0 0
  %6384 = vmatpush1.bf16.msra.mxu0 0
  %6385 = vmatprep.subr.bf16.mxu0 0
  %6386 = vmatpush1.bf16.msra.mxu0 0
  %6387 = vmatprep.subr.bf16.mxu0 0
  %6388 = vmatpush1.bf16.msra.mxu0 0
  %6389 = vmatprep.subr.bf16.mxu0 0
  %6390 = vmatpush1.bf16.msra.mxu0 0
  %6391 = vmatprep.subr.bf16.mxu0 0
  %6392 = vmatpush1.bf16.msra.mxu0 0
  %6393 = vmatprep.mubr.bf16.mxu0 0
  %6394 = vmatmul.mubr.bf16.gmra.mrb[0].mxu0 %v6356
  %v6395 = vpop.f32.mrb[0].mxu0
  %v6396 = vadd.f32 %v6341, %v6395
  %v6397 = vpop.f32.mrb[0].mxu0
  %v6398 = vpop.f32.mrb[0].mxu0
  %v6399 = vadd.f32 %v6341, %v6398
  %v6400 = vpop.f32.mrb[0].mxu0
  %6401 = vmatprep.mubr.bf16.mxu0 0
  %6402 = vmatmul.mubr.bf16.gmra.mrb[0].mxu0 %v6359
  %v6403 = vpop.f32.mrb[0].mxu0
  %v6404 = vadd.f32 %v6341, %v6403
  %v6405 = vpop.f32.mrb[0].mxu0
  %v6406 = vpop.f32.mrb[0].mxu0
  %v6407 = vadd.f32 %v6341, %v6406
  %v6408 = vpop.f32.mrb[0].mxu0
  %6409 = vdwg.mxu0
  %s6410 = scalar_lea.vmem %s7, 48
  %v6411 = vld [vmem:[%s6410] sm:$0xf]
  %v6412 = vld [vmem:[%s6410 + $0x4] sm:$0xf]
  %v6413 = vld [vmem:[%s6410 + $0x8] sm:$0xf]
  %v6414 = vld [vmem:[%s6410 + $0xc] sm:$0xf]
  %s6415 = scalar_lea.vmem %s8, 3
  %v6416 = vld [vmem:[%s6415] sm:$0x1]
  %v6418 = vlaneseq
  %v6419 = vshrl.u32 %v6418, 7
  %v6420 = vsub.s32 0, %v6419
  %v6421 = vrot.slane %v6416, %v6420
  %v6427 = vunpack.c.l.b16 %v6411
  %v6428 = vunpack.c.l.b16 %v6412
  %v6429 = vunpack.c.l.b16 %v6413
  %v6430 = vunpack.c.l.b16 %v6414
  %v6431 = vpack.c.b16 %v6428, %v6427
  %v6432 = vpack.c.b16 %v6430, %v6429
  %6435 = vmatprep.subr.bf16.mxu0 0
  %6436 = vmatpush1.bf16.msra.mxu0 %v6431
  %6437 = vmatprep.subr.bf16.mxu0 0
  %6438 = vmatpush1.bf16.msra.mxu0 %v6432
  %6439 = vmatprep.subr.bf16.mxu0 0
  %6440 = vmatpush1.bf16.msra.mxu0 0
  %6441 = vmatprep.subr.bf16.mxu0 0
  %6442 = vmatpush1.bf16.msra.mxu0 0
  %6443 = vmatprep.subr.bf16.mxu0 0
  %6444 = vmatpush1.bf16.msra.mxu0 0
  %6445 = vmatprep.subr.bf16.mxu0 0
  %6446 = vmatpush1.bf16.msra.mxu0 0
  %6447 = vmatprep.subr.bf16.mxu0 0
  %6448 = vmatpush1.bf16.msra.mxu0 0
  %6449 = vmatprep.subr.bf16.mxu0 0
  %6450 = vmatpush1.bf16.msra.mxu0 0
  %6451 = vmatprep.subr.bf16.mxu0 0
  %6452 = vmatpush1.bf16.msra.mxu0 0
  %6453 = vmatprep.subr.bf16.mxu0 0
  %6454 = vmatpush1.bf16.msra.mxu0 0
  %6455 = vmatprep.subr.bf16.mxu0 0
  %6456 = vmatpush1.bf16.msra.mxu0 0
  %6457 = vmatprep.subr.bf16.mxu0 0
  %6458 = vmatpush1.bf16.msra.mxu0 0
  %6459 = vmatprep.subr.bf16.mxu0 0
  %6460 = vmatpush1.bf16.msra.mxu0 0
  %6461 = vmatprep.subr.bf16.mxu0 0
  %6462 = vmatpush1.bf16.msra.mxu0 0
  %6463 = vmatprep.subr.bf16.mxu0 0
  %6464 = vmatpush1.bf16.msra.mxu0 0
  %6465 = vmatprep.subr.bf16.mxu0 0
  %6466 = vmatpush1.bf16.msra.mxu0 0
  %6467 = vmatprep.mubr.bf16.mxu0 0
  %6468 = vmatmul.mubr.bf16.gmra.mrb[0].mxu0 %v6356
  %v6469 = vpop.f32.mrb[0].mxu0
  %v6470 = vadd.f32 %v6421, %v6469
  %v6471 = vpop.f32.mrb[0].mxu0
  %v6472 = vpop.f32.mrb[0].mxu0
  %v6473 = vadd.f32 %v6421, %v6472
  %v6474 = vpop.f32.mrb[0].mxu0
  %6475 = vmatprep.mubr.bf16.mxu0 0
  %6476 = vmatmul.mubr.bf16.gmra.mrb[0].mxu0 %v6359
  %v6477 = vpop.f32.mrb[0].mxu0
  %v6478 = vadd.f32 %v6421, %v6477
  %v6479 = vpop.f32.mrb[0].mxu0
  %v6480 = vpop.f32.mrb[0].mxu0
  %v6481 = vadd.f32 %v6421, %v6480
  %v6482 = vpop.f32.mrb[0].mxu0
  %6483 = vdwg.mxu0
  %s6484 = scalar_lea.vmem %s9, 48
  %v6485 = vld [vmem:[%s6484] sm:$0xf]
  %v6486 = vld [vmem:[%s6484 + $0x4] sm:$0xf]
  %v6487 = vld [vmem:[%s6484 + $0x8] sm:$0xf]
  %v6488 = vld [vmem:[%s6484 + $0xc] sm:$0xf]
  %s6489 = scalar_lea.vmem %s10, 3
  %v6490 = vld [vmem:[%s6489] sm:$0x1]
  %v6492 = vlaneseq
  %v6493 = vshrl.u32 %v6492, 7
  %v6494 = vsub.s32 0, %v6493
  %v6495 = vrot.slane %v6490, %v6494
  %v6501 = vunpack.c.l.b16 %v6485
  %v6502 = vunpack.c.l.b16 %v6486
  %v6503 = vunpack.c.l.b16 %v6487
  %v6504 = vunpack.c.l.b16 %v6488
  %v6505 = vpack.c.b16 %v6502, %v6501
  %v6506 = vpack.c.b16 %v6504, %v6503
  %6509 = vmatprep.subr.bf16.mxu0 0
  %6510 = vmatpush1.bf16.msra.mxu0 %v6505
  %6511 = vmatprep.subr.bf16.mxu0 0
  %6512 = vmatpush1.bf16.msra.mxu0 %v6506
  %6513 = vmatprep.subr.bf16.mxu0 0
  %6514 = vmatpush1.bf16.msra.mxu0 0
  %6515 = vmatprep.subr.bf16.mxu0 0
  %6516 = vmatpush1.bf16.msra.mxu0 0
  %6517 = vmatprep.subr.bf16.mxu0 0
  %6518 = vmatpush1.bf16.msra.mxu0 0
  %6519 = vmatprep.subr.bf16.mxu0 0
  %6520 = vmatpush1.bf16.msra.mxu0 0
  %6521 = vmatprep.subr.bf16.mxu0 0
  %6522 = vmatpush1.bf16.msra.mxu0 0
  %6523 = vmatprep.subr.bf16.mxu0 0
  %6524 = vmatpush1.bf16.msra.mxu0 0
  %6525 = vmatprep.subr.bf16.mxu0 0
  %6526 = vmatpush1.bf16.msra.mxu0 0
  %6527 = vmatprep.subr.bf16.mxu0 0
  %6528 = vmatpush1.bf16.msra.mxu0 0
  %6529 = vmatprep.subr.bf16.mxu0 0
  %6530 = vmatpush1.bf16.msra.mxu0 0
  %6531 = vmatprep.subr.bf16.mxu0 0
  %6532 = vmatpush1.bf16.msra.mxu0 0
  %6533 = vmatprep.subr.bf16.mxu0 0
  %6534 = vmatpush1.bf16.msra.mxu0 0
  %6535 = vmatprep.subr.bf16.mxu0 0
  %6536 = vmatpush1.bf16.msra.mxu0 0
  %6537 = vmatprep.subr.bf16.mxu0 0
  %6538 = vmatpush1.bf16.msra.mxu0 0
  %6539 = vmatprep.subr.bf16.mxu0 0
  %6540 = vmatpush1.bf16.msra.mxu0 0
  %6541 = vmatprep.mubr.bf16.mxu0 0
  %6542 = vmatmul.mubr.bf16.gmra.mrb[0].mxu0 %v6356
  %v6543 = vpop.f32.mrb[0].mxu0
  %v6544 = vadd.f32 %v6495, %v6543
  %v6545 = vpop.f32.mrb[0].mxu0
  %v6546 = vpop.f32.mrb[0].mxu0
  %v6547 = vadd.f32 %v6495, %v6546
  %v6548 = vpop.f32.mrb[0].mxu0
  %6549 = vmatprep.mubr.bf16.mxu0 0
  %6550 = vmatmul.mubr.bf16.gmra.mrb[0].mxu0 %v6359
  %v6551 = vpop.f32.mrb[0].mxu0
  %v6552 = vadd.f32 %v6495, %v6551
  %v6553 = vpop.f32.mrb[0].mxu0
  %v6554 = vpop.f32.mrb[0].mxu0
  %v6555 = vadd.f32 %v6495, %v6554
  %v6556 = vpop.f32.mrb[0].mxu0
  %6557 = vdwg.mxu0
  %v6558 = vmul.f32 %v6396, 0.35355338
  %v6559 = vmul.f32 %v6399, 0.35355338
  %v6560 = vmul.f32 %v6404, 0.35355338
  %v6561 = vmul.f32 %v6407, 0.35355338
  %v6562 = vpack.c.bf16 %v6559, %v6558
  %v6563 = vpack.c.bf16 %v6561, %v6560
  %v6564 = vpack.c.bf16 %v6473, %v6470
  %v6565 = vpack.c.bf16 %v6481, %v6478
  %v6566 = vmul.bf16 %v6564, %v472
  %v6567 = vmul.bf16 %v6565, %v473
  %v6568 = vmul.bf16 %v6564, %v474
  %v6569 = vmul.bf16 %v6565, %v475
  %v6570 = vmul.bf16 %v6564, %v476
  %v6571 = vmul.bf16 %v6565, %v477
  %v6572 = vmul.bf16 %v6564, %v478
  %v6573 = vmul.bf16 %v6565, %v479
  %v6574 = vpack.c.bf16 %v6547, %v6544
  %v6575 = vpack.c.bf16 %v6555, %v6552
  %v6576 = vmul.bf16 %v6574, %v472
  %v6577 = vmul.bf16 %v6575, %v473
  %v6578 = vmul.bf16 %v6574, %v474
  %v6579 = vmul.bf16 %v6575, %v475
  %v6580 = vmul.bf16 %v6574, %v476
  %v6581 = vmul.bf16 %v6575, %v477
  %v6582 = vmul.bf16 %v6574, %v478
  %v6583 = vmul.bf16 %v6575, %v479
  %v6585 = vsel %vm232, %v6562, 0
  %v6588 = vsel %vm232, %v6563, 0
  %v6591 = vsel %vm232, %v6566, 0
  %v6594 = vsel %vm232, %v6567, 0
  %v6597 = vsel %vm232, %v6568, 0
  %v6600 = vsel %vm232, %v6569, 0
  %v6603 = vsel %vm232, %v6570, 0
  %v6606 = vsel %vm232, %v6571, 0
  %v6609 = vsel %vm232, %v6572, 0
  %v6612 = vsel %vm232, %v6573, 0
  %6614 = vmatprep.subr.bf16.mxu0 0
  %6615 = vmatpush1.bf16.xpose.msra.mxu0 %v6591
  %6616 = vmatprep.subr.bf16.mxu0 0
  %6617 = vmatpush1.bf16.xpose.msra.mxu0 %v6594
  %6618 = vmatprep.subr.bf16.mxu0 0
  %6619 = vmatpush1.bf16.xpose.msra.mxu0 %v6597
  %6620 = vmatprep.subr.bf16.mxu0 0
  %6621 = vmatpush1.bf16.xpose.msra.mxu0 %v6600
  %6622 = vmatprep.subr.bf16.mxu0 0
  %6623 = vmatpush1.bf16.xpose.msra.mxu0 %v6603
  %6624 = vmatprep.subr.bf16.mxu0 0
  %6625 = vmatpush1.bf16.xpose.msra.mxu0 %v6606
  %6626 = vmatprep.subr.bf16.mxu0 0
  %6627 = vmatpush1.bf16.xpose.msra.mxu0 %v6609
  %6628 = vmatprep.subr.bf16.mxu0 0
  %6629 = vmatpush1.bf16.xpose.msra.mxu0 %v6612
  %6630 = vmatprep.subr.bf16.mxu0 0
  %6631 = vmatpush1.bf16.xpose.msra.mxu0 0
  %6632 = vmatprep.subr.bf16.mxu0 0
  %6633 = vmatpush1.bf16.xpose.msra.mxu0 0
  %6634 = vmatprep.subr.bf16.mxu0 0
  %6635 = vmatpush1.bf16.xpose.msra.mxu0 0
  %6636 = vmatprep.subr.bf16.mxu0 0
  %6637 = vmatpush1.bf16.xpose.msra.mxu0 0
  %6638 = vmatprep.subr.bf16.mxu0 0
  %6639 = vmatpush1.bf16.xpose.msra.mxu0 0
  %6640 = vmatprep.subr.bf16.mxu0 0
  %6641 = vmatpush1.bf16.xpose.msra.mxu0 0
  %6642 = vmatprep.subr.bf16.mxu0 0
  %6643 = vmatpush1.bf16.xpose.msra.mxu0 0
  %6644 = vmatprep.subr.bf16.mxu0 0
  %6645 = vmatpush1.bf16.xpose.msra.mxu0 0
  %6646 = vmatprep.mubr.bf16.mxu0 0
  %6647 = vmatmul.mubr.bf16.gmra.mrb[0].mxu0 %v6585
  %v6648 = vpop.f32.mrb[0].mxu0
  %v6649 = vadd.f32 %v85, %v6648
  %v6650 = vpop.f32.mrb[0].mxu0
  %v6651 = vpop.f32.mrb[0].mxu0
  %v6652 = vadd.f32 %v86, %v6651
  %v6653 = vpop.f32.mrb[0].mxu0
  %6654 = vmatprep.mubr.bf16.mxu0 0
  %6655 = vmatmul.mubr.bf16.gmra.mrb[0].mxu0 %v6588
  %v6656 = vpop.f32.mrb[0].mxu0
  %v6657 = vadd.f32 %v87, %v6656
  %v6658 = vpop.f32.mrb[0].mxu0
  %v6659 = vpop.f32.mrb[0].mxu0
  %v6660 = vadd.f32 %v88, %v6659
  %v6661 = vpop.f32.mrb[0].mxu0
  %6662 = vmatprep.mubr.bf16.mxu0 0
  %6663 = vmatmul.mubr.bf16.gmra.mrb[0].mxu0 %v6585
  %v6664 = vpop.f32.mrb[0].mxu0
  %v6665 = vadd.f32 %v89, %v6664
  %v6666 = vpop.f32.mrb[0].mxu0
  %v6667 = vpop.f32.mrb[0].mxu0
  %v6668 = vadd.f32 %v90, %v6667
  %v6669 = vpop.f32.mrb[0].mxu0
  %6670 = vmatprep.mubr.bf16.mxu0 0
  %6671 = vmatmul.mubr.bf16.gmra.mrb[0].mxu0 %v6588
  %v6672 = vpop.f32.mrb[0].mxu0
  %v6673 = vadd.f32 %v91, %v6672
  %v6674 = vpop.f32.mrb[0].mxu0
  %v6675 = vpop.f32.mrb[0].mxu0
  %v6676 = vadd.f32 %v92, %v6675
  %v6677 = vpop.f32.mrb[0].mxu0
  %6678 = vmatprep.mubr.bf16.mxu0 0
  %6679 = vmatmul.mubr.bf16.gmra.mrb[0].mxu0 %v6585
  %v6680 = vpop.f32.mrb[0].mxu0
  %v6681 = vadd.f32 %v93, %v6680
  %v6682 = vpop.f32.mrb[0].mxu0
  %v6683 = vpop.f32.mrb[0].mxu0
  %v6684 = vadd.f32 %v94, %v6683
  %v6685 = vpop.f32.mrb[0].mxu0
  %6686 = vmatprep.mubr.bf16.mxu0 0
  %6687 = vmatmul.mubr.bf16.gmra.mrb[0].mxu0 %v6588
  %v6688 = vpop.f32.mrb[0].mxu0
  %v6689 = vadd.f32 %v95, %v6688
  %v6690 = vpop.f32.mrb[0].mxu0
  %v6691 = vpop.f32.mrb[0].mxu0
  %v6692 = vadd.f32 %v96, %v6691
  %v6693 = vpop.f32.mrb[0].mxu0
  %6694 = vmatprep.mubr.bf16.mxu0 0
  %6695 = vmatmul.mubr.bf16.gmra.mrb[0].mxu0 %v6585
  %v6696 = vpop.f32.mrb[0].mxu0
  %v6697 = vadd.f32 %v97, %v6696
  %v6698 = vpop.f32.mrb[0].mxu0
  %v6699 = vpop.f32.mrb[0].mxu0
  %v6700 = vadd.f32 %v98, %v6699
  %v6701 = vpop.f32.mrb[0].mxu0
  %6702 = vmatprep.mubr.bf16.mxu0 0
  %6703 = vmatmul.mubr.bf16.gmra.mrb[0].mxu0 %v6588
  %v6704 = vpop.f32.mrb[0].mxu0
  %v6705 = vadd.f32 %v99, %v6704
  %v6706 = vpop.f32.mrb[0].mxu0
  %v6707 = vpop.f32.mrb[0].mxu0
  %v6708 = vadd.f32 %v100, %v6707
  %v6709 = vpop.f32.mrb[0].mxu0
  %6710 = vdwg.mxu0
  %6711 = vmax.xlane.f32.xlu0 %v6649
  %v6712 = vpop.xlane.xlu0 %6711
  %6713 = vmax.xlane.f32.xlu0 %v6652
  %v6714 = vpop.xlane.xlu0 %6713
  %6715 = vmax.xlane.f32.xlu0 %v6657
  %v6716 = vpop.xlane.xlu0 %6715
  %6717 = vmax.xlane.f32.xlu0 %v6660
  %v6718 = vpop.xlane.xlu0 %6717
  %6719 = vmax.xlane.f32.xlu0 %v6665
  %v6720 = vpop.xlane.xlu0 %6719
  %6721 = vmax.xlane.f32.xlu0 %v6668
  %v6722 = vpop.xlane.xlu0 %6721
  %6723 = vmax.xlane.f32.xlu0 %v6673
  %v6724 = vpop.xlane.xlu0 %6723
  %6725 = vmax.xlane.f32.xlu0 %v6676
  %v6726 = vpop.xlane.xlu0 %6725
  %6727 = vmax.xlane.f32.xlu0 %v6681
  %v6728 = vpop.xlane.xlu0 %6727
  %6729 = vmax.xlane.f32.xlu0 %v6684
  %v6730 = vpop.xlane.xlu0 %6729
  %6731 = vmax.xlane.f32.xlu0 %v6689
  %v6732 = vpop.xlane.xlu0 %6731
  %6733 = vmax.xlane.f32.xlu0 %v6692
  %v6734 = vpop.xlane.xlu0 %6733
  %6735 = vmax.xlane.f32.xlu0 %v6697
  %v6736 = vpop.xlane.xlu0 %6735
  %6737 = vmax.xlane.f32.xlu0 %v6700
  %v6738 = vpop.xlane.xlu0 %6737
  %6739 = vmax.xlane.f32.xlu0 %v6705
  %v6740 = vpop.xlane.xlu0 %6739
  %6741 = vmax.xlane.f32.xlu0 %v6708
  %v6742 = vpop.xlane.xlu0 %6741
  %v6743 = vsub.f32 %v6649, %v6712
  %v6744 = vsub.f32 %v6652, %v6714
  %v6745 = vsub.f32 %v6657, %v6716
  %v6746 = vsub.f32 %v6660, %v6718
  %v6747 = vsub.f32 %v6665, %v6720
  %v6748 = vsub.f32 %v6668, %v6722
  %v6749 = vsub.f32 %v6673, %v6724
  %v6750 = vsub.f32 %v6676, %v6726
  %v6751 = vsub.f32 %v6681, %v6728
  %v6752 = vsub.f32 %v6684, %v6730
  %v6753 = vsub.f32 %v6689, %v6732
  %v6754 = vsub.f32 %v6692, %v6734
  %v6755 = vsub.f32 %v6697, %v6736
  %v6756 = vsub.f32 %v6700, %v6738
  %v6757 = vsub.f32 %v6705, %v6740
  %v6758 = vsub.f32 %v6708, %v6742
  %v6759 = vmul.f32 %v6743, 1.442695
  %v6760 = vpow.pop %v6759
  %v6761 = vmul.f32 %v6744, 1.442695
  %v6762 = vpow.pop %v6761
  %v6763 = vmul.f32 %v6745, 1.442695
  %v6764 = vpow.pop %v6763
  %v6765 = vmul.f32 %v6746, 1.442695
  %v6766 = vpow.pop %v6765
  %v6767 = vmul.f32 %v6747, 1.442695
  %v6768 = vpow.pop %v6767
  %v6769 = vmul.f32 %v6748, 1.442695
  %v6770 = vpow.pop %v6769
  %v6771 = vmul.f32 %v6749, 1.442695
  %v6772 = vpow.pop %v6771
  %v6773 = vmul.f32 %v6750, 1.442695
  %v6774 = vpow.pop %v6773
  %v6775 = vmul.f32 %v6751, 1.442695
  %v6776 = vpow.pop %v6775
  %v6777 = vmul.f32 %v6752, 1.442695
  %v6778 = vpow.pop %v6777
  %v6779 = vmul.f32 %v6753, 1.442695
  %v6780 = vpow.pop %v6779
  %v6781 = vmul.f32 %v6754, 1.442695
  %v6782 = vpow.pop %v6781
  %v6783 = vmul.f32 %v6755, 1.442695
  %v6784 = vpow.pop %v6783
  %v6785 = vmul.f32 %v6756, 1.442695
  %v6786 = vpow.pop %v6785
  %v6787 = vmul.f32 %v6757, 1.442695
  %v6788 = vpow.pop %v6787
  %v6789 = vmul.f32 %v6758, 1.442695
  %v6790 = vpow.pop %v6789
  %6791 = vadd.xlane.f32.xlu0 %v6760
  %v6792 = vpop.xlane.xlu0 %6791
  %6793 = vadd.xlane.f32.xlu0 %v6762
  %v6794 = vpop.xlane.xlu0 %6793
  %6795 = vadd.xlane.f32.xlu0 %v6764
  %v6796 = vpop.xlane.xlu0 %6795
  %6797 = vadd.xlane.f32.xlu0 %v6766
  %v6798 = vpop.xlane.xlu0 %6797
  %6799 = vadd.xlane.f32.xlu0 %v6768
  %v6800 = vpop.xlane.xlu0 %6799
  %6801 = vadd.xlane.f32.xlu0 %v6770
  %v6802 = vpop.xlane.xlu0 %6801
  %6803 = vadd.xlane.f32.xlu0 %v6772
  %v6804 = vpop.xlane.xlu0 %6803
  %6805 = vadd.xlane.f32.xlu0 %v6774
  %v6806 = vpop.xlane.xlu0 %6805
  %6807 = vadd.xlane.f32.xlu0 %v6776
  %v6808 = vpop.xlane.xlu0 %6807
  %6809 = vadd.xlane.f32.xlu0 %v6778
  %v6810 = vpop.xlane.xlu0 %6809
  %6811 = vadd.xlane.f32.xlu0 %v6780
  %v6812 = vpop.xlane.xlu0 %6811
  %6813 = vadd.xlane.f32.xlu0 %v6782
  %v6814 = vpop.xlane.xlu0 %6813
  %6815 = vadd.xlane.f32.xlu0 %v6784
  %v6816 = vpop.xlane.xlu0 %6815
  %6817 = vadd.xlane.f32.xlu0 %v6786
  %v6818 = vpop.xlane.xlu0 %6817
  %6819 = vadd.xlane.f32.xlu0 %v6788
  %v6820 = vpop.xlane.xlu0 %6819
  %6821 = vadd.xlane.f32.xlu0 %v6790
  %v6822 = vpop.xlane.xlu0 %6821
  %v6823 = vrcp.pop %v6792
  %v6824 = vrcp.pop %v6794
  %v6825 = vrcp.pop %v6796
  %v6826 = vrcp.pop %v6798
  %v6827 = vrcp.pop %v6800
  %v6828 = vrcp.pop %v6802
  %v6829 = vrcp.pop %v6804
  %v6830 = vrcp.pop %v6806
  %v6831 = vrcp.pop %v6808
  %v6832 = vrcp.pop %v6810
  %v6833 = vrcp.pop %v6812
  %v6834 = vrcp.pop %v6814
  %v6835 = vrcp.pop %v6816
  %v6836 = vrcp.pop %v6818
  %v6837 = vrcp.pop %v6820
  %v6838 = vrcp.pop %v6822
  %v6839 = vmul.f32 %v6760, %v6823
  %v6840 = vmul.f32 %v6762, %v6824
  %v6841 = vmul.f32 %v6764, %v6825
  %v6842 = vmul.f32 %v6766, %v6826
  %v6843 = vmul.f32 %v6768, %v6827
  %v6844 = vmul.f32 %v6770, %v6828
  %v6845 = vmul.f32 %v6772, %v6829
  %v6846 = vmul.f32 %v6774, %v6830
  %v6847 = vmul.f32 %v6776, %v6831
  %v6848 = vmul.f32 %v6778, %v6832
  %v6849 = vmul.f32 %v6780, %v6833
  %v6850 = vmul.f32 %v6782, %v6834
  %v6851 = vmul.f32 %v6784, %v6835
  %v6852 = vmul.f32 %v6786, %v6836
  %v6853 = vmul.f32 %v6788, %v6837
  %v6854 = vmul.f32 %v6790, %v6838
  %v6855 = vpack.c.bf16 %v6840, %v6839
  %v6856 = vpack.c.bf16 %v6842, %v6841
  %v6857 = vpack.c.bf16 %v6844, %v6843
  %v6858 = vpack.c.bf16 %v6846, %v6845
  %v6859 = vpack.c.bf16 %v6848, %v6847
  %v6860 = vpack.c.bf16 %v6850, %v6849
  %v6861 = vpack.c.bf16 %v6852, %v6851
  %v6862 = vpack.c.bf16 %v6854, %v6853
  %6863 = vmatprep.subr.bf16.mxu0 0
  %6864 = vmatpush1.bf16.msra.mxu0 %v6576
  %6865 = vmatprep.subr.bf16.mxu0 0
  %6866 = vmatpush1.bf16.msra.mxu0 %v6577
  %6867 = vmatprep.subr.bf16.mxu0 0
  %6868 = vmatpush1.bf16.msra.mxu0 %v6578
  %6869 = vmatprep.subr.bf16.mxu0 0
  %6870 = vmatpush1.bf16.msra.mxu0 %v6579
  %6871 = vmatprep.subr.bf16.mxu0 0
  %6872 = vmatpush1.bf16.msra.mxu0 %v6580
  %6873 = vmatprep.subr.bf16.mxu0 0
  %6874 = vmatpush1.bf16.msra.mxu0 %v6581
  %6875 = vmatprep.subr.bf16.mxu0 0
  %6876 = vmatpush1.bf16.msra.mxu0 %v6582
  %6877 = vmatprep.subr.bf16.mxu0 0
  %6878 = vmatpush1.bf16.msra.mxu0 %v6583
  %6879 = vmatprep.subr.bf16.mxu0 0
  %6880 = vmatpush1.bf16.msra.mxu0 0
  %6881 = vmatprep.subr.bf16.mxu0 0
  %6882 = vmatpush1.bf16.msra.mxu0 0
  %6883 = vmatprep.subr.bf16.mxu0 0
  %6884 = vmatpush1.bf16.msra.mxu0 0
  %6885 = vmatprep.subr.bf16.mxu0 0
  %6886 = vmatpush1.bf16.msra.mxu0 0
  %6887 = vmatprep.subr.bf16.mxu0 0
  %6888 = vmatpush1.bf16.msra.mxu0 0
  %6889 = vmatprep.subr.bf16.mxu0 0
  %6890 = vmatpush1.bf16.msra.mxu0 0
  %6891 = vmatprep.subr.bf16.mxu0 0
  %6892 = vmatpush1.bf16.msra.mxu0 0
  %6893 = vmatprep.subr.bf16.mxu0 0
  %6894 = vmatpush1.bf16.msra.mxu0 0
  %6895 = vmatprep.mubr.bf16.mxu0 0
  %6896 = vmatmul.mubr.bf16.gmra.mrb[0].mxu0 %v6855
  %v6897 = vpop.f32.mrb[0].mxu0
  %v6898 = vadd.f32 0.0, %v6897
  %v6899 = vpop.f32.mrb[0].mxu0
  %v6900 = vpop.f32.mrb[0].mxu0
  %v6901 = vadd.f32 0.0, %v6900
  %v6902 = vpop.f32.mrb[0].mxu0
  %6903 = vmatprep.mubr.bf16.mxu0 0
  %6904 = vmatmul.mubr.bf16.gmra.mrb[0].mxu0 %v6856
  %v6905 = vpop.f32.mrb[0].mxu0
  %v6906 = vadd.f32 0.0, %v6905
  %v6907 = vpop.f32.mrb[0].mxu0
  %v6908 = vpop.f32.mrb[0].mxu0
  %v6909 = vadd.f32 0.0, %v6908
  %v6910 = vpop.f32.mrb[0].mxu0
  %6911 = vmatprep.mubr.bf16.mxu0 0
  %6912 = vmatmul.mubr.bf16.gmra.mrb[0].mxu0 %v6857
  %v6913 = vpop.f32.mrb[0].mxu0
  %v6914 = vadd.f32 0.0, %v6913
  %v6915 = vpop.f32.mrb[0].mxu0
  %v6916 = vpop.f32.mrb[0].mxu0
  %v6917 = vadd.f32 0.0, %v6916
  %v6918 = vpop.f32.mrb[0].mxu0
  %6919 = vmatprep.mubr.bf16.mxu0 0
  %6920 = vmatmul.mubr.bf16.gmra.mrb[0].mxu0 %v6858
  %v6921 = vpop.f32.mrb[0].mxu0
  %v6922 = vadd.f32 0.0, %v6921
  %v6923 = vpop.f32.mrb[0].mxu0
  %v6924 = vpop.f32.mrb[0].mxu0
  %v6925 = vadd.f32 0.0, %v6924
  %v6926 = vpop.f32.mrb[0].mxu0
  %6927 = vmatprep.mubr.bf16.mxu0 0
  %6928 = vmatmul.mubr.bf16.gmra.mrb[0].mxu0 %v6859
  %v6929 = vpop.f32.mrb[0].mxu0
  %v6930 = vadd.f32 0.0, %v6929
  %v6931 = vpop.f32.mrb[0].mxu0
  %v6932 = vpop.f32.mrb[0].mxu0
  %v6933 = vadd.f32 0.0, %v6932
  %v6934 = vpop.f32.mrb[0].mxu0
  %6935 = vmatprep.mubr.bf16.mxu0 0
  %6936 = vmatmul.mubr.bf16.gmra.mrb[0].mxu0 %v6860
  %v6937 = vpop.f32.mrb[0].mxu0
  %v6938 = vadd.f32 0.0, %v6937
  %v6939 = vpop.f32.mrb[0].mxu0
  %v6940 = vpop.f32.mrb[0].mxu0
  %v6941 = vadd.f32 0.0, %v6940
  %v6942 = vpop.f32.mrb[0].mxu0
  %6943 = vmatprep.mubr.bf16.mxu0 0
  %6944 = vmatmul.mubr.bf16.gmra.mrb[0].mxu0 %v6861
  %v6945 = vpop.f32.mrb[0].mxu0
  %v6946 = vadd.f32 0.0, %v6945
  %v6947 = vpop.f32.mrb[0].mxu0
  %v6948 = vpop.f32.mrb[0].mxu0
  %v6949 = vadd.f32 0.0, %v6948
  %v6950 = vpop.f32.mrb[0].mxu0
  %6951 = vmatprep.mubr.bf16.mxu0 0
  %6952 = vmatmul.mubr.bf16.gmra.mrb[0].mxu0 %v6862
  %v6953 = vpop.f32.mrb[0].mxu0
  %v6954 = vadd.f32 0.0, %v6953
  %v6955 = vpop.f32.mrb[0].mxu0
  %v6956 = vpop.f32.mrb[0].mxu0
  %v6957 = vadd.f32 0.0, %v6956
  %v6958 = vpop.f32.mrb[0].mxu0
  %6959 = vdwg.mxu0
  %v6960 = vadd.f32 %v6898, %v6914
  %v6961 = vadd.f32 %v6901, %v6917
  %v6962 = vadd.f32 %v6906, %v6922
  %v6963 = vadd.f32 %v6909, %v6925
  %v6964 = vadd.f32 %v6960, %v6930
  %v6965 = vadd.f32 %v6961, %v6933
  %v6966 = vadd.f32 %v6962, %v6938
  %v6967 = vadd.f32 %v6963, %v6941
  %v6968 = vadd.f32 %v6964, %v6946
  %v6969 = vadd.f32 %v6965, %v6949
  %v6970 = vadd.f32 %v6966, %v6954
  %v6971 = vadd.f32 %v6967, %v6957
  %v6972 = vpack.c.bf16 %v6969, %v6968
  %v6973 = vpack.c.bf16 %v6971, %v6970
  %s6974 = scalar_lea.vmem %s11, 48
  %v6975 = vld [vmem:[%s6974] sm:$0xf]
  %v6976 = vld [vmem:[%s6974 + $0x4] sm:$0xf]
  %v6977 = vld [vmem:[%s6974 + $0x8] sm:$0xf]
  %v6978 = vld [vmem:[%s6974 + $0xc] sm:$0xf]
  %s6979 = scalar_lea.vmem %s12, 3
  %v6980 = vld [vmem:[%s6979] sm:$0x1]
  %v6982 = vlaneseq
  %v6983 = vshrl.u32 %v6982, 7
  %v6984 = vsub.s32 0, %v6983
  %v6985 = vrot.slane %v6980, %v6984
  %v6991 = vunpack.c.l.b16 %v6975
  %v6992 = vunpack.c.l.b16 %v6976
  %v6993 = vunpack.c.l.b16 %v6977
  %v6994 = vunpack.c.l.b16 %v6978
  %v6995 = vpack.c.b16 %v6992, %v6991
  %v6996 = vpack.c.b16 %v6994, %v6993
  %v7000 = vsel %vm232, %v6972, 0
  %v7003 = vsel %vm232, %v6973, 0
  %7005 = vmatprep.subr.bf16.mxu0 0
  %7006 = vmatpush1.bf16.msra.mxu0 %v6995
  %7007 = vmatprep.subr.bf16.mxu0 0
  %7008 = vmatpush1.bf16.msra.mxu0 %v6996
  %7009 = vmatprep.subr.bf16.mxu0 0
  %7010 = vmatpush1.bf16.msra.mxu0 0
  %7011 = vmatprep.subr.bf16.mxu0 0
  %7012 = vmatpush1.bf16.msra.mxu0 0
  %7013 = vmatprep.subr.bf16.mxu0 0
  %7014 = vmatpush1.bf16.msra.mxu0 0
  %7015 = vmatprep.subr.bf16.mxu0 0
  %7016 = vmatpush1.bf16.msra.mxu0 0
  %7017 = vmatprep.subr.bf16.mxu0 0
  %7018 = vmatpush1.bf16.msra.mxu0 0
  %7019 = vmatprep.subr.bf16.mxu0 0
  %7020 = vmatpush1.bf16.msra.mxu0 0
  %7021 = vmatprep.subr.bf16.mxu0 0
  %7022 = vmatpush1.bf16.msra.mxu0 0
  %7023 = vmatprep.subr.bf16.mxu0 0
  %7024 = vmatpush1.bf16.msra.mxu0 0
  %7025 = vmatprep.subr.bf16.mxu0 0
  %7026 = vmatpush1.bf16.msra.mxu0 0
  %7027 = vmatprep.subr.bf16.mxu0 0
  %7028 = vmatpush1.bf16.msra.mxu0 0
  %7029 = vmatprep.subr.bf16.mxu0 0
  %7030 = vmatpush1.bf16.msra.mxu0 0
  %7031 = vmatprep.subr.bf16.mxu0 0
  %7032 = vmatpush1.bf16.msra.mxu0 0
  %7033 = vmatprep.subr.bf16.mxu0 0
  %7034 = vmatpush1.bf16.msra.mxu0 0
  %7035 = vmatprep.subr.bf16.mxu0 0
  %7036 = vmatpush1.bf16.msra.mxu0 0
  %7037 = vmatprep.mubr.bf16.mxu0 0
  %7038 = vmatmul.mubr.bf16.gmra.mrb[0].mxu0 %v7000
  %v7039 = vpop.f32.mrb[0].mxu0
  %v7040 = vadd.f32 %v6985, %v7039
  %v7041 = vpop.f32.mrb[0].mxu0
  %v7042 = vpop.f32.mrb[0].mxu0
  %v7043 = vadd.f32 %v6985, %v7042
  %v7044 = vpop.f32.mrb[0].mxu0
  %7045 = vmatprep.mubr.bf16.mxu0 0
  %7046 = vmatmul.mubr.bf16.gmra.mrb[0].mxu0 %v7003
  %v7047 = vpop.f32.mrb[0].mxu0
  %v7048 = vadd.f32 %v6985, %v7047
  %v7049 = vpop.f32.mrb[0].mxu0
  %v7050 = vpop.f32.mrb[0].mxu0
  %v7051 = vadd.f32 %v6985, %v7050
  %v7052 = vpop.f32.mrb[0].mxu0
  %7053 = vdwg.mxu0
  %v7054 = vadd.f32 %v6324, %v7040
  %v7055 = vadd.f32 %v6325, %v7043
  %v7056 = vadd.f32 %v6326, %v7048
  %v7057 = vadd.f32 %v6327, %v7051
  %v7058 = vsel %vm232, %v7054, 0.0
  %7059 = vadd.xlane.f32.xlu0 %v7058
  %v7060 = vpop.xlane.xlu0 %7059
  %v7061 = vsel %vm232, %v7055, 0.0
  %7062 = vadd.xlane.f32.xlu0 %v7061
  %v7063 = vpop.xlane.xlu0 %7062
  %v7064 = vsel %vm232, %v7056, 0.0
  %7065 = vadd.xlane.f32.xlu0 %v7064
  %v7066 = vpop.xlane.xlu0 %7065
  %v7067 = vsel %vm232, %v7057, 0.0
  %7068 = vadd.xlane.f32.xlu0 %v7067
  %v7069 = vpop.xlane.xlu0 %7068
  %v7070 = vmul.f32 %v7060, %v990
  %v7071 = vmul.f32 %v7063, %v990
  %v7072 = vmul.f32 %v7066, %v990
  %v7073 = vmul.f32 %v7069, %v990
  %v7074 = vsub.f32 %v7054, %v7070
  %v7075 = vsub.f32 %v7055, %v7071
  %v7076 = vsub.f32 %v7056, %v7072
  %v7077 = vsub.f32 %v7057, %v7073
  %v7078 = vmul.f32 %v7074, %v7074
  %v7079 = vmul.f32 %v7075, %v7075
  %v7080 = vmul.f32 %v7076, %v7076
  %v7081 = vmul.f32 %v7077, %v7077
  %v7082 = vsel %vm232, %v7078, 0.0
  %7083 = vadd.xlane.f32.xlu0 %v7082
  %v7084 = vpop.xlane.xlu0 %7083
  %v7085 = vsel %vm232, %v7079, 0.0
  %7086 = vadd.xlane.f32.xlu0 %v7085
  %v7087 = vpop.xlane.xlu0 %7086
  %v7088 = vsel %vm232, %v7080, 0.0
  %7089 = vadd.xlane.f32.xlu0 %v7088
  %v7090 = vpop.xlane.xlu0 %7089
  %v7091 = vsel %vm232, %v7081, 0.0
  %7092 = vadd.xlane.f32.xlu0 %v7091
  %v7093 = vpop.xlane.xlu0 %7092
  %v7094 = vmul.f32 %v7084, %v990
  %v7095 = vmul.f32 %v7087, %v990
  %v7096 = vmul.f32 %v7090, %v990
  %v7097 = vmul.f32 %v7093, %v990
  %v7098 = vadd.f32 %v7094, 1e-05
  %v7099 = vadd.f32 %v7095, 1e-05
  %v7100 = vadd.f32 %v7096, 1e-05
  %v7101 = vadd.f32 %v7097, 1e-05
  %v7102 = vrsqrt.pop %v7098
  %v7103 = vrsqrt.pop %v7099
  %v7104 = vrsqrt.pop %v7100
  %v7105 = vrsqrt.pop %v7101
  %v7106 = vmul.f32 %v7074, %v7102
  %v7107 = vmul.f32 %v7075, %v7103
  %v7108 = vmul.f32 %v7076, %v7104
  %v7109 = vmul.f32 %v7077, %v7105
  %s7110 = scalar_lea.vmem %s13, 3
  %v7111 = vld [vmem:[%s7110] sm:$0x1]
  %v7113 = vlaneseq
  %v7114 = vshrl.u32 %v7113, 7
  %v7115 = vsub.s32 0, %v7114
  %v7116 = vrot.slane %v7111, %v7115
  %v7118 = vmul.f32 %v7106, %v7116
  %v7119 = vmul.f32 %v7107, %v7116
  %v7120 = vmul.f32 %v7108, %v7116
  %v7121 = vmul.f32 %v7109, %v7116
  %s7122 = scalar_lea.vmem %s14, 3
  %v7123 = vld [vmem:[%s7122] sm:$0x1]
  %v7125 = vlaneseq
  %v7126 = vshrl.u32 %v7125, 7
  %v7127 = vsub.s32 0, %v7126
  %v7128 = vrot.slane %v7123, %v7127
  %v7130 = vadd.f32 %v7118, %v7128
  %v7131 = vadd.f32 %v7119, %v7128
  %v7132 = vadd.f32 %v7120, %v7128
  %v7133 = vadd.f32 %v7121, %v7128
  %v7134 = vpack.c.bf16 %v7131, %v7130
  %v7135 = vpack.c.bf16 %v7133, %v7132
  %s7136 = scalar_lea.vmem %s15, 384
  %v7137 = vld [vmem:[%s7136] sm:$0xff]
  %v7138 = vld [vmem:[%s7136 + $0x20] sm:$0xff]
  %v7139 = vld [vmem:[%s7136 + $0x40] sm:$0xff]
  %v7140 = vld [vmem:[%s7136 + $0x60] sm:$0xff]
  %s7141 = scalar_lea.vmem %s16, 24
  %v7142 = vld [vmem:[%s7141] sm:$0x3]
  %v7144 = vlaneseq
  %v7145 = vshrl.u32 %v7144, 7
  %v7146 = vsub.s32 0, %v7145
  %v7147 = vrot.slane %v7142, %v7146
  %v7148 = vlaneseq
  %v7149 = vshrl.u32 %v7148, 7
  %v7150 = vsub.s32 1, %v7149
  %v7151 = vrot.slane %v7142, %v7150
  %v7158 = vunpack.c.l.b16 %v7137
  %v7159 = vunpack.c.h.b16 %v7137
  %v7160 = vunpack.c.l.b16 %v7138
  %v7161 = vunpack.c.h.b16 %v7138
  %v7162 = vunpack.c.l.b16 %v7139
  %v7163 = vunpack.c.h.b16 %v7139
  %v7164 = vunpack.c.l.b16 %v7140
  %v7165 = vunpack.c.h.b16 %v7140
  %v7166 = vpack.c.b16 %v7160, %v7158
  %v7167 = vpack.c.b16 %v7161, %v7159
  %v7168 = vpack.c.b16 %v7164, %v7162
  %v7169 = vpack.c.b16 %v7165, %v7163
  %v7175 = vsel %vm232, %v7134, 0
  %v7178 = vsel %vm232, %v7135, 0
  %7180 = vmatprep.subr.bf16.mxu0 %v7167
  %7181 = vmatpush1.bf16.msra.mxu0 %v7166
  %7182 = vmatprep.subr.bf16.mxu0 %v7169
  %7183 = vmatpush1.bf16.msra.mxu0 %v7168
  %7184 = vmatprep.subr.bf16.mxu0 0
  %7185 = vmatpush1.bf16.msra.mxu0 0
  %7186 = vmatprep.subr.bf16.mxu0 0
  %7187 = vmatpush1.bf16.msra.mxu0 0
  %7188 = vmatprep.subr.bf16.mxu0 0
  %7189 = vmatpush1.bf16.msra.mxu0 0
  %7190 = vmatprep.subr.bf16.mxu0 0
  %7191 = vmatpush1.bf16.msra.mxu0 0
  %7192 = vmatprep.subr.bf16.mxu0 0
  %7193 = vmatpush1.bf16.msra.mxu0 0
  %7194 = vmatprep.subr.bf16.mxu0 0
  %7195 = vmatpush1.bf16.msra.mxu0 0
  %7196 = vmatprep.subr.bf16.mxu0 0
  %7197 = vmatpush1.bf16.msra.mxu0 0
  %7198 = vmatprep.subr.bf16.mxu0 0
  %7199 = vmatpush1.bf16.msra.mxu0 0
  %7200 = vmatprep.subr.bf16.mxu0 0
  %7201 = vmatpush1.bf16.msra.mxu0 0
  %7202 = vmatprep.subr.bf16.mxu0 0
  %7203 = vmatpush1.bf16.msra.mxu0 0
  %7204 = vmatprep.subr.bf16.mxu0 0
  %7205 = vmatpush1.bf16.msra.mxu0 0
  %7206 = vmatprep.subr.bf16.mxu0 0
  %7207 = vmatpush1.bf16.msra.mxu0 0
  %7208 = vmatprep.subr.bf16.mxu0 0
  %7209 = vmatpush1.bf16.msra.mxu0 0
  %7210 = vmatprep.subr.bf16.mxu0 0
  %7211 = vmatpush1.bf16.msra.mxu0 0
  %7212 = vmatprep.mubr.bf16.mxu0 0
  %7213 = vmatmul.mubr.bf16.gmra.mrb[0].mxu0 %v7175
  %v7214 = vpop.f32.mrb[0].mxu0
  %v7215 = vadd.f32 %v7147, %v7214
  %v7216 = vpop.f32.mrb[0].mxu0
  %v7217 = vadd.f32 %v7151, %v7216
  %v7218 = vpop.f32.mrb[0].mxu0
  %v7219 = vadd.f32 %v7147, %v7218
  %v7220 = vpop.f32.mrb[0].mxu0
  %v7221 = vadd.f32 %v7151, %v7220
  %7222 = vmatprep.mubr.bf16.mxu0 0
  %7223 = vmatmul.mubr.bf16.gmra.mrb[0].mxu0 %v7178
  %v7224 = vpop.f32.mrb[0].mxu0
  %v7225 = vadd.f32 %v7147, %v7224
  %v7226 = vpop.f32.mrb[0].mxu0
  %v7227 = vadd.f32 %v7151, %v7226
  %v7228 = vpop.f32.mrb[0].mxu0
  %v7229 = vadd.f32 %v7147, %v7228
  %v7230 = vpop.f32.mrb[0].mxu0
  %v7231 = vadd.f32 %v7151, %v7230
  %7232 = vdwg.mxu0
  %v7233 = vmax.f32 %v7215, 0.0
  %v7234 = vmax.f32 %v7217, 0.0
  %v7235 = vmax.f32 %v7219, 0.0
  %v7236 = vmax.f32 %v7221, 0.0
  %v7237 = vmax.f32 %v7225, 0.0
  %v7238 = vmax.f32 %v7227, 0.0
  %v7239 = vmax.f32 %v7229, 0.0
  %v7240 = vmax.f32 %v7231, 0.0
  %v7241 = vpack.c.bf16 %v7235, %v7233
  %v7242 = vpack.c.bf16 %v7236, %v7234
  %v7243 = vpack.c.bf16 %v7239, %v7237
  %v7244 = vpack.c.bf16 %v7240, %v7238
  %s7245 = scalar_lea.vmem %s17, 1536
  %v7246 = vld [vmem:[%s7245] sm:$0xf]
  %v7247 = vld [vmem:[%s7245 + $0x4] sm:$0xf]
  %v7248 = vld [vmem:[%s7245 + $0x8] sm:$0xf]
  %v7249 = vld [vmem:[%s7245 + $0xc] sm:$0xf]
  %v7250 = vld [vmem:[%s7245 + $0x10] sm:$0xf]
  %v7251 = vld [vmem:[%s7245 + $0x14] sm:$0xf]
  %v7252 = vld [vmem:[%s7245 + $0x18] sm:$0xf]
  %v7253 = vld [vmem:[%s7245 + $0x1c] sm:$0xf]
  %v7254 = vld [vmem:[%s7245 + $0x20] sm:$0xf]
  %v7255 = vld [vmem:[%s7245 + $0x24] sm:$0xf]
  %v7256 = vld [vmem:[%s7245 + $0x28] sm:$0xf]
  %v7257 = vld [vmem:[%s7245 + $0x2c] sm:$0xf]
  %v7258 = vld [vmem:[%s7245 + $0x30] sm:$0xf]
  %v7259 = vld [vmem:[%s7245 + $0x34] sm:$0xf]
  %v7260 = vld [vmem:[%s7245 + $0x38] sm:$0xf]
  %v7261 = vld [vmem:[%s7245 + $0x3c] sm:$0xf]
  %v7262 = vld [vmem:[%s7245 + $0x40] sm:$0xf]
  %v7263 = vld [vmem:[%s7245 + $0x44] sm:$0xf]
  %v7264 = vld [vmem:[%s7245 + $0x48] sm:$0xf]
  %v7265 = vld [vmem:[%s7245 + $0x4c] sm:$0xf]
  %v7266 = vld [vmem:[%s7245 + $0x50] sm:$0xf]
  %v7267 = vld [vmem:[%s7245 + $0x54] sm:$0xf]
  %v7268 = vld [vmem:[%s7245 + $0x58] sm:$0xf]
  %v7269 = vld [vmem:[%s7245 + $0x5c] sm:$0xf]
  %v7270 = vld [vmem:[%s7245 + $0x60] sm:$0xf]
  %v7271 = vld [vmem:[%s7245 + $0x64] sm:$0xf]
  %v7272 = vld [vmem:[%s7245 + $0x68] sm:$0xf]
  %v7273 = vld [vmem:[%s7245 + $0x6c] sm:$0xf]
  %v7274 = vld [vmem:[%s7245 + $0x70] sm:$0xf]
  %v7275 = vld [vmem:[%s7245 + $0x74] sm:$0xf]
  %v7276 = vld [vmem:[%s7245 + $0x78] sm:$0xf]
  %v7277 = vld [vmem:[%s7245 + $0x7c] sm:$0xf]
  %v7278 = vld [vmem:[%s7136 + $0x8] sm:$0xff]
  %v7279 = vld [vmem:[%s7136 + $0x28] sm:$0xff]
  %v7280 = vld [vmem:[%s7136 + $0x48] sm:$0xff]
  %v7281 = vld [vmem:[%s7136 + $0x68] sm:$0xff]
  %v7282 = vld [vmem:[%s7141 + $0x2] sm:$0x3]
  %v7284 = vlaneseq
  %v7285 = vshrl.u32 %v7284, 7
  %v7286 = vsub.s32 0, %v7285
  %v7287 = vrot.slane %v7282, %v7286
  %v7288 = vlaneseq
  %v7289 = vshrl.u32 %v7288, 7
  %v7290 = vsub.s32 1, %v7289
  %v7291 = vrot.slane %v7282, %v7290
  %v7298 = vunpack.c.l.b16 %v7278
  %v7299 = vunpack.c.h.b16 %v7278
  %v7300 = vunpack.c.l.b16 %v7279
  %v7301 = vunpack.c.h.b16 %v7279
  %v7302 = vunpack.c.l.b16 %v7280
  %v7303 = vunpack.c.h.b16 %v7280
  %v7304 = vunpack.c.l.b16 %v7281
  %v7305 = vunpack.c.h.b16 %v7281
  %v7306 = vpack.c.b16 %v7300, %v7298
  %v7307 = vpack.c.b16 %v7301, %v7299
  %v7308 = vpack.c.b16 %v7304, %v7302
  %v7309 = vpack.c.b16 %v7305, %v7303
  %7314 = vmatprep.subr.bf16.mxu0 %v7307
  %7315 = vmatpush1.bf16.msra.mxu0 %v7306
  %7316 = vmatprep.subr.bf16.mxu0 %v7309
  %7317 = vmatpush1.bf16.msra.mxu0 %v7308
  %7318 = vmatprep.subr.bf16.mxu0 0
  %7319 = vmatpush1.bf16.msra.mxu0 0
  %7320 = vmatprep.subr.bf16.mxu0 0
  %7321 = vmatpush1.bf16.msra.mxu0 0
  %7322 = vmatprep.subr.bf16.mxu0 0
  %7323 = vmatpush1.bf16.msra.mxu0 0
  %7324 = vmatprep.subr.bf16.mxu0 0
  %7325 = vmatpush1.bf16.msra.mxu0 0
  %7326 = vmatprep.subr.bf16.mxu0 0
  %7327 = vmatpush1.bf16.msra.mxu0 0
  %7328 = vmatprep.subr.bf16.mxu0 0
  %7329 = vmatpush1.bf16.msra.mxu0 0
  %7330 = vmatprep.subr.bf16.mxu0 0
  %7331 = vmatpush1.bf16.msra.mxu0 0
  %7332 = vmatprep.subr.bf16.mxu0 0
  %7333 = vmatpush1.bf16.msra.mxu0 0
  %7334 = vmatprep.subr.bf16.mxu0 0
  %7335 = vmatpush1.bf16.msra.mxu0 0
  %7336 = vmatprep.subr.bf16.mxu0 0
  %7337 = vmatpush1.bf16.msra.mxu0 0
  %7338 = vmatprep.subr.bf16.mxu0 0
  %7339 = vmatpush1.bf16.msra.mxu0 0
  %7340 = vmatprep.subr.bf16.mxu0 0
  %7341 = vmatpush1.bf16.msra.mxu0 0
  %7342 = vmatprep.subr.bf16.mxu0 0
  %7343 = vmatpush1.bf16.msra.mxu0 0
  %7344 = vmatprep.subr.bf16.mxu0 0
  %7345 = vmatpush1.bf16.msra.mxu0 0
  %7346 = vmatprep.mubr.bf16.mxu0 0
  %7347 = vmatmul.mubr.bf16.gmra.mrb[0].mxu0 %v7175
  %v7348 = vpop.f32.mrb[0].mxu0
  %v7349 = vadd.f32 %v7287, %v7348
  %v7350 = vpop.f32.mrb[0].mxu0
  %v7351 = vadd.f32 %v7291, %v7350
  %v7352 = vpop.f32.mrb[0].mxu0
  %v7353 = vadd.f32 %v7287, %v7352
  %v7354 = vpop.f32.mrb[0].mxu0
  %v7355 = vadd.f32 %v7291, %v7354
  %7356 = vmatprep.mubr.bf16.mxu0 0
  %7357 = vmatmul.mubr.bf16.gmra.mrb[0].mxu0 %v7178
  %v7358 = vpop.f32.mrb[0].mxu0
  %v7359 = vadd.f32 %v7287, %v7358
  %v7360 = vpop.f32.mrb[0].mxu0
  %v7361 = vadd.f32 %v7291, %v7360
  %v7362 = vpop.f32.mrb[0].mxu0
  %v7363 = vadd.f32 %v7287, %v7362
  %v7364 = vpop.f32.mrb[0].mxu0
  %v7365 = vadd.f32 %v7291, %v7364
  %7366 = vdwg.mxu0
  %v7367 = vmax.f32 %v7349, 0.0
  %v7368 = vmax.f32 %v7351, 0.0
  %v7369 = vmax.f32 %v7353, 0.0
  %v7370 = vmax.f32 %v7355, 0.0
  %v7371 = vmax.f32 %v7359, 0.0
  %v7372 = vmax.f32 %v7361, 0.0
  %v7373 = vmax.f32 %v7363, 0.0
  %v7374 = vmax.f32 %v7365, 0.0
  %v7375 = vpack.c.bf16 %v7369, %v7367
  %v7376 = vpack.c.bf16 %v7370, %v7368
  %v7377 = vpack.c.bf16 %v7373, %v7371
  %v7378 = vpack.c.bf16 %v7374, %v7372
  %v7379 = vld [vmem:[%s7245 + $0x80] sm:$0xf]
  %v7380 = vld [vmem:[%s7245 + $0x84] sm:$0xf]
  %v7381 = vld [vmem:[%s7245 + $0x88] sm:$0xf]
  %v7382 = vld [vmem:[%s7245 + $0x8c] sm:$0xf]
  %v7383 = vld [vmem:[%s7245 + $0x90] sm:$0xf]
  %v7384 = vld [vmem:[%s7245 + $0x94] sm:$0xf]
  %v7385 = vld [vmem:[%s7245 + $0x98] sm:$0xf]
  %v7386 = vld [vmem:[%s7245 + $0x9c] sm:$0xf]
  %v7387 = vld [vmem:[%s7245 + $0xa0] sm:$0xf]
  %v7388 = vld [vmem:[%s7245 + $0xa4] sm:$0xf]
  %v7389 = vld [vmem:[%s7245 + $0xa8] sm:$0xf]
  %v7390 = vld [vmem:[%s7245 + $0xac] sm:$0xf]
  %v7391 = vld [vmem:[%s7245 + $0xb0] sm:$0xf]
  %v7392 = vld [vmem:[%s7245 + $0xb4] sm:$0xf]
  %v7393 = vld [vmem:[%s7245 + $0xb8] sm:$0xf]
  %v7394 = vld [vmem:[%s7245 + $0xbc] sm:$0xf]
  %v7395 = vld [vmem:[%s7245 + $0xc0] sm:$0xf]
  %v7396 = vld [vmem:[%s7245 + $0xc4] sm:$0xf]
  %v7397 = vld [vmem:[%s7245 + $0xc8] sm:$0xf]
  %v7398 = vld [vmem:[%s7245 + $0xcc] sm:$0xf]
  %v7399 = vld [vmem:[%s7245 + $0xd0] sm:$0xf]
  %v7400 = vld [vmem:[%s7245 + $0xd4] sm:$0xf]
  %v7401 = vld [vmem:[%s7245 + $0xd8] sm:$0xf]
  %v7402 = vld [vmem:[%s7245 + $0xdc] sm:$0xf]
  %v7403 = vld [vmem:[%s7245 + $0xe0] sm:$0xf]
  %v7404 = vld [vmem:[%s7245 + $0xe4] sm:$0xf]
  %v7405 = vld [vmem:[%s7245 + $0xe8] sm:$0xf]
  %v7406 = vld [vmem:[%s7245 + $0xec] sm:$0xf]
  %v7407 = vld [vmem:[%s7245 + $0xf0] sm:$0xf]
  %v7408 = vld [vmem:[%s7245 + $0xf4] sm:$0xf]
  %v7409 = vld [vmem:[%s7245 + $0xf8] sm:$0xf]
  %v7410 = vld [vmem:[%s7245 + $0xfc] sm:$0xf]
  %v7443 = vunpack.c.l.b16 %v7379
  %v7444 = vunpack.c.l.b16 %v7380
  %v7445 = vunpack.c.l.b16 %v7381
  %v7446 = vunpack.c.l.b16 %v7382
  %v7447 = vunpack.c.l.b16 %v7383
  %v7448 = vunpack.c.l.b16 %v7384
  %v7449 = vunpack.c.l.b16 %v7385
  %v7450 = vunpack.c.l.b16 %v7386
  %v7451 = vunpack.c.l.b16 %v7387
  %v7452 = vunpack.c.l.b16 %v7388
  %v7453 = vunpack.c.l.b16 %v7389
  %v7454 = vunpack.c.l.b16 %v7390
  %v7455 = vunpack.c.l.b16 %v7391
  %v7456 = vunpack.c.l.b16 %v7392
  %v7457 = vunpack.c.l.b16 %v7393
  %v7458 = vunpack.c.l.b16 %v7394
  %v7459 = vunpack.c.l.b16 %v7395
  %v7460 = vunpack.c.l.b16 %v7396
  %v7461 = vunpack.c.l.b16 %v7397
  %v7462 = vunpack.c.l.b16 %v7398
  %v7463 = vunpack.c.l.b16 %v7399
  %v7464 = vunpack.c.l.b16 %v7400
  %v7465 = vunpack.c.l.b16 %v7401
  %v7466 = vunpack.c.l.b16 %v7402
  %v7467 = vunpack.c.l.b16 %v7403
  %v7468 = vunpack.c.l.b16 %v7404
  %v7469 = vunpack.c.l.b16 %v7405
  %v7470 = vunpack.c.l.b16 %v7406
  %v7471 = vunpack.c.l.b16 %v7407
  %v7472 = vunpack.c.l.b16 %v7408
  %v7473 = vunpack.c.l.b16 %v7409
  %v7474 = vunpack.c.l.b16 %v7410
  %v7475 = vpack.c.b16 %v7444, %v7443
  %v7476 = vpack.c.b16 %v7446, %v7445
  %v7477 = vpack.c.b16 %v7448, %v7447
  %v7478 = vpack.c.b16 %v7450, %v7449
  %v7479 = vpack.c.b16 %v7452, %v7451
  %v7480 = vpack.c.b16 %v7454, %v7453
  %v7481 = vpack.c.b16 %v7456, %v7455
  %v7482 = vpack.c.b16 %v7458, %v7457
  %v7483 = vpack.c.b16 %v7460, %v7459
  %v7484 = vpack.c.b16 %v7462, %v7461
  %v7485 = vpack.c.b16 %v7464, %v7463
  %v7486 = vpack.c.b16 %v7466, %v7465
  %v7487 = vpack.c.b16 %v7468, %v7467
  %v7488 = vpack.c.b16 %v7470, %v7469
  %v7489 = vpack.c.b16 %v7472, %v7471
  %v7490 = vpack.c.b16 %v7474, %v7473
  %7507 = vmatprep.subr.bf16.mxu0 0
  %7508 = vmatpush1.bf16.msra.mxu0 %v7475
  %7509 = vmatprep.subr.bf16.mxu0 0
  %7510 = vmatpush1.bf16.msra.mxu0 %v7476
  %7511 = vmatprep.subr.bf16.mxu0 0
  %7512 = vmatpush1.bf16.msra.mxu0 %v7477
  %7513 = vmatprep.subr.bf16.mxu0 0
  %7514 = vmatpush1.bf16.msra.mxu0 %v7478
  %7515 = vmatprep.subr.bf16.mxu0 0
  %7516 = vmatpush1.bf16.msra.mxu0 %v7479
  %7517 = vmatprep.subr.bf16.mxu0 0
  %7518 = vmatpush1.bf16.msra.mxu0 %v7480
  %7519 = vmatprep.subr.bf16.mxu0 0
  %7520 = vmatpush1.bf16.msra.mxu0 %v7481
  %7521 = vmatprep.subr.bf16.mxu0 0
  %7522 = vmatpush1.bf16.msra.mxu0 %v7482
  %7523 = vmatprep.subr.bf16.mxu0 0
  %7524 = vmatpush1.bf16.msra.mxu0 %v7483
  %7525 = vmatprep.subr.bf16.mxu0 0
  %7526 = vmatpush1.bf16.msra.mxu0 %v7484
  %7527 = vmatprep.subr.bf16.mxu0 0
  %7528 = vmatpush1.bf16.msra.mxu0 %v7485
  %7529 = vmatprep.subr.bf16.mxu0 0
  %7530 = vmatpush1.bf16.msra.mxu0 %v7486
  %7531 = vmatprep.subr.bf16.mxu0 0
  %7532 = vmatpush1.bf16.msra.mxu0 %v7487
  %7533 = vmatprep.subr.bf16.mxu0 0
  %7534 = vmatpush1.bf16.msra.mxu0 %v7488
  %7535 = vmatprep.subr.bf16.mxu0 0
  %7536 = vmatpush1.bf16.msra.mxu0 %v7489
  %7537 = vmatprep.subr.bf16.mxu0 0
  %7538 = vmatpush1.bf16.msra.mxu0 %v7490
  %7539 = vmatprep.mubr.bf16.mxu0 %v7376
  %7540 = vmatmul.mubr.bf16.gmra.mrb[0].mxu0 %v7375
  %v7541 = vpop.f32.mrb[0].mxu0
  %v7542 = vadd.f32 0.0, %v7541
  %v7543 = vpop.f32.mrb[0].mxu0
  %v7544 = vpop.f32.mrb[0].mxu0
  %v7545 = vadd.f32 0.0, %v7544
  %v7546 = vpop.f32.mrb[0].mxu0
  %7547 = vmatprep.mubr.bf16.mxu0 %v7378
  %7548 = vmatmul.mubr.bf16.gmra.mrb[0].mxu0 %v7377
  %v7549 = vpop.f32.mrb[0].mxu0
  %v7550 = vadd.f32 0.0, %v7549
  %v7551 = vpop.f32.mrb[0].mxu0
  %v7552 = vpop.f32.mrb[0].mxu0
  %v7553 = vadd.f32 0.0, %v7552
  %v7554 = vpop.f32.mrb[0].mxu0
  %7555 = vdwg.mxu0
  %v7588 = vunpack.c.l.b16 %v7246
  %v7589 = vunpack.c.l.b16 %v7247
  %v7590 = vunpack.c.l.b16 %v7248
  %v7591 = vunpack.c.l.b16 %v7249
  %v7592 = vunpack.c.l.b16 %v7250
  %v7593 = vunpack.c.l.b16 %v7251
  %v7594 = vunpack.c.l.b16 %v7252
  %v7595 = vunpack.c.l.b16 %v7253
  %v7596 = vunpack.c.l.b16 %v7254
  %v7597 = vunpack.c.l.b16 %v7255
  %v7598 = vunpack.c.l.b16 %v7256
  %v7599 = vunpack.c.l.b16 %v7257
  %v7600 = vunpack.c.l.b16 %v7258
  %v7601 = vunpack.c.l.b16 %v7259
  %v7602 = vunpack.c.l.b16 %v7260
  %v7603 = vunpack.c.l.b16 %v7261
  %v7604 = vunpack.c.l.b16 %v7262
  %v7605 = vunpack.c.l.b16 %v7263
  %v7606 = vunpack.c.l.b16 %v7264
  %v7607 = vunpack.c.l.b16 %v7265
  %v7608 = vunpack.c.l.b16 %v7266
  %v7609 = vunpack.c.l.b16 %v7267
  %v7610 = vunpack.c.l.b16 %v7268
  %v7611 = vunpack.c.l.b16 %v7269
  %v7612 = vunpack.c.l.b16 %v7270
  %v7613 = vunpack.c.l.b16 %v7271
  %v7614 = vunpack.c.l.b16 %v7272
  %v7615 = vunpack.c.l.b16 %v7273
  %v7616 = vunpack.c.l.b16 %v7274
  %v7617 = vunpack.c.l.b16 %v7275
  %v7618 = vunpack.c.l.b16 %v7276
  %v7619 = vunpack.c.l.b16 %v7277
  %v7620 = vpack.c.b16 %v7589, %v7588
  %v7621 = vpack.c.b16 %v7591, %v7590
  %v7622 = vpack.c.b16 %v7593, %v7592
  %v7623 = vpack.c.b16 %v7595, %v7594
  %v7624 = vpack.c.b16 %v7597, %v7596
  %v7625 = vpack.c.b16 %v7599, %v7598
  %v7626 = vpack.c.b16 %v7601, %v7600
  %v7627 = vpack.c.b16 %v7603, %v7602
  %v7628 = vpack.c.b16 %v7605, %v7604
  %v7629 = vpack.c.b16 %v7607, %v7606
  %v7630 = vpack.c.b16 %v7609, %v7608
  %v7631 = vpack.c.b16 %v7611, %v7610
  %v7632 = vpack.c.b16 %v7613, %v7612
  %v7633 = vpack.c.b16 %v7615, %v7614
  %v7634 = vpack.c.b16 %v7617, %v7616
  %v7635 = vpack.c.b16 %v7619, %v7618
  %7652 = vmatprep.subr.bf16.mxu0 0
  %7653 = vmatpush1.bf16.msra.mxu0 %v7620
  %7654 = vmatprep.subr.bf16.mxu0 0
  %7655 = vmatpush1.bf16.msra.mxu0 %v7621
  %7656 = vmatprep.subr.bf16.mxu0 0
  %7657 = vmatpush1.bf16.msra.mxu0 %v7622
  %7658 = vmatprep.subr.bf16.mxu0 0
  %7659 = vmatpush1.bf16.msra.mxu0 %v7623
  %7660 = vmatprep.subr.bf16.mxu0 0
  %7661 = vmatpush1.bf16.msra.mxu0 %v7624
  %7662 = vmatprep.subr.bf16.mxu0 0
  %7663 = vmatpush1.bf16.msra.mxu0 %v7625
  %7664 = vmatprep.subr.bf16.mxu0 0
  %7665 = vmatpush1.bf16.msra.mxu0 %v7626
  %7666 = vmatprep.subr.bf16.mxu0 0
  %7667 = vmatpush1.bf16.msra.mxu0 %v7627
  %7668 = vmatprep.subr.bf16.mxu0 0
  %7669 = vmatpush1.bf16.msra.mxu0 %v7628
  %7670 = vmatprep.subr.bf16.mxu0 0
  %7671 = vmatpush1.bf16.msra.mxu0 %v7629
  %7672 = vmatprep.subr.bf16.mxu0 0
  %7673 = vmatpush1.bf16.msra.mxu0 %v7630
  %7674 = vmatprep.subr.bf16.mxu0 0
  %7675 = vmatpush1.bf16.msra.mxu0 %v7631
  %7676 = vmatprep.subr.bf16.mxu0 0
  %7677 = vmatpush1.bf16.msra.mxu0 %v7632
  %7678 = vmatprep.subr.bf16.mxu0 0
  %7679 = vmatpush1.bf16.msra.mxu0 %v7633
  %7680 = vmatprep.subr.bf16.mxu0 0
  %7681 = vmatpush1.bf16.msra.mxu0 %v7634
  %7682 = vmatprep.subr.bf16.mxu0 0
  %7683 = vmatpush1.bf16.msra.mxu0 %v7635
  %7684 = vmatprep.mubr.bf16.mxu0 %v7242
  %7685 = vmatmul.mubr.bf16.gmra.mrb[0].mxu0 %v7241
  %v7686 = vpop.f32.mrb[0].mxu0
  %v7687 = vadd.f32 %v7542, %v7686
  %v7688 = vpop.f32.mrb[0].mxu0
  %v7689 = vpop.f32.mrb[0].mxu0
  %v7690 = vadd.f32 %v7545, %v7689
  %v7691 = vpop.f32.mrb[0].mxu0
  %7692 = vmatprep.mubr.bf16.mxu0 %v7244
  %7693 = vmatmul.mubr.bf16.gmra.mrb[0].mxu0 %v7243
  %v7694 = vpop.f32.mrb[0].mxu0
  %v7695 = vadd.f32 %v7550, %v7694
  %v7696 = vpop.f32.mrb[0].mxu0
  %v7697 = vpop.f32.mrb[0].mxu0
  %v7698 = vadd.f32 %v7553, %v7697
  %v7699 = vpop.f32.mrb[0].mxu0
  %7700 = vdwg.mxu0
  %v7701 = vld [vmem:[%s7136 + $0x10] sm:$0xff]
  %v7702 = vld [vmem:[%s7136 + $0x30] sm:$0xff]
  %v7703 = vld [vmem:[%s7136 + $0x50] sm:$0xff]
  %v7704 = vld [vmem:[%s7136 + $0x70] sm:$0xff]
  %v7705 = vld [vmem:[%s7141 + $0x4] sm:$0x3]
  %v7707 = vlaneseq
  %v7708 = vshrl.u32 %v7707, 7
  %v7709 = vsub.s32 0, %v7708
  %v7710 = vrot.slane %v7705, %v7709
  %v7711 = vlaneseq
  %v7712 = vshrl.u32 %v7711, 7
  %v7713 = vsub.s32 1, %v7712
  %v7714 = vrot.slane %v7705, %v7713
  %v7721 = vunpack.c.l.b16 %v7701
  %v7722 = vunpack.c.h.b16 %v7701
  %v7723 = vunpack.c.l.b16 %v7702
  %v7724 = vunpack.c.h.b16 %v7702
  %v7725 = vunpack.c.l.b16 %v7703
  %v7726 = vunpack.c.h.b16 %v7703
  %v7727 = vunpack.c.l.b16 %v7704
  %v7728 = vunpack.c.h.b16 %v7704
  %v7729 = vpack.c.b16 %v7723, %v7721
  %v7730 = vpack.c.b16 %v7724, %v7722
  %v7731 = vpack.c.b16 %v7727, %v7725
  %v7732 = vpack.c.b16 %v7728, %v7726
  %7737 = vmatprep.subr.bf16.mxu0 %v7730
  %7738 = vmatpush1.bf16.msra.mxu0 %v7729
  %7739 = vmatprep.subr.bf16.mxu0 %v7732
  %7740 = vmatpush1.bf16.msra.mxu0 %v7731
  %7741 = vmatprep.subr.bf16.mxu0 0
  %7742 = vmatpush1.bf16.msra.mxu0 0
  %7743 = vmatprep.subr.bf16.mxu0 0
  %7744 = vmatpush1.bf16.msra.mxu0 0
  %7745 = vmatprep.subr.bf16.mxu0 0
  %7746 = vmatpush1.bf16.msra.mxu0 0
  %7747 = vmatprep.subr.bf16.mxu0 0
  %7748 = vmatpush1.bf16.msra.mxu0 0
  %7749 = vmatprep.subr.bf16.mxu0 0
  %7750 = vmatpush1.bf16.msra.mxu0 0
  %7751 = vmatprep.subr.bf16.mxu0 0
  %7752 = vmatpush1.bf16.msra.mxu0 0
  %7753 = vmatprep.subr.bf16.mxu0 0
  %7754 = vmatpush1.bf16.msra.mxu0 0
  %7755 = vmatprep.subr.bf16.mxu0 0
  %7756 = vmatpush1.bf16.msra.mxu0 0
  %7757 = vmatprep.subr.bf16.mxu0 0
  %7758 = vmatpush1.bf16.msra.mxu0 0
  %7759 = vmatprep.subr.bf16.mxu0 0
  %7760 = vmatpush1.bf16.msra.mxu0 0
  %7761 = vmatprep.subr.bf16.mxu0 0
  %7762 = vmatpush1.bf16.msra.mxu0 0
  %7763 = vmatprep.subr.bf16.mxu0 0
  %7764 = vmatpush1.bf16.msra.mxu0 0
  %7765 = vmatprep.subr.bf16.mxu0 0
  %7766 = vmatpush1.bf16.msra.mxu0 0
  %7767 = vmatprep.subr.bf16.mxu0 0
  %7768 = vmatpush1.bf16.msra.mxu0 0
  %7769 = vmatprep.mubr.bf16.mxu0 0
  %7770 = vmatmul.mubr.bf16.gmra.mrb[0].mxu0 %v7175
  %v7771 = vpop.f32.mrb[0].mxu0
  %v7772 = vadd.f32 %v7710, %v7771
  %v7773 = vpop.f32.mrb[0].mxu0
  %v7774 = vadd.f32 %v7714, %v7773
  %v7775 = vpop.f32.mrb[0].mxu0
  %v7776 = vadd.f32 %v7710, %v7775
  %v7777 = vpop.f32.mrb[0].mxu0
  %v7778 = vadd.f32 %v7714, %v7777
  %7779 = vmatprep.mubr.bf16.mxu0 0
  %7780 = vmatmul.mubr.bf16.gmra.mrb[0].mxu0 %v7178
  %v7781 = vpop.f32.mrb[0].mxu0
  %v7782 = vadd.f32 %v7710, %v7781
  %v7783 = vpop.f32.mrb[0].mxu0
  %v7784 = vadd.f32 %v7714, %v7783
  %v7785 = vpop.f32.mrb[0].mxu0
  %v7786 = vadd.f32 %v7710, %v7785
  %v7787 = vpop.f32.mrb[0].mxu0
  %v7788 = vadd.f32 %v7714, %v7787
  %7789 = vdwg.mxu0
  %v7790 = vmax.f32 %v7772, 0.0
  %v7791 = vmax.f32 %v7774, 0.0
  %v7792 = vmax.f32 %v7776, 0.0
  %v7793 = vmax.f32 %v7778, 0.0
  %v7794 = vmax.f32 %v7782, 0.0
  %v7795 = vmax.f32 %v7784, 0.0
  %v7796 = vmax.f32 %v7786, 0.0
  %v7797 = vmax.f32 %v7788, 0.0
  %v7798 = vpack.c.bf16 %v7792, %v7790
  %v7799 = vpack.c.bf16 %v7793, %v7791
  %v7800 = vpack.c.bf16 %v7796, %v7794
  %v7801 = vpack.c.bf16 %v7797, %v7795
  %v7802 = vld [vmem:[%s7245 + $0x100] sm:$0xf]
  %v7803 = vld [vmem:[%s7245 + $0x104] sm:$0xf]
  %v7804 = vld [vmem:[%s7245 + $0x108] sm:$0xf]
  %v7805 = vld [vmem:[%s7245 + $0x10c] sm:$0xf]
  %v7806 = vld [vmem:[%s7245 + $0x110] sm:$0xf]
  %v7807 = vld [vmem:[%s7245 + $0x114] sm:$0xf]
  %v7808 = vld [vmem:[%s7245 + $0x118] sm:$0xf]
  %v7809 = vld [vmem:[%s7245 + $0x11c] sm:$0xf]
  %v7810 = vld [vmem:[%s7245 + $0x120] sm:$0xf]
  %v7811 = vld [vmem:[%s7245 + $0x124] sm:$0xf]
  %v7812 = vld [vmem:[%s7245 + $0x128] sm:$0xf]
  %v7813 = vld [vmem:[%s7245 + $0x12c] sm:$0xf]
  %v7814 = vld [vmem:[%s7245 + $0x130] sm:$0xf]
  %v7815 = vld [vmem:[%s7245 + $0x134] sm:$0xf]
  %v7816 = vld [vmem:[%s7245 + $0x138] sm:$0xf]
  %v7817 = vld [vmem:[%s7245 + $0x13c] sm:$0xf]
  %v7818 = vld [vmem:[%s7245 + $0x140] sm:$0xf]
  %v7819 = vld [vmem:[%s7245 + $0x144] sm:$0xf]
  %v7820 = vld [vmem:[%s7245 + $0x148] sm:$0xf]
  %v7821 = vld [vmem:[%s7245 + $0x14c] sm:$0xf]
  %v7822 = vld [vmem:[%s7245 + $0x150] sm:$0xf]
  %v7823 = vld [vmem:[%s7245 + $0x154] sm:$0xf]
  %v7824 = vld [vmem:[%s7245 + $0x158] sm:$0xf]
  %v7825 = vld [vmem:[%s7245 + $0x15c] sm:$0xf]
  %v7826 = vld [vmem:[%s7245 + $0x160] sm:$0xf]
  %v7827 = vld [vmem:[%s7245 + $0x164] sm:$0xf]
  %v7828 = vld [vmem:[%s7245 + $0x168] sm:$0xf]
  %v7829 = vld [vmem:[%s7245 + $0x16c] sm:$0xf]
  %v7830 = vld [vmem:[%s7245 + $0x170] sm:$0xf]
  %v7831 = vld [vmem:[%s7245 + $0x174] sm:$0xf]
  %v7832 = vld [vmem:[%s7245 + $0x178] sm:$0xf]
  %v7833 = vld [vmem:[%s7245 + $0x17c] sm:$0xf]
  %v7866 = vunpack.c.l.b16 %v7802
  %v7867 = vunpack.c.l.b16 %v7803
  %v7868 = vunpack.c.l.b16 %v7804
  %v7869 = vunpack.c.l.b16 %v7805
  %v7870 = vunpack.c.l.b16 %v7806
  %v7871 = vunpack.c.l.b16 %v7807
  %v7872 = vunpack.c.l.b16 %v7808
  %v7873 = vunpack.c.l.b16 %v7809
  %v7874 = vunpack.c.l.b16 %v7810
  %v7875 = vunpack.c.l.b16 %v7811
  %v7876 = vunpack.c.l.b16 %v7812
  %v7877 = vunpack.c.l.b16 %v7813
  %v7878 = vunpack.c.l.b16 %v7814
  %v7879 = vunpack.c.l.b16 %v7815
  %v7880 = vunpack.c.l.b16 %v7816
  %v7881 = vunpack.c.l.b16 %v7817
  %v7882 = vunpack.c.l.b16 %v7818
  %v7883 = vunpack.c.l.b16 %v7819
  %v7884 = vunpack.c.l.b16 %v7820
  %v7885 = vunpack.c.l.b16 %v7821
  %v7886 = vunpack.c.l.b16 %v7822
  %v7887 = vunpack.c.l.b16 %v7823
  %v7888 = vunpack.c.l.b16 %v7824
  %v7889 = vunpack.c.l.b16 %v7825
  %v7890 = vunpack.c.l.b16 %v7826
  %v7891 = vunpack.c.l.b16 %v7827
  %v7892 = vunpack.c.l.b16 %v7828
  %v7893 = vunpack.c.l.b16 %v7829
  %v7894 = vunpack.c.l.b16 %v7830
  %v7895 = vunpack.c.l.b16 %v7831
  %v7896 = vunpack.c.l.b16 %v7832
  %v7897 = vunpack.c.l.b16 %v7833
  %v7898 = vpack.c.b16 %v7867, %v7866
  %v7899 = vpack.c.b16 %v7869, %v7868
  %v7900 = vpack.c.b16 %v7871, %v7870
  %v7901 = vpack.c.b16 %v7873, %v7872
  %v7902 = vpack.c.b16 %v7875, %v7874
  %v7903 = vpack.c.b16 %v7877, %v7876
  %v7904 = vpack.c.b16 %v7879, %v7878
  %v7905 = vpack.c.b16 %v7881, %v7880
  %v7906 = vpack.c.b16 %v7883, %v7882
  %v7907 = vpack.c.b16 %v7885, %v7884
  %v7908 = vpack.c.b16 %v7887, %v7886
  %v7909 = vpack.c.b16 %v7889, %v7888
  %v7910 = vpack.c.b16 %v7891, %v7890
  %v7911 = vpack.c.b16 %v7893, %v7892
  %v7912 = vpack.c.b16 %v7895, %v7894
  %v7913 = vpack.c.b16 %v7897, %v7896
  %7930 = vmatprep.subr.bf16.mxu0 0
  %7931 = vmatpush1.bf16.msra.mxu0 %v7898
  %7932 = vmatprep.subr.bf16.mxu0 0
  %7933 = vmatpush1.bf16.msra.mxu0 %v7899
  %7934 = vmatprep.subr.bf16.mxu0 0
  %7935 = vmatpush1.bf16.msra.mxu0 %v7900
  %7936 = vmatprep.subr.bf16.mxu0 0
  %7937 = vmatpush1.bf16.msra.mxu0 %v7901
  %7938 = vmatprep.subr.bf16.mxu0 0
  %7939 = vmatpush1.bf16.msra.mxu0 %v7902
  %7940 = vmatprep.subr.bf16.mxu0 0
  %7941 = vmatpush1.bf16.msra.mxu0 %v7903
  %7942 = vmatprep.subr.bf16.mxu0 0
  %7943 = vmatpush1.bf16.msra.mxu0 %v7904
  %7944 = vmatprep.subr.bf16.mxu0 0
  %7945 = vmatpush1.bf16.msra.mxu0 %v7905
  %7946 = vmatprep.subr.bf16.mxu0 0
  %7947 = vmatpush1.bf16.msra.mxu0 %v7906
  %7948 = vmatprep.subr.bf16.mxu0 0
  %7949 = vmatpush1.bf16.msra.mxu0 %v7907
  %7950 = vmatprep.subr.bf16.mxu0 0
  %7951 = vmatpush1.bf16.msra.mxu0 %v7908
  %7952 = vmatprep.subr.bf16.mxu0 0
  %7953 = vmatpush1.bf16.msra.mxu0 %v7909
  %7954 = vmatprep.subr.bf16.mxu0 0
  %7955 = vmatpush1.bf16.msra.mxu0 %v7910
  %7956 = vmatprep.subr.bf16.mxu0 0
  %7957 = vmatpush1.bf16.msra.mxu0 %v7911
  %7958 = vmatprep.subr.bf16.mxu0 0
  %7959 = vmatpush1.bf16.msra.mxu0 %v7912
  %7960 = vmatprep.subr.bf16.mxu0 0
  %7961 = vmatpush1.bf16.msra.mxu0 %v7913
  %7962 = vmatprep.mubr.bf16.mxu0 %v7799
  %7963 = vmatmul.mubr.bf16.gmra.mrb[0].mxu0 %v7798
  %v7964 = vpop.f32.mrb[0].mxu0
  %v7965 = vadd.f32 0.0, %v7964
  %v7966 = vpop.f32.mrb[0].mxu0
  %v7967 = vpop.f32.mrb[0].mxu0
  %v7968 = vadd.f32 0.0, %v7967
  %v7969 = vpop.f32.mrb[0].mxu0
  %7970 = vmatprep.mubr.bf16.mxu0 %v7801
  %7971 = vmatmul.mubr.bf16.gmra.mrb[0].mxu0 %v7800
  %v7972 = vpop.f32.mrb[0].mxu0
  %v7973 = vadd.f32 0.0, %v7972
  %v7974 = vpop.f32.mrb[0].mxu0
  %v7975 = vpop.f32.mrb[0].mxu0
  %v7976 = vadd.f32 0.0, %v7975
  %v7977 = vpop.f32.mrb[0].mxu0
  %7978 = vdwg.mxu0
  %v7979 = vadd.f32 %v7687, %v7965
  %v7980 = vadd.f32 %v7690, %v7968
  %v7981 = vadd.f32 %v7695, %v7973
  %v7982 = vadd.f32 %v7698, %v7976
  %v7983 = vld [vmem:[%s7136 + $0x18] sm:$0xff]
  %v7984 = vld [vmem:[%s7136 + $0x38] sm:$0xff]
  %v7985 = vld [vmem:[%s7136 + $0x58] sm:$0xff]
  %v7986 = vld [vmem:[%s7136 + $0x78] sm:$0xff]
  %v7987 = vld [vmem:[%s7141 + $0x6] sm:$0x3]
  %v7989 = vlaneseq
  %v7990 = vshrl.u32 %v7989, 7
  %v7991 = vsub.s32 0, %v7990
  %v7992 = vrot.slane %v7987, %v7991
  %v7993 = vlaneseq
  %v7994 = vshrl.u32 %v7993, 7
  %v7995 = vsub.s32 1, %v7994
  %v7996 = vrot.slane %v7987, %v7995
  %v8003 = vunpack.c.l.b16 %v7983
  %v8004 = vunpack.c.h.b16 %v7983
  %v8005 = vunpack.c.l.b16 %v7984
  %v8006 = vunpack.c.h.b16 %v7984
  %v8007 = vunpack.c.l.b16 %v7985
  %v8008 = vunpack.c.h.b16 %v7985
  %v8009 = vunpack.c.l.b16 %v7986
  %v8010 = vunpack.c.h.b16 %v7986
  %v8011 = vpack.c.b16 %v8005, %v8003
  %v8012 = vpack.c.b16 %v8006, %v8004
  %v8013 = vpack.c.b16 %v8009, %v8007
  %v8014 = vpack.c.b16 %v8010, %v8008
  %8019 = vmatprep.subr.bf16.mxu0 %v8012
  %8020 = vmatpush1.bf16.msra.mxu0 %v8011
  %8021 = vmatprep.subr.bf16.mxu0 %v8014
  %8022 = vmatpush1.bf16.msra.mxu0 %v8013
  %8023 = vmatprep.subr.bf16.mxu0 0
  %8024 = vmatpush1.bf16.msra.mxu0 0
  %8025 = vmatprep.subr.bf16.mxu0 0
  %8026 = vmatpush1.bf16.msra.mxu0 0
  %8027 = vmatprep.subr.bf16.mxu0 0
  %8028 = vmatpush1.bf16.msra.mxu0 0
  %8029 = vmatprep.subr.bf16.mxu0 0
  %8030 = vmatpush1.bf16.msra.mxu0 0
  %8031 = vmatprep.subr.bf16.mxu0 0
  %8032 = vmatpush1.bf16.msra.mxu0 0
  %8033 = vmatprep.subr.bf16.mxu0 0
  %8034 = vmatpush1.bf16.msra.mxu0 0
  %8035 = vmatprep.subr.bf16.mxu0 0
  %8036 = vmatpush1.bf16.msra.mxu0 0
  %8037 = vmatprep.subr.bf16.mxu0 0
  %8038 = vmatpush1.bf16.msra.mxu0 0
  %8039 = vmatprep.subr.bf16.mxu0 0
  %8040 = vmatpush1.bf16.msra.mxu0 0
  %8041 = vmatprep.subr.bf16.mxu0 0
  %8042 = vmatpush1.bf16.msra.mxu0 0
  %8043 = vmatprep.subr.bf16.mxu0 0
  %8044 = vmatpush1.bf16.msra.mxu0 0
  %8045 = vmatprep.subr.bf16.mxu0 0
  %8046 = vmatpush1.bf16.msra.mxu0 0
  %8047 = vmatprep.subr.bf16.mxu0 0
  %8048 = vmatpush1.bf16.msra.mxu0 0
  %8049 = vmatprep.subr.bf16.mxu0 0
  %8050 = vmatpush1.bf16.msra.mxu0 0
  %8051 = vmatprep.mubr.bf16.mxu0 0
  %8052 = vmatmul.mubr.bf16.gmra.mrb[0].mxu0 %v7175
  %v8053 = vpop.f32.mrb[0].mxu0
  %v8054 = vadd.f32 %v7992, %v8053
  %v8055 = vpop.f32.mrb[0].mxu0
  %v8056 = vadd.f32 %v7996, %v8055
  %v8057 = vpop.f32.mrb[0].mxu0
  %v8058 = vadd.f32 %v7992, %v8057
  %v8059 = vpop.f32.mrb[0].mxu0
  %v8060 = vadd.f32 %v7996, %v8059
  %8061 = vmatprep.mubr.bf16.mxu0 0
  %8062 = vmatmul.mubr.bf16.gmra.mrb[0].mxu0 %v7178
  %v8063 = vpop.f32.mrb[0].mxu0
  %v8064 = vadd.f32 %v7992, %v8063
  %v8065 = vpop.f32.mrb[0].mxu0
  %v8066 = vadd.f32 %v7996, %v8065
  %v8067 = vpop.f32.mrb[0].mxu0
  %v8068 = vadd.f32 %v7992, %v8067
  %v8069 = vpop.f32.mrb[0].mxu0
  %v8070 = vadd.f32 %v7996, %v8069
  %8071 = vdwg.mxu0
  %v8072 = vmax.f32 %v8054, 0.0
  %v8073 = vmax.f32 %v8056, 0.0
  %v8074 = vmax.f32 %v8058, 0.0
  %v8075 = vmax.f32 %v8060, 0.0
  %v8076 = vmax.f32 %v8064, 0.0
  %v8077 = vmax.f32 %v8066, 0.0
  %v8078 = vmax.f32 %v8068, 0.0
  %v8079 = vmax.f32 %v8070, 0.0
  %v8080 = vpack.c.bf16 %v8074, %v8072
  %v8081 = vpack.c.bf16 %v8075, %v8073
  %v8082 = vpack.c.bf16 %v8078, %v8076
  %v8083 = vpack.c.bf16 %v8079, %v8077
  %v8084 = vld [vmem:[%s7245 + $0x180] sm:$0xf]
  %v8085 = vld [vmem:[%s7245 + $0x184] sm:$0xf]
  %v8086 = vld [vmem:[%s7245 + $0x188] sm:$0xf]
  %v8087 = vld [vmem:[%s7245 + $0x18c] sm:$0xf]
  %v8088 = vld [vmem:[%s7245 + $0x190] sm:$0xf]
  %v8089 = vld [vmem:[%s7245 + $0x194] sm:$0xf]
  %v8090 = vld [vmem:[%s7245 + $0x198] sm:$0xf]
  %v8091 = vld [vmem:[%s7245 + $0x19c] sm:$0xf]
  %v8092 = vld [vmem:[%s7245 + $0x1a0] sm:$0xf]
  %v8093 = vld [vmem:[%s7245 + $0x1a4] sm:$0xf]
  %v8094 = vld [vmem:[%s7245 + $0x1a8] sm:$0xf]
  %v8095 = vld [vmem:[%s7245 + $0x1ac] sm:$0xf]
  %v8096 = vld [vmem:[%s7245 + $0x1b0] sm:$0xf]
  %v8097 = vld [vmem:[%s7245 + $0x1b4] sm:$0xf]
  %v8098 = vld [vmem:[%s7245 + $0x1b8] sm:$0xf]
  %v8099 = vld [vmem:[%s7245 + $0x1bc] sm:$0xf]
  %v8100 = vld [vmem:[%s7245 + $0x1c0] sm:$0xf]
  %v8101 = vld [vmem:[%s7245 + $0x1c4] sm:$0xf]
  %v8102 = vld [vmem:[%s7245 + $0x1c8] sm:$0xf]
  %v8103 = vld [vmem:[%s7245 + $0x1cc] sm:$0xf]
  %v8104 = vld [vmem:[%s7245 + $0x1d0] sm:$0xf]
  %v8105 = vld [vmem:[%s7245 + $0x1d4] sm:$0xf]
  %v8106 = vld [vmem:[%s7245 + $0x1d8] sm:$0xf]
  %v8107 = vld [vmem:[%s7245 + $0x1dc] sm:$0xf]
  %v8108 = vld [vmem:[%s7245 + $0x1e0] sm:$0xf]
  %v8109 = vld [vmem:[%s7245 + $0x1e4] sm:$0xf]
  %v8110 = vld [vmem:[%s7245 + $0x1e8] sm:$0xf]
  %v8111 = vld [vmem:[%s7245 + $0x1ec] sm:$0xf]
  %v8112 = vld [vmem:[%s7245 + $0x1f0] sm:$0xf]
  %v8113 = vld [vmem:[%s7245 + $0x1f4] sm:$0xf]
  %v8114 = vld [vmem:[%s7245 + $0x1f8] sm:$0xf]
  %v8115 = vld [vmem:[%s7245 + $0x1fc] sm:$0xf]
  %v8148 = vunpack.c.l.b16 %v8084
  %v8149 = vunpack.c.l.b16 %v8085
  %v8150 = vunpack.c.l.b16 %v8086
  %v8151 = vunpack.c.l.b16 %v8087
  %v8152 = vunpack.c.l.b16 %v8088
  %v8153 = vunpack.c.l.b16 %v8089
  %v8154 = vunpack.c.l.b16 %v8090
  %v8155 = vunpack.c.l.b16 %v8091
  %v8156 = vunpack.c.l.b16 %v8092
  %v8157 = vunpack.c.l.b16 %v8093
  %v8158 = vunpack.c.l.b16 %v8094
  %v8159 = vunpack.c.l.b16 %v8095
  %v8160 = vunpack.c.l.b16 %v8096
  %v8161 = vunpack.c.l.b16 %v8097
  %v8162 = vunpack.c.l.b16 %v8098
  %v8163 = vunpack.c.l.b16 %v8099
  %v8164 = vunpack.c.l.b16 %v8100
  %v8165 = vunpack.c.l.b16 %v8101
  %v8166 = vunpack.c.l.b16 %v8102
  %v8167 = vunpack.c.l.b16 %v8103
  %v8168 = vunpack.c.l.b16 %v8104
  %v8169 = vunpack.c.l.b16 %v8105
  %v8170 = vunpack.c.l.b16 %v8106
  %v8171 = vunpack.c.l.b16 %v8107
  %v8172 = vunpack.c.l.b16 %v8108
  %v8173 = vunpack.c.l.b16 %v8109
  %v8174 = vunpack.c.l.b16 %v8110
  %v8175 = vunpack.c.l.b16 %v8111
  %v8176 = vunpack.c.l.b16 %v8112
  %v8177 = vunpack.c.l.b16 %v8113
  %v8178 = vunpack.c.l.b16 %v8114
  %v8179 = vunpack.c.l.b16 %v8115
  %v8180 = vpack.c.b16 %v8149, %v8148
  %v8181 = vpack.c.b16 %v8151, %v8150
  %v8182 = vpack.c.b16 %v8153, %v8152
  %v8183 = vpack.c.b16 %v8155, %v8154
  %v8184 = vpack.c.b16 %v8157, %v8156
  %v8185 = vpack.c.b16 %v8159, %v8158
  %v8186 = vpack.c.b16 %v8161, %v8160
  %v8187 = vpack.c.b16 %v8163, %v8162
  %v8188 = vpack.c.b16 %v8165, %v8164
  %v8189 = vpack.c.b16 %v8167, %v8166
  %v8190 = vpack.c.b16 %v8169, %v8168
  %v8191 = vpack.c.b16 %v8171, %v8170
  %v8192 = vpack.c.b16 %v8173, %v8172
  %v8193 = vpack.c.b16 %v8175, %v8174
  %v8194 = vpack.c.b16 %v8177, %v8176
  %v8195 = vpack.c.b16 %v8179, %v8178
  %8212 = vmatprep.subr.bf16.mxu0 0
  %8213 = vmatpush1.bf16.msra.mxu0 %v8180
  %8214 = vmatprep.subr.bf16.mxu0 0
  %8215 = vmatpush1.bf16.msra.mxu0 %v8181
  %8216 = vmatprep.subr.bf16.mxu0 0
  %8217 = vmatpush1.bf16.msra.mxu0 %v8182
  %8218 = vmatprep.subr.bf16.mxu0 0
  %8219 = vmatpush1.bf16.msra.mxu0 %v8183
  %8220 = vmatprep.subr.bf16.mxu0 0
  %8221 = vmatpush1.bf16.msra.mxu0 %v8184
  %8222 = vmatprep.subr.bf16.mxu0 0
  %8223 = vmatpush1.bf16.msra.mxu0 %v8185
  %8224 = vmatprep.subr.bf16.mxu0 0
  %8225 = vmatpush1.bf16.msra.mxu0 %v8186
  %8226 = vmatprep.subr.bf16.mxu0 0
  %8227 = vmatpush1.bf16.msra.mxu0 %v8187
  %8228 = vmatprep.subr.bf16.mxu0 0
  %8229 = vmatpush1.bf16.msra.mxu0 %v8188
  %8230 = vmatprep.subr.bf16.mxu0 0
  %8231 = vmatpush1.bf16.msra.mxu0 %v8189
  %8232 = vmatprep.subr.bf16.mxu0 0
  %8233 = vmatpush1.bf16.msra.mxu0 %v8190
  %8234 = vmatprep.subr.bf16.mxu0 0
  %8235 = vmatpush1.bf16.msra.mxu0 %v8191
  %8236 = vmatprep.subr.bf16.mxu0 0
  %8237 = vmatpush1.bf16.msra.mxu0 %v8192
  %8238 = vmatprep.subr.bf16.mxu0 0
  %8239 = vmatpush1.bf16.msra.mxu0 %v8193
  %8240 = vmatprep.subr.bf16.mxu0 0
  %8241 = vmatpush1.bf16.msra.mxu0 %v8194
  %8242 = vmatprep.subr.bf16.mxu0 0
  %8243 = vmatpush1.bf16.msra.mxu0 %v8195
  %8244 = vmatprep.mubr.bf16.mxu0 %v8081
  %8245 = vmatmul.mubr.bf16.gmra.mrb[0].mxu0 %v8080
  %v8246 = vpop.f32.mrb[0].mxu0
  %v8247 = vadd.f32 0.0, %v8246
  %v8248 = vpop.f32.mrb[0].mxu0
  %v8249 = vpop.f32.mrb[0].mxu0
  %v8250 = vadd.f32 0.0, %v8249
  %v8251 = vpop.f32.mrb[0].mxu0
  %8252 = vmatprep.mubr.bf16.mxu0 %v8083
  %8253 = vmatmul.mubr.bf16.gmra.mrb[0].mxu0 %v8082
  %v8254 = vpop.f32.mrb[0].mxu0
  %v8255 = vadd.f32 0.0, %v8254
  %v8256 = vpop.f32.mrb[0].mxu0
  %v8257 = vpop.f32.mrb[0].mxu0
  %v8258 = vadd.f32 0.0, %v8257
  %v8259 = vpop.f32.mrb[0].mxu0
  %8260 = vdwg.mxu0
  %v8261 = vadd.f32 %v7979, %v8247
  %v8262 = vadd.f32 %v7980, %v8250
  %v8263 = vadd.f32 %v7981, %v8255
  %v8264 = vadd.f32 %v7982, %v8258
  %s8265 = scalar_lea.vmem %s18, 3
  %v8266 = vld [vmem:[%s8265] sm:$0x1]
  %v8268 = vlaneseq
  %v8269 = vshrl.u32 %v8268, 7
  %v8270 = vsub.s32 0, %v8269
  %v8271 = vrot.slane %v8266, %v8270
  %v8273 = vadd.f32 %v8261, %v8271
  %v8274 = vadd.f32 %v8262, %v8271
  %v8275 = vadd.f32 %v8263, %v8271
  %v8276 = vadd.f32 %v8264, %v8271
  %v8277 = vadd.f32 %v7130, %v8273
  %v8278 = vadd.f32 %v7131, %v8274
  %v8279 = vadd.f32 %v7132, %v8275
  %v8280 = vadd.f32 %v7133, %v8276
  %v8281 = vsel %vm232, %v8277, 0.0
  %8282 = vadd.xlane.f32.xlu0 %v8281
  %v8283 = vpop.xlane.xlu0 %8282
  %v8284 = vsel %vm232, %v8278, 0.0
  %8285 = vadd.xlane.f32.xlu0 %v8284
  %v8286 = vpop.xlane.xlu0 %8285
  %v8287 = vsel %vm232, %v8279, 0.0
  %8288 = vadd.xlane.f32.xlu0 %v8287
  %v8289 = vpop.xlane.xlu0 %8288
  %v8290 = vsel %vm232, %v8280, 0.0
  %8291 = vadd.xlane.f32.xlu0 %v8290
  %v8292 = vpop.xlane.xlu0 %8291
  %v8293 = vmul.f32 %v8283, %v990
  %v8294 = vmul.f32 %v8286, %v990
  %v8295 = vmul.f32 %v8289, %v990
  %v8296 = vmul.f32 %v8292, %v990
  %v8297 = vsub.f32 %v8277, %v8293
  %v8298 = vsub.f32 %v8278, %v8294
  %v8299 = vsub.f32 %v8279, %v8295
  %v8300 = vsub.f32 %v8280, %v8296
  %v8301 = vmul.f32 %v8297, %v8297
  %v8302 = vmul.f32 %v8298, %v8298
  %v8303 = vmul.f32 %v8299, %v8299
  %v8304 = vmul.f32 %v8300, %v8300
  %v8305 = vsel %vm232, %v8301, 0.0
  %8306 = vadd.xlane.f32.xlu0 %v8305
  %v8307 = vpop.xlane.xlu0 %8306
  %v8308 = vsel %vm232, %v8302, 0.0
  %8309 = vadd.xlane.f32.xlu0 %v8308
  %v8310 = vpop.xlane.xlu0 %8309
  %v8311 = vsel %vm232, %v8303, 0.0
  %8312 = vadd.xlane.f32.xlu0 %v8311
  %v8313 = vpop.xlane.xlu0 %8312
  %v8314 = vsel %vm232, %v8304, 0.0
  %8315 = vadd.xlane.f32.xlu0 %v8314
  %v8316 = vpop.xlane.xlu0 %8315
  %v8317 = vmul.f32 %v8307, %v990
  %v8318 = vmul.f32 %v8310, %v990
  %v8319 = vmul.f32 %v8313, %v990
  %v8320 = vmul.f32 %v8316, %v990
  %v8321 = vadd.f32 %v8317, 1e-05
  %v8322 = vadd.f32 %v8318, 1e-05
  %v8323 = vadd.f32 %v8319, 1e-05
  %v8324 = vadd.f32 %v8320, 1e-05
  %v8325 = vrsqrt.pop %v8321
  %v8326 = vrsqrt.pop %v8322
  %v8327 = vrsqrt.pop %v8323
  %v8328 = vrsqrt.pop %v8324
  %v8329 = vmul.f32 %v8297, %v8325
  %v8330 = vmul.f32 %v8298, %v8326
  %v8331 = vmul.f32 %v8299, %v8327
  %v8332 = vmul.f32 %v8300, %v8328
  %s8333 = scalar_lea.vmem %s19, 3
  %v8334 = vld [vmem:[%s8333] sm:$0x1]
  %v8336 = vlaneseq
  %v8337 = vshrl.u32 %v8336, 7
  %v8338 = vsub.s32 0, %v8337
  %v8339 = vrot.slane %v8334, %v8338
  %v8341 = vmul.f32 %v8329, %v8339
  %v8342 = vmul.f32 %v8330, %v8339
  %v8343 = vmul.f32 %v8331, %v8339
  %v8344 = vmul.f32 %v8332, %v8339
  %s8345 = scalar_lea.vmem %s20, 3
  %v8346 = vld [vmem:[%s8345] sm:$0x1]
  %v8348 = vlaneseq
  %v8349 = vshrl.u32 %v8348, 7
  %v8350 = vsub.s32 0, %v8349
  %v8351 = vrot.slane %v8346, %v8350
  %v8353 = vadd.f32 %v8341, %v8351
  %v8354 = vadd.f32 %v8342, %v8351
  %v8355 = vadd.f32 %v8343, %v8351
  %v8356 = vadd.f32 %v8344, %v8351
  %8357 = vst.msk [vmem:[%s21] sm:$0xff] %vm232, %v8353
  %8358 = vst.msk [vmem:[%s21 + $0x8] sm:$0xff] %vm232, %v8354
  %8359 = vst.msk [vmem:[%s21 + $0x10] sm:$0xff] %vm232, %v8355
  %8360 = vst.msk [vmem:[%s21 + $0x18] sm:$0xff] %vm232, %v8356
  // Predicated region
  $region86: #{patch_transformer_encoder.1} parent=0 // pred_check
    _
  $region87: #{patch_transformer_encoder.1} parent=0 // pred_check_branch
    %8362 = sbr.rel (0) target = $region89
  $region88: #{patch_transformer_encoder.1} parent=0 // pred_region
    _
  $region89: #{patch_transformer_encoder.1} parent=0 // pred_fallthru
    _
  // Predicated region
  $region90: #{patch_transformer_encoder.1} parent=0 // pred_check
    _
  $region91: #{patch_transformer_encoder.1} parent=0 // pred_check_branch
    %8364 = sbr.rel (0) target = $region93
  $region92: #{patch_transformer_encoder.1} parent=0 // pred_region
    _
  $region93: #{patch_transformer_encoder.1} parent=0 // pred_fallthru
    _

</llo_original>
